<compile_context>
chip_gen: v6e
topology: v6e:2x2x1
jax: 0.10.0
libtpu: 0.0.40
codegen_flags: <defaults>
</compile_context>

<pallas_src>
import functools

import jax
import jax.numpy as jnp
import numpy as np
from jax.experimental import pallas as pl
from jax.experimental.pallas import tpu as pltpu

BN_EPS = 1e-5


def _im2col_dot(tap_fn, w_ref, m_rows):
    """All nine 3x3 taps K-fused into a single MXU matmul (K = 9 * C_in).

    Taps are packed in f32 (robust unaligned lane concat for small C) and cast
    back to bf16 for the MXU; the values are already bf16-rounded so the cast
    is exact and numerics match a direct bf16 im2col.
    """
    taps = [tap_fn(kh, kw).astype(jnp.float32).reshape(m_rows, -1)
            for kh in range(3) for kw in range(3)]
    col = jnp.concatenate(taps, axis=-1).astype(jnp.bfloat16)   # (M, 9*C)
    return jnp.dot(col, w_ref[...], preferred_element_type=jnp.float32)


def _resnet_block_kernel(x_ref, w1_ref, w2_ref, wsc_ref, sb_ref,
                         o_ref, h1p_ref, *,
                         NB, TH, Wo, Cin, Cout, stride, has_proj):
    # x_ref  : (NB, s*s, Hp+2, Wp, Cin) bf16 -- phase-split, spatially padded
    #          input (one extra zero phase-row top/bottom for the tile halo).
    # o_ref  : (NB, TH, Wo, Cout) f32 output-row tile.
    # h1p_ref: (NB, TH+2, Wo+2, Cout) bf16 scratch = zero-padded conv2 input.
    s = stride
    th = pl.program_id(1)
    n_th = pl.num_programs(1)
    row0 = th * TH                       # first output row of this tile
    M1 = NB * (TH + 2) * Wo              # conv1 rows: tile + 1-row halo each side
    M2 = NB * TH * Wo                    # conv2 / output rows

    s1, b1 = sb_ref[0:1, :], sb_ref[1:2, :]
    s2, b2 = sb_ref[2:3, :], sb_ref[3:4, :]
    ssc, bsc = sb_ref[4:5, :], sb_ref[5:6, :]

    # ---- conv1: 3x3 / stride s / pad 1 over TH+2 candidate h1 rows ---------
    def tap1(kh, kw):
        p = (kh % s) * s + (kw % s)              # stride phase of this tap
        return x_ref[:, p,
                     pl.ds(row0 + kh // s, TH + 2),
                     kw // s: kw // s + Wo, :]

    h1 = _im2col_dot(tap1, w1_ref, M1)           # (M1, Cout) f32
    h1 = jnp.maximum(h1 * s1 + b1, 0.0)          # folded bn1 + ReLU

    # ---- stage h1 for conv2: zero the borders only, interior overwritten ---
    zc = jnp.zeros((NB, TH + 2, 1, Cout), h1p_ref.dtype)
    h1p_ref[:, :, 0:1, :] = zc
    h1p_ref[:, :, Wo + 1:Wo + 2, :] = zc
    h1p_ref[:, :, 1:Wo + 1, :] = (
        h1.astype(h1p_ref.dtype).reshape(NB, TH + 2, Wo, Cout))
    zr = jnp.zeros((NB, 1, Wo + 2, Cout), h1p_ref.dtype)

    @pl.when(th == 0)
    def _():                                     # h1 row -1 is conv2 zero pad
        h1p_ref[:, 0:1, :, :] = zr

    @pl.when(th == n_th - 1)
    def _():                                     # h1 row Ho is conv2 zero pad
        h1p_ref[:, TH + 1:TH + 2, :, :] = zr

    # ---- conv2: 3x3 / stride 1 / pad 1 --------------------------------------
    def tap2(kh, kw):
        return h1p_ref[:, kh:kh + TH, kw:kw + Wo, :]

    h2 = _im2col_dot(tap2, w2_ref, M2)           # (M2, Cout) f32
    h2 = h2 * s2 + b2                            # folded bn2

    # ---- shortcut: identity, or conv1x1(stride) + BN projection ------------
    # The (kh=1, kw=1) tap of the 3x3 stencil is exactly the stride-s
    # subsampled, unpadded input (valid for both the identity and the
    # projection branch).
    xc = x_ref[:, (1 % s) * s + (1 % s),
               pl.ds(row0 + 1 // s + 1, TH),
               1 // s: 1 // s + Wo, :].reshape(M2, Cin)
    if has_proj:
        res = jnp.dot(xc, wsc_ref[...], preferred_element_type=jnp.float32)
        res = res * ssc + bsc                    # folded bnsc
    else:
        res = xc.astype(jnp.float32)

    out = jnp.maximum(h2 + res, 0.0)
    o_ref[...] = out.reshape(NB, TH, Wo, Cout).astype(o_ref.dtype)


def _fold_bn(gamma, beta, mean, var):
    scale = (gamma / jnp.sqrt(var + BN_EPS)).astype(jnp.float32)
    bias = (beta - mean * scale).astype(jnp.float32)
    return scale, bias


def resnet_block(x_nchw, params, *, stride=1):
    N, Cin, H, W = x_nchw.shape
    Cout = params["w1"].shape[0]
    has_proj = (Cin != Cout) or (stride != 1)
    s = stride
    Ho = (H - 1) // s + 1
    Wo = (W - 1) // s + 1

    # Batch images per grid step: largest divisor of N that is <= 8.
    NB = max(d for d in range(1, min(N, 8) + 1) if N % d == 0)
    # Output-row tile TH (must divide Ho); prefer 4..16 rows with >=2 tiles so
    # the grid has pipeline depth and >=2 parallel steps (v7x megacore).
    th_cands = [d for d in range(1, Ho + 1) if Ho % d == 0]
    th_pref = [d for d in th_cands if 4 <= d <= 16 and Ho // d >= 2]
    TH = max(th_pref) if th_pref else Ho
    n_th = Ho // TH
    # Guarantee >= 2 total grid steps when possible.
    if (N // NB) * n_th < 2:
        smaller = [d for d in range(1, NB) if N % d == 0 and (N // d) * n_th >= 2]
        if smaller:
            NB = max(smaller)

    # NCHW -> NHWC (bf16 for the MXU), spatial zero-pad by 1 for the 3x3 convs.
    x = jnp.transpose(x_nchw, (0, 2, 3, 1)).astype(jnp.bfloat16)
    x_pad = jnp.pad(x, ((0, 0), (1, 1), (1, 1), (0, 0)))

    # Phase-split (space-to-depth) so the kernel only issues contiguous loads.
    if s == 1:
        PH, Hp, Wp = 1, H + 2, W + 2
        x_ph = x_pad[:, None]                                 # (N,1,H+2,W+2,C)
    else:
        Hp = -(-(H + 2) // s)
        Wp = -(-(W + 2) // s)
        xpp = jnp.pad(x_pad, ((0, 0), (0, Hp * s - (H + 2)),
                              (0, Wp * s - (W + 2)), (0, 0)))
        x_ph = (xpp.reshape(N, Hp, s, Wp, s, Cin)
                   .transpose(0, 2, 4, 1, 3, 5)
                   .reshape(N, s * s, Hp, Wp, Cin))           # (N,s*s,Hp,Wp,C)
        PH = s * s
    # One extra zero phase-row top+bottom so every tile's conv1 halo rows
    # (h1 rows h0-1 and h0+TH) are computed from in-bounds reads.
    x_ph = jnp.pad(x_ph, ((0, 0), (0, 0), (1, 1), (0, 0), (0, 0)))
    Hp2 = Hp + 2

    # PyTorch OIHW weights -> HWIO, flattened to K-fused (9*C, Cout) matrices.
    w1 = (jnp.transpose(params["w1"], (2, 3, 1, 0))
          .reshape(9 * Cin, Cout).astype(jnp.bfloat16))
    w2 = (jnp.transpose(params["w2"], (2, 3, 1, 0))
          .reshape(9 * Cout, Cout).astype(jnp.bfloat16))
    s1, b1 = _fold_bn(*params["bn1"])
    s2, b2 = _fold_bn(*params["bn2"])
    if has_proj:
        wsc = (jnp.transpose(params["wsc"], (2, 3, 1, 0))[0, 0]
               .astype(jnp.bfloat16))                         # (Cin, Cout)
        ssc, bsc = _fold_bn(*params["bnsc"])
    else:
        wsc = jnp.zeros((1, 1), jnp.bfloat16)                 # unused placeholder
        ssc = jnp.ones((Cout,), jnp.float32)
        bsc = jnp.zeros((Cout,), jnp.float32)
    zf = jnp.zeros((Cout,), jnp.float32)
    # Pack all folded BN scale/bias vectors into one (8, Cout) operand.
    sb = jnp.stack([s1, b1, s2, b2, ssc, bsc, zf, zf])        # (8, Cout) f32

    kernel = functools.partial(
        _resnet_block_kernel, NB=NB, TH=TH, Wo=Wo, Cin=Cin, Cout=Cout,
        stride=stride, has_proj=has_proj)

    def const_spec(shape):
        nd = len(shape)
        # Constant index_map -> never re-DMA'd; single-buffered so the weight
        # blocks don't take 2x VMEM (matters on v7x's 64 MiB VMEM).
        return pl.BlockSpec(shape, lambda n, t: (0,) * nd,
                            pipeline_mode=pl.Buffered(1))

    # Explicit scoped-VMEM budget from the actual block/scratch/intermediate
    # byte counts (with headroom), clamped to the chip's physical VMEM.
    M1 = NB * (TH + 2) * Wo
    M2 = NB * TH * Wo
    est = (2 * NB * PH * Hp2 * Wp * Cin * 2            # input block x2 buffers
           + 2 * NB * TH * Wo * Cout * 4               # output block x2 buffers
           + int(w1.size + w2.size + wsc.size) * 2 + int(sb.size) * 4
           + NB * (TH + 2) * (Wo + 2) * Cout * 2       # h1p scratch
           + 2 * (M1 * 9 * Cin * 6 + M2 * 9 * Cout * 6 + 4 * M2 * Cout * 4))
    try:
        vmem_cap = int(pltpu.get_tpu_info().vmem_capacity_bytes)
    except Exception:
        vmem_cap = 128 * 1024 * 1024
    vmem_limit = int(max(32 * 1024 * 1024, min(2 * est, vmem_cap * 3 // 4)))

    out_nhwc = pl.pallas_call(
        kernel,
        out_shape=jax.ShapeDtypeStruct((N, Ho, Wo, Cout), jnp.float32),
        grid=(N // NB, n_th),
        in_specs=[
            pl.BlockSpec((NB, PH, Hp2, Wp, Cin), lambda n, t: (n, 0, 0, 0, 0)),
            const_spec(w1.shape),
            const_spec(w2.shape),
            const_spec(wsc.shape),
            const_spec(sb.shape),
        ],
        out_specs=pl.BlockSpec((NB, TH, Wo, Cout), lambda n, t: (n, t, 0, 0)),
        scratch_shapes=[pltpu.VMEM((NB, TH + 2, Wo + 2, Cout), jnp.bfloat16)],
        compiler_params=pltpu.CompilerParams(
            dimension_semantics=("parallel", "parallel"),
            vmem_limit_bytes=vmem_limit),
    )(x_ph, w1, w2, wsc, sb)

    return jnp.transpose(out_nhwc, (0, 3, 1, 2))   # back to NCHW


def _reference(x_nchw, params, *, stride=1):
    """Pure-JAX (lax.conv) reference of the PyTorch forward, eval-mode BN."""
    x = jnp.transpose(x_nchw, (0, 2, 3, 1)).astype(jnp.bfloat16)
    Cin = x_nchw.shape[1]
    Cout = params["w1"].shape[0]
    has_proj = (Cin != Cout) or (stride != 1)

    def conv(v, w_oihw, s, pad):
        w = jnp.transpose(w_oihw, (2, 3, 1, 0)).astype(jnp.bfloat16)
        return jax.lax.conv_general_dilated(
            v, w, (s, s), [(pad, pad), (pad, pad)],
            dimension_numbers=("NHWC", "HWIO", "NHWC"),
            preferred_element_type=jnp.float32)

    def bn(v, stats):
        sc, bi = _fold_bn(*stats)
        return v * sc.reshape(1, 1, 1, -1) + bi.reshape(1, 1, 1, -1)

    out = jax.nn.relu(bn(conv(x, params["w1"], stride, 1), params["bn1"]))
    out = bn(conv(out.astype(jnp.bfloat16), params["w2"], 1, 1), params["bn2"])
    if has_proj:
        res = bn(conv(x, params["wsc"], stride, 0), params["bnsc"])
    else:
        res = x.astype(jnp.float32)
    out = jax.nn.relu(out + res)
    return jnp.transpose(out, (0, 3, 1, 2))


def _make_params(key, cin, cout):
    ks = jax.random.split(key, 15)

    def bn_params(k0, k1, k2, k3):
        gamma = 1.0 + 0.1 * jax.random.normal(k0, (cout,), jnp.float32)
        beta = 0.1 * jax.random.normal(k1, (cout,), jnp.float32)
        mean = 0.1 * jax.random.normal(k2, (cout,), jnp.float32)
        var = jax.random.uniform(k3, (cout,), jnp.float32, 0.5, 1.5)
        return gamma, beta, mean, var

    return {
        "w1": 0.1 * jax.random.normal(ks[0], (cout, cin, 3, 3), jnp.float32),
        "w2": 0.1 * jax.random.normal(ks[1], (cout, cout, 3, 3), jnp.float32),
        "wsc": 0.1 * jax.random.normal(ks[2], (cout, cin, 1, 1), jnp.float32),
        "bn1": bn_params(ks[3], ks[4], ks[5], ks[6]),
        "bn2": bn_params(ks[7], ks[8], ks[9], ks[10]),
        "bnsc": bn_params(ks[11], ks[12], ks[13], ks[14]),
    }


if __name__ == "__main__":
    key = jax.random.PRNGKey(0)

    # (N, Cin, Cout, H, W, stride): projection, identity, and strided blocks.
    configs = [
        (2, 4, 8, 16, 16, 1),   # Cin != Cout -> projection shortcut
        (2, 8, 8, 16, 16, 1),   # identity shortcut
        (2, 4, 8, 16, 16, 2),   # stride-2 projection shortcut
    ]

    block_fn = jax.jit(resnet_block, static_argnames=("stride",))

    for (N, Cin, Cout, H, W, STRIDE) in configs:
        kp, kx, key = jax.random.split(key, 3)
        params = _make_params(kp, Cin, Cout)
        x = jax.random.normal(kx, (N, Cin, H, W), jnp.float32)

        out = jax.block_until_ready(block_fn(x, params, stride=STRIDE))
        ref = jax.block_until_ready(_reference(x, params, stride=STRIDE))
        np.testing.assert_allclose(np.asarray(out), np.asarray(ref),
                                   rtol=5e-3, atol=5e-3)

    print("KERNEL_OK")
</pallas_src>

<mosaic_0001>
module attributes {stable_mosaic.version = 11 : i64} {
  func.func @_resnet_block_kernel(%arg0: i32, %arg1: i32, %arg2: memref<2x1x20x18x4xbf16, #tpu.memory_space<vmem>>, %arg3: memref<36x8xbf16, #tpu.memory_space<vmem>>, %arg4: memref<72x8xbf16, #tpu.memory_space<vmem>>, %arg5: memref<4x8xbf16, #tpu.memory_space<vmem>>, %arg6: memref<8x8xf32, #tpu.memory_space<vmem>>, %arg7: memref<2x8x16x8xf32, #tpu.memory_space<vmem>>, %arg8: memref<2x10x18x8xbf16, #tpu.memory_space<vmem>>) attributes {dimension_semantics = [#tpu.dimension_semantics<parallel>, #tpu.dimension_semantics<parallel>], iteration_bounds = array<i64: 1, 2>, scalar_prefetch = 0 : i64, scratch_operands = 1 : i64, tpu.core_type = #tpu.core_type<tc>, window_params = [{transform_indices = @transform_0, window_bounds = array<i64: 2, 1, 20, 18, 4>}, {pipeline_mode = #tpu.pipeline_mode<synchronous>, transform_indices = @transform_1, window_bounds = array<i64: 36, 8>}, {pipeline_mode = #tpu.pipeline_mode<synchronous>, transform_indices = @transform_2, window_bounds = array<i64: 72, 8>}, {pipeline_mode = #tpu.pipeline_mode<synchronous>, transform_indices = @transform_3, window_bounds = array<i64: 4, 8>}, {pipeline_mode = #tpu.pipeline_mode<synchronous>, transform_indices = @transform_4, window_bounds = array<i64: 8, 8>}, {transform_indices = @transform_5, window_bounds = array<i64: 2, 8, 16, 8>}]} {
    %c8_i32 = arith.constant 8 : i32
    %0 = arith.muli %arg1, %c8_i32 : i32
    %c0 = arith.constant 0 : index
    %c0_0 = arith.constant 0 : index
    %1 = vector.load %arg6[%c0, %c0_0] : memref<8x8xf32, #tpu.memory_space<vmem>>, vector<1x8xf32>
    %c1 = arith.constant 1 : index
    %c0_1 = arith.constant 0 : index
    %2 = vector.load %arg6[%c1, %c0_1] : memref<8x8xf32, #tpu.memory_space<vmem>>, vector<1x8xf32>
    %c2 = arith.constant 2 : index
    %c0_2 = arith.constant 0 : index
    %3 = vector.load %arg6[%c2, %c0_2] : memref<8x8xf32, #tpu.memory_space<vmem>>, vector<1x8xf32>
    %c3 = arith.constant 3 : index
    %c0_3 = arith.constant 0 : index
    %4 = vector.load %arg6[%c3, %c0_3] : memref<8x8xf32, #tpu.memory_space<vmem>>, vector<1x8xf32>
    %c4 = arith.constant 4 : index
    %c0_4 = arith.constant 0 : index
    %5 = vector.load %arg6[%c4, %c0_4] : memref<8x8xf32, #tpu.memory_space<vmem>>, vector<1x8xf32>
    %c5 = arith.constant 5 : index
    %c0_5 = arith.constant 0 : index
    %6 = vector.load %arg6[%c5, %c0_5] : memref<8x8xf32, #tpu.memory_space<vmem>>, vector<1x8xf32>
    %c0_i32 = arith.constant 0 : i32
    %7 = arith.addi %0, %c0_i32 : i32
    %c0_6 = arith.constant 0 : index
    %c0_7 = arith.constant 0 : index
    %8 = arith.index_cast %7 : i32 to index
    %c0_8 = arith.constant 0 : index
    %c0_9 = arith.constant 0 : index
    %9 = vector.load %arg2[%c0_6, %c0_7, %8, %c0_8, %c0_9] : memref<2x1x20x18x4xbf16, #tpu.memory_space<vmem>>, vector<2x1x10x16x4xbf16>
    %10 = vector.shape_cast %9 : vector<2x1x10x16x4xbf16> to vector<2x10x16x4xbf16>
    %11 = arith.extf %10 : vector<2x10x16x4xbf16> to vector<2x10x16x4xf32>
    %12 = vector.shape_cast %11 : vector<2x10x16x4xf32> to vector<320x4xf32>
    %c0_i32_10 = arith.constant 0 : i32
    %13 = arith.addi %0, %c0_i32_10 : i32
    %c0_11 = arith.constant 0 : index
    %c0_12 = arith.constant 0 : index
    %14 = arith.index_cast %13 : i32 to index
    %c1_13 = arith.constant 1 : index
    %c0_14 = arith.constant 0 : index
    %15 = vector.load %arg2[%c0_11, %c0_12, %14, %c1_13, %c0_14] : memref<2x1x20x18x4xbf16, #tpu.memory_space<vmem>>, vector<2x1x10x16x4xbf16>
    %16 = vector.shape_cast %15 : vector<2x1x10x16x4xbf16> to vector<2x10x16x4xbf16>
    %17 = arith.extf %16 : vector<2x10x16x4xbf16> to vector<2x10x16x4xf32>
    %18 = vector.shape_cast %17 : vector<2x10x16x4xf32> to vector<320x4xf32>
    %c0_i32_15 = arith.constant 0 : i32
    %19 = arith.addi %0, %c0_i32_15 : i32
    %c0_16 = arith.constant 0 : index
    %c0_17 = arith.constant 0 : index
    %20 = arith.index_cast %19 : i32 to index
    %c2_18 = arith.constant 2 : index
    %c0_19 = arith.constant 0 : index
    %21 = vector.load %arg2[%c0_16, %c0_17, %20, %c2_18, %c0_19] : memref<2x1x20x18x4xbf16, #tpu.memory_space<vmem>>, vector<2x1x10x16x4xbf16>
    %22 = vector.shape_cast %21 : vector<2x1x10x16x4xbf16> to vector<2x10x16x4xbf16>
    %23 = arith.extf %22 : vector<2x10x16x4xbf16> to vector<2x10x16x4xf32>
    %24 = vector.shape_cast %23 : vector<2x10x16x4xf32> to vector<320x4xf32>
    %c1_i32 = arith.constant 1 : i32
    %25 = arith.addi %0, %c1_i32 : i32
    %c0_20 = arith.constant 0 : index
    %c0_21 = arith.constant 0 : index
    %26 = arith.index_cast %25 : i32 to index
    %c0_22 = arith.constant 0 : index
    %c0_23 = arith.constant 0 : index
    %27 = vector.load %arg2[%c0_20, %c0_21, %26, %c0_22, %c0_23] : memref<2x1x20x18x4xbf16, #tpu.memory_space<vmem>>, vector<2x1x10x16x4xbf16>
    %28 = vector.shape_cast %27 : vector<2x1x10x16x4xbf16> to vector<2x10x16x4xbf16>
    %29 = arith.extf %28 : vector<2x10x16x4xbf16> to vector<2x10x16x4xf32>
    %30 = vector.shape_cast %29 : vector<2x10x16x4xf32> to vector<320x4xf32>
    %c1_i32_24 = arith.constant 1 : i32
    %31 = arith.addi %0, %c1_i32_24 : i32
    %c0_25 = arith.constant 0 : index
    %c0_26 = arith.constant 0 : index
    %32 = arith.index_cast %31 : i32 to index
    %c1_27 = arith.constant 1 : index
    %c0_28 = arith.constant 0 : index
    %33 = vector.load %arg2[%c0_25, %c0_26, %32, %c1_27, %c0_28] : memref<2x1x20x18x4xbf16, #tpu.memory_space<vmem>>, vector<2x1x10x16x4xbf16>
    %34 = vector.shape_cast %33 : vector<2x1x10x16x4xbf16> to vector<2x10x16x4xbf16>
    %35 = arith.extf %34 : vector<2x10x16x4xbf16> to vector<2x10x16x4xf32>
    %36 = vector.shape_cast %35 : vector<2x10x16x4xf32> to vector<320x4xf32>
    %c1_i32_29 = arith.constant 1 : i32
    %37 = arith.addi %0, %c1_i32_29 : i32
    %c0_30 = arith.constant 0 : index
    %c0_31 = arith.constant 0 : index
    %38 = arith.index_cast %37 : i32 to index
    %c2_32 = arith.constant 2 : index
    %c0_33 = arith.constant 0 : index
    %39 = vector.load %arg2[%c0_30, %c0_31, %38, %c2_32, %c0_33] : memref<2x1x20x18x4xbf16, #tpu.memory_space<vmem>>, vector<2x1x10x16x4xbf16>
    %40 = vector.shape_cast %39 : vector<2x1x10x16x4xbf16> to vector<2x10x16x4xbf16>
    %41 = arith.extf %40 : vector<2x10x16x4xbf16> to vector<2x10x16x4xf32>
    %42 = vector.shape_cast %41 : vector<2x10x16x4xf32> to vector<320x4xf32>
    %c2_i32 = arith.constant 2 : i32
    %43 = arith.addi %0, %c2_i32 : i32
    %c0_34 = arith.constant 0 : index
    %c0_35 = arith.constant 0 : index
    %44 = arith.index_cast %43 : i32 to index
    %c0_36 = arith.constant 0 : index
    %c0_37 = arith.constant 0 : index
    %45 = vector.load %arg2[%c0_34, %c0_35, %44, %c0_36, %c0_37] : memref<2x1x20x18x4xbf16, #tpu.memory_space<vmem>>, vector<2x1x10x16x4xbf16>
    %46 = vector.shape_cast %45 : vector<2x1x10x16x4xbf16> to vector<2x10x16x4xbf16>
    %47 = arith.extf %46 : vector<2x10x16x4xbf16> to vector<2x10x16x4xf32>
    %48 = vector.shape_cast %47 : vector<2x10x16x4xf32> to vector<320x4xf32>
    %c2_i32_38 = arith.constant 2 : i32
    %49 = arith.addi %0, %c2_i32_38 : i32
    %c0_39 = arith.constant 0 : index
    %c0_40 = arith.constant 0 : index
    %50 = arith.index_cast %49 : i32 to index
    %c1_41 = arith.constant 1 : index
    %c0_42 = arith.constant 0 : index
    %51 = vector.load %arg2[%c0_39, %c0_40, %50, %c1_41, %c0_42] : memref<2x1x20x18x4xbf16, #tpu.memory_space<vmem>>, vector<2x1x10x16x4xbf16>
    %52 = vector.shape_cast %51 : vector<2x1x10x16x4xbf16> to vector<2x10x16x4xbf16>
    %53 = arith.extf %52 : vector<2x10x16x4xbf16> to vector<2x10x16x4xf32>
    %54 = vector.shape_cast %53 : vector<2x10x16x4xf32> to vector<320x4xf32>
    %c2_i32_43 = arith.constant 2 : i32
    %55 = arith.addi %0, %c2_i32_43 : i32
    %c0_44 = arith.constant 0 : index
    %c0_45 = arith.constant 0 : index
    %56 = arith.index_cast %55 : i32 to index
    %c2_46 = arith.constant 2 : index
    %c0_47 = arith.constant 0 : index
    %57 = vector.load %arg2[%c0_44, %c0_45, %56, %c2_46, %c0_47] : memref<2x1x20x18x4xbf16, #tpu.memory_space<vmem>>, vector<2x1x10x16x4xbf16>
    %58 = vector.shape_cast %57 : vector<2x1x10x16x4xbf16> to vector<2x10x16x4xbf16>
    %59 = arith.extf %58 : vector<2x10x16x4xbf16> to vector<2x10x16x4xf32>
    %60 = vector.shape_cast %59 : vector<2x10x16x4xf32> to vector<320x4xf32>
    %61 = tpu.concatenate %12, %18, %24, %30, %36, %42, %48, %54, %60 in 1 : vector<320x4xf32>, vector<320x4xf32>, vector<320x4xf32>, vector<320x4xf32>, vector<320x4xf32>, vector<320x4xf32>, vector<320x4xf32>, vector<320x4xf32>, vector<320x4xf32> -> vector<320x36xf32>
    %62 = arith.truncf %61 : vector<320x36xf32> to vector<320x36xbf16>
    %c0_48 = arith.constant 0 : index
    %c0_49 = arith.constant 0 : index
    %63 = vector.load %arg3[%c0_48, %c0_49] : memref<36x8xbf16, #tpu.memory_space<vmem>>, vector<36x8xbf16>
    %cst = arith.constant dense<0.000000e+00> : vector<320x8xf32>
    %64 = tpu.matmul %62, %63, %cst {dimension_numbers = #tpu.dot_dimension_numbers<[1], [0], [0], [1], [0, 0, 1, 1], [], []>} : vector<320x36xbf16>, vector<36x8xbf16>, vector<320x8xf32> -> vector<320x8xf32>
    %65 = vector.broadcast %1 : vector<1x8xf32> to vector<320x8xf32>
    %66 = arith.mulf %64, %65 : vector<320x8xf32>
    %67 = vector.broadcast %2 : vector<1x8xf32> to vector<320x8xf32>
    %68 = arith.addf %66, %67 : vector<320x8xf32>
    %cst_50 = arith.constant 0.000000e+00 : f32
    %69 = vector.broadcast %cst_50 : f32 to vector<320x8xf32>
    %70 = arith.maximumf %68, %69 : vector<320x8xf32>
    %cst_51 = arith.constant 0.000000e+00 : bf16
    %71 = vector.broadcast %cst_51 : bf16 to vector<2x10x1x8xbf16>
    %c0_52 = arith.constant 0 : index
    %c0_53 = arith.constant 0 : index
    %c0_54 = arith.constant 0 : index
    %c0_55 = arith.constant 0 : index
    %72 = vector.load %arg8[%c0_52, %c0_53, %c0_54, %c0_55] : memref<2x10x18x8xbf16, #tpu.memory_space<vmem>>, vector<2x10x1x8xbf16>
    tpu.vector_store %arg8[%c0_52, %c0_53, %c0_54, %c0_55], %71 {strides = array<i32>} : memref<2x10x18x8xbf16, #tpu.memory_space<vmem>>, vector<2x10x1x8xbf16>,
    %c0_56 = arith.constant 0 : index
    %c0_57 = arith.constant 0 : index
    %c17 = arith.constant 17 : index
    %c0_58 = arith.constant 0 : index
    %73 = vector.load %arg8[%c0_56, %c0_57, %c17, %c0_58] : memref<2x10x18x8xbf16, #tpu.memory_space<vmem>>, vector<2x10x1x8xbf16>
    tpu.vector_store %arg8[%c0_56, %c0_57, %c17, %c0_58], %71 {strides = array<i32>} : memref<2x10x18x8xbf16, #tpu.memory_space<vmem>>, vector<2x10x1x8xbf16>,
    %74 = arith.truncf %70 : vector<320x8xf32> to vector<320x8xbf16>
    %75 = vector.shape_cast %74 : vector<320x8xbf16> to vector<2x10x16x8xbf16>
    %c0_59 = arith.constant 0 : index
    %c0_60 = arith.constant 0 : index
    %c1_61 = arith.constant 1 : index
    %c0_62 = arith.constant 0 : index
    %76 = vector.load %arg8[%c0_59, %c0_60, %c1_61, %c0_62] : memref<2x10x18x8xbf16, #tpu.memory_space<vmem>>, vector<2x10x16x8xbf16>
    tpu.vector_store %arg8[%c0_59, %c0_60, %c1_61, %c0_62], %75 {strides = array<i32>} : memref<2x10x18x8xbf16, #tpu.memory_space<vmem>>, vector<2x10x16x8xbf16>,
    %cst_63 = arith.constant 0.000000e+00 : bf16
    %77 = vector.broadcast %cst_63 : bf16 to vector<2x1x18x8xbf16>
    %c0_i32_64 = arith.constant 0 : i32
    %78 = arith.cmpi eq, %arg1, %c0_i32_64 : i32
    %79 = arith.extui %78 : i1 to i32
    %c0_i32_65 = arith.constant 0 : i32
    %80 = arith.cmpi ne, %79, %c0_i32_65 : i32
    scf.if %80 {
      %c0_121 = arith.constant 0 : index
      %c0_122 = arith.constant 0 : index
      %c0_123 = arith.constant 0 : index
      %c0_124 = arith.constant 0 : index
      %136 = vector.load %arg8[%c0_121, %c0_122, %c0_123, %c0_124] : memref<2x10x18x8xbf16, #tpu.memory_space<vmem>>, vector<2x1x18x8xbf16>
      tpu.vector_store %arg8[%c0_121, %c0_122, %c0_123, %c0_124], %77 {strides = array<i32>} : memref<2x10x18x8xbf16, #tpu.memory_space<vmem>>, vector<2x1x18x8xbf16>,
    } else {
    }
    %c1_i32_66 = arith.constant 1 : i32
    %81 = arith.cmpi eq, %arg1, %c1_i32_66 : i32
    %82 = arith.extui %81 : i1 to i32
    %c0_i32_67 = arith.constant 0 : i32
    %83 = arith.cmpi ne, %82, %c0_i32_67 : i32
    scf.if %83 {
      %c0_121 = arith.constant 0 : index
      %c9 = arith.constant 9 : index
      %c0_122 = arith.constant 0 : index
      %c0_123 = arith.constant 0 : index
      %136 = vector.load %arg8[%c0_121, %c9, %c0_122, %c0_123] : memref<2x10x18x8xbf16, #tpu.memory_space<vmem>>, vector<2x1x18x8xbf16>
      tpu.vector_store %arg8[%c0_121, %c9, %c0_122, %c0_123], %77 {strides = array<i32>} : memref<2x10x18x8xbf16, #tpu.memory_space<vmem>>, vector<2x1x18x8xbf16>,
    } else {
    }
    %c0_68 = arith.constant 0 : index
    %c0_69 = arith.constant 0 : index
    %c0_70 = arith.constant 0 : index
    %c0_71 = arith.constant 0 : index
    %84 = vector.load %arg8[%c0_68, %c0_69, %c0_70, %c0_71] : memref<2x10x18x8xbf16, #tpu.memory_space<vmem>>, vector<2x8x16x8xbf16>
    %85 = arith.extf %84 : vector<2x8x16x8xbf16> to vector<2x8x16x8xf32>
    %86 = vector.shape_cast %85 : vector<2x8x16x8xf32> to vector<256x8xf32>
    %c0_72 = arith.constant 0 : index
    %c0_73 = arith.constant 0 : index
    %c1_74 = arith.constant 1 : index
    %c0_75 = arith.constant 0 : index
    %87 = vector.load %arg8[%c0_72, %c0_73, %c1_74, %c0_75] : memref<2x10x18x8xbf16, #tpu.memory_space<vmem>>, vector<2x8x16x8xbf16>
    %88 = arith.extf %87 : vector<2x8x16x8xbf16> to vector<2x8x16x8xf32>
    %89 = vector.shape_cast %88 : vector<2x8x16x8xf32> to vector<256x8xf32>
    %c0_76 = arith.constant 0 : index
    %c0_77 = arith.constant 0 : index
    %c2_78 = arith.constant 2 : index
    %c0_79 = arith.constant 0 : index
    %90 = vector.load %arg8[%c0_76, %c0_77, %c2_78, %c0_79] : memref<2x10x18x8xbf16, #tpu.memory_space<vmem>>, vector<2x8x16x8xbf16>
    %91 = arith.extf %90 : vector<2x8x16x8xbf16> to vector<2x8x16x8xf32>
    %92 = vector.shape_cast %91 : vector<2x8x16x8xf32> to vector<256x8xf32>
    %c0_80 = arith.constant 0 : index
    %c1_81 = arith.constant 1 : index
    %c0_82 = arith.constant 0 : index
    %c0_83 = arith.constant 0 : index
    %93 = vector.load %arg8[%c0_80, %c1_81, %c0_82, %c0_83] : memref<2x10x18x8xbf16, #tpu.memory_space<vmem>>, vector<2x8x16x8xbf16>
    %94 = arith.extf %93 : vector<2x8x16x8xbf16> to vector<2x8x16x8xf32>
    %95 = vector.shape_cast %94 : vector<2x8x16x8xf32> to vector<256x8xf32>
    %c0_84 = arith.constant 0 : index
    %c1_85 = arith.constant 1 : index
    %c1_86 = arith.constant 1 : index
    %c0_87 = arith.constant 0 : index
    %96 = vector.load %arg8[%c0_84, %c1_85, %c1_86, %c0_87] : memref<2x10x18x8xbf16, #tpu.memory_space<vmem>>, vector<2x8x16x8xbf16>
    %97 = arith.extf %96 : vector<2x8x16x8xbf16> to vector<2x8x16x8xf32>
    %98 = vector.shape_cast %97 : vector<2x8x16x8xf32> to vector<256x8xf32>
    %c0_88 = arith.constant 0 : index
    %c1_89 = arith.constant 1 : index
    %c2_90 = arith.constant 2 : index
    %c0_91 = arith.constant 0 : index
    %99 = vector.load %arg8[%c0_88, %c1_89, %c2_90, %c0_91] : memref<2x10x18x8xbf16, #tpu.memory_space<vmem>>, vector<2x8x16x8xbf16>
    %100 = arith.extf %99 : vector<2x8x16x8xbf16> to vector<2x8x16x8xf32>
    %101 = vector.shape_cast %100 : vector<2x8x16x8xf32> to vector<256x8xf32>
    %c0_92 = arith.constant 0 : index
    %c2_93 = arith.constant 2 : index
    %c0_94 = arith.constant 0 : index
    %c0_95 = arith.constant 0 : index
    %102 = vector.load %arg8[%c0_92, %c2_93, %c0_94, %c0_95] : memref<2x10x18x8xbf16, #tpu.memory_space<vmem>>, vector<2x8x16x8xbf16>
    %103 = arith.extf %102 : vector<2x8x16x8xbf16> to vector<2x8x16x8xf32>
    %104 = vector.shape_cast %103 : vector<2x8x16x8xf32> to vector<256x8xf32>
    %c0_96 = arith.constant 0 : index
    %c2_97 = arith.constant 2 : index
    %c1_98 = arith.constant 1 : index
    %c0_99 = arith.constant 0 : index
    %105 = vector.load %arg8[%c0_96, %c2_97, %c1_98, %c0_99] : memref<2x10x18x8xbf16, #tpu.memory_space<vmem>>, vector<2x8x16x8xbf16>
    %106 = arith.extf %105 : vector<2x8x16x8xbf16> to vector<2x8x16x8xf32>
    %107 = vector.shape_cast %106 : vector<2x8x16x8xf32> to vector<256x8xf32>
    %c0_100 = arith.constant 0 : index
    %c2_101 = arith.constant 2 : index
    %c2_102 = arith.constant 2 : index
    %c0_103 = arith.constant 0 : index
    %108 = vector.load %arg8[%c0_100, %c2_101, %c2_102, %c0_103] : memref<2x10x18x8xbf16, #tpu.memory_space<vmem>>, vector<2x8x16x8xbf16>
    %109 = arith.extf %108 : vector<2x8x16x8xbf16> to vector<2x8x16x8xf32>
    %110 = vector.shape_cast %109 : vector<2x8x16x8xf32> to vector<256x8xf32>
    %111 = tpu.concatenate %86, %89, %92, %95, %98, %101, %104, %107, %110 in 1 : vector<256x8xf32>, vector<256x8xf32>, vector<256x8xf32>, vector<256x8xf32>, vector<256x8xf32>, vector<256x8xf32>, vector<256x8xf32>, vector<256x8xf32>, vector<256x8xf32> -> vector<256x72xf32>
    %112 = arith.truncf %111 : vector<256x72xf32> to vector<256x72xbf16>
    %c0_104 = arith.constant 0 : index
    %c0_105 = arith.constant 0 : index
    %113 = vector.load %arg4[%c0_104, %c0_105] : memref<72x8xbf16, #tpu.memory_space<vmem>>, vector<72x8xbf16>
    %cst_106 = arith.constant dense<0.000000e+00> : vector<256x8xf32>
    %114 = tpu.matmul %112, %113, %cst_106 {dimension_numbers = #tpu.dot_dimension_numbers<[1], [0], [0], [1], [0, 0, 1, 1], [], []>} : vector<256x72xbf16>, vector<72x8xbf16>, vector<256x8xf32> -> vector<256x8xf32>
    %115 = vector.broadcast %3 : vector<1x8xf32> to vector<256x8xf32>
    %116 = arith.mulf %114, %115 : vector<256x8xf32>
    %117 = vector.broadcast %4 : vector<1x8xf32> to vector<256x8xf32>
    %118 = arith.addf %116, %117 : vector<256x8xf32>
    %c1_i32_107 = arith.constant 1 : i32
    %119 = arith.addi %0, %c1_i32_107 : i32
    %c1_i32_108 = arith.constant 1 : i32
    %120 = arith.addi %119, %c1_i32_108 : i32
    %c0_109 = arith.constant 0 : index
    %c0_110 = arith.constant 0 : index
    %121 = arith.index_cast %120 : i32 to index
    %c1_111 = arith.constant 1 : index
    %c0_112 = arith.constant 0 : index
    %122 = vector.load %arg2[%c0_109, %c0_110, %121, %c1_111, %c0_112] : memref<2x1x20x18x4xbf16, #tpu.memory_space<vmem>>, vector<2x1x8x16x4xbf16>
    %123 = vector.shape_cast %122 : vector<2x1x8x16x4xbf16> to vector<2x8x16x4xbf16>
    %124 = vector.shape_cast %123 : vector<2x8x16x4xbf16> to vector<256x4xbf16>
    %c0_113 = arith.constant 0 : index
    %c0_114 = arith.constant 0 : index
    %125 = vector.load %arg5[%c0_113, %c0_114] : memref<4x8xbf16, #tpu.memory_space<vmem>>, vector<4x8xbf16>
    %cst_115 = arith.constant dense<0.000000e+00> : vector<256x8xf32>
    %126 = tpu.matmul %124, %125, %cst_115 {dimension_numbers = #tpu.dot_dimension_numbers<[1], [0], [0], [1], [0, 0, 1, 1], [], []>} : vector<256x4xbf16>, vector<4x8xbf16>, vector<256x8xf32> -> vector<256x8xf32>
    %127 = vector.broadcast %5 : vector<1x8xf32> to vector<256x8xf32>
    %128 = arith.mulf %126, %127 : vector<256x8xf32>
    %129 = vector.broadcast %6 : vector<1x8xf32> to vector<256x8xf32>
    %130 = arith.addf %128, %129 : vector<256x8xf32>
    %131 = arith.addf %118, %130 : vector<256x8xf32>
    %cst_116 = arith.constant 0.000000e+00 : f32
    %132 = vector.broadcast %cst_116 : f32 to vector<256x8xf32>
    %133 = arith.maximumf %131, %132 : vector<256x8xf32>
    %134 = vector.shape_cast %133 : vector<256x8xf32> to vector<2x8x16x8xf32>
    %c0_117 = arith.constant 0 : index
    %c0_118 = arith.constant 0 : index
    %c0_119 = arith.constant 0 : index
    %c0_120 = arith.constant 0 : index
    %135 = vector.load %arg7[%c0_117, %c0_118, %c0_119, %c0_120] : memref<2x8x16x8xf32, #tpu.memory_space<vmem>>, vector<2x8x16x8xf32>
    tpu.vector_store %arg7[%c0_117, %c0_118, %c0_119, %c0_120], %134 {strides = array<i32>} : memref<2x8x16x8xf32, #tpu.memory_space<vmem>>, vector<2x8x16x8xf32>,
    return
  }
  func.func @transform_0(%arg0: i32, %arg1: i32) -> (i32, i32, i32, i32, i32) {
    %c0_i32 = arith.constant 0 : i32
    %c0_i32_0 = arith.constant 0 : i32
    %c0_i32_1 = arith.constant 0 : i32
    %c0_i32_2 = arith.constant 0 : i32
    %c0_i32_3 = arith.constant 0 : i32
    return %arg0, %c0_i32, %c0_i32_0, %c0_i32_1, %c0_i32_2 : i32, i32, i32, i32, i32
  }
  func.func @transform_1(%arg0: i32, %arg1: i32) -> (i32, i32) {
    %c0_i32 = arith.constant 0 : i32
    %c0_i32_0 = arith.constant 0 : i32
    %c0_i32_1 = arith.constant 0 : i32
    return %c0_i32, %c0_i32_0 : i32, i32
  }
  func.func @transform_2(%arg0: i32, %arg1: i32) -> (i32, i32) {
    %c0_i32 = arith.constant 0 : i32
    %c0_i32_0 = arith.constant 0 : i32
    %c0_i32_1 = arith.constant 0 : i32
    return %c0_i32, %c0_i32_0 : i32, i32
  }
  func.func @transform_3(%arg0: i32, %arg1: i32) -> (i32, i32) {
    %c0_i32 = arith.constant 0 : i32
    %c0_i32_0 = arith.constant 0 : i32
    %c0_i32_1 = arith.constant 0 : i32
    return %c0_i32, %c0_i32_0 : i32, i32
  }
  func.func @transform_4(%arg0: i32, %arg1: i32) -> (i32, i32) {
    %c0_i32 = arith.constant 0 : i32
    %c0_i32_0 = arith.constant 0 : i32
    %c0_i32_1 = arith.constant 0 : i32
    return %c0_i32, %c0_i32_0 : i32, i32
  }
  func.func @transform_5(%arg0: i32, %arg1: i32) -> (i32, i32, i32, i32) {
    %c0_i32 = arith.constant 0 : i32
    %c0_i32_0 = arith.constant 0 : i32
    %c0_i32_1 = arith.constant 0 : i32
    return %arg0, %arg1, %c0_i32, %c0_i32_0 : i32, i32, i32, i32
  }
}

</mosaic_0001>

<llo_original>
// kernel: resnet_block.1
$region0: #{resnet_block.1}
  #allocation0 [shape = 'u32[]', space=smem, size = 0x4, offset = 0x4, fixed_abs, tag = 'smem constant byte address 0x4 - core index']
  #allocation1 [shape = 'u32[144,128]{1,0:T(1,128)}', space=vmem, size = 0x12000, scoped, tag = 'internal scratch']
  #allocation2 [shape = 'bf16[2,10,18,8]{3,2,1,0:T(8,128)(2,1)}', space=vmem, size = 0x1e000, scoped, tag = 'scratch operand']
  %s0 = inlined_call_operand.vmem [shape: bf16[2,1,20,18,4], index: 0, kind: input, shape index: {}]
  %s1 = inlined_call_operand.vmem [shape: bf16[36,8], index: 1, kind: input, shape index: {}]
  %s2 = inlined_call_operand.vmem [shape: bf16[72,8], index: 2, kind: input, shape index: {}]
  %s3 = inlined_call_operand.vmem [shape: bf16[4,8], index: 3, kind: input, shape index: {}]
  %s4 = inlined_call_operand.vmem [shape: f32[8,8], index: 4, kind: input, shape index: {}]
  %s5 = inlined_call_operand.vmem [shape: f32[2,16,16,8], index: 5, kind: output, shape index: {}]
  %s6 = sld [smem:[#allocation0]]
  $region95: #{resnet_block.1} parent=0
    _
  %s8 = ssub.s32 1, %s6
  %s9 = scalar_select 0, %s8, %s6
  $region1: #{resnet_block.1} parent=0
    #allocation3 [shape = 'u8[262144]{0}', space=vmem, size = 0x40000, scoped, tag = 'output window, operand 0']
    loop: start=0, step=1, limit=4
    $region2: #{resnet_block.1} parent=1 // loop_pre_header
      _
    $region3: #{resnet_block.1} parent=1 // loop_header
      %s11 = sphi 0, %s15
      %p12 = scmp.ge.s32.totalorder %s11, 4
      %s18 = sphi 0, %s30
      %s19 = sphi 0, %s26
      %s20 = sphi 0, %s18
      %s21 = sphi 0, %s19
      %s22 = sphi 0, %s20
      %s23 = sphi 0, %s21
      %s33 = sphi 0, %s35
      %s36 = sphi 0, %s33
      %s37 = sphi 0, %s36
      %s53 = sphi 0, %s37
      %s57 = sphi 0, %s57
      %s59 = sphi 0, %s57
      %s60 = sphi 0, %s59
      %s74 = sphi 0, %s60
      %s78 = sphi 0, %s78
      %s80 = sphi 0, %s78
      %s81 = sphi 0, %s80
      %s95 = sphi 0, %s81
      %s99 = sphi 0, %s99
      %s101 = sphi 0, %s99
      %s102 = sphi 0, %s101
      %s116 = sphi 0, %s102
      %s120 = sphi 0, %s120
      %s122 = sphi 0, %s120
      %s123 = sphi 0, %s122
      %s137 = sphi 0, %s123
      %s145 = sphi 0, %s147
      %s148 = sphi 0, %s145
      %s149 = sphi 0, %s148
      %s165 = sphi 0, %s149
    $region4: #{resnet_block.1} parent=1 // loop_header_branch
      %14 = sbr.rel (%p12) target = $region8
    $region5: #{resnet_block.1} parent=1 // loop_body
      %s16 = ssub.s32 %s11, 1
      %s17 = ssub.s32 %s11, 2
      %s24 = sadd.s32 1, %s19
      %p25 = scmp.ge.s32.totalorder %s24, 2
      %s26 = scalar_select %p25, 0, %s24
      %s27 = sadd.s32 1, %s18
      %s28 = scalar_select %p25, %s27, %s18
      %p29 = scmp.ge.s32.totalorder %s28, 1
      %s30 = scalar_select %p29, 0, %s28
      %s31 = ssub.s32 %s18, %s30
      %p32 = scmp.eq.s32.totalorder %s31, 0
      %s34 = sadd.s32 %s33, 1
      %s35 = scalar_select %p32, %s33, %s34
      %p38 = pneg %p32
      %p39 = scmp.eq.s32.totalorder %s11, 1
      %p40 = por %p38, %p39
      %p41 = scmp.ne.s32.totalorder %s33, %s36
      %p42 = scmp.eq.s32.totalorder %s11, 0
      %p43 = por %p41, %p42
      %p44 = scmp.ne.s32.totalorder %s33, %s36
      %p45 = scmp.eq.s32.totalorder %s16, 1
      %p46 = por %p44, %p45
      %p47 = scmp.ne.s32.totalorder %s36, %s37
      %p48 = scmp.eq.s32.totalorder %s16, 0
      %p49 = por %p47, %p48
      %p50 = scmp.ne.s32.totalorder %s36, %s37
      %p51 = scmp.eq.s32.totalorder %s17, 1
      %p52 = por %p50, %p51
      %p54 = scmp.ne.s32.totalorder %s37, %s53
      %p55 = scmp.eq.s32.totalorder %s17, 0
      %p56 = por %p54, %p55
      %s58 = sadd.s32 %s57, 1
      %p61 = scmp.eq.s32.totalorder %s11, 1
      %p62 = scmp.ne.s32.totalorder %s57, %s59
      %p63 = scmp.eq.s32.totalorder %s11, 0
      %p64 = por %p62, %p63
      %p65 = scmp.ne.s32.totalorder %s57, %s59
      %p66 = scmp.eq.s32.totalorder %s16, 1
      %p67 = por %p65, %p66
      %p68 = scmp.ne.s32.totalorder %s59, %s60
      %p69 = scmp.eq.s32.totalorder %s16, 0
      %p70 = por %p68, %p69
      %p71 = scmp.ne.s32.totalorder %s59, %s60
      %p72 = scmp.eq.s32.totalorder %s17, 1
      %p73 = por %p71, %p72
      %p75 = scmp.ne.s32.totalorder %s60, %s74
      %p76 = scmp.eq.s32.totalorder %s17, 0
      %p77 = por %p75, %p76
      %s79 = sadd.s32 %s78, 1
      %p82 = scmp.eq.s32.totalorder %s11, 1
      %p83 = scmp.ne.s32.totalorder %s78, %s80
      %p84 = scmp.eq.s32.totalorder %s11, 0
      %p85 = por %p83, %p84
      %p86 = scmp.ne.s32.totalorder %s78, %s80
      %p87 = scmp.eq.s32.totalorder %s16, 1
      %p88 = por %p86, %p87
      %p89 = scmp.ne.s32.totalorder %s80, %s81
      %p90 = scmp.eq.s32.totalorder %s16, 0
      %p91 = por %p89, %p90
      %p92 = scmp.ne.s32.totalorder %s80, %s81
      %p93 = scmp.eq.s32.totalorder %s17, 1
      %p94 = por %p92, %p93
      %p96 = scmp.ne.s32.totalorder %s81, %s95
      %p97 = scmp.eq.s32.totalorder %s17, 0
      %p98 = por %p96, %p97
      %s100 = sadd.s32 %s99, 1
      %p103 = scmp.eq.s32.totalorder %s11, 1
      %p104 = scmp.ne.s32.totalorder %s99, %s101
      %p105 = scmp.eq.s32.totalorder %s11, 0
      %p106 = por %p104, %p105
      %p107 = scmp.ne.s32.totalorder %s99, %s101
      %p108 = scmp.eq.s32.totalorder %s16, 1
      %p109 = por %p107, %p108
      %p110 = scmp.ne.s32.totalorder %s101, %s102
      %p111 = scmp.eq.s32.totalorder %s16, 0
      %p112 = por %p110, %p111
      %p113 = scmp.ne.s32.totalorder %s101, %s102
      %p114 = scmp.eq.s32.totalorder %s17, 1
      %p115 = por %p113, %p114
      %p117 = scmp.ne.s32.totalorder %s102, %s116
      %p118 = scmp.eq.s32.totalorder %s17, 0
      %p119 = por %p117, %p118
      %s121 = sadd.s32 %s120, 1
      %p124 = scmp.eq.s32.totalorder %s11, 1
      %p125 = scmp.ne.s32.totalorder %s120, %s122
      %p126 = scmp.eq.s32.totalorder %s11, 0
      %p127 = por %p125, %p126
      %p128 = scmp.ne.s32.totalorder %s120, %s122
      %p129 = scmp.eq.s32.totalorder %s16, 1
      %p130 = por %p128, %p129
      %p131 = scmp.ne.s32.totalorder %s122, %s123
      %p132 = scmp.eq.s32.totalorder %s16, 0
      %p133 = por %p131, %p132
      %p134 = scmp.ne.s32.totalorder %s122, %s123
      %p135 = scmp.eq.s32.totalorder %s17, 1
      %p136 = por %p134, %p135
      %p138 = scmp.ne.s32.totalorder %s123, %s137
      %p139 = scmp.eq.s32.totalorder %s17, 0
      %p140 = por %p138, %p139
      %s141 = ssub.s32 %s18, %s30
      %s142 = ssub.s32 %s19, %s26
      %s143 = sor.u32 %s141, %s142
      %p144 = scmp.eq.s32.totalorder %s143, 0
      %s146 = sadd.s32 %s145, 1
      %s147 = scalar_select %p144, %s145, %s146
      %p150 = pneg %p144
      %p151 = scmp.eq.s32.totalorder %s11, 1
      %p152 = por %p150, %p151
      %p153 = scmp.ne.s32.totalorder %s145, %s148
      %p154 = scmp.eq.s32.totalorder %s11, 0
      %p155 = por %p153, %p154
      %p156 = scmp.ne.s32.totalorder %s145, %s148
      %p157 = scmp.eq.s32.totalorder %s16, 1
      %p158 = por %p156, %p157
      %p159 = scmp.ne.s32.totalorder %s148, %s149
      %p160 = scmp.eq.s32.totalorder %s16, 0
      %p161 = por %p159, %p160
      %p162 = scmp.ne.s32.totalorder %s148, %s149
      %p163 = scmp.eq.s32.totalorder %s17, 1
      %p164 = por %p162, %p163
      %p166 = scmp.ne.s32.totalorder %s149, %s165
      %p167 = scmp.eq.s32.totalorder %s17, 0
      %p168 = por %p166, %p167
      %p169 = scmp.le.s32.totalorder 1, %s11
      %p170 = scmp.lt.s32.totalorder %s11, 3
      %p171 = pnand %p169, %p170
      %p172 = pneg %p171
      // Predicated region
      $region9: #{resnet_block.1} parent=5 // pred_check
        _
      $region10: #{resnet_block.1} parent=5 // pred_check_branch
        %174 = sbr.rel (%p171) target = $region12
      $region11: #{resnet_block.1} parent=5 // pred_region
        %s175 = ssub.s32 %s11, 1
        // Predicated region
        $region13: #{resnet_block.1} parent=11 // pred_check
          %p176 = pneg %p49
        $region14: #{resnet_block.1} parent=11 // pred_check_branch
          %178 = sbr.rel (%p176) target = $region16
        $region15: #{resnet_block.1} parent=11 // pred_region
          %s179 = smul.u32 2, %s20
          %p180 = scmp.lt.s32.totalorder %s179, 1
          %s181 = scalar_select %p180, %s179, 1
          %s182 = smul.addr %s181, 60
          %s183 = smul.addr %s182, 4
          %s184 = scalar_lea.vmem %s0, %s183
          %s185 = smul.u32 2, %s20
        $region16: #{resnet_block.1} parent=11 // pred_fallthru
          _
        // Predicated region
        $region17: #{resnet_block.1} parent=11 // pred_check
          %p186 = pneg %p70
        $region18: #{resnet_block.1} parent=11 // pred_check_branch
          %188 = sbr.rel (%p186) target = $region20
        $region19: #{resnet_block.1} parent=11 // pred_region
          _
        $region20: #{resnet_block.1} parent=11 // pred_fallthru
          _
        // Predicated region
        $region21: #{resnet_block.1} parent=11 // pred_check
          %p189 = pneg %p91
        $region22: #{resnet_block.1} parent=11 // pred_check_branch
          %191 = sbr.rel (%p189) target = $region24
        $region23: #{resnet_block.1} parent=11 // pred_region
          _
        $region24: #{resnet_block.1} parent=11 // pred_fallthru
          _
        // Predicated region
        $region25: #{resnet_block.1} parent=11 // pred_check
          %p192 = pneg %p112
        $region26: #{resnet_block.1} parent=11 // pred_check_branch
          %194 = sbr.rel (%p192) target = $region28
        $region27: #{resnet_block.1} parent=11 // pred_region
          _
        $region28: #{resnet_block.1} parent=11 // pred_fallthru
          _
        // Predicated region
        $region29: #{resnet_block.1} parent=11 // pred_check
          %p195 = pneg %p133
        $region30: #{resnet_block.1} parent=11 // pred_check_branch
          %197 = sbr.rel (%p195) target = $region32
        $region31: #{resnet_block.1} parent=11 // pred_region
          _
        $region32: #{resnet_block.1} parent=11 // pred_fallthru
          _
      $region12: #{resnet_block.1} parent=5 // pred_fallthru
        _
      %p198 = scmp.lt.s32.totalorder %s11, 2
      // Predicated region
      $region33: #{resnet_block.1} parent=5 // pred_check
        %p199 = pneg %p198
      $region34: #{resnet_block.1} parent=5 // pred_check_branch
        %201 = sbr.rel (%p199) target = $region36
      $region35: #{resnet_block.1} parent=5 // pred_region
        _
      $region36: #{resnet_block.1} parent=5 // pred_fallthru
        _
      %p202 = scmp.le.s32.totalorder 1, %s11
      %p203 = scmp.lt.s32.totalorder %s11, 3
      %p204 = pnand %p202, %p203
      %p205 = pneg %p204
      // Predicated region
      $region37: #{resnet_block.1} parent=5 // pred_check
        _
      $region38: #{resnet_block.1} parent=5 // pred_check_branch
        %207 = sbr.rel (%p204) target = $region40
      $region39: #{resnet_block.1} parent=5 // pred_region
        %s208 = ssub.s32 %s11, 1
        %s209 = smul.u32 2, %s20
        %p210 = scmp.lt.s32.totalorder %s209, 1
        %s211 = scalar_select %p210, %s209, 1
        %s212 = smul.addr %s211, 60
        %s213 = smul.addr %s212, 4
        %s214 = scalar_lea.vmem %s0, %s213
        %p215 = pneg %p49
        %p216 = pneg %p46
        %p217 = pneg %p70
        %p218 = pneg %p67
        %p219 = pneg %p91
        %p220 = pneg %p88
        %p221 = pneg %p112
        %p222 = pneg %p109
        %p223 = pneg %p133
        %p224 = pneg %p130
        %p225 = pneg %p161
        %p226 = pneg %p158
        %s227 = sand.u32 %s148, 1
        %s228 = sand.u32 %s148, 1
        %s229 = smul.addr %s228, 256
        %s230 = scalar_lea.vmem [#allocation3], %s229
        %s231 = smul.u32 2, %s20
        %p232 = scmp.lt.s32.totalorder %s231, 1
        %s233 = scalar_select %p232, %s231, 1
        %s234 = smul.addr %s233, 60
        %s235 = smul.addr %s234, 4
        %s236 = scalar_lea.vmem %s0, %s235
        %s237 = smul.u32 2, %s20
        %s238 = smul.u32 2, %s20
        %s239 = smul.u32 8, %s21
        %s241 = smul.u32 %s21, 8
        %v242 = vld [vmem:[%s4] sm:$0x1]
        %v243 = vld [vmem:[%s4 + $0x1] sm:$0x1]
        %v244 = vld [vmem:[%s4 + $0x2] sm:$0x1]
        %v245 = vld [vmem:[%s4 + $0x3] sm:$0x1]
        %v246 = vld [vmem:[%s4 + $0x4] sm:$0x1]
        %v247 = vld [vmem:[%s4 + $0x5] sm:$0x1]
        %s248 = smul.u32 %s241, 3
        %s249 = smul.addr %s248, 4
        %s250 = scalar_lea.vmem %s236, %s249
        %v251 = vld [vmem:[%s250] sm:$0xf]
        %v252 = vld [vmem:[%s250 + $0x4] sm:$0xf]
        %v253 = vld [vmem:[%s250 + $0xc] sm:$0xf]
        %v254 = vld [vmem:[%s250 + $0x10] sm:$0xf]
        %v255 = vld [vmem:[%s250 + $0x18] sm:$0xf]
        %v256 = vld [vmem:[%s250 + $0x1c] sm:$0xf]
        %v257 = vld [vmem:[%s250 + $0x24] sm:$0xf]
        %v258 = vld [vmem:[%s250 + $0x28] sm:$0xf]
        %v259 = vld [vmem:[%s250 + $0x30] sm:$0xf]
        %v260 = vld [vmem:[%s250 + $0x34] sm:$0xf]
        %v261 = vld [vmem:[%s250 + $0x3c] sm:$0xf]
        %v262 = vld [vmem:[%s250 + $0x40] sm:$0xf]
        %v263 = vld [vmem:[%s250 + $0x48] sm:$0xf]
        %v264 = vld [vmem:[%s250 + $0x4c] sm:$0xf]
        %v265 = vld [vmem:[%s250 + $0x54] sm:$0xf]
        %v266 = vld [vmem:[%s250 + $0x58] sm:$0xf]
        %v267 = vld [vmem:[%s250 + $0x60] sm:$0xf]
        %v268 = vld [vmem:[%s250 + $0x64] sm:$0xf]
        %v269 = vld [vmem:[%s250 + $0x6c] sm:$0xf]
        %v270 = vld [vmem:[%s250 + $0x70] sm:$0xf]
        %v271 = vld [vmem:[%s250 + $0xf0] sm:$0xf]
        %v272 = vld [vmem:[%s250 + $0xf4] sm:$0xf]
        %v273 = vld [vmem:[%s250 + $0xfc] sm:$0xf]
        %v274 = vld [vmem:[%s250 + $0x100] sm:$0xf]
        %v275 = vld [vmem:[%s250 + $0x108] sm:$0xf]
        %v276 = vld [vmem:[%s250 + $0x10c] sm:$0xf]
        %v277 = vld [vmem:[%s250 + $0x114] sm:$0xf]
        %v278 = vld [vmem:[%s250 + $0x118] sm:$0xf]
        %v279 = vld [vmem:[%s250 + $0x120] sm:$0xf]
        %v280 = vld [vmem:[%s250 + $0x124] sm:$0xf]
        %v281 = vld [vmem:[%s250 + $0x12c] sm:$0xf]
        %v282 = vld [vmem:[%s250 + $0x130] sm:$0xf]
        %v283 = vld [vmem:[%s250 + $0x138] sm:$0xf]
        %v284 = vld [vmem:[%s250 + $0x13c] sm:$0xf]
        %v285 = vld [vmem:[%s250 + $0x144] sm:$0xf]
        %v286 = vld [vmem:[%s250 + $0x148] sm:$0xf]
        %v287 = vld [vmem:[%s250 + $0x150] sm:$0xf]
        %v288 = vld [vmem:[%s250 + $0x154] sm:$0xf]
        %v289 = vld [vmem:[%s250 + $0x15c] sm:$0xf]
        %v290 = vld [vmem:[%s250 + $0x160] sm:$0xf]
        %v291 = vunpack.c.l.bf16 %v251
        %v292 = vunpack.c.l.bf16 %v252
        %v293 = vunpack.c.l.bf16 %v253
        %v294 = vunpack.c.l.bf16 %v254
        %v295 = vunpack.c.l.bf16 %v255
        %v296 = vunpack.c.l.bf16 %v256
        %v297 = vunpack.c.l.bf16 %v257
        %v298 = vunpack.c.l.bf16 %v258
        %v299 = vunpack.c.l.bf16 %v259
        %v300 = vunpack.c.l.bf16 %v260
        %v301 = vunpack.c.l.bf16 %v261
        %v302 = vunpack.c.l.bf16 %v262
        %v303 = vunpack.c.l.bf16 %v263
        %v304 = vunpack.c.l.bf16 %v264
        %v305 = vunpack.c.l.bf16 %v265
        %v306 = vunpack.c.l.bf16 %v266
        %v307 = vunpack.c.l.bf16 %v267
        %v308 = vunpack.c.l.bf16 %v268
        %v309 = vunpack.c.l.bf16 %v269
        %v310 = vunpack.c.l.bf16 %v270
        %v311 = vunpack.c.l.bf16 %v271
        %v312 = vunpack.c.l.bf16 %v272
        %v313 = vunpack.c.l.bf16 %v273
        %v314 = vunpack.c.l.bf16 %v274
        %v315 = vunpack.c.l.bf16 %v275
        %v316 = vunpack.c.l.bf16 %v276
        %v317 = vunpack.c.l.bf16 %v277
        %v318 = vunpack.c.l.bf16 %v278
        %v319 = vunpack.c.l.bf16 %v279
        %v320 = vunpack.c.l.bf16 %v280
        %v321 = vunpack.c.l.bf16 %v281
        %v322 = vunpack.c.l.bf16 %v282
        %v323 = vunpack.c.l.bf16 %v283
        %v324 = vunpack.c.l.bf16 %v284
        %v325 = vunpack.c.l.bf16 %v285
        %v326 = vunpack.c.l.bf16 %v286
        %v327 = vunpack.c.l.bf16 %v287
        %v328 = vunpack.c.l.bf16 %v288
        %v329 = vunpack.c.l.bf16 %v289
        %v330 = vunpack.c.l.bf16 %v290
        %v331 = vld [vmem:[%s250 + $0x8] sm:$0x1]
        %v332 = vld [vmem:[%s250 + $0x14] sm:$0x1]
        %v333 = vld [vmem:[%s250 + $0x20] sm:$0x1]
        %v334 = vld [vmem:[%s250 + $0x2c] sm:$0x1]
        %v335 = vld [vmem:[%s250 + $0x38] sm:$0x1]
        %v336 = vld [vmem:[%s250 + $0x44] sm:$0x1]
        %v337 = vld [vmem:[%s250 + $0x50] sm:$0x1]
        %v338 = vld [vmem:[%s250 + $0x5c] sm:$0x1]
        %v339 = vld [vmem:[%s250 + $0x68] sm:$0x1]
        %v340 = vld [vmem:[%s250 + $0x74] sm:$0x1]
        %v341 = vld [vmem:[%s250 + $0xf8] sm:$0x1]
        %v342 = vld [vmem:[%s250 + $0x104] sm:$0x1]
        %v343 = vld [vmem:[%s250 + $0x110] sm:$0x1]
        %v344 = vld [vmem:[%s250 + $0x11c] sm:$0x1]
        %v345 = vld [vmem:[%s250 + $0x128] sm:$0x1]
        %v346 = vld [vmem:[%s250 + $0x134] sm:$0x1]
        %v347 = vld [vmem:[%s250 + $0x140] sm:$0x1]
        %v348 = vld [vmem:[%s250 + $0x14c] sm:$0x1]
        %v349 = vld [vmem:[%s250 + $0x158] sm:$0x1]
        %v350 = vld [vmem:[%s250 + $0x164] sm:$0x1]
        %v351 = vunpack.c.l.bf16 %v331
        %v352 = vunpack.c.l.bf16 %v332
        %v353 = vunpack.c.l.bf16 %v333
        %v354 = vunpack.c.l.bf16 %v334
        %v355 = vunpack.c.l.bf16 %v335
        %v356 = vunpack.c.l.bf16 %v336
        %v357 = vunpack.c.l.bf16 %v337
        %v358 = vunpack.c.l.bf16 %v338
        %v359 = vunpack.c.l.bf16 %v339
        %v360 = vunpack.c.l.bf16 %v340
        %v361 = vunpack.c.l.bf16 %v341
        %v362 = vunpack.c.l.bf16 %v342
        %v363 = vunpack.c.l.bf16 %v343
        %v364 = vunpack.c.l.bf16 %v344
        %v365 = vunpack.c.l.bf16 %v345
        %v366 = vunpack.c.l.bf16 %v346
        %v367 = vunpack.c.l.bf16 %v347
        %v368 = vunpack.c.l.bf16 %v348
        %v369 = vunpack.c.l.bf16 %v349
        %v370 = vunpack.c.l.bf16 %v350
        %vm431 = vcmask 1046528
        %v432 = vrot.slane %v291, 1
        %v433 = vrot.slane %v292, 1
        %v434 = vsel %vm431, %v432, %v433
        %v435 = vrot.slane %v351, 1
        %v436 = vsel %vm431, %v433, %v435
        %v437 = vrot.slane %v293, 1
        %v438 = vrot.slane %v294, 1
        %v439 = vsel %vm431, %v437, %v438
        %v440 = vrot.slane %v352, 1
        %v441 = vsel %vm431, %v438, %v440
        %v442 = vrot.slane %v295, 1
        %v443 = vrot.slane %v296, 1
        %v444 = vsel %vm431, %v442, %v443
        %v445 = vrot.slane %v353, 1
        %v446 = vsel %vm431, %v443, %v445
        %v447 = vrot.slane %v297, 1
        %v448 = vrot.slane %v298, 1
        %v449 = vsel %vm431, %v447, %v448
        %v450 = vrot.slane %v354, 1
        %v451 = vsel %vm431, %v448, %v450
        %v452 = vrot.slane %v299, 1
        %v453 = vrot.slane %v300, 1
        %v454 = vsel %vm431, %v452, %v453
        %v455 = vrot.slane %v355, 1
        %v456 = vsel %vm431, %v453, %v455
        %v457 = vrot.slane %v301, 1
        %v458 = vrot.slane %v302, 1
        %v459 = vsel %vm431, %v457, %v458
        %v460 = vrot.slane %v356, 1
        %v461 = vsel %vm431, %v458, %v460
        %v462 = vrot.slane %v303, 1
        %v463 = vrot.slane %v304, 1
        %v464 = vsel %vm431, %v462, %v463
        %v465 = vrot.slane %v357, 1
        %v466 = vsel %vm431, %v463, %v465
        %v467 = vrot.slane %v305, 1
        %v468 = vrot.slane %v306, 1
        %v469 = vsel %vm431, %v467, %v468
        %v470 = vrot.slane %v358, 1
        %v471 = vsel %vm431, %v468, %v470
        %v472 = vrot.slane %v307, 1
        %v473 = vrot.slane %v308, 1
        %v474 = vsel %vm431, %v472, %v473
        %v475 = vrot.slane %v359, 1
        %v476 = vsel %vm431, %v473, %v475
        %v477 = vrot.slane %v309, 1
        %v478 = vrot.slane %v310, 1
        %v479 = vsel %vm431, %v477, %v478
        %v480 = vrot.slane %v360, 1
        %v481 = vsel %vm431, %v478, %v480
        %v482 = vrot.slane %v311, 1
        %v483 = vrot.slane %v312, 1
        %v484 = vsel %vm431, %v482, %v483
        %v485 = vrot.slane %v361, 1
        %v486 = vsel %vm431, %v483, %v485
        %v487 = vrot.slane %v313, 1
        %v488 = vrot.slane %v314, 1
        %v489 = vsel %vm431, %v487, %v488
        %v490 = vrot.slane %v362, 1
        %v491 = vsel %vm431, %v488, %v490
        %v492 = vrot.slane %v315, 1
        %v493 = vrot.slane %v316, 1
        %v494 = vsel %vm431, %v492, %v493
        %v495 = vrot.slane %v363, 1
        %v496 = vsel %vm431, %v493, %v495
        %v497 = vrot.slane %v317, 1
        %v498 = vrot.slane %v318, 1
        %v499 = vsel %vm431, %v497, %v498
        %v500 = vrot.slane %v364, 1
        %v501 = vsel %vm431, %v498, %v500
        %v502 = vrot.slane %v319, 1
        %v503 = vrot.slane %v320, 1
        %v504 = vsel %vm431, %v502, %v503
        %v505 = vrot.slane %v365, 1
        %v506 = vsel %vm431, %v503, %v505
        %v507 = vrot.slane %v321, 1
        %v508 = vrot.slane %v322, 1
        %v509 = vsel %vm431, %v507, %v508
        %v510 = vrot.slane %v366, 1
        %v511 = vsel %vm431, %v508, %v510
        %v512 = vrot.slane %v323, 1
        %v513 = vrot.slane %v324, 1
        %v514 = vsel %vm431, %v512, %v513
        %v515 = vrot.slane %v367, 1
        %v516 = vsel %vm431, %v513, %v515
        %v517 = vrot.slane %v325, 1
        %v518 = vrot.slane %v326, 1
        %v519 = vsel %vm431, %v517, %v518
        %v520 = vrot.slane %v368, 1
        %v521 = vsel %vm431, %v518, %v520
        %v522 = vrot.slane %v327, 1
        %v523 = vrot.slane %v328, 1
        %v524 = vsel %vm431, %v522, %v523
        %v525 = vrot.slane %v369, 1
        %v526 = vsel %vm431, %v523, %v525
        %v527 = vrot.slane %v329, 1
        %v528 = vrot.slane %v330, 1
        %v529 = vsel %vm431, %v527, %v528
        %v530 = vrot.slane %v370, 1
        %v531 = vsel %vm431, %v528, %v530
        %v532 = vld [vmem:[%s250] sm:$0xe]
        %v533 = vld [vmem:[%s250 + $0xc] sm:$0xe]
        %v534 = vld [vmem:[%s250 + $0x18] sm:$0xe]
        %v535 = vld [vmem:[%s250 + $0x24] sm:$0xe]
        %v536 = vld [vmem:[%s250 + $0x30] sm:$0xe]
        %v537 = vld [vmem:[%s250 + $0x3c] sm:$0xe]
        %v538 = vld [vmem:[%s250 + $0x48] sm:$0xe]
        %v539 = vld [vmem:[%s250 + $0x54] sm:$0xe]
        %v540 = vld [vmem:[%s250 + $0x60] sm:$0xe]
        %v541 = vld [vmem:[%s250 + $0x6c] sm:$0xe]
        %v542 = vld [vmem:[%s250 + $0xf0] sm:$0xe]
        %v543 = vld [vmem:[%s250 + $0xfc] sm:$0xe]
        %v544 = vld [vmem:[%s250 + $0x108] sm:$0xe]
        %v545 = vld [vmem:[%s250 + $0x114] sm:$0xe]
        %v546 = vld [vmem:[%s250 + $0x120] sm:$0xe]
        %v547 = vld [vmem:[%s250 + $0x12c] sm:$0xe]
        %v548 = vld [vmem:[%s250 + $0x138] sm:$0xe]
        %v549 = vld [vmem:[%s250 + $0x144] sm:$0xe]
        %v550 = vld [vmem:[%s250 + $0x150] sm:$0xe]
        %v551 = vld [vmem:[%s250 + $0x15c] sm:$0xe]
        %v552 = vunpack.c.l.bf16 %v532
        %v553 = vunpack.c.l.bf16 %v533
        %v554 = vunpack.c.l.bf16 %v534
        %v555 = vunpack.c.l.bf16 %v535
        %v556 = vunpack.c.l.bf16 %v536
        %v557 = vunpack.c.l.bf16 %v537
        %v558 = vunpack.c.l.bf16 %v538
        %v559 = vunpack.c.l.bf16 %v539
        %v560 = vunpack.c.l.bf16 %v540
        %v561 = vunpack.c.l.bf16 %v541
        %v562 = vunpack.c.l.bf16 %v542
        %v563 = vunpack.c.l.bf16 %v543
        %v564 = vunpack.c.l.bf16 %v544
        %v565 = vunpack.c.l.bf16 %v545
        %v566 = vunpack.c.l.bf16 %v546
        %v567 = vunpack.c.l.bf16 %v547
        %v568 = vunpack.c.l.bf16 %v548
        %v569 = vunpack.c.l.bf16 %v549
        %v570 = vunpack.c.l.bf16 %v550
        %v571 = vunpack.c.l.bf16 %v551
        %vm592 = vcmask 1045504
        %v593 = vrot.slane %v552, 2
        %v594 = vrot.slane %v292, 2
        %v595 = vsel %vm592, %v593, %v594
        %v596 = vrot.slane %v351, 2
        %v597 = vsel %vm592, %v594, %v596
        %v598 = vrot.slane %v553, 2
        %v599 = vrot.slane %v294, 2
        %v600 = vsel %vm592, %v598, %v599
        %v601 = vrot.slane %v352, 2
        %v602 = vsel %vm592, %v599, %v601
        %v603 = vrot.slane %v554, 2
        %v604 = vrot.slane %v296, 2
        %v605 = vsel %vm592, %v603, %v604
        %v606 = vrot.slane %v353, 2
        %v607 = vsel %vm592, %v604, %v606
        %v608 = vrot.slane %v555, 2
        %v609 = vrot.slane %v298, 2
        %v610 = vsel %vm592, %v608, %v609
        %v611 = vrot.slane %v354, 2
        %v612 = vsel %vm592, %v609, %v611
        %v613 = vrot.slane %v556, 2
        %v614 = vrot.slane %v300, 2
        %v615 = vsel %vm592, %v613, %v614
        %v616 = vrot.slane %v355, 2
        %v617 = vsel %vm592, %v614, %v616
        %v618 = vrot.slane %v557, 2
        %v619 = vrot.slane %v302, 2
        %v620 = vsel %vm592, %v618, %v619
        %v621 = vrot.slane %v356, 2
        %v622 = vsel %vm592, %v619, %v621
        %v623 = vrot.slane %v558, 2
        %v624 = vrot.slane %v304, 2
        %v625 = vsel %vm592, %v623, %v624
        %v626 = vrot.slane %v357, 2
        %v627 = vsel %vm592, %v624, %v626
        %v628 = vrot.slane %v559, 2
        %v629 = vrot.slane %v306, 2
        %v630 = vsel %vm592, %v628, %v629
        %v631 = vrot.slane %v358, 2
        %v632 = vsel %vm592, %v629, %v631
        %v633 = vrot.slane %v560, 2
        %v634 = vrot.slane %v308, 2
        %v635 = vsel %vm592, %v633, %v634
        %v636 = vrot.slane %v359, 2
        %v637 = vsel %vm592, %v634, %v636
        %v638 = vrot.slane %v561, 2
        %v639 = vrot.slane %v310, 2
        %v640 = vsel %vm592, %v638, %v639
        %v641 = vrot.slane %v360, 2
        %v642 = vsel %vm592, %v639, %v641
        %v643 = vrot.slane %v562, 2
        %v644 = vrot.slane %v312, 2
        %v645 = vsel %vm592, %v643, %v644
        %v646 = vrot.slane %v361, 2
        %v647 = vsel %vm592, %v644, %v646
        %v648 = vrot.slane %v563, 2
        %v649 = vrot.slane %v314, 2
        %v650 = vsel %vm592, %v648, %v649
        %v651 = vrot.slane %v362, 2
        %v652 = vsel %vm592, %v649, %v651
        %v653 = vrot.slane %v564, 2
        %v654 = vrot.slane %v316, 2
        %v655 = vsel %vm592, %v653, %v654
        %v656 = vrot.slane %v363, 2
        %v657 = vsel %vm592, %v654, %v656
        %v658 = vrot.slane %v565, 2
        %v659 = vrot.slane %v318, 2
        %v660 = vsel %vm592, %v658, %v659
        %v661 = vrot.slane %v364, 2
        %v662 = vsel %vm592, %v659, %v661
        %v663 = vrot.slane %v566, 2
        %v664 = vrot.slane %v320, 2
        %v665 = vsel %vm592, %v663, %v664
        %v666 = vrot.slane %v365, 2
        %v667 = vsel %vm592, %v664, %v666
        %v668 = vrot.slane %v567, 2
        %v669 = vrot.slane %v322, 2
        %v670 = vsel %vm592, %v668, %v669
        %v671 = vrot.slane %v366, 2
        %v672 = vsel %vm592, %v669, %v671
        %v673 = vrot.slane %v568, 2
        %v674 = vrot.slane %v324, 2
        %v675 = vsel %vm592, %v673, %v674
        %v676 = vrot.slane %v367, 2
        %v677 = vsel %vm592, %v674, %v676
        %v678 = vrot.slane %v569, 2
        %v679 = vrot.slane %v326, 2
        %v680 = vsel %vm592, %v678, %v679
        %v681 = vrot.slane %v368, 2
        %v682 = vsel %vm592, %v679, %v681
        %v683 = vrot.slane %v570, 2
        %v684 = vrot.slane %v328, 2
        %v685 = vsel %vm592, %v683, %v684
        %v686 = vrot.slane %v369, 2
        %v687 = vsel %vm592, %v684, %v686
        %v688 = vrot.slane %v571, 2
        %v689 = vrot.slane %v330, 2
        %v690 = vsel %vm592, %v688, %v689
        %v691 = vrot.slane %v370, 2
        %v692 = vsel %vm592, %v689, %v691
        %s693 = sadd.s32 %s241, 1
        %s694 = smul.u32 %s693, 3
        %s695 = smul.addr %s694, 4
        %s696 = scalar_lea.vmem %s236, %s695
        %v697 = vld [vmem:[%s696] sm:$0xf]
        %v698 = vld [vmem:[%s696 + $0x4] sm:$0xf]
        %v699 = vld [vmem:[%s696 + $0xc] sm:$0xf]
        %v700 = vld [vmem:[%s696 + $0x10] sm:$0xf]
        %v701 = vld [vmem:[%s696 + $0x18] sm:$0xf]
        %v702 = vld [vmem:[%s696 + $0x1c] sm:$0xf]
        %v703 = vld [vmem:[%s696 + $0x24] sm:$0xf]
        %v704 = vld [vmem:[%s696 + $0x28] sm:$0xf]
        %v705 = vld [vmem:[%s696 + $0x30] sm:$0xf]
        %v706 = vld [vmem:[%s696 + $0x34] sm:$0xf]
        %v707 = vld [vmem:[%s696 + $0x3c] sm:$0xf]
        %v708 = vld [vmem:[%s696 + $0x40] sm:$0xf]
        %v709 = vld [vmem:[%s696 + $0x48] sm:$0xf]
        %v710 = vld [vmem:[%s696 + $0x4c] sm:$0xf]
        %v711 = vld [vmem:[%s696 + $0x54] sm:$0xf]
        %v712 = vld [vmem:[%s696 + $0x58] sm:$0xf]
        %v713 = vld [vmem:[%s696 + $0x60] sm:$0xf]
        %v714 = vld [vmem:[%s696 + $0x64] sm:$0xf]
        %v715 = vld [vmem:[%s696 + $0x6c] sm:$0xf]
        %v716 = vld [vmem:[%s696 + $0x70] sm:$0xf]
        %v717 = vld [vmem:[%s696 + $0xf0] sm:$0xf]
        %v718 = vld [vmem:[%s696 + $0xf4] sm:$0xf]
        %v719 = vld [vmem:[%s696 + $0xfc] sm:$0xf]
        %v720 = vld [vmem:[%s696 + $0x100] sm:$0xf]
        %v721 = vld [vmem:[%s696 + $0x108] sm:$0xf]
        %v722 = vld [vmem:[%s696 + $0x10c] sm:$0xf]
        %v723 = vld [vmem:[%s696 + $0x114] sm:$0xf]
        %v724 = vld [vmem:[%s696 + $0x118] sm:$0xf]
        %v725 = vld [vmem:[%s696 + $0x120] sm:$0xf]
        %v726 = vld [vmem:[%s696 + $0x124] sm:$0xf]
        %v727 = vld [vmem:[%s696 + $0x12c] sm:$0xf]
        %v728 = vld [vmem:[%s696 + $0x130] sm:$0xf]
        %v729 = vld [vmem:[%s696 + $0x138] sm:$0xf]
        %v730 = vld [vmem:[%s696 + $0x13c] sm:$0xf]
        %v731 = vld [vmem:[%s696 + $0x144] sm:$0xf]
        %v732 = vld [vmem:[%s696 + $0x148] sm:$0xf]
        %v733 = vld [vmem:[%s696 + $0x150] sm:$0xf]
        %v734 = vld [vmem:[%s696 + $0x154] sm:$0xf]
        %v735 = vld [vmem:[%s696 + $0x15c] sm:$0xf]
        %v736 = vld [vmem:[%s696 + $0x160] sm:$0xf]
        %v737 = vunpack.c.l.bf16 %v697
        %v738 = vunpack.c.l.bf16 %v698
        %v739 = vunpack.c.l.bf16 %v699
        %v740 = vunpack.c.l.bf16 %v700
        %v741 = vunpack.c.l.bf16 %v701
        %v742 = vunpack.c.l.bf16 %v702
        %v743 = vunpack.c.l.bf16 %v703
        %v744 = vunpack.c.l.bf16 %v704
        %v745 = vunpack.c.l.bf16 %v705
        %v746 = vunpack.c.l.bf16 %v706
        %v747 = vunpack.c.l.bf16 %v707
        %v748 = vunpack.c.l.bf16 %v708
        %v749 = vunpack.c.l.bf16 %v709
        %v750 = vunpack.c.l.bf16 %v710
        %v751 = vunpack.c.l.bf16 %v711
        %v752 = vunpack.c.l.bf16 %v712
        %v753 = vunpack.c.l.bf16 %v713
        %v754 = vunpack.c.l.bf16 %v714
        %v755 = vunpack.c.l.bf16 %v715
        %v756 = vunpack.c.l.bf16 %v716
        %v757 = vunpack.c.l.bf16 %v717
        %v758 = vunpack.c.l.bf16 %v718
        %v759 = vunpack.c.l.bf16 %v719
        %v760 = vunpack.c.l.bf16 %v720
        %v761 = vunpack.c.l.bf16 %v721
        %v762 = vunpack.c.l.bf16 %v722
        %v763 = vunpack.c.l.bf16 %v723
        %v764 = vunpack.c.l.bf16 %v724
        %v765 = vunpack.c.l.bf16 %v725
        %v766 = vunpack.c.l.bf16 %v726
        %v767 = vunpack.c.l.bf16 %v727
        %v768 = vunpack.c.l.bf16 %v728
        %v769 = vunpack.c.l.bf16 %v729
        %v770 = vunpack.c.l.bf16 %v730
        %v771 = vunpack.c.l.bf16 %v731
        %v772 = vunpack.c.l.bf16 %v732
        %v773 = vunpack.c.l.bf16 %v733
        %v774 = vunpack.c.l.bf16 %v734
        %v775 = vunpack.c.l.bf16 %v735
        %v776 = vunpack.c.l.bf16 %v736
        %v777 = vld [vmem:[%s696 + $0x8] sm:$0x1]
        %v778 = vld [vmem:[%s696 + $0x14] sm:$0x1]
        %v779 = vld [vmem:[%s696 + $0x20] sm:$0x1]
        %v780 = vld [vmem:[%s696 + $0x2c] sm:$0x1]
        %v781 = vld [vmem:[%s696 + $0x38] sm:$0x1]
        %v782 = vld [vmem:[%s696 + $0x44] sm:$0x1]
        %v783 = vld [vmem:[%s696 + $0x50] sm:$0x1]
        %v784 = vld [vmem:[%s696 + $0x5c] sm:$0x1]
        %v785 = vld [vmem:[%s696 + $0x68] sm:$0x1]
        %v786 = vld [vmem:[%s696 + $0x74] sm:$0x1]
        %v787 = vld [vmem:[%s696 + $0xf8] sm:$0x1]
        %v788 = vld [vmem:[%s696 + $0x104] sm:$0x1]
        %v789 = vld [vmem:[%s696 + $0x110] sm:$0x1]
        %v790 = vld [vmem:[%s696 + $0x11c] sm:$0x1]
        %v791 = vld [vmem:[%s696 + $0x128] sm:$0x1]
        %v792 = vld [vmem:[%s696 + $0x134] sm:$0x1]
        %v793 = vld [vmem:[%s696 + $0x140] sm:$0x1]
        %v794 = vld [vmem:[%s696 + $0x14c] sm:$0x1]
        %v795 = vld [vmem:[%s696 + $0x158] sm:$0x1]
        %v796 = vld [vmem:[%s696 + $0x164] sm:$0x1]
        %v797 = vunpack.c.l.bf16 %v777
        %v798 = vunpack.c.l.bf16 %v778
        %v799 = vunpack.c.l.bf16 %v779
        %v800 = vunpack.c.l.bf16 %v780
        %v801 = vunpack.c.l.bf16 %v781
        %v802 = vunpack.c.l.bf16 %v782
        %v803 = vunpack.c.l.bf16 %v783
        %v804 = vunpack.c.l.bf16 %v784
        %v805 = vunpack.c.l.bf16 %v785
        %v806 = vunpack.c.l.bf16 %v786
        %v807 = vunpack.c.l.bf16 %v787
        %v808 = vunpack.c.l.bf16 %v788
        %v809 = vunpack.c.l.bf16 %v789
        %v810 = vunpack.c.l.bf16 %v790
        %v811 = vunpack.c.l.bf16 %v791
        %v812 = vunpack.c.l.bf16 %v792
        %v813 = vunpack.c.l.bf16 %v793
        %v814 = vunpack.c.l.bf16 %v794
        %v815 = vunpack.c.l.bf16 %v795
        %v816 = vunpack.c.l.bf16 %v796
        %v877 = vrot.slane %v737, 1
        %v878 = vrot.slane %v738, 1
        %v879 = vsel %vm431, %v877, %v878
        %v880 = vrot.slane %v797, 1
        %v881 = vsel %vm431, %v878, %v880
        %v882 = vrot.slane %v739, 1
        %v883 = vrot.slane %v740, 1
        %v884 = vsel %vm431, %v882, %v883
        %v885 = vrot.slane %v798, 1
        %v886 = vsel %vm431, %v883, %v885
        %v887 = vrot.slane %v741, 1
        %v888 = vrot.slane %v742, 1
        %v889 = vsel %vm431, %v887, %v888
        %v890 = vrot.slane %v799, 1
        %v891 = vsel %vm431, %v888, %v890
        %v892 = vrot.slane %v743, 1
        %v893 = vrot.slane %v744, 1
        %v894 = vsel %vm431, %v892, %v893
        %v895 = vrot.slane %v800, 1
        %v896 = vsel %vm431, %v893, %v895
        %v897 = vrot.slane %v745, 1
        %v898 = vrot.slane %v746, 1
        %v899 = vsel %vm431, %v897, %v898
        %v900 = vrot.slane %v801, 1
        %v901 = vsel %vm431, %v898, %v900
        %v902 = vrot.slane %v747, 1
        %v903 = vrot.slane %v748, 1
        %v904 = vsel %vm431, %v902, %v903
        %v905 = vrot.slane %v802, 1
        %v906 = vsel %vm431, %v903, %v905
        %v907 = vrot.slane %v749, 1
        %v908 = vrot.slane %v750, 1
        %v909 = vsel %vm431, %v907, %v908
        %v910 = vrot.slane %v803, 1
        %v911 = vsel %vm431, %v908, %v910
        %v912 = vrot.slane %v751, 1
        %v913 = vrot.slane %v752, 1
        %v914 = vsel %vm431, %v912, %v913
        %v915 = vrot.slane %v804, 1
        %v916 = vsel %vm431, %v913, %v915
        %v917 = vrot.slane %v753, 1
        %v918 = vrot.slane %v754, 1
        %v919 = vsel %vm431, %v917, %v918
        %v920 = vrot.slane %v805, 1
        %v921 = vsel %vm431, %v918, %v920
        %v922 = vrot.slane %v755, 1
        %v923 = vrot.slane %v756, 1
        %v924 = vsel %vm431, %v922, %v923
        %v925 = vrot.slane %v806, 1
        %v926 = vsel %vm431, %v923, %v925
        %v927 = vrot.slane %v757, 1
        %v928 = vrot.slane %v758, 1
        %v929 = vsel %vm431, %v927, %v928
        %v930 = vrot.slane %v807, 1
        %v931 = vsel %vm431, %v928, %v930
        %v932 = vrot.slane %v759, 1
        %v933 = vrot.slane %v760, 1
        %v934 = vsel %vm431, %v932, %v933
        %v935 = vrot.slane %v808, 1
        %v936 = vsel %vm431, %v933, %v935
        %v937 = vrot.slane %v761, 1
        %v938 = vrot.slane %v762, 1
        %v939 = vsel %vm431, %v937, %v938
        %v940 = vrot.slane %v809, 1
        %v941 = vsel %vm431, %v938, %v940
        %v942 = vrot.slane %v763, 1
        %v943 = vrot.slane %v764, 1
        %v944 = vsel %vm431, %v942, %v943
        %v945 = vrot.slane %v810, 1
        %v946 = vsel %vm431, %v943, %v945
        %v947 = vrot.slane %v765, 1
        %v948 = vrot.slane %v766, 1
        %v949 = vsel %vm431, %v947, %v948
        %v950 = vrot.slane %v811, 1
        %v951 = vsel %vm431, %v948, %v950
        %v952 = vrot.slane %v767, 1
        %v953 = vrot.slane %v768, 1
        %v954 = vsel %vm431, %v952, %v953
        %v955 = vrot.slane %v812, 1
        %v956 = vsel %vm431, %v953, %v955
        %v957 = vrot.slane %v769, 1
        %v958 = vrot.slane %v770, 1
        %v959 = vsel %vm431, %v957, %v958
        %v960 = vrot.slane %v813, 1
        %v961 = vsel %vm431, %v958, %v960
        %v962 = vrot.slane %v771, 1
        %v963 = vrot.slane %v772, 1
        %v964 = vsel %vm431, %v962, %v963
        %v965 = vrot.slane %v814, 1
        %v966 = vsel %vm431, %v963, %v965
        %v967 = vrot.slane %v773, 1
        %v968 = vrot.slane %v774, 1
        %v969 = vsel %vm431, %v967, %v968
        %v970 = vrot.slane %v815, 1
        %v971 = vsel %vm431, %v968, %v970
        %v972 = vrot.slane %v775, 1
        %v973 = vrot.slane %v776, 1
        %v974 = vsel %vm431, %v972, %v973
        %v975 = vrot.slane %v816, 1
        %v976 = vsel %vm431, %v973, %v975
        %v977 = vld [vmem:[%s696] sm:$0xe]
        %v978 = vld [vmem:[%s696 + $0xc] sm:$0xe]
        %v979 = vld [vmem:[%s696 + $0x18] sm:$0xe]
        %v980 = vld [vmem:[%s696 + $0x24] sm:$0xe]
        %v981 = vld [vmem:[%s696 + $0x30] sm:$0xe]
        %v982 = vld [vmem:[%s696 + $0x3c] sm:$0xe]
        %v983 = vld [vmem:[%s696 + $0x48] sm:$0xe]
        %v984 = vld [vmem:[%s696 + $0x54] sm:$0xe]
        %v985 = vld [vmem:[%s696 + $0x60] sm:$0xe]
        %v986 = vld [vmem:[%s696 + $0x6c] sm:$0xe]
        %v987 = vld [vmem:[%s696 + $0xf0] sm:$0xe]
        %v988 = vld [vmem:[%s696 + $0xfc] sm:$0xe]
        %v989 = vld [vmem:[%s696 + $0x108] sm:$0xe]
        %v990 = vld [vmem:[%s696 + $0x114] sm:$0xe]
        %v991 = vld [vmem:[%s696 + $0x120] sm:$0xe]
        %v992 = vld [vmem:[%s696 + $0x12c] sm:$0xe]
        %v993 = vld [vmem:[%s696 + $0x138] sm:$0xe]
        %v994 = vld [vmem:[%s696 + $0x144] sm:$0xe]
        %v995 = vld [vmem:[%s696 + $0x150] sm:$0xe]
        %v996 = vld [vmem:[%s696 + $0x15c] sm:$0xe]
        %v997 = vunpack.c.l.bf16 %v977
        %v998 = vunpack.c.l.bf16 %v978
        %v999 = vunpack.c.l.bf16 %v979
        %v1000 = vunpack.c.l.bf16 %v980
        %v1001 = vunpack.c.l.bf16 %v981
        %v1002 = vunpack.c.l.bf16 %v982
        %v1003 = vunpack.c.l.bf16 %v983
        %v1004 = vunpack.c.l.bf16 %v984
        %v1005 = vunpack.c.l.bf16 %v985
        %v1006 = vunpack.c.l.bf16 %v986
        %v1007 = vunpack.c.l.bf16 %v987
        %v1008 = vunpack.c.l.bf16 %v988
        %v1009 = vunpack.c.l.bf16 %v989
        %v1010 = vunpack.c.l.bf16 %v990
        %v1011 = vunpack.c.l.bf16 %v991
        %v1012 = vunpack.c.l.bf16 %v992
        %v1013 = vunpack.c.l.bf16 %v993
        %v1014 = vunpack.c.l.bf16 %v994
        %v1015 = vunpack.c.l.bf16 %v995
        %v1016 = vunpack.c.l.bf16 %v996
        %v1037 = vrot.slane %v997, 2
        %v1038 = vrot.slane %v738, 2
        %v1039 = vsel %vm592, %v1037, %v1038
        %v1040 = vrot.slane %v797, 2
        %v1041 = vsel %vm592, %v1038, %v1040
        %v1042 = vrot.slane %v998, 2
        %v1043 = vrot.slane %v740, 2
        %v1044 = vsel %vm592, %v1042, %v1043
        %v1045 = vrot.slane %v798, 2
        %v1046 = vsel %vm592, %v1043, %v1045
        %v1047 = vrot.slane %v999, 2
        %v1048 = vrot.slane %v742, 2
        %v1049 = vsel %vm592, %v1047, %v1048
        %v1050 = vrot.slane %v799, 2
        %v1051 = vsel %vm592, %v1048, %v1050
        %v1052 = vrot.slane %v1000, 2
        %v1053 = vrot.slane %v744, 2
        %v1054 = vsel %vm592, %v1052, %v1053
        %v1055 = vrot.slane %v800, 2
        %v1056 = vsel %vm592, %v1053, %v1055
        %v1057 = vrot.slane %v1001, 2
        %v1058 = vrot.slane %v746, 2
        %v1059 = vsel %vm592, %v1057, %v1058
        %v1060 = vrot.slane %v801, 2
        %v1061 = vsel %vm592, %v1058, %v1060
        %v1062 = vrot.slane %v1002, 2
        %v1063 = vrot.slane %v748, 2
        %v1064 = vsel %vm592, %v1062, %v1063
        %v1065 = vrot.slane %v802, 2
        %v1066 = vsel %vm592, %v1063, %v1065
        %v1067 = vrot.slane %v1003, 2
        %v1068 = vrot.slane %v750, 2
        %v1069 = vsel %vm592, %v1067, %v1068
        %v1070 = vrot.slane %v803, 2
        %v1071 = vsel %vm592, %v1068, %v1070
        %v1072 = vrot.slane %v1004, 2
        %v1073 = vrot.slane %v752, 2
        %v1074 = vsel %vm592, %v1072, %v1073
        %v1075 = vrot.slane %v804, 2
        %v1076 = vsel %vm592, %v1073, %v1075
        %v1077 = vrot.slane %v1005, 2
        %v1078 = vrot.slane %v754, 2
        %v1079 = vsel %vm592, %v1077, %v1078
        %v1080 = vrot.slane %v805, 2
        %v1081 = vsel %vm592, %v1078, %v1080
        %v1082 = vrot.slane %v1006, 2
        %v1083 = vrot.slane %v756, 2
        %v1084 = vsel %vm592, %v1082, %v1083
        %v1085 = vrot.slane %v806, 2
        %v1086 = vsel %vm592, %v1083, %v1085
        %v1087 = vrot.slane %v1007, 2
        %v1088 = vrot.slane %v758, 2
        %v1089 = vsel %vm592, %v1087, %v1088
        %v1090 = vrot.slane %v807, 2
        %v1091 = vsel %vm592, %v1088, %v1090
        %v1092 = vrot.slane %v1008, 2
        %v1093 = vrot.slane %v760, 2
        %v1094 = vsel %vm592, %v1092, %v1093
        %v1095 = vrot.slane %v808, 2
        %v1096 = vsel %vm592, %v1093, %v1095
        %v1097 = vrot.slane %v1009, 2
        %v1098 = vrot.slane %v762, 2
        %v1099 = vsel %vm592, %v1097, %v1098
        %v1100 = vrot.slane %v809, 2
        %v1101 = vsel %vm592, %v1098, %v1100
        %v1102 = vrot.slane %v1010, 2
        %v1103 = vrot.slane %v764, 2
        %v1104 = vsel %vm592, %v1102, %v1103
        %v1105 = vrot.slane %v810, 2
        %v1106 = vsel %vm592, %v1103, %v1105
        %v1107 = vrot.slane %v1011, 2
        %v1108 = vrot.slane %v766, 2
        %v1109 = vsel %vm592, %v1107, %v1108
        %v1110 = vrot.slane %v811, 2
        %v1111 = vsel %vm592, %v1108, %v1110
        %v1112 = vrot.slane %v1012, 2
        %v1113 = vrot.slane %v768, 2
        %v1114 = vsel %vm592, %v1112, %v1113
        %v1115 = vrot.slane %v812, 2
        %v1116 = vsel %vm592, %v1113, %v1115
        %v1117 = vrot.slane %v1013, 2
        %v1118 = vrot.slane %v770, 2
        %v1119 = vsel %vm592, %v1117, %v1118
        %v1120 = vrot.slane %v813, 2
        %v1121 = vsel %vm592, %v1118, %v1120
        %v1122 = vrot.slane %v1014, 2
        %v1123 = vrot.slane %v772, 2
        %v1124 = vsel %vm592, %v1122, %v1123
        %v1125 = vrot.slane %v814, 2
        %v1126 = vsel %vm592, %v1123, %v1125
        %v1127 = vrot.slane %v1015, 2
        %v1128 = vrot.slane %v774, 2
        %v1129 = vsel %vm592, %v1127, %v1128
        %v1130 = vrot.slane %v815, 2
        %v1131 = vsel %vm592, %v1128, %v1130
        %v1132 = vrot.slane %v1016, 2
        %v1133 = vrot.slane %v776, 2
        %v1134 = vsel %vm592, %v1132, %v1133
        %v1135 = vrot.slane %v816, 2
        %v1136 = vsel %vm592, %v1133, %v1135
        %s1137 = sadd.s32 %s241, 2
        %s1138 = smul.u32 %s1137, 3
        %s1139 = smul.addr %s1138, 4
        %s1140 = scalar_lea.vmem %s236, %s1139
        %v1141 = vld [vmem:[%s1140] sm:$0xf]
        %v1142 = vld [vmem:[%s1140 + $0x4] sm:$0xf]
        %v1143 = vld [vmem:[%s1140 + $0xc] sm:$0xf]
        %v1144 = vld [vmem:[%s1140 + $0x10] sm:$0xf]
        %v1145 = vld [vmem:[%s1140 + $0x18] sm:$0xf]
        %v1146 = vld [vmem:[%s1140 + $0x1c] sm:$0xf]
        %v1147 = vld [vmem:[%s1140 + $0x24] sm:$0xf]
        %v1148 = vld [vmem:[%s1140 + $0x28] sm:$0xf]
        %v1149 = vld [vmem:[%s1140 + $0x30] sm:$0xf]
        %v1150 = vld [vmem:[%s1140 + $0x34] sm:$0xf]
        %v1151 = vld [vmem:[%s1140 + $0x3c] sm:$0xf]
        %v1152 = vld [vmem:[%s1140 + $0x40] sm:$0xf]
        %v1153 = vld [vmem:[%s1140 + $0x48] sm:$0xf]
        %v1154 = vld [vmem:[%s1140 + $0x4c] sm:$0xf]
        %v1155 = vld [vmem:[%s1140 + $0x54] sm:$0xf]
        %v1156 = vld [vmem:[%s1140 + $0x58] sm:$0xf]
        %v1157 = vld [vmem:[%s1140 + $0x60] sm:$0xf]
        %v1158 = vld [vmem:[%s1140 + $0x64] sm:$0xf]
        %v1159 = vld [vmem:[%s1140 + $0x6c] sm:$0xf]
        %v1160 = vld [vmem:[%s1140 + $0x70] sm:$0xf]
        %v1161 = vld [vmem:[%s1140 + $0xf0] sm:$0xf]
        %v1162 = vld [vmem:[%s1140 + $0xf4] sm:$0xf]
        %v1163 = vld [vmem:[%s1140 + $0xfc] sm:$0xf]
        %v1164 = vld [vmem:[%s1140 + $0x100] sm:$0xf]
        %v1165 = vld [vmem:[%s1140 + $0x108] sm:$0xf]
        %v1166 = vld [vmem:[%s1140 + $0x10c] sm:$0xf]
        %v1167 = vld [vmem:[%s1140 + $0x114] sm:$0xf]
        %v1168 = vld [vmem:[%s1140 + $0x118] sm:$0xf]
        %v1169 = vld [vmem:[%s1140 + $0x120] sm:$0xf]
        %v1170 = vld [vmem:[%s1140 + $0x124] sm:$0xf]
        %v1171 = vld [vmem:[%s1140 + $0x12c] sm:$0xf]
        %v1172 = vld [vmem:[%s1140 + $0x130] sm:$0xf]
        %v1173 = vld [vmem:[%s1140 + $0x138] sm:$0xf]
        %v1174 = vld [vmem:[%s1140 + $0x13c] sm:$0xf]
        %v1175 = vld [vmem:[%s1140 + $0x144] sm:$0xf]
        %v1176 = vld [vmem:[%s1140 + $0x148] sm:$0xf]
        %v1177 = vld [vmem:[%s1140 + $0x150] sm:$0xf]
        %v1178 = vld [vmem:[%s1140 + $0x154] sm:$0xf]
        %v1179 = vld [vmem:[%s1140 + $0x15c] sm:$0xf]
        %v1180 = vld [vmem:[%s1140 + $0x160] sm:$0xf]
        %v1181 = vunpack.c.l.bf16 %v1141
        %v1182 = vunpack.c.l.bf16 %v1142
        %v1183 = vunpack.c.l.bf16 %v1143
        %v1184 = vunpack.c.l.bf16 %v1144
        %v1185 = vunpack.c.l.bf16 %v1145
        %v1186 = vunpack.c.l.bf16 %v1146
        %v1187 = vunpack.c.l.bf16 %v1147
        %v1188 = vunpack.c.l.bf16 %v1148
        %v1189 = vunpack.c.l.bf16 %v1149
        %v1190 = vunpack.c.l.bf16 %v1150
        %v1191 = vunpack.c.l.bf16 %v1151
        %v1192 = vunpack.c.l.bf16 %v1152
        %v1193 = vunpack.c.l.bf16 %v1153
        %v1194 = vunpack.c.l.bf16 %v1154
        %v1195 = vunpack.c.l.bf16 %v1155
        %v1196 = vunpack.c.l.bf16 %v1156
        %v1197 = vunpack.c.l.bf16 %v1157
        %v1198 = vunpack.c.l.bf16 %v1158
        %v1199 = vunpack.c.l.bf16 %v1159
        %v1200 = vunpack.c.l.bf16 %v1160
        %v1201 = vunpack.c.l.bf16 %v1161
        %v1202 = vunpack.c.l.bf16 %v1162
        %v1203 = vunpack.c.l.bf16 %v1163
        %v1204 = vunpack.c.l.bf16 %v1164
        %v1205 = vunpack.c.l.bf16 %v1165
        %v1206 = vunpack.c.l.bf16 %v1166
        %v1207 = vunpack.c.l.bf16 %v1167
        %v1208 = vunpack.c.l.bf16 %v1168
        %v1209 = vunpack.c.l.bf16 %v1169
        %v1210 = vunpack.c.l.bf16 %v1170
        %v1211 = vunpack.c.l.bf16 %v1171
        %v1212 = vunpack.c.l.bf16 %v1172
        %v1213 = vunpack.c.l.bf16 %v1173
        %v1214 = vunpack.c.l.bf16 %v1174
        %v1215 = vunpack.c.l.bf16 %v1175
        %v1216 = vunpack.c.l.bf16 %v1176
        %v1217 = vunpack.c.l.bf16 %v1177
        %v1218 = vunpack.c.l.bf16 %v1178
        %v1219 = vunpack.c.l.bf16 %v1179
        %v1220 = vunpack.c.l.bf16 %v1180
        %v1221 = vld [vmem:[%s1140 + $0x8] sm:$0x1]
        %v1222 = vld [vmem:[%s1140 + $0x14] sm:$0x1]
        %v1223 = vld [vmem:[%s1140 + $0x20] sm:$0x1]
        %v1224 = vld [vmem:[%s1140 + $0x2c] sm:$0x1]
        %v1225 = vld [vmem:[%s1140 + $0x38] sm:$0x1]
        %v1226 = vld [vmem:[%s1140 + $0x44] sm:$0x1]
        %v1227 = vld [vmem:[%s1140 + $0x50] sm:$0x1]
        %v1228 = vld [vmem:[%s1140 + $0x5c] sm:$0x1]
        %v1229 = vld [vmem:[%s1140 + $0x68] sm:$0x1]
        %v1230 = vld [vmem:[%s1140 + $0x74] sm:$0x1]
        %v1231 = vld [vmem:[%s1140 + $0xf8] sm:$0x1]
        %v1232 = vld [vmem:[%s1140 + $0x104] sm:$0x1]
        %v1233 = vld [vmem:[%s1140 + $0x110] sm:$0x1]
        %v1234 = vld [vmem:[%s1140 + $0x11c] sm:$0x1]
        %v1235 = vld [vmem:[%s1140 + $0x128] sm:$0x1]
        %v1236 = vld [vmem:[%s1140 + $0x134] sm:$0x1]
        %v1237 = vld [vmem:[%s1140 + $0x140] sm:$0x1]
        %v1238 = vld [vmem:[%s1140 + $0x14c] sm:$0x1]
        %v1239 = vld [vmem:[%s1140 + $0x158] sm:$0x1]
        %v1240 = vld [vmem:[%s1140 + $0x164] sm:$0x1]
        %v1241 = vunpack.c.l.bf16 %v1221
        %v1242 = vunpack.c.l.bf16 %v1222
        %v1243 = vunpack.c.l.bf16 %v1223
        %v1244 = vunpack.c.l.bf16 %v1224
        %v1245 = vunpack.c.l.bf16 %v1225
        %v1246 = vunpack.c.l.bf16 %v1226
        %v1247 = vunpack.c.l.bf16 %v1227
        %v1248 = vunpack.c.l.bf16 %v1228
        %v1249 = vunpack.c.l.bf16 %v1229
        %v1250 = vunpack.c.l.bf16 %v1230
        %v1251 = vunpack.c.l.bf16 %v1231
        %v1252 = vunpack.c.l.bf16 %v1232
        %v1253 = vunpack.c.l.bf16 %v1233
        %v1254 = vunpack.c.l.bf16 %v1234
        %v1255 = vunpack.c.l.bf16 %v1235
        %v1256 = vunpack.c.l.bf16 %v1236
        %v1257 = vunpack.c.l.bf16 %v1237
        %v1258 = vunpack.c.l.bf16 %v1238
        %v1259 = vunpack.c.l.bf16 %v1239
        %v1260 = vunpack.c.l.bf16 %v1240
        %v1321 = vrot.slane %v1181, 1
        %v1322 = vrot.slane %v1182, 1
        %v1323 = vsel %vm431, %v1321, %v1322
        %v1324 = vrot.slane %v1241, 1
        %v1325 = vsel %vm431, %v1322, %v1324
        %v1326 = vrot.slane %v1183, 1
        %v1327 = vrot.slane %v1184, 1
        %v1328 = vsel %vm431, %v1326, %v1327
        %v1329 = vrot.slane %v1242, 1
        %v1330 = vsel %vm431, %v1327, %v1329
        %v1331 = vrot.slane %v1185, 1
        %v1332 = vrot.slane %v1186, 1
        %v1333 = vsel %vm431, %v1331, %v1332
        %v1334 = vrot.slane %v1243, 1
        %v1335 = vsel %vm431, %v1332, %v1334
        %v1336 = vrot.slane %v1187, 1
        %v1337 = vrot.slane %v1188, 1
        %v1338 = vsel %vm431, %v1336, %v1337
        %v1339 = vrot.slane %v1244, 1
        %v1340 = vsel %vm431, %v1337, %v1339
        %v1341 = vrot.slane %v1189, 1
        %v1342 = vrot.slane %v1190, 1
        %v1343 = vsel %vm431, %v1341, %v1342
        %v1344 = vrot.slane %v1245, 1
        %v1345 = vsel %vm431, %v1342, %v1344
        %v1346 = vrot.slane %v1191, 1
        %v1347 = vrot.slane %v1192, 1
        %v1348 = vsel %vm431, %v1346, %v1347
        %v1349 = vrot.slane %v1246, 1
        %v1350 = vsel %vm431, %v1347, %v1349
        %v1351 = vrot.slane %v1193, 1
        %v1352 = vrot.slane %v1194, 1
        %v1353 = vsel %vm431, %v1351, %v1352
        %v1354 = vrot.slane %v1247, 1
        %v1355 = vsel %vm431, %v1352, %v1354
        %v1356 = vrot.slane %v1195, 1
        %v1357 = vrot.slane %v1196, 1
        %v1358 = vsel %vm431, %v1356, %v1357
        %v1359 = vrot.slane %v1248, 1
        %v1360 = vsel %vm431, %v1357, %v1359
        %v1361 = vrot.slane %v1197, 1
        %v1362 = vrot.slane %v1198, 1
        %v1363 = vsel %vm431, %v1361, %v1362
        %v1364 = vrot.slane %v1249, 1
        %v1365 = vsel %vm431, %v1362, %v1364
        %v1366 = vrot.slane %v1199, 1
        %v1367 = vrot.slane %v1200, 1
        %v1368 = vsel %vm431, %v1366, %v1367
        %v1369 = vrot.slane %v1250, 1
        %v1370 = vsel %vm431, %v1367, %v1369
        %v1371 = vrot.slane %v1201, 1
        %v1372 = vrot.slane %v1202, 1
        %v1373 = vsel %vm431, %v1371, %v1372
        %v1374 = vrot.slane %v1251, 1
        %v1375 = vsel %vm431, %v1372, %v1374
        %v1376 = vrot.slane %v1203, 1
        %v1377 = vrot.slane %v1204, 1
        %v1378 = vsel %vm431, %v1376, %v1377
        %v1379 = vrot.slane %v1252, 1
        %v1380 = vsel %vm431, %v1377, %v1379
        %v1381 = vrot.slane %v1205, 1
        %v1382 = vrot.slane %v1206, 1
        %v1383 = vsel %vm431, %v1381, %v1382
        %v1384 = vrot.slane %v1253, 1
        %v1385 = vsel %vm431, %v1382, %v1384
        %v1386 = vrot.slane %v1207, 1
        %v1387 = vrot.slane %v1208, 1
        %v1388 = vsel %vm431, %v1386, %v1387
        %v1389 = vrot.slane %v1254, 1
        %v1390 = vsel %vm431, %v1387, %v1389
        %v1391 = vrot.slane %v1209, 1
        %v1392 = vrot.slane %v1210, 1
        %v1393 = vsel %vm431, %v1391, %v1392
        %v1394 = vrot.slane %v1255, 1
        %v1395 = vsel %vm431, %v1392, %v1394
        %v1396 = vrot.slane %v1211, 1
        %v1397 = vrot.slane %v1212, 1
        %v1398 = vsel %vm431, %v1396, %v1397
        %v1399 = vrot.slane %v1256, 1
        %v1400 = vsel %vm431, %v1397, %v1399
        %v1401 = vrot.slane %v1213, 1
        %v1402 = vrot.slane %v1214, 1
        %v1403 = vsel %vm431, %v1401, %v1402
        %v1404 = vrot.slane %v1257, 1
        %v1405 = vsel %vm431, %v1402, %v1404
        %v1406 = vrot.slane %v1215, 1
        %v1407 = vrot.slane %v1216, 1
        %v1408 = vsel %vm431, %v1406, %v1407
        %v1409 = vrot.slane %v1258, 1
        %v1410 = vsel %vm431, %v1407, %v1409
        %v1411 = vrot.slane %v1217, 1
        %v1412 = vrot.slane %v1218, 1
        %v1413 = vsel %vm431, %v1411, %v1412
        %v1414 = vrot.slane %v1259, 1
        %v1415 = vsel %vm431, %v1412, %v1414
        %v1416 = vrot.slane %v1219, 1
        %v1417 = vrot.slane %v1220, 1
        %v1418 = vsel %vm431, %v1416, %v1417
        %v1419 = vrot.slane %v1260, 1
        %v1420 = vsel %vm431, %v1417, %v1419
        %v1421 = vld [vmem:[%s1140] sm:$0xe]
        %v1422 = vld [vmem:[%s1140 + $0xc] sm:$0xe]
        %v1423 = vld [vmem:[%s1140 + $0x18] sm:$0xe]
        %v1424 = vld [vmem:[%s1140 + $0x24] sm:$0xe]
        %v1425 = vld [vmem:[%s1140 + $0x30] sm:$0xe]
        %v1426 = vld [vmem:[%s1140 + $0x3c] sm:$0xe]
        %v1427 = vld [vmem:[%s1140 + $0x48] sm:$0xe]
        %v1428 = vld [vmem:[%s1140 + $0x54] sm:$0xe]
        %v1429 = vld [vmem:[%s1140 + $0x60] sm:$0xe]
        %v1430 = vld [vmem:[%s1140 + $0x6c] sm:$0xe]
        %v1431 = vld [vmem:[%s1140 + $0xf0] sm:$0xe]
        %v1432 = vld [vmem:[%s1140 + $0xfc] sm:$0xe]
        %v1433 = vld [vmem:[%s1140 + $0x108] sm:$0xe]
        %v1434 = vld [vmem:[%s1140 + $0x114] sm:$0xe]
        %v1435 = vld [vmem:[%s1140 + $0x120] sm:$0xe]
        %v1436 = vld [vmem:[%s1140 + $0x12c] sm:$0xe]
        %v1437 = vld [vmem:[%s1140 + $0x138] sm:$0xe]
        %v1438 = vld [vmem:[%s1140 + $0x144] sm:$0xe]
        %v1439 = vld [vmem:[%s1140 + $0x150] sm:$0xe]
        %v1440 = vld [vmem:[%s1140 + $0x15c] sm:$0xe]
        %v1441 = vunpack.c.l.bf16 %v1421
        %v1442 = vunpack.c.l.bf16 %v1422
        %v1443 = vunpack.c.l.bf16 %v1423
        %v1444 = vunpack.c.l.bf16 %v1424
        %v1445 = vunpack.c.l.bf16 %v1425
        %v1446 = vunpack.c.l.bf16 %v1426
        %v1447 = vunpack.c.l.bf16 %v1427
        %v1448 = vunpack.c.l.bf16 %v1428
        %v1449 = vunpack.c.l.bf16 %v1429
        %v1450 = vunpack.c.l.bf16 %v1430
        %v1451 = vunpack.c.l.bf16 %v1431
        %v1452 = vunpack.c.l.bf16 %v1432
        %v1453 = vunpack.c.l.bf16 %v1433
        %v1454 = vunpack.c.l.bf16 %v1434
        %v1455 = vunpack.c.l.bf16 %v1435
        %v1456 = vunpack.c.l.bf16 %v1436
        %v1457 = vunpack.c.l.bf16 %v1437
        %v1458 = vunpack.c.l.bf16 %v1438
        %v1459 = vunpack.c.l.bf16 %v1439
        %v1460 = vunpack.c.l.bf16 %v1440
        %v1481 = vrot.slane %v1441, 2
        %v1482 = vrot.slane %v1182, 2
        %v1483 = vsel %vm592, %v1481, %v1482
        %v1484 = vrot.slane %v1241, 2
        %v1485 = vsel %vm592, %v1482, %v1484
        %v1486 = vrot.slane %v1442, 2
        %v1487 = vrot.slane %v1184, 2
        %v1488 = vsel %vm592, %v1486, %v1487
        %v1489 = vrot.slane %v1242, 2
        %v1490 = vsel %vm592, %v1487, %v1489
        %v1491 = vrot.slane %v1443, 2
        %v1492 = vrot.slane %v1186, 2
        %v1493 = vsel %vm592, %v1491, %v1492
        %v1494 = vrot.slane %v1243, 2
        %v1495 = vsel %vm592, %v1492, %v1494
        %v1496 = vrot.slane %v1444, 2
        %v1497 = vrot.slane %v1188, 2
        %v1498 = vsel %vm592, %v1496, %v1497
        %v1499 = vrot.slane %v1244, 2
        %v1500 = vsel %vm592, %v1497, %v1499
        %v1501 = vrot.slane %v1445, 2
        %v1502 = vrot.slane %v1190, 2
        %v1503 = vsel %vm592, %v1501, %v1502
        %v1504 = vrot.slane %v1245, 2
        %v1505 = vsel %vm592, %v1502, %v1504
        %v1506 = vrot.slane %v1446, 2
        %v1507 = vrot.slane %v1192, 2
        %v1508 = vsel %vm592, %v1506, %v1507
        %v1509 = vrot.slane %v1246, 2
        %v1510 = vsel %vm592, %v1507, %v1509
        %v1511 = vrot.slane %v1447, 2
        %v1512 = vrot.slane %v1194, 2
        %v1513 = vsel %vm592, %v1511, %v1512
        %v1514 = vrot.slane %v1247, 2
        %v1515 = vsel %vm592, %v1512, %v1514
        %v1516 = vrot.slane %v1448, 2
        %v1517 = vrot.slane %v1196, 2
        %v1518 = vsel %vm592, %v1516, %v1517
        %v1519 = vrot.slane %v1248, 2
        %v1520 = vsel %vm592, %v1517, %v1519
        %v1521 = vrot.slane %v1449, 2
        %v1522 = vrot.slane %v1198, 2
        %v1523 = vsel %vm592, %v1521, %v1522
        %v1524 = vrot.slane %v1249, 2
        %v1525 = vsel %vm592, %v1522, %v1524
        %v1526 = vrot.slane %v1450, 2
        %v1527 = vrot.slane %v1200, 2
        %v1528 = vsel %vm592, %v1526, %v1527
        %v1529 = vrot.slane %v1250, 2
        %v1530 = vsel %vm592, %v1527, %v1529
        %v1531 = vrot.slane %v1451, 2
        %v1532 = vrot.slane %v1202, 2
        %v1533 = vsel %vm592, %v1531, %v1532
        %v1534 = vrot.slane %v1251, 2
        %v1535 = vsel %vm592, %v1532, %v1534
        %v1536 = vrot.slane %v1452, 2
        %v1537 = vrot.slane %v1204, 2
        %v1538 = vsel %vm592, %v1536, %v1537
        %v1539 = vrot.slane %v1252, 2
        %v1540 = vsel %vm592, %v1537, %v1539
        %v1541 = vrot.slane %v1453, 2
        %v1542 = vrot.slane %v1206, 2
        %v1543 = vsel %vm592, %v1541, %v1542
        %v1544 = vrot.slane %v1253, 2
        %v1545 = vsel %vm592, %v1542, %v1544
        %v1546 = vrot.slane %v1454, 2
        %v1547 = vrot.slane %v1208, 2
        %v1548 = vsel %vm592, %v1546, %v1547
        %v1549 = vrot.slane %v1254, 2
        %v1550 = vsel %vm592, %v1547, %v1549
        %v1551 = vrot.slane %v1455, 2
        %v1552 = vrot.slane %v1210, 2
        %v1553 = vsel %vm592, %v1551, %v1552
        %v1554 = vrot.slane %v1255, 2
        %v1555 = vsel %vm592, %v1552, %v1554
        %v1556 = vrot.slane %v1456, 2
        %v1557 = vrot.slane %v1212, 2
        %v1558 = vsel %vm592, %v1556, %v1557
        %v1559 = vrot.slane %v1256, 2
        %v1560 = vsel %vm592, %v1557, %v1559
        %v1561 = vrot.slane %v1457, 2
        %v1562 = vrot.slane %v1214, 2
        %v1563 = vsel %vm592, %v1561, %v1562
        %v1564 = vrot.slane %v1257, 2
        %v1565 = vsel %vm592, %v1562, %v1564
        %v1566 = vrot.slane %v1458, 2
        %v1567 = vrot.slane %v1216, 2
        %v1568 = vsel %vm592, %v1566, %v1567
        %v1569 = vrot.slane %v1258, 2
        %v1570 = vsel %vm592, %v1567, %v1569
        %v1571 = vrot.slane %v1459, 2
        %v1572 = vrot.slane %v1218, 2
        %v1573 = vsel %vm592, %v1571, %v1572
        %v1574 = vrot.slane %v1259, 2
        %v1575 = vsel %vm592, %v1572, %v1574
        %v1576 = vrot.slane %v1460, 2
        %v1577 = vrot.slane %v1220, 2
        %v1578 = vsel %vm592, %v1576, %v1577
        %v1579 = vrot.slane %v1260, 2
        %v1580 = vsel %vm592, %v1577, %v1579
        %1581 = vrot.lane.b32.xlu0 %v434, 4
        %v1582 = vpop.permute.xlu0 %1581
        %1583 = vrot.lane.b32.xlu0 %v436, 4
        %v1584 = vpop.permute.xlu0 %1583
        %1585 = vrot.lane.b32.xlu0 %v439, 4
        %v1586 = vpop.permute.xlu0 %1585
        %1587 = vrot.lane.b32.xlu0 %v441, 4
        %v1588 = vpop.permute.xlu0 %1587
        %1589 = vrot.lane.b32.xlu0 %v444, 4
        %v1590 = vpop.permute.xlu0 %1589
        %1591 = vrot.lane.b32.xlu0 %v446, 4
        %v1592 = vpop.permute.xlu0 %1591
        %1593 = vrot.lane.b32.xlu0 %v449, 4
        %v1594 = vpop.permute.xlu0 %1593
        %1595 = vrot.lane.b32.xlu0 %v451, 4
        %v1596 = vpop.permute.xlu0 %1595
        %1597 = vrot.lane.b32.xlu0 %v454, 4
        %v1598 = vpop.permute.xlu0 %1597
        %1599 = vrot.lane.b32.xlu0 %v456, 4
        %v1600 = vpop.permute.xlu0 %1599
        %1601 = vrot.lane.b32.xlu0 %v459, 4
        %v1602 = vpop.permute.xlu0 %1601
        %1603 = vrot.lane.b32.xlu0 %v461, 4
        %v1604 = vpop.permute.xlu0 %1603
        %1605 = vrot.lane.b32.xlu0 %v464, 4
        %v1606 = vpop.permute.xlu0 %1605
        %1607 = vrot.lane.b32.xlu0 %v466, 4
        %v1608 = vpop.permute.xlu0 %1607
        %1609 = vrot.lane.b32.xlu0 %v469, 4
        %v1610 = vpop.permute.xlu0 %1609
        %1611 = vrot.lane.b32.xlu0 %v471, 4
        %v1612 = vpop.permute.xlu0 %1611
        %1613 = vrot.lane.b32.xlu0 %v474, 4
        %v1614 = vpop.permute.xlu0 %1613
        %1615 = vrot.lane.b32.xlu0 %v476, 4
        %v1616 = vpop.permute.xlu0 %1615
        %1617 = vrot.lane.b32.xlu0 %v479, 4
        %v1618 = vpop.permute.xlu0 %1617
        %1619 = vrot.lane.b32.xlu0 %v481, 4
        %v1620 = vpop.permute.xlu0 %1619
        %1621 = vrot.lane.b32.xlu0 %v484, 4
        %v1622 = vpop.permute.xlu0 %1621
        %1623 = vrot.lane.b32.xlu0 %v486, 4
        %v1624 = vpop.permute.xlu0 %1623
        %1625 = vrot.lane.b32.xlu0 %v489, 4
        %v1626 = vpop.permute.xlu0 %1625
        %1627 = vrot.lane.b32.xlu0 %v491, 4
        %v1628 = vpop.permute.xlu0 %1627
        %1629 = vrot.lane.b32.xlu0 %v494, 4
        %v1630 = vpop.permute.xlu0 %1629
        %1631 = vrot.lane.b32.xlu0 %v496, 4
        %v1632 = vpop.permute.xlu0 %1631
        %1633 = vrot.lane.b32.xlu0 %v499, 4
        %v1634 = vpop.permute.xlu0 %1633
        %1635 = vrot.lane.b32.xlu0 %v501, 4
        %v1636 = vpop.permute.xlu0 %1635
        %1637 = vrot.lane.b32.xlu0 %v504, 4
        %v1638 = vpop.permute.xlu0 %1637
        %1639 = vrot.lane.b32.xlu0 %v506, 4
        %v1640 = vpop.permute.xlu0 %1639
        %1641 = vrot.lane.b32.xlu0 %v509, 4
        %v1642 = vpop.permute.xlu0 %1641
        %1643 = vrot.lane.b32.xlu0 %v511, 4
        %v1644 = vpop.permute.xlu0 %1643
        %1645 = vrot.lane.b32.xlu0 %v514, 4
        %v1646 = vpop.permute.xlu0 %1645
        %1647 = vrot.lane.b32.xlu0 %v516, 4
        %v1648 = vpop.permute.xlu0 %1647
        %1649 = vrot.lane.b32.xlu0 %v519, 4
        %v1650 = vpop.permute.xlu0 %1649
        %1651 = vrot.lane.b32.xlu0 %v521, 4
        %v1652 = vpop.permute.xlu0 %1651
        %1653 = vrot.lane.b32.xlu0 %v524, 4
        %v1654 = vpop.permute.xlu0 %1653
        %1655 = vrot.lane.b32.xlu0 %v526, 4
        %v1656 = vpop.permute.xlu0 %1655
        %1657 = vrot.lane.b32.xlu0 %v529, 4
        %v1658 = vpop.permute.xlu0 %1657
        %1659 = vrot.lane.b32.xlu0 %v531, 4
        %v1660 = vpop.permute.xlu0 %1659
        %1701 = vrot.lane.b32.xlu0 %v595, 8
        %v1702 = vpop.permute.xlu0 %1701
        %1703 = vrot.lane.b32.xlu0 %v597, 8
        %v1704 = vpop.permute.xlu0 %1703
        %1705 = vrot.lane.b32.xlu0 %v600, 8
        %v1706 = vpop.permute.xlu0 %1705
        %1707 = vrot.lane.b32.xlu0 %v602, 8
        %v1708 = vpop.permute.xlu0 %1707
        %1709 = vrot.lane.b32.xlu0 %v605, 8
        %v1710 = vpop.permute.xlu0 %1709
        %1711 = vrot.lane.b32.xlu0 %v607, 8
        %v1712 = vpop.permute.xlu0 %1711
        %1713 = vrot.lane.b32.xlu0 %v610, 8
        %v1714 = vpop.permute.xlu0 %1713
        %1715 = vrot.lane.b32.xlu0 %v612, 8
        %v1716 = vpop.permute.xlu0 %1715
        %1717 = vrot.lane.b32.xlu0 %v615, 8
        %v1718 = vpop.permute.xlu0 %1717
        %1719 = vrot.lane.b32.xlu0 %v617, 8
        %v1720 = vpop.permute.xlu0 %1719
        %1721 = vrot.lane.b32.xlu0 %v620, 8
        %v1722 = vpop.permute.xlu0 %1721
        %1723 = vrot.lane.b32.xlu0 %v622, 8
        %v1724 = vpop.permute.xlu0 %1723
        %1725 = vrot.lane.b32.xlu0 %v625, 8
        %v1726 = vpop.permute.xlu0 %1725
        %1727 = vrot.lane.b32.xlu0 %v627, 8
        %v1728 = vpop.permute.xlu0 %1727
        %1729 = vrot.lane.b32.xlu0 %v630, 8
        %v1730 = vpop.permute.xlu0 %1729
        %1731 = vrot.lane.b32.xlu0 %v632, 8
        %v1732 = vpop.permute.xlu0 %1731
        %1733 = vrot.lane.b32.xlu0 %v635, 8
        %v1734 = vpop.permute.xlu0 %1733
        %1735 = vrot.lane.b32.xlu0 %v637, 8
        %v1736 = vpop.permute.xlu0 %1735
        %1737 = vrot.lane.b32.xlu0 %v640, 8
        %v1738 = vpop.permute.xlu0 %1737
        %1739 = vrot.lane.b32.xlu0 %v642, 8
        %v1740 = vpop.permute.xlu0 %1739
        %1741 = vrot.lane.b32.xlu0 %v645, 8
        %v1742 = vpop.permute.xlu0 %1741
        %1743 = vrot.lane.b32.xlu0 %v647, 8
        %v1744 = vpop.permute.xlu0 %1743
        %1745 = vrot.lane.b32.xlu0 %v650, 8
        %v1746 = vpop.permute.xlu0 %1745
        %1747 = vrot.lane.b32.xlu0 %v652, 8
        %v1748 = vpop.permute.xlu0 %1747
        %1749 = vrot.lane.b32.xlu0 %v655, 8
        %v1750 = vpop.permute.xlu0 %1749
        %1751 = vrot.lane.b32.xlu0 %v657, 8
        %v1752 = vpop.permute.xlu0 %1751
        %1753 = vrot.lane.b32.xlu0 %v660, 8
        %v1754 = vpop.permute.xlu0 %1753
        %1755 = vrot.lane.b32.xlu0 %v662, 8
        %v1756 = vpop.permute.xlu0 %1755
        %1757 = vrot.lane.b32.xlu0 %v665, 8
        %v1758 = vpop.permute.xlu0 %1757
        %1759 = vrot.lane.b32.xlu0 %v667, 8
        %v1760 = vpop.permute.xlu0 %1759
        %1761 = vrot.lane.b32.xlu0 %v670, 8
        %v1762 = vpop.permute.xlu0 %1761
        %1763 = vrot.lane.b32.xlu0 %v672, 8
        %v1764 = vpop.permute.xlu0 %1763
        %1765 = vrot.lane.b32.xlu0 %v675, 8
        %v1766 = vpop.permute.xlu0 %1765
        %1767 = vrot.lane.b32.xlu0 %v677, 8
        %v1768 = vpop.permute.xlu0 %1767
        %1769 = vrot.lane.b32.xlu0 %v680, 8
        %v1770 = vpop.permute.xlu0 %1769
        %1771 = vrot.lane.b32.xlu0 %v682, 8
        %v1772 = vpop.permute.xlu0 %1771
        %1773 = vrot.lane.b32.xlu0 %v685, 8
        %v1774 = vpop.permute.xlu0 %1773
        %1775 = vrot.lane.b32.xlu0 %v687, 8
        %v1776 = vpop.permute.xlu0 %1775
        %1777 = vrot.lane.b32.xlu0 %v690, 8
        %v1778 = vpop.permute.xlu0 %1777
        %1779 = vrot.lane.b32.xlu0 %v692, 8
        %v1780 = vpop.permute.xlu0 %1779
        %1821 = vrot.lane.b32.xlu0 %v737, 12
        %v1822 = vpop.permute.xlu0 %1821
        %1823 = vrot.lane.b32.xlu0 %v738, 12
        %v1824 = vpop.permute.xlu0 %1823
        %1825 = vrot.lane.b32.xlu0 %v739, 12
        %v1826 = vpop.permute.xlu0 %1825
        %1827 = vrot.lane.b32.xlu0 %v740, 12
        %v1828 = vpop.permute.xlu0 %1827
        %1829 = vrot.lane.b32.xlu0 %v741, 12
        %v1830 = vpop.permute.xlu0 %1829
        %1831 = vrot.lane.b32.xlu0 %v742, 12
        %v1832 = vpop.permute.xlu0 %1831
        %1833 = vrot.lane.b32.xlu0 %v743, 12
        %v1834 = vpop.permute.xlu0 %1833
        %1835 = vrot.lane.b32.xlu0 %v744, 12
        %v1836 = vpop.permute.xlu0 %1835
        %1837 = vrot.lane.b32.xlu0 %v745, 12
        %v1838 = vpop.permute.xlu0 %1837
        %1839 = vrot.lane.b32.xlu0 %v746, 12
        %v1840 = vpop.permute.xlu0 %1839
        %1841 = vrot.lane.b32.xlu0 %v747, 12
        %v1842 = vpop.permute.xlu0 %1841
        %1843 = vrot.lane.b32.xlu0 %v748, 12
        %v1844 = vpop.permute.xlu0 %1843
        %1845 = vrot.lane.b32.xlu0 %v749, 12
        %v1846 = vpop.permute.xlu0 %1845
        %1847 = vrot.lane.b32.xlu0 %v750, 12
        %v1848 = vpop.permute.xlu0 %1847
        %1849 = vrot.lane.b32.xlu0 %v751, 12
        %v1850 = vpop.permute.xlu0 %1849
        %1851 = vrot.lane.b32.xlu0 %v752, 12
        %v1852 = vpop.permute.xlu0 %1851
        %1853 = vrot.lane.b32.xlu0 %v753, 12
        %v1854 = vpop.permute.xlu0 %1853
        %1855 = vrot.lane.b32.xlu0 %v754, 12
        %v1856 = vpop.permute.xlu0 %1855
        %1857 = vrot.lane.b32.xlu0 %v755, 12
        %v1858 = vpop.permute.xlu0 %1857
        %1859 = vrot.lane.b32.xlu0 %v756, 12
        %v1860 = vpop.permute.xlu0 %1859
        %1861 = vrot.lane.b32.xlu0 %v757, 12
        %v1862 = vpop.permute.xlu0 %1861
        %1863 = vrot.lane.b32.xlu0 %v758, 12
        %v1864 = vpop.permute.xlu0 %1863
        %1865 = vrot.lane.b32.xlu0 %v759, 12
        %v1866 = vpop.permute.xlu0 %1865
        %1867 = vrot.lane.b32.xlu0 %v760, 12
        %v1868 = vpop.permute.xlu0 %1867
        %1869 = vrot.lane.b32.xlu0 %v761, 12
        %v1870 = vpop.permute.xlu0 %1869
        %1871 = vrot.lane.b32.xlu0 %v762, 12
        %v1872 = vpop.permute.xlu0 %1871
        %1873 = vrot.lane.b32.xlu0 %v763, 12
        %v1874 = vpop.permute.xlu0 %1873
        %1875 = vrot.lane.b32.xlu0 %v764, 12
        %v1876 = vpop.permute.xlu0 %1875
        %1877 = vrot.lane.b32.xlu0 %v765, 12
        %v1878 = vpop.permute.xlu0 %1877
        %1879 = vrot.lane.b32.xlu0 %v766, 12
        %v1880 = vpop.permute.xlu0 %1879
        %1881 = vrot.lane.b32.xlu0 %v767, 12
        %v1882 = vpop.permute.xlu0 %1881
        %1883 = vrot.lane.b32.xlu0 %v768, 12
        %v1884 = vpop.permute.xlu0 %1883
        %1885 = vrot.lane.b32.xlu0 %v769, 12
        %v1886 = vpop.permute.xlu0 %1885
        %1887 = vrot.lane.b32.xlu0 %v770, 12
        %v1888 = vpop.permute.xlu0 %1887
        %1889 = vrot.lane.b32.xlu0 %v771, 12
        %v1890 = vpop.permute.xlu0 %1889
        %1891 = vrot.lane.b32.xlu0 %v772, 12
        %v1892 = vpop.permute.xlu0 %1891
        %1893 = vrot.lane.b32.xlu0 %v773, 12
        %v1894 = vpop.permute.xlu0 %1893
        %1895 = vrot.lane.b32.xlu0 %v774, 12
        %v1896 = vpop.permute.xlu0 %1895
        %1897 = vrot.lane.b32.xlu0 %v775, 12
        %v1898 = vpop.permute.xlu0 %1897
        %1899 = vrot.lane.b32.xlu0 %v776, 12
        %v1900 = vpop.permute.xlu0 %1899
        %1941 = vrot.lane.b32.xlu0 %v879, 16
        %v1942 = vpop.permute.xlu0 %1941
        %1943 = vrot.lane.b32.xlu0 %v881, 16
        %v1944 = vpop.permute.xlu0 %1943
        %1945 = vrot.lane.b32.xlu0 %v884, 16
        %v1946 = vpop.permute.xlu0 %1945
        %1947 = vrot.lane.b32.xlu0 %v886, 16
        %v1948 = vpop.permute.xlu0 %1947
        %1949 = vrot.lane.b32.xlu0 %v889, 16
        %v1950 = vpop.permute.xlu0 %1949
        %1951 = vrot.lane.b32.xlu0 %v891, 16
        %v1952 = vpop.permute.xlu0 %1951
        %1953 = vrot.lane.b32.xlu0 %v894, 16
        %v1954 = vpop.permute.xlu0 %1953
        %1955 = vrot.lane.b32.xlu0 %v896, 16
        %v1956 = vpop.permute.xlu0 %1955
        %1957 = vrot.lane.b32.xlu0 %v899, 16
        %v1958 = vpop.permute.xlu0 %1957
        %1959 = vrot.lane.b32.xlu0 %v901, 16
        %v1960 = vpop.permute.xlu0 %1959
        %1961 = vrot.lane.b32.xlu0 %v904, 16
        %v1962 = vpop.permute.xlu0 %1961
        %1963 = vrot.lane.b32.xlu0 %v906, 16
        %v1964 = vpop.permute.xlu0 %1963
        %1965 = vrot.lane.b32.xlu0 %v909, 16
        %v1966 = vpop.permute.xlu0 %1965
        %1967 = vrot.lane.b32.xlu0 %v911, 16
        %v1968 = vpop.permute.xlu0 %1967
        %1969 = vrot.lane.b32.xlu0 %v914, 16
        %v1970 = vpop.permute.xlu0 %1969
        %1971 = vrot.lane.b32.xlu0 %v916, 16
        %v1972 = vpop.permute.xlu0 %1971
        %1973 = vrot.lane.b32.xlu0 %v919, 16
        %v1974 = vpop.permute.xlu0 %1973
        %1975 = vrot.lane.b32.xlu0 %v921, 16
        %v1976 = vpop.permute.xlu0 %1975
        %1977 = vrot.lane.b32.xlu0 %v924, 16
        %v1978 = vpop.permute.xlu0 %1977
        %1979 = vrot.lane.b32.xlu0 %v926, 16
        %v1980 = vpop.permute.xlu0 %1979
        %1981 = vrot.lane.b32.xlu0 %v929, 16
        %v1982 = vpop.permute.xlu0 %1981
        %1983 = vrot.lane.b32.xlu0 %v931, 16
        %v1984 = vpop.permute.xlu0 %1983
        %1985 = vrot.lane.b32.xlu0 %v934, 16
        %v1986 = vpop.permute.xlu0 %1985
        %1987 = vrot.lane.b32.xlu0 %v936, 16
        %v1988 = vpop.permute.xlu0 %1987
        %1989 = vrot.lane.b32.xlu0 %v939, 16
        %v1990 = vpop.permute.xlu0 %1989
        %1991 = vrot.lane.b32.xlu0 %v941, 16
        %v1992 = vpop.permute.xlu0 %1991
        %1993 = vrot.lane.b32.xlu0 %v944, 16
        %v1994 = vpop.permute.xlu0 %1993
        %1995 = vrot.lane.b32.xlu0 %v946, 16
        %v1996 = vpop.permute.xlu0 %1995
        %1997 = vrot.lane.b32.xlu0 %v949, 16
        %v1998 = vpop.permute.xlu0 %1997
        %1999 = vrot.lane.b32.xlu0 %v951, 16
        %v2000 = vpop.permute.xlu0 %1999
        %2001 = vrot.lane.b32.xlu0 %v954, 16
        %v2002 = vpop.permute.xlu0 %2001
        %2003 = vrot.lane.b32.xlu0 %v956, 16
        %v2004 = vpop.permute.xlu0 %2003
        %2005 = vrot.lane.b32.xlu0 %v959, 16
        %v2006 = vpop.permute.xlu0 %2005
        %2007 = vrot.lane.b32.xlu0 %v961, 16
        %v2008 = vpop.permute.xlu0 %2007
        %2009 = vrot.lane.b32.xlu0 %v964, 16
        %v2010 = vpop.permute.xlu0 %2009
        %2011 = vrot.lane.b32.xlu0 %v966, 16
        %v2012 = vpop.permute.xlu0 %2011
        %2013 = vrot.lane.b32.xlu0 %v969, 16
        %v2014 = vpop.permute.xlu0 %2013
        %2015 = vrot.lane.b32.xlu0 %v971, 16
        %v2016 = vpop.permute.xlu0 %2015
        %2017 = vrot.lane.b32.xlu0 %v974, 16
        %v2018 = vpop.permute.xlu0 %2017
        %2019 = vrot.lane.b32.xlu0 %v976, 16
        %v2020 = vpop.permute.xlu0 %2019
        %2061 = vrot.lane.b32.xlu0 %v1039, 20
        %v2062 = vpop.permute.xlu0 %2061
        %2063 = vrot.lane.b32.xlu0 %v1041, 20
        %v2064 = vpop.permute.xlu0 %2063
        %2065 = vrot.lane.b32.xlu0 %v1044, 20
        %v2066 = vpop.permute.xlu0 %2065
        %2067 = vrot.lane.b32.xlu0 %v1046, 20
        %v2068 = vpop.permute.xlu0 %2067
        %2069 = vrot.lane.b32.xlu0 %v1049, 20
        %v2070 = vpop.permute.xlu0 %2069
        %2071 = vrot.lane.b32.xlu0 %v1051, 20
        %v2072 = vpop.permute.xlu0 %2071
        %2073 = vrot.lane.b32.xlu0 %v1054, 20
        %v2074 = vpop.permute.xlu0 %2073
        %2075 = vrot.lane.b32.xlu0 %v1056, 20
        %v2076 = vpop.permute.xlu0 %2075
        %2077 = vrot.lane.b32.xlu0 %v1059, 20
        %v2078 = vpop.permute.xlu0 %2077
        %2079 = vrot.lane.b32.xlu0 %v1061, 20
        %v2080 = vpop.permute.xlu0 %2079
        %2081 = vrot.lane.b32.xlu0 %v1064, 20
        %v2082 = vpop.permute.xlu0 %2081
        %2083 = vrot.lane.b32.xlu0 %v1066, 20
        %v2084 = vpop.permute.xlu0 %2083
        %2085 = vrot.lane.b32.xlu0 %v1069, 20
        %v2086 = vpop.permute.xlu0 %2085
        %2087 = vrot.lane.b32.xlu0 %v1071, 20
        %v2088 = vpop.permute.xlu0 %2087
        %2089 = vrot.lane.b32.xlu0 %v1074, 20
        %v2090 = vpop.permute.xlu0 %2089
        %2091 = vrot.lane.b32.xlu0 %v1076, 20
        %v2092 = vpop.permute.xlu0 %2091
        %2093 = vrot.lane.b32.xlu0 %v1079, 20
        %v2094 = vpop.permute.xlu0 %2093
        %2095 = vrot.lane.b32.xlu0 %v1081, 20
        %v2096 = vpop.permute.xlu0 %2095
        %2097 = vrot.lane.b32.xlu0 %v1084, 20
        %v2098 = vpop.permute.xlu0 %2097
        %2099 = vrot.lane.b32.xlu0 %v1086, 20
        %v2100 = vpop.permute.xlu0 %2099
        %2101 = vrot.lane.b32.xlu0 %v1089, 20
        %v2102 = vpop.permute.xlu0 %2101
        %2103 = vrot.lane.b32.xlu0 %v1091, 20
        %v2104 = vpop.permute.xlu0 %2103
        %2105 = vrot.lane.b32.xlu0 %v1094, 20
        %v2106 = vpop.permute.xlu0 %2105
        %2107 = vrot.lane.b32.xlu0 %v1096, 20
        %v2108 = vpop.permute.xlu0 %2107
        %2109 = vrot.lane.b32.xlu0 %v1099, 20
        %v2110 = vpop.permute.xlu0 %2109
        %2111 = vrot.lane.b32.xlu0 %v1101, 20
        %v2112 = vpop.permute.xlu0 %2111
        %2113 = vrot.lane.b32.xlu0 %v1104, 20
        %v2114 = vpop.permute.xlu0 %2113
        %2115 = vrot.lane.b32.xlu0 %v1106, 20
        %v2116 = vpop.permute.xlu0 %2115
        %2117 = vrot.lane.b32.xlu0 %v1109, 20
        %v2118 = vpop.permute.xlu0 %2117
        %2119 = vrot.lane.b32.xlu0 %v1111, 20
        %v2120 = vpop.permute.xlu0 %2119
        %2121 = vrot.lane.b32.xlu0 %v1114, 20
        %v2122 = vpop.permute.xlu0 %2121
        %2123 = vrot.lane.b32.xlu0 %v1116, 20
        %v2124 = vpop.permute.xlu0 %2123
        %2125 = vrot.lane.b32.xlu0 %v1119, 20
        %v2126 = vpop.permute.xlu0 %2125
        %2127 = vrot.lane.b32.xlu0 %v1121, 20
        %v2128 = vpop.permute.xlu0 %2127
        %2129 = vrot.lane.b32.xlu0 %v1124, 20
        %v2130 = vpop.permute.xlu0 %2129
        %2131 = vrot.lane.b32.xlu0 %v1126, 20
        %v2132 = vpop.permute.xlu0 %2131
        %2133 = vrot.lane.b32.xlu0 %v1129, 20
        %v2134 = vpop.permute.xlu0 %2133
        %2135 = vrot.lane.b32.xlu0 %v1131, 20
        %v2136 = vpop.permute.xlu0 %2135
        %2137 = vrot.lane.b32.xlu0 %v1134, 20
        %v2138 = vpop.permute.xlu0 %2137
        %2139 = vrot.lane.b32.xlu0 %v1136, 20
        %v2140 = vpop.permute.xlu0 %2139
        %2181 = vrot.lane.b32.xlu0 %v1181, 24
        %v2182 = vpop.permute.xlu0 %2181
        %2183 = vrot.lane.b32.xlu0 %v1182, 24
        %v2184 = vpop.permute.xlu0 %2183
        %2185 = vrot.lane.b32.xlu0 %v1183, 24
        %v2186 = vpop.permute.xlu0 %2185
        %2187 = vrot.lane.b32.xlu0 %v1184, 24
        %v2188 = vpop.permute.xlu0 %2187
        %2189 = vrot.lane.b32.xlu0 %v1185, 24
        %v2190 = vpop.permute.xlu0 %2189
        %2191 = vrot.lane.b32.xlu0 %v1186, 24
        %v2192 = vpop.permute.xlu0 %2191
        %2193 = vrot.lane.b32.xlu0 %v1187, 24
        %v2194 = vpop.permute.xlu0 %2193
        %2195 = vrot.lane.b32.xlu0 %v1188, 24
        %v2196 = vpop.permute.xlu0 %2195
        %2197 = vrot.lane.b32.xlu0 %v1189, 24
        %v2198 = vpop.permute.xlu0 %2197
        %2199 = vrot.lane.b32.xlu0 %v1190, 24
        %v2200 = vpop.permute.xlu0 %2199
        %2201 = vrot.lane.b32.xlu0 %v1191, 24
        %v2202 = vpop.permute.xlu0 %2201
        %2203 = vrot.lane.b32.xlu0 %v1192, 24
        %v2204 = vpop.permute.xlu0 %2203
        %2205 = vrot.lane.b32.xlu0 %v1193, 24
        %v2206 = vpop.permute.xlu0 %2205
        %2207 = vrot.lane.b32.xlu0 %v1194, 24
        %v2208 = vpop.permute.xlu0 %2207
        %2209 = vrot.lane.b32.xlu0 %v1195, 24
        %v2210 = vpop.permute.xlu0 %2209
        %2211 = vrot.lane.b32.xlu0 %v1196, 24
        %v2212 = vpop.permute.xlu0 %2211
        %2213 = vrot.lane.b32.xlu0 %v1197, 24
        %v2214 = vpop.permute.xlu0 %2213
        %2215 = vrot.lane.b32.xlu0 %v1198, 24
        %v2216 = vpop.permute.xlu0 %2215
        %2217 = vrot.lane.b32.xlu0 %v1199, 24
        %v2218 = vpop.permute.xlu0 %2217
        %2219 = vrot.lane.b32.xlu0 %v1200, 24
        %v2220 = vpop.permute.xlu0 %2219
        %2221 = vrot.lane.b32.xlu0 %v1201, 24
        %v2222 = vpop.permute.xlu0 %2221
        %2223 = vrot.lane.b32.xlu0 %v1202, 24
        %v2224 = vpop.permute.xlu0 %2223
        %2225 = vrot.lane.b32.xlu0 %v1203, 24
        %v2226 = vpop.permute.xlu0 %2225
        %2227 = vrot.lane.b32.xlu0 %v1204, 24
        %v2228 = vpop.permute.xlu0 %2227
        %2229 = vrot.lane.b32.xlu0 %v1205, 24
        %v2230 = vpop.permute.xlu0 %2229
        %2231 = vrot.lane.b32.xlu0 %v1206, 24
        %v2232 = vpop.permute.xlu0 %2231
        %2233 = vrot.lane.b32.xlu0 %v1207, 24
        %v2234 = vpop.permute.xlu0 %2233
        %2235 = vrot.lane.b32.xlu0 %v1208, 24
        %v2236 = vpop.permute.xlu0 %2235
        %2237 = vrot.lane.b32.xlu0 %v1209, 24
        %v2238 = vpop.permute.xlu0 %2237
        %2239 = vrot.lane.b32.xlu0 %v1210, 24
        %v2240 = vpop.permute.xlu0 %2239
        %2241 = vrot.lane.b32.xlu0 %v1211, 24
        %v2242 = vpop.permute.xlu0 %2241
        %2243 = vrot.lane.b32.xlu0 %v1212, 24
        %v2244 = vpop.permute.xlu0 %2243
        %2245 = vrot.lane.b32.xlu0 %v1213, 24
        %v2246 = vpop.permute.xlu0 %2245
        %2247 = vrot.lane.b32.xlu0 %v1214, 24
        %v2248 = vpop.permute.xlu0 %2247
        %2249 = vrot.lane.b32.xlu0 %v1215, 24
        %v2250 = vpop.permute.xlu0 %2249
        %2251 = vrot.lane.b32.xlu0 %v1216, 24
        %v2252 = vpop.permute.xlu0 %2251
        %2253 = vrot.lane.b32.xlu0 %v1217, 24
        %v2254 = vpop.permute.xlu0 %2253
        %2255 = vrot.lane.b32.xlu0 %v1218, 24
        %v2256 = vpop.permute.xlu0 %2255
        %2257 = vrot.lane.b32.xlu0 %v1219, 24
        %v2258 = vpop.permute.xlu0 %2257
        %2259 = vrot.lane.b32.xlu0 %v1220, 24
        %v2260 = vpop.permute.xlu0 %2259
        %2301 = vrot.lane.b32.xlu0 %v1323, 28
        %v2302 = vpop.permute.xlu0 %2301
        %2303 = vrot.lane.b32.xlu0 %v1325, 28
        %v2304 = vpop.permute.xlu0 %2303
        %2305 = vrot.lane.b32.xlu0 %v1328, 28
        %v2306 = vpop.permute.xlu0 %2305
        %2307 = vrot.lane.b32.xlu0 %v1330, 28
        %v2308 = vpop.permute.xlu0 %2307
        %2309 = vrot.lane.b32.xlu0 %v1333, 28
        %v2310 = vpop.permute.xlu0 %2309
        %2311 = vrot.lane.b32.xlu0 %v1335, 28
        %v2312 = vpop.permute.xlu0 %2311
        %2313 = vrot.lane.b32.xlu0 %v1338, 28
        %v2314 = vpop.permute.xlu0 %2313
        %2315 = vrot.lane.b32.xlu0 %v1340, 28
        %v2316 = vpop.permute.xlu0 %2315
        %2317 = vrot.lane.b32.xlu0 %v1343, 28
        %v2318 = vpop.permute.xlu0 %2317
        %2319 = vrot.lane.b32.xlu0 %v1345, 28
        %v2320 = vpop.permute.xlu0 %2319
        %2321 = vrot.lane.b32.xlu0 %v1348, 28
        %v2322 = vpop.permute.xlu0 %2321
        %2323 = vrot.lane.b32.xlu0 %v1350, 28
        %v2324 = vpop.permute.xlu0 %2323
        %2325 = vrot.lane.b32.xlu0 %v1353, 28
        %v2326 = vpop.permute.xlu0 %2325
        %2327 = vrot.lane.b32.xlu0 %v1355, 28
        %v2328 = vpop.permute.xlu0 %2327
        %2329 = vrot.lane.b32.xlu0 %v1358, 28
        %v2330 = vpop.permute.xlu0 %2329
        %2331 = vrot.lane.b32.xlu0 %v1360, 28
        %v2332 = vpop.permute.xlu0 %2331
        %2333 = vrot.lane.b32.xlu0 %v1363, 28
        %v2334 = vpop.permute.xlu0 %2333
        %2335 = vrot.lane.b32.xlu0 %v1365, 28
        %v2336 = vpop.permute.xlu0 %2335
        %2337 = vrot.lane.b32.xlu0 %v1368, 28
        %v2338 = vpop.permute.xlu0 %2337
        %2339 = vrot.lane.b32.xlu0 %v1370, 28
        %v2340 = vpop.permute.xlu0 %2339
        %2341 = vrot.lane.b32.xlu0 %v1373, 28
        %v2342 = vpop.permute.xlu0 %2341
        %2343 = vrot.lane.b32.xlu0 %v1375, 28
        %v2344 = vpop.permute.xlu0 %2343
        %2345 = vrot.lane.b32.xlu0 %v1378, 28
        %v2346 = vpop.permute.xlu0 %2345
        %2347 = vrot.lane.b32.xlu0 %v1380, 28
        %v2348 = vpop.permute.xlu0 %2347
        %2349 = vrot.lane.b32.xlu0 %v1383, 28
        %v2350 = vpop.permute.xlu0 %2349
        %2351 = vrot.lane.b32.xlu0 %v1385, 28
        %v2352 = vpop.permute.xlu0 %2351
        %2353 = vrot.lane.b32.xlu0 %v1388, 28
        %v2354 = vpop.permute.xlu0 %2353
        %2355 = vrot.lane.b32.xlu0 %v1390, 28
        %v2356 = vpop.permute.xlu0 %2355
        %2357 = vrot.lane.b32.xlu0 %v1393, 28
        %v2358 = vpop.permute.xlu0 %2357
        %2359 = vrot.lane.b32.xlu0 %v1395, 28
        %v2360 = vpop.permute.xlu0 %2359
        %2361 = vrot.lane.b32.xlu0 %v1398, 28
        %v2362 = vpop.permute.xlu0 %2361
        %2363 = vrot.lane.b32.xlu0 %v1400, 28
        %v2364 = vpop.permute.xlu0 %2363
        %2365 = vrot.lane.b32.xlu0 %v1403, 28
        %v2366 = vpop.permute.xlu0 %2365
        %2367 = vrot.lane.b32.xlu0 %v1405, 28
        %v2368 = vpop.permute.xlu0 %2367
        %2369 = vrot.lane.b32.xlu0 %v1408, 28
        %v2370 = vpop.permute.xlu0 %2369
        %2371 = vrot.lane.b32.xlu0 %v1410, 28
        %v2372 = vpop.permute.xlu0 %2371
        %2373 = vrot.lane.b32.xlu0 %v1413, 28
        %v2374 = vpop.permute.xlu0 %2373
        %2375 = vrot.lane.b32.xlu0 %v1415, 28
        %v2376 = vpop.permute.xlu0 %2375
        %2377 = vrot.lane.b32.xlu0 %v1418, 28
        %v2378 = vpop.permute.xlu0 %2377
        %2379 = vrot.lane.b32.xlu0 %v1420, 28
        %v2380 = vpop.permute.xlu0 %2379
        %2421 = vrot.lane.b32.xlu0 %v1483, 32
        %v2422 = vpop.permute.xlu0 %2421
        %2423 = vrot.lane.b32.xlu0 %v1485, 32
        %v2424 = vpop.permute.xlu0 %2423
        %2425 = vrot.lane.b32.xlu0 %v1488, 32
        %v2426 = vpop.permute.xlu0 %2425
        %2427 = vrot.lane.b32.xlu0 %v1490, 32
        %v2428 = vpop.permute.xlu0 %2427
        %2429 = vrot.lane.b32.xlu0 %v1493, 32
        %v2430 = vpop.permute.xlu0 %2429
        %2431 = vrot.lane.b32.xlu0 %v1495, 32
        %v2432 = vpop.permute.xlu0 %2431
        %2433 = vrot.lane.b32.xlu0 %v1498, 32
        %v2434 = vpop.permute.xlu0 %2433
        %2435 = vrot.lane.b32.xlu0 %v1500, 32
        %v2436 = vpop.permute.xlu0 %2435
        %2437 = vrot.lane.b32.xlu0 %v1503, 32
        %v2438 = vpop.permute.xlu0 %2437
        %2439 = vrot.lane.b32.xlu0 %v1505, 32
        %v2440 = vpop.permute.xlu0 %2439
        %2441 = vrot.lane.b32.xlu0 %v1508, 32
        %v2442 = vpop.permute.xlu0 %2441
        %2443 = vrot.lane.b32.xlu0 %v1510, 32
        %v2444 = vpop.permute.xlu0 %2443
        %2445 = vrot.lane.b32.xlu0 %v1513, 32
        %v2446 = vpop.permute.xlu0 %2445
        %2447 = vrot.lane.b32.xlu0 %v1515, 32
        %v2448 = vpop.permute.xlu0 %2447
        %2449 = vrot.lane.b32.xlu0 %v1518, 32
        %v2450 = vpop.permute.xlu0 %2449
        %2451 = vrot.lane.b32.xlu0 %v1520, 32
        %v2452 = vpop.permute.xlu0 %2451
        %2453 = vrot.lane.b32.xlu0 %v1523, 32
        %v2454 = vpop.permute.xlu0 %2453
        %2455 = vrot.lane.b32.xlu0 %v1525, 32
        %v2456 = vpop.permute.xlu0 %2455
        %2457 = vrot.lane.b32.xlu0 %v1528, 32
        %v2458 = vpop.permute.xlu0 %2457
        %2459 = vrot.lane.b32.xlu0 %v1530, 32
        %v2460 = vpop.permute.xlu0 %2459
        %2461 = vrot.lane.b32.xlu0 %v1533, 32
        %v2462 = vpop.permute.xlu0 %2461
        %2463 = vrot.lane.b32.xlu0 %v1535, 32
        %v2464 = vpop.permute.xlu0 %2463
        %2465 = vrot.lane.b32.xlu0 %v1538, 32
        %v2466 = vpop.permute.xlu0 %2465
        %2467 = vrot.lane.b32.xlu0 %v1540, 32
        %v2468 = vpop.permute.xlu0 %2467
        %2469 = vrot.lane.b32.xlu0 %v1543, 32
        %v2470 = vpop.permute.xlu0 %2469
        %2471 = vrot.lane.b32.xlu0 %v1545, 32
        %v2472 = vpop.permute.xlu0 %2471
        %2473 = vrot.lane.b32.xlu0 %v1548, 32
        %v2474 = vpop.permute.xlu0 %2473
        %2475 = vrot.lane.b32.xlu0 %v1550, 32
        %v2476 = vpop.permute.xlu0 %2475
        %2477 = vrot.lane.b32.xlu0 %v1553, 32
        %v2478 = vpop.permute.xlu0 %2477
        %2479 = vrot.lane.b32.xlu0 %v1555, 32
        %v2480 = vpop.permute.xlu0 %2479
        %2481 = vrot.lane.b32.xlu0 %v1558, 32
        %v2482 = vpop.permute.xlu0 %2481
        %2483 = vrot.lane.b32.xlu0 %v1560, 32
        %v2484 = vpop.permute.xlu0 %2483
        %2485 = vrot.lane.b32.xlu0 %v1563, 32
        %v2486 = vpop.permute.xlu0 %2485
        %2487 = vrot.lane.b32.xlu0 %v1565, 32
        %v2488 = vpop.permute.xlu0 %2487
        %2489 = vrot.lane.b32.xlu0 %v1568, 32
        %v2490 = vpop.permute.xlu0 %2489
        %2491 = vrot.lane.b32.xlu0 %v1570, 32
        %v2492 = vpop.permute.xlu0 %2491
        %2493 = vrot.lane.b32.xlu0 %v1573, 32
        %v2494 = vpop.permute.xlu0 %2493
        %2495 = vrot.lane.b32.xlu0 %v1575, 32
        %v2496 = vpop.permute.xlu0 %2495
        %2497 = vrot.lane.b32.xlu0 %v1578, 32
        %v2498 = vpop.permute.xlu0 %2497
        %2499 = vrot.lane.b32.xlu0 %v1580, 32
        %v2500 = vpop.permute.xlu0 %2499
        %vm2541 = vcmask 31744
        %v2542 = vsel %vm2541, %v291, %v1582
        %v2543 = vsel %vm2541, %v292, %v1584
        %v2544 = vsel %vm2541, %v293, %v1586
        %v2545 = vsel %vm2541, %v294, %v1588
        %v2546 = vsel %vm2541, %v295, %v1590
        %v2547 = vsel %vm2541, %v296, %v1592
        %v2548 = vsel %vm2541, %v297, %v1594
        %v2549 = vsel %vm2541, %v298, %v1596
        %v2550 = vsel %vm2541, %v299, %v1598
        %v2551 = vsel %vm2541, %v300, %v1600
        %v2552 = vsel %vm2541, %v301, %v1602
        %v2553 = vsel %vm2541, %v302, %v1604
        %v2554 = vsel %vm2541, %v303, %v1606
        %v2555 = vsel %vm2541, %v304, %v1608
        %v2556 = vsel %vm2541, %v305, %v1610
        %v2557 = vsel %vm2541, %v306, %v1612
        %v2558 = vsel %vm2541, %v307, %v1614
        %v2559 = vsel %vm2541, %v308, %v1616
        %v2560 = vsel %vm2541, %v309, %v1618
        %v2561 = vsel %vm2541, %v310, %v1620
        %v2562 = vsel %vm2541, %v311, %v1622
        %v2563 = vsel %vm2541, %v312, %v1624
        %v2564 = vsel %vm2541, %v313, %v1626
        %v2565 = vsel %vm2541, %v314, %v1628
        %v2566 = vsel %vm2541, %v315, %v1630
        %v2567 = vsel %vm2541, %v316, %v1632
        %v2568 = vsel %vm2541, %v317, %v1634
        %v2569 = vsel %vm2541, %v318, %v1636
        %v2570 = vsel %vm2541, %v319, %v1638
        %v2571 = vsel %vm2541, %v320, %v1640
        %v2572 = vsel %vm2541, %v321, %v1642
        %v2573 = vsel %vm2541, %v322, %v1644
        %v2574 = vsel %vm2541, %v323, %v1646
        %v2575 = vsel %vm2541, %v324, %v1648
        %v2576 = vsel %vm2541, %v325, %v1650
        %v2577 = vsel %vm2541, %v326, %v1652
        %v2578 = vsel %vm2541, %v327, %v1654
        %v2579 = vsel %vm2541, %v328, %v1656
        %v2580 = vsel %vm2541, %v329, %v1658
        %v2581 = vsel %vm2541, %v330, %v1660
        %vm2582 = vcmask 64512
        %v2583 = vsel %vm2582, %v2542, %v1702
        %v2584 = vsel %vm2582, %v2543, %v1704
        %v2585 = vsel %vm2582, %v2544, %v1706
        %v2586 = vsel %vm2582, %v2545, %v1708
        %v2587 = vsel %vm2582, %v2546, %v1710
        %v2588 = vsel %vm2582, %v2547, %v1712
        %v2589 = vsel %vm2582, %v2548, %v1714
        %v2590 = vsel %vm2582, %v2549, %v1716
        %v2591 = vsel %vm2582, %v2550, %v1718
        %v2592 = vsel %vm2582, %v2551, %v1720
        %v2593 = vsel %vm2582, %v2552, %v1722
        %v2594 = vsel %vm2582, %v2553, %v1724
        %v2595 = vsel %vm2582, %v2554, %v1726
        %v2596 = vsel %vm2582, %v2555, %v1728
        %v2597 = vsel %vm2582, %v2556, %v1730
        %v2598 = vsel %vm2582, %v2557, %v1732
        %v2599 = vsel %vm2582, %v2558, %v1734
        %v2600 = vsel %vm2582, %v2559, %v1736
        %v2601 = vsel %vm2582, %v2560, %v1738
        %v2602 = vsel %vm2582, %v2561, %v1740
        %v2603 = vsel %vm2582, %v2562, %v1742
        %v2604 = vsel %vm2582, %v2563, %v1744
        %v2605 = vsel %vm2582, %v2564, %v1746
        %v2606 = vsel %vm2582, %v2565, %v1748
        %v2607 = vsel %vm2582, %v2566, %v1750
        %v2608 = vsel %vm2582, %v2567, %v1752
        %v2609 = vsel %vm2582, %v2568, %v1754
        %v2610 = vsel %vm2582, %v2569, %v1756
        %v2611 = vsel %vm2582, %v2570, %v1758
        %v2612 = vsel %vm2582, %v2571, %v1760
        %v2613 = vsel %vm2582, %v2572, %v1762
        %v2614 = vsel %vm2582, %v2573, %v1764
        %v2615 = vsel %vm2582, %v2574, %v1766
        %v2616 = vsel %vm2582, %v2575, %v1768
        %v2617 = vsel %vm2582, %v2576, %v1770
        %v2618 = vsel %vm2582, %v2577, %v1772
        %v2619 = vsel %vm2582, %v2578, %v1774
        %v2620 = vsel %vm2582, %v2579, %v1776
        %v2621 = vsel %vm2582, %v2580, %v1778
        %v2622 = vsel %vm2582, %v2581, %v1780
        %vm2623 = vcmask 97280
        %v2624 = vsel %vm2623, %v2583, %v1822
        %v2625 = vsel %vm2623, %v2584, %v1824
        %v2626 = vsel %vm2623, %v2585, %v1826
        %v2627 = vsel %vm2623, %v2586, %v1828
        %v2628 = vsel %vm2623, %v2587, %v1830
        %v2629 = vsel %vm2623, %v2588, %v1832
        %v2630 = vsel %vm2623, %v2589, %v1834
        %v2631 = vsel %vm2623, %v2590, %v1836
        %v2632 = vsel %vm2623, %v2591, %v1838
        %v2633 = vsel %vm2623, %v2592, %v1840
        %v2634 = vsel %vm2623, %v2593, %v1842
        %v2635 = vsel %vm2623, %v2594, %v1844
        %v2636 = vsel %vm2623, %v2595, %v1846
        %v2637 = vsel %vm2623, %v2596, %v1848
        %v2638 = vsel %vm2623, %v2597, %v1850
        %v2639 = vsel %vm2623, %v2598, %v1852
        %v2640 = vsel %vm2623, %v2599, %v1854
        %v2641 = vsel %vm2623, %v2600, %v1856
        %v2642 = vsel %vm2623, %v2601, %v1858
        %v2643 = vsel %vm2623, %v2602, %v1860
        %v2644 = vsel %vm2623, %v2603, %v1862
        %v2645 = vsel %vm2623, %v2604, %v1864
        %v2646 = vsel %vm2623, %v2605, %v1866
        %v2647 = vsel %vm2623, %v2606, %v1868
        %v2648 = vsel %vm2623, %v2607, %v1870
        %v2649 = vsel %vm2623, %v2608, %v1872
        %v2650 = vsel %vm2623, %v2609, %v1874
        %v2651 = vsel %vm2623, %v2610, %v1876
        %v2652 = vsel %vm2623, %v2611, %v1878
        %v2653 = vsel %vm2623, %v2612, %v1880
        %v2654 = vsel %vm2623, %v2613, %v1882
        %v2655 = vsel %vm2623, %v2614, %v1884
        %v2656 = vsel %vm2623, %v2615, %v1886
        %v2657 = vsel %vm2623, %v2616, %v1888
        %v2658 = vsel %vm2623, %v2617, %v1890
        %v2659 = vsel %vm2623, %v2618, %v1892
        %v2660 = vsel %vm2623, %v2619, %v1894
        %v2661 = vsel %vm2623, %v2620, %v1896
        %v2662 = vsel %vm2623, %v2621, %v1898
        %v2663 = vsel %vm2623, %v2622, %v1900
        %vm2664 = vcmask 130048
        %v2665 = vsel %vm2664, %v2624, %v1942
        %v2666 = vsel %vm2664, %v2625, %v1944
        %v2667 = vsel %vm2664, %v2626, %v1946
        %v2668 = vsel %vm2664, %v2627, %v1948
        %v2669 = vsel %vm2664, %v2628, %v1950
        %v2670 = vsel %vm2664, %v2629, %v1952
        %v2671 = vsel %vm2664, %v2630, %v1954
        %v2672 = vsel %vm2664, %v2631, %v1956
        %v2673 = vsel %vm2664, %v2632, %v1958
        %v2674 = vsel %vm2664, %v2633, %v1960
        %v2675 = vsel %vm2664, %v2634, %v1962
        %v2676 = vsel %vm2664, %v2635, %v1964
        %v2677 = vsel %vm2664, %v2636, %v1966
        %v2678 = vsel %vm2664, %v2637, %v1968
        %v2679 = vsel %vm2664, %v2638, %v1970
        %v2680 = vsel %vm2664, %v2639, %v1972
        %v2681 = vsel %vm2664, %v2640, %v1974
        %v2682 = vsel %vm2664, %v2641, %v1976
        %v2683 = vsel %vm2664, %v2642, %v1978
        %v2684 = vsel %vm2664, %v2643, %v1980
        %v2685 = vsel %vm2664, %v2644, %v1982
        %v2686 = vsel %vm2664, %v2645, %v1984
        %v2687 = vsel %vm2664, %v2646, %v1986
        %v2688 = vsel %vm2664, %v2647, %v1988
        %v2689 = vsel %vm2664, %v2648, %v1990
        %v2690 = vsel %vm2664, %v2649, %v1992
        %v2691 = vsel %vm2664, %v2650, %v1994
        %v2692 = vsel %vm2664, %v2651, %v1996
        %v2693 = vsel %vm2664, %v2652, %v1998
        %v2694 = vsel %vm2664, %v2653, %v2000
        %v2695 = vsel %vm2664, %v2654, %v2002
        %v2696 = vsel %vm2664, %v2655, %v2004
        %v2697 = vsel %vm2664, %v2656, %v2006
        %v2698 = vsel %vm2664, %v2657, %v2008
        %v2699 = vsel %vm2664, %v2658, %v2010
        %v2700 = vsel %vm2664, %v2659, %v2012
        %v2701 = vsel %vm2664, %v2660, %v2014
        %v2702 = vsel %vm2664, %v2661, %v2016
        %v2703 = vsel %vm2664, %v2662, %v2018
        %v2704 = vsel %vm2664, %v2663, %v2020
        %vm2705 = vcmask 162816
        %v2706 = vsel %vm2705, %v2665, %v2062
        %v2707 = vsel %vm2705, %v2666, %v2064
        %v2708 = vsel %vm2705, %v2667, %v2066
        %v2709 = vsel %vm2705, %v2668, %v2068
        %v2710 = vsel %vm2705, %v2669, %v2070
        %v2711 = vsel %vm2705, %v2670, %v2072
        %v2712 = vsel %vm2705, %v2671, %v2074
        %v2713 = vsel %vm2705, %v2672, %v2076
        %v2714 = vsel %vm2705, %v2673, %v2078
        %v2715 = vsel %vm2705, %v2674, %v2080
        %v2716 = vsel %vm2705, %v2675, %v2082
        %v2717 = vsel %vm2705, %v2676, %v2084
        %v2718 = vsel %vm2705, %v2677, %v2086
        %v2719 = vsel %vm2705, %v2678, %v2088
        %v2720 = vsel %vm2705, %v2679, %v2090
        %v2721 = vsel %vm2705, %v2680, %v2092
        %v2722 = vsel %vm2705, %v2681, %v2094
        %v2723 = vsel %vm2705, %v2682, %v2096
        %v2724 = vsel %vm2705, %v2683, %v2098
        %v2725 = vsel %vm2705, %v2684, %v2100
        %v2726 = vsel %vm2705, %v2685, %v2102
        %v2727 = vsel %vm2705, %v2686, %v2104
        %v2728 = vsel %vm2705, %v2687, %v2106
        %v2729 = vsel %vm2705, %v2688, %v2108
        %v2730 = vsel %vm2705, %v2689, %v2110
        %v2731 = vsel %vm2705, %v2690, %v2112
        %v2732 = vsel %vm2705, %v2691, %v2114
        %v2733 = vsel %vm2705, %v2692, %v2116
        %v2734 = vsel %vm2705, %v2693, %v2118
        %v2735 = vsel %vm2705, %v2694, %v2120
        %v2736 = vsel %vm2705, %v2695, %v2122
        %v2737 = vsel %vm2705, %v2696, %v2124
        %v2738 = vsel %vm2705, %v2697, %v2126
        %v2739 = vsel %vm2705, %v2698, %v2128
        %v2740 = vsel %vm2705, %v2699, %v2130
        %v2741 = vsel %vm2705, %v2700, %v2132
        %v2742 = vsel %vm2705, %v2701, %v2134
        %v2743 = vsel %vm2705, %v2702, %v2136
        %v2744 = vsel %vm2705, %v2703, %v2138
        %v2745 = vsel %vm2705, %v2704, %v2140
        %vm2746 = vcmask 195584
        %v2747 = vsel %vm2746, %v2706, %v2182
        %v2748 = vsel %vm2746, %v2707, %v2184
        %v2749 = vsel %vm2746, %v2708, %v2186
        %v2750 = vsel %vm2746, %v2709, %v2188
        %v2751 = vsel %vm2746, %v2710, %v2190
        %v2752 = vsel %vm2746, %v2711, %v2192
        %v2753 = vsel %vm2746, %v2712, %v2194
        %v2754 = vsel %vm2746, %v2713, %v2196
        %v2755 = vsel %vm2746, %v2714, %v2198
        %v2756 = vsel %vm2746, %v2715, %v2200
        %v2757 = vsel %vm2746, %v2716, %v2202
        %v2758 = vsel %vm2746, %v2717, %v2204
        %v2759 = vsel %vm2746, %v2718, %v2206
        %v2760 = vsel %vm2746, %v2719, %v2208
        %v2761 = vsel %vm2746, %v2720, %v2210
        %v2762 = vsel %vm2746, %v2721, %v2212
        %v2763 = vsel %vm2746, %v2722, %v2214
        %v2764 = vsel %vm2746, %v2723, %v2216
        %v2765 = vsel %vm2746, %v2724, %v2218
        %v2766 = vsel %vm2746, %v2725, %v2220
        %v2767 = vsel %vm2746, %v2726, %v2222
        %v2768 = vsel %vm2746, %v2727, %v2224
        %v2769 = vsel %vm2746, %v2728, %v2226
        %v2770 = vsel %vm2746, %v2729, %v2228
        %v2771 = vsel %vm2746, %v2730, %v2230
        %v2772 = vsel %vm2746, %v2731, %v2232
        %v2773 = vsel %vm2746, %v2732, %v2234
        %v2774 = vsel %vm2746, %v2733, %v2236
        %v2775 = vsel %vm2746, %v2734, %v2238
        %v2776 = vsel %vm2746, %v2735, %v2240
        %v2777 = vsel %vm2746, %v2736, %v2242
        %v2778 = vsel %vm2746, %v2737, %v2244
        %v2779 = vsel %vm2746, %v2738, %v2246
        %v2780 = vsel %vm2746, %v2739, %v2248
        %v2781 = vsel %vm2746, %v2740, %v2250
        %v2782 = vsel %vm2746, %v2741, %v2252
        %v2783 = vsel %vm2746, %v2742, %v2254
        %v2784 = vsel %vm2746, %v2743, %v2256
        %v2785 = vsel %vm2746, %v2744, %v2258
        %v2786 = vsel %vm2746, %v2745, %v2260
        %vm2787 = vcmask 228352
        %v2788 = vsel %vm2787, %v2747, %v2302
        %v2789 = vsel %vm2787, %v2748, %v2304
        %v2790 = vsel %vm2787, %v2749, %v2306
        %v2791 = vsel %vm2787, %v2750, %v2308
        %v2792 = vsel %vm2787, %v2751, %v2310
        %v2793 = vsel %vm2787, %v2752, %v2312
        %v2794 = vsel %vm2787, %v2753, %v2314
        %v2795 = vsel %vm2787, %v2754, %v2316
        %v2796 = vsel %vm2787, %v2755, %v2318
        %v2797 = vsel %vm2787, %v2756, %v2320
        %v2798 = vsel %vm2787, %v2757, %v2322
        %v2799 = vsel %vm2787, %v2758, %v2324
        %v2800 = vsel %vm2787, %v2759, %v2326
        %v2801 = vsel %vm2787, %v2760, %v2328
        %v2802 = vsel %vm2787, %v2761, %v2330
        %v2803 = vsel %vm2787, %v2762, %v2332
        %v2804 = vsel %vm2787, %v2763, %v2334
        %v2805 = vsel %vm2787, %v2764, %v2336
        %v2806 = vsel %vm2787, %v2765, %v2338
        %v2807 = vsel %vm2787, %v2766, %v2340
        %v2808 = vsel %vm2787, %v2767, %v2342
        %v2809 = vsel %vm2787, %v2768, %v2344
        %v2810 = vsel %vm2787, %v2769, %v2346
        %v2811 = vsel %vm2787, %v2770, %v2348
        %v2812 = vsel %vm2787, %v2771, %v2350
        %v2813 = vsel %vm2787, %v2772, %v2352
        %v2814 = vsel %vm2787, %v2773, %v2354
        %v2815 = vsel %vm2787, %v2774, %v2356
        %v2816 = vsel %vm2787, %v2775, %v2358
        %v2817 = vsel %vm2787, %v2776, %v2360
        %v2818 = vsel %vm2787, %v2777, %v2362
        %v2819 = vsel %vm2787, %v2778, %v2364
        %v2820 = vsel %vm2787, %v2779, %v2366
        %v2821 = vsel %vm2787, %v2780, %v2368
        %v2822 = vsel %vm2787, %v2781, %v2370
        %v2823 = vsel %vm2787, %v2782, %v2372
        %v2824 = vsel %vm2787, %v2783, %v2374
        %v2825 = vsel %vm2787, %v2784, %v2376
        %v2826 = vsel %vm2787, %v2785, %v2378
        %v2827 = vsel %vm2787, %v2786, %v2380
        %vm2828 = vcmask 261120
        %v2829 = vsel %vm2828, %v2788, %v2422
        %v2830 = vsel %vm2828, %v2789, %v2424
        %v2831 = vsel %vm2828, %v2790, %v2426
        %v2832 = vsel %vm2828, %v2791, %v2428
        %v2833 = vsel %vm2828, %v2792, %v2430
        %v2834 = vsel %vm2828, %v2793, %v2432
        %v2835 = vsel %vm2828, %v2794, %v2434
        %v2836 = vsel %vm2828, %v2795, %v2436
        %v2837 = vsel %vm2828, %v2796, %v2438
        %v2838 = vsel %vm2828, %v2797, %v2440
        %v2839 = vsel %vm2828, %v2798, %v2442
        %v2840 = vsel %vm2828, %v2799, %v2444
        %v2841 = vsel %vm2828, %v2800, %v2446
        %v2842 = vsel %vm2828, %v2801, %v2448
        %v2843 = vsel %vm2828, %v2802, %v2450
        %v2844 = vsel %vm2828, %v2803, %v2452
        %v2845 = vsel %vm2828, %v2804, %v2454
        %v2846 = vsel %vm2828, %v2805, %v2456
        %v2847 = vsel %vm2828, %v2806, %v2458
        %v2848 = vsel %vm2828, %v2807, %v2460
        %v2849 = vsel %vm2828, %v2808, %v2462
        %v2850 = vsel %vm2828, %v2809, %v2464
        %v2851 = vsel %vm2828, %v2810, %v2466
        %v2852 = vsel %vm2828, %v2811, %v2468
        %v2853 = vsel %vm2828, %v2812, %v2470
        %v2854 = vsel %vm2828, %v2813, %v2472
        %v2855 = vsel %vm2828, %v2814, %v2474
        %v2856 = vsel %vm2828, %v2815, %v2476
        %v2857 = vsel %vm2828, %v2816, %v2478
        %v2858 = vsel %vm2828, %v2817, %v2480
        %v2859 = vsel %vm2828, %v2818, %v2482
        %v2860 = vsel %vm2828, %v2819, %v2484
        %v2861 = vsel %vm2828, %v2820, %v2486
        %v2862 = vsel %vm2828, %v2821, %v2488
        %v2863 = vsel %vm2828, %v2822, %v2490
        %v2864 = vsel %vm2828, %v2823, %v2492
        %v2865 = vsel %vm2828, %v2824, %v2494
        %v2866 = vsel %vm2828, %v2825, %v2496
        %v2867 = vsel %vm2828, %v2826, %v2498
        %v2868 = vsel %vm2828, %v2827, %v2500
        %v2869 = vpack.c.bf16 %v2830, %v2829
        %v2870 = vpack.c.bf16 %v2832, %v2831
        %v2871 = vpack.c.bf16 %v2834, %v2833
        %v2872 = vpack.c.bf16 %v2836, %v2835
        %v2873 = vpack.c.bf16 %v2838, %v2837
        %v2874 = vpack.c.bf16 %v2840, %v2839
        %v2875 = vpack.c.bf16 %v2842, %v2841
        %v2876 = vpack.c.bf16 %v2844, %v2843
        %v2877 = vpack.c.bf16 %v2846, %v2845
        %v2878 = vpack.c.bf16 %v2848, %v2847
        %v2879 = vpack.c.bf16 %v2850, %v2849
        %v2880 = vpack.c.bf16 %v2852, %v2851
        %v2881 = vpack.c.bf16 %v2854, %v2853
        %v2882 = vpack.c.bf16 %v2856, %v2855
        %v2883 = vpack.c.bf16 %v2858, %v2857
        %v2884 = vpack.c.bf16 %v2860, %v2859
        %v2885 = vpack.c.bf16 %v2862, %v2861
        %v2886 = vpack.c.bf16 %v2864, %v2863
        %v2887 = vpack.c.bf16 %v2866, %v2865
        %v2888 = vpack.c.bf16 %v2868, %v2867
        %v2889 = vld [vmem:[%s1] sm:$0xf]
        %v2890 = vld [vmem:[%s1 + $0x4] sm:$0xf]
        %v2891 = vld [vmem:[%s1 + $0x8] sm:$0xf]
        %v2892 = vld [vmem:[%s1 + $0xc] sm:$0xf]
        %v2893 = vld [vmem:[%s1 + $0x10] sm:$0x3]
        %v2899 = vunpack.c.l.b16 %v2889
        %v2900 = vunpack.c.l.b16 %v2890
        %v2901 = vunpack.c.l.b16 %v2891
        %v2902 = vunpack.c.l.b16 %v2892
        %v2903 = vunpack.c.l.b16 %v2893
        %v2904 = vpack.c.b16 %v2900, %v2899
        %v2905 = vpack.c.b16 %v2902, %v2901
        %v2906 = vpack.c.b16 %v2903, %v2903
        %vm2909 = vcmask 293888
        %v2911 = vsel %vm2909, %v2869, 0
        %v2914 = vsel %vm2909, %v2870, 0
        %v2917 = vsel %vm2909, %v2871, 0
        %v2920 = vsel %vm2909, %v2872, 0
        %v2923 = vsel %vm2909, %v2873, 0
        %v2926 = vsel %vm2909, %v2874, 0
        %v2929 = vsel %vm2909, %v2875, 0
        %v2932 = vsel %vm2909, %v2876, 0
        %v2935 = vsel %vm2909, %v2877, 0
        %v2938 = vsel %vm2909, %v2878, 0
        %v2941 = vsel %vm2909, %v2879, 0
        %v2944 = vsel %vm2909, %v2880, 0
        %v2947 = vsel %vm2909, %v2881, 0
        %v2950 = vsel %vm2909, %v2882, 0
        %v2953 = vsel %vm2909, %v2883, 0
        %v2956 = vsel %vm2909, %v2884, 0
        %v2959 = vsel %vm2909, %v2885, 0
        %v2962 = vsel %vm2909, %v2886, 0
        %v2965 = vsel %vm2909, %v2887, 0
        %v2968 = vsel %vm2909, %v2888, 0
        %vm2970 = vcmask 1041408
        %v2972 = vsel %vm2970, %v2906, 0
        %2974 = vmatprep.subr.bf16.mxu0 0
        %2975 = vmatpush1.bf16.msra.mxu0 0
        %2976 = vmatprep.subr.bf16.mxu0 0
        %2977 = vmatpush1.bf16.msra.mxu0 0
        %2978 = vmatprep.subr.bf16.mxu0 0
        %2979 = vmatpush1.bf16.msra.mxu0 0
        %2980 = vmatprep.subr.bf16.mxu0 0
        %2981 = vmatpush1.bf16.msra.mxu0 0
        %2982 = vmatprep.subr.bf16.mxu0 0
        %2983 = vmatpush1.bf16.msra.mxu0 0
        %2984 = vmatprep.subr.bf16.mxu0 0
        %2985 = vmatpush1.bf16.msra.mxu0 %v2972
        %2986 = vmatprep.subr.bf16.mxu0 0
        %2987 = vmatpush1.bf16.msra.mxu0 %v2905
        %2988 = vmatprep.subr.bf16.mxu0 0
        %2989 = vmatpush1.bf16.msra.mxu0 %v2904
        %2990 = vmatprep.subr.bf16.mxu0 0
        %2991 = vmatpush2.bf16.msra.mxu0 0
        %2992 = vmatprep.subr.bf16.mxu0 0
        %2993 = vmatpush2.bf16.msra.mxu0 0
        %2994 = vmatprep.subr.bf16.mxu0 0
        %2995 = vmatpush2.bf16.msra.mxu0 0
        %2996 = vmatprep.subr.bf16.mxu0 0
        %2997 = vmatpush2.bf16.msra.mxu0 0
        %2998 = vmatprep.subr.bf16.mxu0 0
        %2999 = vmatpush2.bf16.msra.mxu0 0
        %3000 = vmatprep.subr.bf16.mxu0 0
        %3001 = vmatpush2.bf16.msra.mxu0 0
        %3002 = vmatprep.subr.bf16.mxu0 0
        %3003 = vmatpush2.bf16.msra.mxu0 0
        %3004 = vmatprep.subr.bf16.mxu0 0
        %3005 = vmatpush2.bf16.msra.mxu0 0
        %3006 = vmatprep.mubr.bf16.mxu0 0
        %3007 = vmatmul.mubr.bf16.gmra.mxu0 %v2911
        %v3008 = vpop.f32.mrf.mxu0
        %v3009 = vadd.f32 0.0, %v3008
        %v3010 = vpop.f32.mrf.mxu0
        %v3011 = vpop.f32.mrf.mxu0
        %v3012 = vadd.f32 0.0, %v3011
        %v3013 = vpop.f32.mrf.mxu0
        %3014 = vmatprep.mubr.bf16.mxu0 0
        %3015 = vmatmul.mubr.bf16.gmra.mxu0 %v2914
        %v3016 = vpop.f32.mrf.mxu0
        %v3017 = vadd.f32 0.0, %v3016
        %v3018 = vpop.f32.mrf.mxu0
        %v3019 = vpop.f32.mrf.mxu0
        %v3020 = vadd.f32 0.0, %v3019
        %v3021 = vpop.f32.mrf.mxu0
        %3022 = vmatprep.mubr.bf16.mxu0 0
        %3023 = vmatmul.mubr.bf16.gmra.mxu0 %v2917
        %v3024 = vpop.f32.mrf.mxu0
        %v3025 = vadd.f32 0.0, %v3024
        %v3026 = vpop.f32.mrf.mxu0
        %v3027 = vpop.f32.mrf.mxu0
        %v3028 = vadd.f32 0.0, %v3027
        %v3029 = vpop.f32.mrf.mxu0
        %3030 = vmatprep.mubr.bf16.mxu0 0
        %3031 = vmatmul.mubr.bf16.gmra.mxu0 %v2920
        %v3032 = vpop.f32.mrf.mxu0
        %v3033 = vadd.f32 0.0, %v3032
        %v3034 = vpop.f32.mrf.mxu0
        %v3035 = vpop.f32.mrf.mxu0
        %v3036 = vadd.f32 0.0, %v3035
        %v3037 = vpop.f32.mrf.mxu0
        %3038 = vmatprep.mubr.bf16.mxu0 0
        %3039 = vmatmul.mubr.bf16.gmra.mxu0 %v2923
        %v3040 = vpop.f32.mrf.mxu0
        %v3041 = vadd.f32 0.0, %v3040
        %v3042 = vpop.f32.mrf.mxu0
        %v3043 = vpop.f32.mrf.mxu0
        %v3044 = vadd.f32 0.0, %v3043
        %v3045 = vpop.f32.mrf.mxu0
        %3046 = vmatprep.mubr.bf16.mxu0 0
        %3047 = vmatmul.mubr.bf16.gmra.mxu0 %v2926
        %v3048 = vpop.f32.mrf.mxu0
        %v3049 = vadd.f32 0.0, %v3048
        %v3050 = vpop.f32.mrf.mxu0
        %v3051 = vpop.f32.mrf.mxu0
        %v3052 = vadd.f32 0.0, %v3051
        %v3053 = vpop.f32.mrf.mxu0
        %3054 = vmatprep.mubr.bf16.mxu0 0
        %3055 = vmatmul.mubr.bf16.gmra.mxu0 %v2929
        %v3056 = vpop.f32.mrf.mxu0
        %v3057 = vadd.f32 0.0, %v3056
        %v3058 = vpop.f32.mrf.mxu0
        %v3059 = vpop.f32.mrf.mxu0
        %v3060 = vadd.f32 0.0, %v3059
        %v3061 = vpop.f32.mrf.mxu0
        %3062 = vmatprep.mubr.bf16.mxu0 0
        %3063 = vmatmul.mubr.bf16.gmra.mxu0 %v2932
        %v3064 = vpop.f32.mrf.mxu0
        %v3065 = vadd.f32 0.0, %v3064
        %v3066 = vpop.f32.mrf.mxu0
        %v3067 = vpop.f32.mrf.mxu0
        %v3068 = vadd.f32 0.0, %v3067
        %v3069 = vpop.f32.mrf.mxu0
        %3070 = vmatprep.mubr.bf16.mxu0 0
        %3071 = vmatmul.mubr.bf16.gmra.mxu0 %v2935
        %v3072 = vpop.f32.mrf.mxu0
        %v3073 = vadd.f32 0.0, %v3072
        %v3074 = vpop.f32.mrf.mxu0
        %v3075 = vpop.f32.mrf.mxu0
        %v3076 = vadd.f32 0.0, %v3075
        %v3077 = vpop.f32.mrf.mxu0
        %3078 = vmatprep.mubr.bf16.mxu0 0
        %3079 = vmatmul.mubr.bf16.gmra.mxu0 %v2938
        %v3080 = vpop.f32.mrf.mxu0
        %v3081 = vadd.f32 0.0, %v3080
        %v3082 = vpop.f32.mrf.mxu0
        %v3083 = vpop.f32.mrf.mxu0
        %v3084 = vadd.f32 0.0, %v3083
        %v3085 = vpop.f32.mrf.mxu0
        %3086 = vmatprep.mubr.bf16.mxu0 0
        %3087 = vmatmul.mubr.bf16.gmra.mxu0 %v2941
        %v3088 = vpop.f32.mrf.mxu0
        %v3089 = vadd.f32 0.0, %v3088
        %v3090 = vpop.f32.mrf.mxu0
        %v3091 = vpop.f32.mrf.mxu0
        %v3092 = vadd.f32 0.0, %v3091
        %v3093 = vpop.f32.mrf.mxu0
        %3094 = vmatprep.mubr.bf16.mxu0 0
        %3095 = vmatmul.mubr.bf16.gmra.mxu0 %v2944
        %v3096 = vpop.f32.mrf.mxu0
        %v3097 = vadd.f32 0.0, %v3096
        %v3098 = vpop.f32.mrf.mxu0
        %v3099 = vpop.f32.mrf.mxu0
        %v3100 = vadd.f32 0.0, %v3099
        %v3101 = vpop.f32.mrf.mxu0
        %3102 = vmatprep.mubr.bf16.mxu0 0
        %3103 = vmatmul.mubr.bf16.gmra.mxu0 %v2947
        %v3104 = vpop.f32.mrf.mxu0
        %v3105 = vadd.f32 0.0, %v3104
        %v3106 = vpop.f32.mrf.mxu0
        %v3107 = vpop.f32.mrf.mxu0
        %v3108 = vadd.f32 0.0, %v3107
        %v3109 = vpop.f32.mrf.mxu0
        %3110 = vmatprep.mubr.bf16.mxu0 0
        %3111 = vmatmul.mubr.bf16.gmra.mxu0 %v2950
        %v3112 = vpop.f32.mrf.mxu0
        %v3113 = vadd.f32 0.0, %v3112
        %v3114 = vpop.f32.mrf.mxu0
        %v3115 = vpop.f32.mrf.mxu0
        %v3116 = vadd.f32 0.0, %v3115
        %v3117 = vpop.f32.mrf.mxu0
        %3118 = vmatprep.mubr.bf16.mxu0 0
        %3119 = vmatmul.mubr.bf16.gmra.mxu0 %v2953
        %v3120 = vpop.f32.mrf.mxu0
        %v3121 = vadd.f32 0.0, %v3120
        %v3122 = vpop.f32.mrf.mxu0
        %v3123 = vpop.f32.mrf.mxu0
        %v3124 = vadd.f32 0.0, %v3123
        %v3125 = vpop.f32.mrf.mxu0
        %3126 = vmatprep.mubr.bf16.mxu0 0
        %3127 = vmatmul.mubr.bf16.gmra.mxu0 %v2956
        %v3128 = vpop.f32.mrf.mxu0
        %v3129 = vadd.f32 0.0, %v3128
        %v3130 = vpop.f32.mrf.mxu0
        %v3131 = vpop.f32.mrf.mxu0
        %v3132 = vadd.f32 0.0, %v3131
        %v3133 = vpop.f32.mrf.mxu0
        %3134 = vmatprep.mubr.bf16.mxu0 0
        %3135 = vmatmul.mubr.bf16.gmra.mxu0 %v2959
        %v3136 = vpop.f32.mrf.mxu0
        %v3137 = vadd.f32 0.0, %v3136
        %v3138 = vpop.f32.mrf.mxu0
        %v3139 = vpop.f32.mrf.mxu0
        %v3140 = vadd.f32 0.0, %v3139
        %v3141 = vpop.f32.mrf.mxu0
        %3142 = vmatprep.mubr.bf16.mxu0 0
        %3143 = vmatmul.mubr.bf16.gmra.mxu0 %v2962
        %v3144 = vpop.f32.mrf.mxu0
        %v3145 = vadd.f32 0.0, %v3144
        %v3146 = vpop.f32.mrf.mxu0
        %v3147 = vpop.f32.mrf.mxu0
        %v3148 = vadd.f32 0.0, %v3147
        %v3149 = vpop.f32.mrf.mxu0
        %3150 = vmatprep.mubr.bf16.mxu0 0
        %3151 = vmatmul.mubr.bf16.gmra.mxu0 %v2965
        %v3152 = vpop.f32.mrf.mxu0
        %v3153 = vadd.f32 0.0, %v3152
        %v3154 = vpop.f32.mrf.mxu0
        %v3155 = vpop.f32.mrf.mxu0
        %v3156 = vadd.f32 0.0, %v3155
        %v3157 = vpop.f32.mrf.mxu0
        %3158 = vmatprep.mubr.bf16.mxu0 0
        %3159 = vmatmul.mubr.bf16.gmra.mxu0 %v2968
        %v3160 = vpop.f32.mrf.mxu0
        %v3161 = vadd.f32 0.0, %v3160
        %v3162 = vpop.f32.mrf.mxu0
        %v3163 = vpop.f32.mrf.mxu0
        %v3164 = vadd.f32 0.0, %v3163
        %v3165 = vpop.f32.mrf.mxu0
        %3166 = vdwg.mxu0
        %v3167 = vlaneseq
        %v3168 = vshrl.u32 %v3167, 7
        %v3169 = vsub.s32 0, %v3168
        %v3170 = vrot.slane %v242, %v3169
        %v3171 = vmul.f32 %v3009, %v3170
        %v3172 = vmul.f32 %v3012, %v3170
        %v3173 = vmul.f32 %v3017, %v3170
        %v3174 = vmul.f32 %v3020, %v3170
        %v3175 = vmul.f32 %v3025, %v3170
        %v3176 = vmul.f32 %v3028, %v3170
        %v3177 = vmul.f32 %v3033, %v3170
        %v3178 = vmul.f32 %v3036, %v3170
        %v3179 = vmul.f32 %v3041, %v3170
        %v3180 = vmul.f32 %v3044, %v3170
        %v3181 = vmul.f32 %v3049, %v3170
        %v3182 = vmul.f32 %v3052, %v3170
        %v3183 = vmul.f32 %v3057, %v3170
        %v3184 = vmul.f32 %v3060, %v3170
        %v3185 = vmul.f32 %v3065, %v3170
        %v3186 = vmul.f32 %v3068, %v3170
        %v3187 = vmul.f32 %v3073, %v3170
        %v3188 = vmul.f32 %v3076, %v3170
        %v3189 = vmul.f32 %v3081, %v3170
        %v3190 = vmul.f32 %v3084, %v3170
        %v3191 = vmul.f32 %v3089, %v3170
        %v3192 = vmul.f32 %v3092, %v3170
        %v3193 = vmul.f32 %v3097, %v3170
        %v3194 = vmul.f32 %v3100, %v3170
        %v3195 = vmul.f32 %v3105, %v3170
        %v3196 = vmul.f32 %v3108, %v3170
        %v3197 = vmul.f32 %v3113, %v3170
        %v3198 = vmul.f32 %v3116, %v3170
        %v3199 = vmul.f32 %v3121, %v3170
        %v3200 = vmul.f32 %v3124, %v3170
        %v3201 = vmul.f32 %v3129, %v3170
        %v3202 = vmul.f32 %v3132, %v3170
        %v3203 = vmul.f32 %v3137, %v3170
        %v3204 = vmul.f32 %v3140, %v3170
        %v3205 = vmul.f32 %v3145, %v3170
        %v3206 = vmul.f32 %v3148, %v3170
        %v3207 = vmul.f32 %v3153, %v3170
        %v3208 = vmul.f32 %v3156, %v3170
        %v3209 = vmul.f32 %v3161, %v3170
        %v3210 = vmul.f32 %v3164, %v3170
        %v3211 = vlaneseq
        %v3212 = vshrl.u32 %v3211, 7
        %v3213 = vsub.s32 0, %v3212
        %v3214 = vrot.slane %v243, %v3213
        %v3215 = vadd.f32 %v3171, %v3214
        %v3216 = vadd.f32 %v3172, %v3214
        %v3217 = vadd.f32 %v3173, %v3214
        %v3218 = vadd.f32 %v3174, %v3214
        %v3219 = vadd.f32 %v3175, %v3214
        %v3220 = vadd.f32 %v3176, %v3214
        %v3221 = vadd.f32 %v3177, %v3214
        %v3222 = vadd.f32 %v3178, %v3214
        %v3223 = vadd.f32 %v3179, %v3214
        %v3224 = vadd.f32 %v3180, %v3214
        %v3225 = vadd.f32 %v3181, %v3214
        %v3226 = vadd.f32 %v3182, %v3214
        %v3227 = vadd.f32 %v3183, %v3214
        %v3228 = vadd.f32 %v3184, %v3214
        %v3229 = vadd.f32 %v3185, %v3214
        %v3230 = vadd.f32 %v3186, %v3214
        %v3231 = vadd.f32 %v3187, %v3214
        %v3232 = vadd.f32 %v3188, %v3214
        %v3233 = vadd.f32 %v3189, %v3214
        %v3234 = vadd.f32 %v3190, %v3214
        %v3235 = vadd.f32 %v3191, %v3214
        %v3236 = vadd.f32 %v3192, %v3214
        %v3237 = vadd.f32 %v3193, %v3214
        %v3238 = vadd.f32 %v3194, %v3214
        %v3239 = vadd.f32 %v3195, %v3214
        %v3240 = vadd.f32 %v3196, %v3214
        %v3241 = vadd.f32 %v3197, %v3214
        %v3242 = vadd.f32 %v3198, %v3214
        %v3243 = vadd.f32 %v3199, %v3214
        %v3244 = vadd.f32 %v3200, %v3214
        %v3245 = vadd.f32 %v3201, %v3214
        %v3246 = vadd.f32 %v3202, %v3214
        %v3247 = vadd.f32 %v3203, %v3214
        %v3248 = vadd.f32 %v3204, %v3214
        %v3249 = vadd.f32 %v3205, %v3214
        %v3250 = vadd.f32 %v3206, %v3214
        %v3251 = vadd.f32 %v3207, %v3214
        %v3252 = vadd.f32 %v3208, %v3214
        %v3253 = vadd.f32 %v3209, %v3214
        %v3254 = vadd.f32 %v3210, %v3214
        %v3255 = vmax.f32 %v3215, 0.0
        %v3256 = vmax.f32 %v3216, 0.0
        %v3257 = vmax.f32 %v3217, 0.0
        %v3258 = vmax.f32 %v3218, 0.0
        %v3259 = vmax.f32 %v3219, 0.0
        %v3260 = vmax.f32 %v3220, 0.0
        %v3261 = vmax.f32 %v3221, 0.0
        %v3262 = vmax.f32 %v3222, 0.0
        %v3263 = vmax.f32 %v3223, 0.0
        %v3264 = vmax.f32 %v3224, 0.0
        %v3265 = vmax.f32 %v3225, 0.0
        %v3266 = vmax.f32 %v3226, 0.0
        %v3267 = vmax.f32 %v3227, 0.0
        %v3268 = vmax.f32 %v3228, 0.0
        %v3269 = vmax.f32 %v3229, 0.0
        %v3270 = vmax.f32 %v3230, 0.0
        %v3271 = vmax.f32 %v3231, 0.0
        %v3272 = vmax.f32 %v3232, 0.0
        %v3273 = vmax.f32 %v3233, 0.0
        %v3274 = vmax.f32 %v3234, 0.0
        %v3275 = vmax.f32 %v3235, 0.0
        %v3276 = vmax.f32 %v3236, 0.0
        %v3277 = vmax.f32 %v3237, 0.0
        %v3278 = vmax.f32 %v3238, 0.0
        %v3279 = vmax.f32 %v3239, 0.0
        %v3280 = vmax.f32 %v3240, 0.0
        %v3281 = vmax.f32 %v3241, 0.0
        %v3282 = vmax.f32 %v3242, 0.0
        %v3283 = vmax.f32 %v3243, 0.0
        %v3284 = vmax.f32 %v3244, 0.0
        %v3285 = vmax.f32 %v3245, 0.0
        %v3286 = vmax.f32 %v3246, 0.0
        %v3287 = vmax.f32 %v3247, 0.0
        %v3288 = vmax.f32 %v3248, 0.0
        %v3289 = vmax.f32 %v3249, 0.0
        %v3290 = vmax.f32 %v3250, 0.0
        %v3291 = vmax.f32 %v3251, 0.0
        %v3292 = vmax.f32 %v3252, 0.0
        %v3293 = vmax.f32 %v3253, 0.0
        %v3294 = vmax.f32 %v3254, 0.0
        %vm3295 = vcmask 57344
        %vm3296 = vsmask.f32 256
        %vm3297 = vmand %vm3295, %vm3296
        %v3298 = vld [vmem:[#allocation2] sm:$0x1]
        %v3299 = vsel %vm3297, 0, %v3298
        %3300 = vst [vmem:[#allocation2] sm:$0x1] %v3299
        %v3301 = vld [vmem:[#allocation2 + $0xc] sm:$0x1]
        %v3302 = vsel %vm3297, 0, %v3301
        %3303 = vst [vmem:[#allocation2 + $0xc] sm:$0x1] %v3302
        %v3304 = vld [vmem:[#allocation2 + $0x18] sm:$0x1]
        %v3305 = vsel %vm3297, 0, %v3304
        %3306 = vst [vmem:[#allocation2 + $0x18] sm:$0x1] %v3305
        %v3307 = vld [vmem:[#allocation2 + $0x24] sm:$0x1]
        %v3308 = vsel %vm3297, 0, %v3307
        %3309 = vst [vmem:[#allocation2 + $0x24] sm:$0x1] %v3308
        %v3310 = vld [vmem:[#allocation2 + $0x30] sm:$0x1]
        %v3311 = vsel %vm3297, 0, %v3310
        %3312 = vst [vmem:[#allocation2 + $0x30] sm:$0x1] %v3311
        %v3313 = vld [vmem:[#allocation2 + $0x3c] sm:$0x1]
        %v3314 = vsel %vm3297, 0, %v3313
        %3315 = vst [vmem:[#allocation2 + $0x3c] sm:$0x1] %v3314
        %v3316 = vld [vmem:[#allocation2 + $0x48] sm:$0x1]
        %v3317 = vsel %vm3297, 0, %v3316
        %3318 = vst [vmem:[#allocation2 + $0x48] sm:$0x1] %v3317
        %v3319 = vld [vmem:[#allocation2 + $0x54] sm:$0x1]
        %v3320 = vsel %vm3297, 0, %v3319
        %3321 = vst [vmem:[#allocation2 + $0x54] sm:$0x1] %v3320
        %v3322 = vld [vmem:[#allocation2 + $0x60] sm:$0x1]
        %v3323 = vsel %vm3297, 0, %v3322
        %3324 = vst [vmem:[#allocation2 + $0x60] sm:$0x1] %v3323
        %v3325 = vld [vmem:[#allocation2 + $0x6c] sm:$0x1]
        %v3326 = vsel %vm3297, 0, %v3325
        %3327 = vst [vmem:[#allocation2 + $0x6c] sm:$0x1] %v3326
        %v3328 = vld [vmem:[#allocation2 + $0x78] sm:$0x1]
        %v3329 = vsel %vm3297, 0, %v3328
        %3330 = vst [vmem:[#allocation2 + $0x78] sm:$0x1] %v3329
        %v3331 = vld [vmem:[#allocation2 + $0x84] sm:$0x1]
        %v3332 = vsel %vm3297, 0, %v3331
        %3333 = vst [vmem:[#allocation2 + $0x84] sm:$0x1] %v3332
        %v3334 = vld [vmem:[#allocation2 + $0x90] sm:$0x1]
        %v3335 = vsel %vm3297, 0, %v3334
        %3336 = vst [vmem:[#allocation2 + $0x90] sm:$0x1] %v3335
        %v3337 = vld [vmem:[#allocation2 + $0x9c] sm:$0x1]
        %v3338 = vsel %vm3297, 0, %v3337
        %3339 = vst [vmem:[#allocation2 + $0x9c] sm:$0x1] %v3338
        %v3340 = vld [vmem:[#allocation2 + $0xa8] sm:$0x1]
        %v3341 = vsel %vm3297, 0, %v3340
        %3342 = vst [vmem:[#allocation2 + $0xa8] sm:$0x1] %v3341
        %v3343 = vld [vmem:[#allocation2 + $0xb4] sm:$0x1]
        %v3344 = vsel %vm3297, 0, %v3343
        %3345 = vst [vmem:[#allocation2 + $0xb4] sm:$0x1] %v3344
        %v3346 = vld [vmem:[#allocation2 + $0xc0] sm:$0x1]
        %v3347 = vsel %vm3297, 0, %v3346
        %3348 = vst [vmem:[#allocation2 + $0xc0] sm:$0x1] %v3347
        %v3349 = vld [vmem:[#allocation2 + $0xcc] sm:$0x1]
        %v3350 = vsel %vm3297, 0, %v3349
        %3351 = vst [vmem:[#allocation2 + $0xcc] sm:$0x1] %v3350
        %v3352 = vld [vmem:[#allocation2 + $0xd8] sm:$0x1]
        %v3353 = vsel %vm3297, 0, %v3352
        %3354 = vst [vmem:[#allocation2 + $0xd8] sm:$0x1] %v3353
        %v3355 = vld [vmem:[#allocation2 + $0xe4] sm:$0x1]
        %v3356 = vsel %vm3297, 0, %v3355
        %3357 = vst [vmem:[#allocation2 + $0xe4] sm:$0x1] %v3356
        %vm3358 = vsmask.f32 7938
        %vm3359 = vmand %vm3295, %vm3358
        %v3360 = vld [vmem:[#allocation2 + $0x8] sm:$0x1]
        %v3361 = vsel %vm3359, 0, %v3360
        %3362 = vst [vmem:[#allocation2 + $0x8] sm:$0x1] %v3361
        %v3363 = vld [vmem:[#allocation2 + $0x14] sm:$0x1]
        %v3364 = vsel %vm3359, 0, %v3363
        %3365 = vst [vmem:[#allocation2 + $0x14] sm:$0x1] %v3364
        %v3366 = vld [vmem:[#allocation2 + $0x20] sm:$0x1]
        %v3367 = vsel %vm3359, 0, %v3366
        %3368 = vst [vmem:[#allocation2 + $0x20] sm:$0x1] %v3367
        %v3369 = vld [vmem:[#allocation2 + $0x2c] sm:$0x1]
        %v3370 = vsel %vm3359, 0, %v3369
        %3371 = vst [vmem:[#allocation2 + $0x2c] sm:$0x1] %v3370
        %v3372 = vld [vmem:[#allocation2 + $0x38] sm:$0x1]
        %v3373 = vsel %vm3359, 0, %v3372
        %3374 = vst [vmem:[#allocation2 + $0x38] sm:$0x1] %v3373
        %v3375 = vld [vmem:[#allocation2 + $0x44] sm:$0x1]
        %v3376 = vsel %vm3359, 0, %v3375
        %3377 = vst [vmem:[#allocation2 + $0x44] sm:$0x1] %v3376
        %v3378 = vld [vmem:[#allocation2 + $0x50] sm:$0x1]
        %v3379 = vsel %vm3359, 0, %v3378
        %3380 = vst [vmem:[#allocation2 + $0x50] sm:$0x1] %v3379
        %v3381 = vld [vmem:[#allocation2 + $0x5c] sm:$0x1]
        %v3382 = vsel %vm3359, 0, %v3381
        %3383 = vst [vmem:[#allocation2 + $0x5c] sm:$0x1] %v3382
        %v3384 = vld [vmem:[#allocation2 + $0x68] sm:$0x1]
        %v3385 = vsel %vm3359, 0, %v3384
        %3386 = vst [vmem:[#allocation2 + $0x68] sm:$0x1] %v3385
        %v3387 = vld [vmem:[#allocation2 + $0x74] sm:$0x1]
        %v3388 = vsel %vm3359, 0, %v3387
        %3389 = vst [vmem:[#allocation2 + $0x74] sm:$0x1] %v3388
        %v3390 = vld [vmem:[#allocation2 + $0x80] sm:$0x1]
        %v3391 = vsel %vm3359, 0, %v3390
        %3392 = vst [vmem:[#allocation2 + $0x80] sm:$0x1] %v3391
        %v3393 = vld [vmem:[#allocation2 + $0x8c] sm:$0x1]
        %v3394 = vsel %vm3359, 0, %v3393
        %3395 = vst [vmem:[#allocation2 + $0x8c] sm:$0x1] %v3394
        %v3396 = vld [vmem:[#allocation2 + $0x98] sm:$0x1]
        %v3397 = vsel %vm3359, 0, %v3396
        %3398 = vst [vmem:[#allocation2 + $0x98] sm:$0x1] %v3397
        %v3399 = vld [vmem:[#allocation2 + $0xa4] sm:$0x1]
        %v3400 = vsel %vm3359, 0, %v3399
        %3401 = vst [vmem:[#allocation2 + $0xa4] sm:$0x1] %v3400
        %v3402 = vld [vmem:[#allocation2 + $0xb0] sm:$0x1]
        %v3403 = vsel %vm3359, 0, %v3402
        %3404 = vst [vmem:[#allocation2 + $0xb0] sm:$0x1] %v3403
        %v3405 = vld [vmem:[#allocation2 + $0xbc] sm:$0x1]
        %v3406 = vsel %vm3359, 0, %v3405
        %3407 = vst [vmem:[#allocation2 + $0xbc] sm:$0x1] %v3406
        %v3408 = vld [vmem:[#allocation2 + $0xc8] sm:$0x1]
        %v3409 = vsel %vm3359, 0, %v3408
        %3410 = vst [vmem:[#allocation2 + $0xc8] sm:$0x1] %v3409
        %v3411 = vld [vmem:[#allocation2 + $0xd4] sm:$0x1]
        %v3412 = vsel %vm3359, 0, %v3411
        %3413 = vst [vmem:[#allocation2 + $0xd4] sm:$0x1] %v3412
        %v3414 = vld [vmem:[#allocation2 + $0xe0] sm:$0x1]
        %v3415 = vsel %vm3359, 0, %v3414
        %3416 = vst [vmem:[#allocation2 + $0xe0] sm:$0x1] %v3415
        %v3417 = vld [vmem:[#allocation2 + $0xec] sm:$0x1]
        %v3418 = vsel %vm3359, 0, %v3417
        %3419 = vst [vmem:[#allocation2 + $0xec] sm:$0x1] %v3418
        %v3420 = vpack.c.bf16 %v3256, %v3255
        %v3421 = vpack.c.bf16 %v3258, %v3257
        %v3422 = vpack.c.bf16 %v3260, %v3259
        %v3423 = vpack.c.bf16 %v3262, %v3261
        %v3424 = vpack.c.bf16 %v3264, %v3263
        %v3425 = vpack.c.bf16 %v3266, %v3265
        %v3426 = vpack.c.bf16 %v3268, %v3267
        %v3427 = vpack.c.bf16 %v3270, %v3269
        %v3428 = vpack.c.bf16 %v3272, %v3271
        %v3429 = vpack.c.bf16 %v3274, %v3273
        %v3430 = vpack.c.bf16 %v3276, %v3275
        %v3431 = vpack.c.bf16 %v3278, %v3277
        %v3432 = vpack.c.bf16 %v3280, %v3279
        %v3433 = vpack.c.bf16 %v3282, %v3281
        %v3434 = vpack.c.bf16 %v3284, %v3283
        %v3435 = vpack.c.bf16 %v3286, %v3285
        %v3436 = vpack.c.bf16 %v3288, %v3287
        %v3437 = vpack.c.bf16 %v3290, %v3289
        %v3438 = vpack.c.bf16 %v3292, %v3291
        %v3439 = vpack.c.bf16 %v3294, %v3293
        %v3460 = vunpack.c.l.b16 %v3420
        %v3461 = vunpack.c.h.b16 %v3420
        %v3462 = vunpack.c.l.b16 %v3421
        %v3463 = vunpack.c.h.b16 %v3421
        %v3464 = vunpack.c.l.b16 %v3422
        %v3465 = vunpack.c.h.b16 %v3422
        %v3466 = vunpack.c.l.b16 %v3423
        %v3467 = vunpack.c.h.b16 %v3423
        %v3468 = vunpack.c.l.b16 %v3424
        %v3469 = vunpack.c.h.b16 %v3424
        %v3470 = vunpack.c.l.b16 %v3425
        %v3471 = vunpack.c.h.b16 %v3425
        %v3472 = vunpack.c.l.b16 %v3426
        %v3473 = vunpack.c.h.b16 %v3426
        %v3474 = vunpack.c.l.b16 %v3427
        %v3475 = vunpack.c.h.b16 %v3427
        %v3476 = vunpack.c.l.b16 %v3428
        %v3477 = vunpack.c.h.b16 %v3428
        %v3478 = vunpack.c.l.b16 %v3429
        %v3479 = vunpack.c.h.b16 %v3429
        %v3480 = vunpack.c.l.b16 %v3430
        %v3481 = vunpack.c.h.b16 %v3430
        %v3482 = vunpack.c.l.b16 %v3431
        %v3483 = vunpack.c.h.b16 %v3431
        %v3484 = vunpack.c.l.b16 %v3432
        %v3485 = vunpack.c.h.b16 %v3432
        %v3486 = vunpack.c.l.b16 %v3433
        %v3487 = vunpack.c.h.b16 %v3433
        %v3488 = vunpack.c.l.b16 %v3434
        %v3489 = vunpack.c.h.b16 %v3434
        %v3490 = vunpack.c.l.b16 %v3435
        %v3491 = vunpack.c.h.b16 %v3435
        %v3492 = vunpack.c.l.b16 %v3436
        %v3493 = vunpack.c.h.b16 %v3436
        %v3494 = vunpack.c.l.b16 %v3437
        %v3495 = vunpack.c.h.b16 %v3437
        %v3496 = vunpack.c.l.b16 %v3438
        %v3497 = vunpack.c.h.b16 %v3438
        %v3498 = vunpack.c.l.b16 %v3439
        %v3499 = vunpack.c.h.b16 %v3439
        %v3500 = vpack.c.b16 %v3460, %v3460
        %v3501 = vpack.c.b16 %v3461, %v3461
        %v3502 = vpack.c.b16 %v3462, %v3462
        %v3503 = vpack.c.b16 %v3463, %v3463
        %v3504 = vpack.c.b16 %v3464, %v3464
        %v3505 = vpack.c.b16 %v3465, %v3465
        %v3506 = vpack.c.b16 %v3466, %v3466
        %v3507 = vpack.c.b16 %v3467, %v3467
        %v3508 = vpack.c.b16 %v3468, %v3468
        %v3509 = vpack.c.b16 %v3469, %v3469
        %v3510 = vpack.c.b16 %v3470, %v3470
        %v3511 = vpack.c.b16 %v3471, %v3471
        %v3512 = vpack.c.b16 %v3472, %v3472
        %v3513 = vpack.c.b16 %v3473, %v3473
        %v3514 = vpack.c.b16 %v3474, %v3474
        %v3515 = vpack.c.b16 %v3475, %v3475
        %v3516 = vpack.c.b16 %v3476, %v3476
        %v3517 = vpack.c.b16 %v3477, %v3477
        %v3518 = vpack.c.b16 %v3478, %v3478
        %v3519 = vpack.c.b16 %v3479, %v3479
        %v3520 = vpack.c.b16 %v3480, %v3480
        %v3521 = vpack.c.b16 %v3481, %v3481
        %v3522 = vpack.c.b16 %v3482, %v3482
        %v3523 = vpack.c.b16 %v3483, %v3483
        %v3524 = vpack.c.b16 %v3484, %v3484
        %v3525 = vpack.c.b16 %v3485, %v3485
        %v3526 = vpack.c.b16 %v3486, %v3486
        %v3527 = vpack.c.b16 %v3487, %v3487
        %v3528 = vpack.c.b16 %v3488, %v3488
        %v3529 = vpack.c.b16 %v3489, %v3489
        %v3530 = vpack.c.b16 %v3490, %v3490
        %v3531 = vpack.c.b16 %v3491, %v3491
        %v3532 = vpack.c.b16 %v3492, %v3492
        %v3533 = vpack.c.b16 %v3493, %v3493
        %v3534 = vpack.c.b16 %v3494, %v3494
        %v3535 = vpack.c.b16 %v3495, %v3495
        %v3536 = vpack.c.b16 %v3496, %v3496
        %v3537 = vpack.c.b16 %v3497, %v3497
        %v3538 = vpack.c.b16 %v3498, %v3498
        %v3539 = vpack.c.b16 %v3499, %v3499
        %vm3540 = vsmask.f32 4368
        %vm3541 = vmor %vm3296, %vm3540
        %v3543 = vshrl.u32 %v3500, 16
        %v3545 = vrot.slane %v3543, 7
        %v3546 = vshll.u32 %v3500, 16
        %v3548 = vor.u32 %v3545, %v3546
        %v3549 = vrot.slane %v3545, 4
        %v3551 = vshrl.u32 %v3501, 16
        %v3553 = vrot.slane %v3551, 7
        %v3554 = vshll.u32 %v3501, 16
        %v3556 = vor.u32 %v3553, %v3554
        %v3557 = vsel %vm3541, %v3549, %v3556
        %v3558 = vrot.slane %v3553, 4
        %v3560 = vshrl.u32 %v3502, 16
        %v3562 = vrot.slane %v3560, 7
        %v3563 = vshll.u32 %v3502, 16
        %v3565 = vor.u32 %v3562, %v3563
        %v3566 = vrot.slane %v3562, 4
        %v3568 = vshrl.u32 %v3503, 16
        %v3570 = vrot.slane %v3568, 7
        %v3571 = vshll.u32 %v3503, 16
        %v3573 = vor.u32 %v3570, %v3571
        %v3574 = vsel %vm3541, %v3566, %v3573
        %v3575 = vrot.slane %v3570, 4
        %v3577 = vshrl.u32 %v3504, 16
        %v3579 = vrot.slane %v3577, 7
        %v3580 = vshll.u32 %v3504, 16
        %v3582 = vor.u32 %v3579, %v3580
        %v3583 = vrot.slane %v3579, 4
        %v3585 = vshrl.u32 %v3505, 16
        %v3587 = vrot.slane %v3585, 7
        %v3588 = vshll.u32 %v3505, 16
        %v3590 = vor.u32 %v3587, %v3588
        %v3591 = vsel %vm3541, %v3583, %v3590
        %v3592 = vrot.slane %v3587, 4
        %v3594 = vshrl.u32 %v3506, 16
        %v3596 = vrot.slane %v3594, 7
        %v3597 = vshll.u32 %v3506, 16
        %v3599 = vor.u32 %v3596, %v3597
        %v3600 = vrot.slane %v3596, 4
        %v3602 = vshrl.u32 %v3507, 16
        %v3604 = vrot.slane %v3602, 7
        %v3605 = vshll.u32 %v3507, 16
        %v3607 = vor.u32 %v3604, %v3605
        %v3608 = vsel %vm3541, %v3600, %v3607
        %v3609 = vrot.slane %v3604, 4
        %v3611 = vshrl.u32 %v3508, 16
        %v3613 = vrot.slane %v3611, 7
        %v3614 = vshll.u32 %v3508, 16
        %v3616 = vor.u32 %v3613, %v3614
        %v3617 = vrot.slane %v3613, 4
        %v3619 = vshrl.u32 %v3509, 16
        %v3621 = vrot.slane %v3619, 7
        %v3622 = vshll.u32 %v3509, 16
        %v3624 = vor.u32 %v3621, %v3622
        %v3625 = vsel %vm3541, %v3617, %v3624
        %v3626 = vrot.slane %v3621, 4
        %v3628 = vshrl.u32 %v3510, 16
        %v3630 = vrot.slane %v3628, 7
        %v3631 = vshll.u32 %v3510, 16
        %v3633 = vor.u32 %v3630, %v3631
        %v3634 = vrot.slane %v3630, 4
        %v3636 = vshrl.u32 %v3511, 16
        %v3638 = vrot.slane %v3636, 7
        %v3639 = vshll.u32 %v3511, 16
        %v3641 = vor.u32 %v3638, %v3639
        %v3642 = vsel %vm3541, %v3634, %v3641
        %v3643 = vrot.slane %v3638, 4
        %v3645 = vshrl.u32 %v3512, 16
        %v3647 = vrot.slane %v3645, 7
        %v3648 = vshll.u32 %v3512, 16
        %v3650 = vor.u32 %v3647, %v3648
        %v3651 = vrot.slane %v3647, 4
        %v3653 = vshrl.u32 %v3513, 16
        %v3655 = vrot.slane %v3653, 7
        %v3656 = vshll.u32 %v3513, 16
        %v3658 = vor.u32 %v3655, %v3656
        %v3659 = vsel %vm3541, %v3651, %v3658
        %v3660 = vrot.slane %v3655, 4
        %v3662 = vshrl.u32 %v3514, 16
        %v3664 = vrot.slane %v3662, 7
        %v3665 = vshll.u32 %v3514, 16
        %v3667 = vor.u32 %v3664, %v3665
        %v3668 = vrot.slane %v3664, 4
        %v3670 = vshrl.u32 %v3515, 16
        %v3672 = vrot.slane %v3670, 7
        %v3673 = vshll.u32 %v3515, 16
        %v3675 = vor.u32 %v3672, %v3673
        %v3676 = vsel %vm3541, %v3668, %v3675
        %v3677 = vrot.slane %v3672, 4
        %v3679 = vshrl.u32 %v3516, 16
        %v3681 = vrot.slane %v3679, 7
        %v3682 = vshll.u32 %v3516, 16
        %v3684 = vor.u32 %v3681, %v3682
        %v3685 = vrot.slane %v3681, 4
        %v3687 = vshrl.u32 %v3517, 16
        %v3689 = vrot.slane %v3687, 7
        %v3690 = vshll.u32 %v3517, 16
        %v3692 = vor.u32 %v3689, %v3690
        %v3693 = vsel %vm3541, %v3685, %v3692
        %v3694 = vrot.slane %v3689, 4
        %v3696 = vshrl.u32 %v3518, 16
        %v3698 = vrot.slane %v3696, 7
        %v3699 = vshll.u32 %v3518, 16
        %v3701 = vor.u32 %v3698, %v3699
        %v3702 = vrot.slane %v3698, 4
        %v3704 = vshrl.u32 %v3519, 16
        %v3706 = vrot.slane %v3704, 7
        %v3707 = vshll.u32 %v3519, 16
        %v3709 = vor.u32 %v3706, %v3707
        %v3710 = vsel %vm3541, %v3702, %v3709
        %v3711 = vrot.slane %v3706, 4
        %v3713 = vshrl.u32 %v3520, 16
        %v3715 = vrot.slane %v3713, 7
        %v3716 = vshll.u32 %v3520, 16
        %v3718 = vor.u32 %v3715, %v3716
        %v3719 = vrot.slane %v3715, 4
        %v3721 = vshrl.u32 %v3521, 16
        %v3723 = vrot.slane %v3721, 7
        %v3724 = vshll.u32 %v3521, 16
        %v3726 = vor.u32 %v3723, %v3724
        %v3727 = vsel %vm3541, %v3719, %v3726
        %v3728 = vrot.slane %v3723, 4
        %v3730 = vshrl.u32 %v3522, 16
        %v3732 = vrot.slane %v3730, 7
        %v3733 = vshll.u32 %v3522, 16
        %v3735 = vor.u32 %v3732, %v3733
        %v3736 = vrot.slane %v3732, 4
        %v3738 = vshrl.u32 %v3523, 16
        %v3740 = vrot.slane %v3738, 7
        %v3741 = vshll.u32 %v3523, 16
        %v3743 = vor.u32 %v3740, %v3741
        %v3744 = vsel %vm3541, %v3736, %v3743
        %v3745 = vrot.slane %v3740, 4
        %v3747 = vshrl.u32 %v3524, 16
        %v3749 = vrot.slane %v3747, 7
        %v3750 = vshll.u32 %v3524, 16
        %v3752 = vor.u32 %v3749, %v3750
        %v3753 = vrot.slane %v3749, 4
        %v3755 = vshrl.u32 %v3525, 16
        %v3757 = vrot.slane %v3755, 7
        %v3758 = vshll.u32 %v3525, 16
        %v3760 = vor.u32 %v3757, %v3758
        %v3761 = vsel %vm3541, %v3753, %v3760
        %v3762 = vrot.slane %v3757, 4
        %v3764 = vshrl.u32 %v3526, 16
        %v3766 = vrot.slane %v3764, 7
        %v3767 = vshll.u32 %v3526, 16
        %v3769 = vor.u32 %v3766, %v3767
        %v3770 = vrot.slane %v3766, 4
        %v3772 = vshrl.u32 %v3527, 16
        %v3774 = vrot.slane %v3772, 7
        %v3775 = vshll.u32 %v3527, 16
        %v3777 = vor.u32 %v3774, %v3775
        %v3778 = vsel %vm3541, %v3770, %v3777
        %v3779 = vrot.slane %v3774, 4
        %v3781 = vshrl.u32 %v3528, 16
        %v3783 = vrot.slane %v3781, 7
        %v3784 = vshll.u32 %v3528, 16
        %v3786 = vor.u32 %v3783, %v3784
        %v3787 = vrot.slane %v3783, 4
        %v3789 = vshrl.u32 %v3529, 16
        %v3791 = vrot.slane %v3789, 7
        %v3792 = vshll.u32 %v3529, 16
        %v3794 = vor.u32 %v3791, %v3792
        %v3795 = vsel %vm3541, %v3787, %v3794
        %v3796 = vrot.slane %v3791, 4
        %v3798 = vshrl.u32 %v3530, 16
        %v3800 = vrot.slane %v3798, 7
        %v3801 = vshll.u32 %v3530, 16
        %v3803 = vor.u32 %v3800, %v3801
        %v3804 = vrot.slane %v3800, 4
        %v3806 = vshrl.u32 %v3531, 16
        %v3808 = vrot.slane %v3806, 7
        %v3809 = vshll.u32 %v3531, 16
        %v3811 = vor.u32 %v3808, %v3809
        %v3812 = vsel %vm3541, %v3804, %v3811
        %v3813 = vrot.slane %v3808, 4
        %v3815 = vshrl.u32 %v3532, 16
        %v3817 = vrot.slane %v3815, 7
        %v3818 = vshll.u32 %v3532, 16
        %v3820 = vor.u32 %v3817, %v3818
        %v3821 = vrot.slane %v3817, 4
        %v3823 = vshrl.u32 %v3533, 16
        %v3825 = vrot.slane %v3823, 7
        %v3826 = vshll.u32 %v3533, 16
        %v3828 = vor.u32 %v3825, %v3826
        %v3829 = vsel %vm3541, %v3821, %v3828
        %v3830 = vrot.slane %v3825, 4
        %v3832 = vshrl.u32 %v3534, 16
        %v3834 = vrot.slane %v3832, 7
        %v3835 = vshll.u32 %v3534, 16
        %v3837 = vor.u32 %v3834, %v3835
        %v3838 = vrot.slane %v3834, 4
        %v3840 = vshrl.u32 %v3535, 16
        %v3842 = vrot.slane %v3840, 7
        %v3843 = vshll.u32 %v3535, 16
        %v3845 = vor.u32 %v3842, %v3843
        %v3846 = vsel %vm3541, %v3838, %v3845
        %v3847 = vrot.slane %v3842, 4
        %v3849 = vshrl.u32 %v3536, 16
        %v3851 = vrot.slane %v3849, 7
        %v3852 = vshll.u32 %v3536, 16
        %v3854 = vor.u32 %v3851, %v3852
        %v3855 = vrot.slane %v3851, 4
        %v3857 = vshrl.u32 %v3537, 16
        %v3859 = vrot.slane %v3857, 7
        %v3860 = vshll.u32 %v3537, 16
        %v3862 = vor.u32 %v3859, %v3860
        %v3863 = vsel %vm3541, %v3855, %v3862
        %v3864 = vrot.slane %v3859, 4
        %v3866 = vshrl.u32 %v3538, 16
        %v3868 = vrot.slane %v3866, 7
        %v3869 = vshll.u32 %v3538, 16
        %v3871 = vor.u32 %v3868, %v3869
        %v3872 = vrot.slane %v3868, 4
        %v3874 = vshrl.u32 %v3539, 16
        %v3876 = vrot.slane %v3874, 7
        %v3877 = vshll.u32 %v3539, 16
        %v3879 = vor.u32 %v3876, %v3877
        %v3880 = vsel %vm3541, %v3872, %v3879
        %v3881 = vrot.slane %v3876, 4
        %vm3942 = vcmask 60416
        %vm3943 = vmand %vm3942, %vm3358
        %v3944 = vld [vmem:[#allocation2] sm:$0xf]
        %v3945 = vsel %vm3943, %v3548, %v3944
        %3946 = vst [vmem:[#allocation2] sm:$0xf] %v3945
        %vm3947 = vcmask 60416
        %3948 = vst.msk [vmem:[#allocation2 + $0x4] sm:$0xf] %vm3947, %v3557
        %v3949 = vld [vmem:[#allocation2 + $0x8] sm:$0x1]
        %v3950 = vsel %vm3297, %v3558, %v3949
        %3951 = vst [vmem:[#allocation2 + $0x8] sm:$0x1] %v3950
        %v3952 = vld [vmem:[#allocation2 + $0xc] sm:$0xf]
        %v3953 = vsel %vm3943, %v3565, %v3952
        %3954 = vst [vmem:[#allocation2 + $0xc] sm:$0xf] %v3953
        %3955 = vst.msk [vmem:[#allocation2 + $0x10] sm:$0xf] %vm3947, %v3574
        %v3956 = vld [vmem:[#allocation2 + $0x14] sm:$0x1]
        %v3957 = vsel %vm3297, %v3575, %v3956
        %3958 = vst [vmem:[#allocation2 + $0x14] sm:$0x1] %v3957
        %v3959 = vld [vmem:[#allocation2 + $0x18] sm:$0xf]
        %v3960 = vsel %vm3943, %v3582, %v3959
        %3961 = vst [vmem:[#allocation2 + $0x18] sm:$0xf] %v3960
        %3962 = vst.msk [vmem:[#allocation2 + $0x1c] sm:$0xf] %vm3947, %v3591
        %v3963 = vld [vmem:[#allocation2 + $0x20] sm:$0x1]
        %v3964 = vsel %vm3297, %v3592, %v3963
        %3965 = vst [vmem:[#allocation2 + $0x20] sm:$0x1] %v3964
        %v3966 = vld [vmem:[#allocation2 + $0x24] sm:$0xf]
        %v3967 = vsel %vm3943, %v3599, %v3966
        %3968 = vst [vmem:[#allocation2 + $0x24] sm:$0xf] %v3967
        %3969 = vst.msk [vmem:[#allocation2 + $0x28] sm:$0xf] %vm3947, %v3608
        %v3970 = vld [vmem:[#allocation2 + $0x2c] sm:$0x1]
        %v3971 = vsel %vm3297, %v3609, %v3970
        %3972 = vst [vmem:[#allocation2 + $0x2c] sm:$0x1] %v3971
        %v3973 = vld [vmem:[#allocation2 + $0x30] sm:$0xf]
        %v3974 = vsel %vm3943, %v3616, %v3973
        %3975 = vst [vmem:[#allocation2 + $0x30] sm:$0xf] %v3974
        %3976 = vst.msk [vmem:[#allocation2 + $0x34] sm:$0xf] %vm3947, %v3625
        %v3977 = vld [vmem:[#allocation2 + $0x38] sm:$0x1]
        %v3978 = vsel %vm3297, %v3626, %v3977
        %3979 = vst [vmem:[#allocation2 + $0x38] sm:$0x1] %v3978
        %v3980 = vld [vmem:[#allocation2 + $0x3c] sm:$0xf]
        %v3981 = vsel %vm3943, %v3633, %v3980
        %3982 = vst [vmem:[#allocation2 + $0x3c] sm:$0xf] %v3981
        %3983 = vst.msk [vmem:[#allocation2 + $0x40] sm:$0xf] %vm3947, %v3642
        %v3984 = vld [vmem:[#allocation2 + $0x44] sm:$0x1]
        %v3985 = vsel %vm3297, %v3643, %v3984
        %3986 = vst [vmem:[#allocation2 + $0x44] sm:$0x1] %v3985
        %v3987 = vld [vmem:[#allocation2 + $0x48] sm:$0xf]
        %v3988 = vsel %vm3943, %v3650, %v3987
        %3989 = vst [vmem:[#allocation2 + $0x48] sm:$0xf] %v3988
        %3990 = vst.msk [vmem:[#allocation2 + $0x4c] sm:$0xf] %vm3947, %v3659
        %v3991 = vld [vmem:[#allocation2 + $0x50] sm:$0x1]
        %v3992 = vsel %vm3297, %v3660, %v3991
        %3993 = vst [vmem:[#allocation2 + $0x50] sm:$0x1] %v3992
        %v3994 = vld [vmem:[#allocation2 + $0x54] sm:$0xf]
        %v3995 = vsel %vm3943, %v3667, %v3994
        %3996 = vst [vmem:[#allocation2 + $0x54] sm:$0xf] %v3995
        %3997 = vst.msk [vmem:[#allocation2 + $0x58] sm:$0xf] %vm3947, %v3676
        %v3998 = vld [vmem:[#allocation2 + $0x5c] sm:$0x1]
        %v3999 = vsel %vm3297, %v3677, %v3998
        %4000 = vst [vmem:[#allocation2 + $0x5c] sm:$0x1] %v3999
        %v4001 = vld [vmem:[#allocation2 + $0x60] sm:$0xf]
        %v4002 = vsel %vm3943, %v3684, %v4001
        %4003 = vst [vmem:[#allocation2 + $0x60] sm:$0xf] %v4002
        %4004 = vst.msk [vmem:[#allocation2 + $0x64] sm:$0xf] %vm3947, %v3693
        %v4005 = vld [vmem:[#allocation2 + $0x68] sm:$0x1]
        %v4006 = vsel %vm3297, %v3694, %v4005
        %4007 = vst [vmem:[#allocation2 + $0x68] sm:$0x1] %v4006
        %v4008 = vld [vmem:[#allocation2 + $0x6c] sm:$0xf]
        %v4009 = vsel %vm3943, %v3701, %v4008
        %4010 = vst [vmem:[#allocation2 + $0x6c] sm:$0xf] %v4009
        %4011 = vst.msk [vmem:[#allocation2 + $0x70] sm:$0xf] %vm3947, %v3710
        %v4012 = vld [vmem:[#allocation2 + $0x74] sm:$0x1]
        %v4013 = vsel %vm3297, %v3711, %v4012
        %4014 = vst [vmem:[#allocation2 + $0x74] sm:$0x1] %v4013
        %v4015 = vld [vmem:[#allocation2 + $0x78] sm:$0xf]
        %v4016 = vsel %vm3943, %v3718, %v4015
        %4017 = vst [vmem:[#allocation2 + $0x78] sm:$0xf] %v4016
        %4018 = vst.msk [vmem:[#allocation2 + $0x7c] sm:$0xf] %vm3947, %v3727
        %v4019 = vld [vmem:[#allocation2 + $0x80] sm:$0x1]
        %v4020 = vsel %vm3297, %v3728, %v4019
        %4021 = vst [vmem:[#allocation2 + $0x80] sm:$0x1] %v4020
        %v4022 = vld [vmem:[#allocation2 + $0x84] sm:$0xf]
        %v4023 = vsel %vm3943, %v3735, %v4022
        %4024 = vst [vmem:[#allocation2 + $0x84] sm:$0xf] %v4023
        %4025 = vst.msk [vmem:[#allocation2 + $0x88] sm:$0xf] %vm3947, %v3744
        %v4026 = vld [vmem:[#allocation2 + $0x8c] sm:$0x1]
        %v4027 = vsel %vm3297, %v3745, %v4026
        %4028 = vst [vmem:[#allocation2 + $0x8c] sm:$0x1] %v4027
        %v4029 = vld [vmem:[#allocation2 + $0x90] sm:$0xf]
        %v4030 = vsel %vm3943, %v3752, %v4029
        %4031 = vst [vmem:[#allocation2 + $0x90] sm:$0xf] %v4030
        %4032 = vst.msk [vmem:[#allocation2 + $0x94] sm:$0xf] %vm3947, %v3761
        %v4033 = vld [vmem:[#allocation2 + $0x98] sm:$0x1]
        %v4034 = vsel %vm3297, %v3762, %v4033
        %4035 = vst [vmem:[#allocation2 + $0x98] sm:$0x1] %v4034
        %v4036 = vld [vmem:[#allocation2 + $0x9c] sm:$0xf]
        %v4037 = vsel %vm3943, %v3769, %v4036
        %4038 = vst [vmem:[#allocation2 + $0x9c] sm:$0xf] %v4037
        %4039 = vst.msk [vmem:[#allocation2 + $0xa0] sm:$0xf] %vm3947, %v3778
        %v4040 = vld [vmem:[#allocation2 + $0xa4] sm:$0x1]
        %v4041 = vsel %vm3297, %v3779, %v4040
        %4042 = vst [vmem:[#allocation2 + $0xa4] sm:$0x1] %v4041
        %v4043 = vld [vmem:[#allocation2 + $0xa8] sm:$0xf]
        %v4044 = vsel %vm3943, %v3786, %v4043
        %4045 = vst [vmem:[#allocation2 + $0xa8] sm:$0xf] %v4044
        %4046 = vst.msk [vmem:[#allocation2 + $0xac] sm:$0xf] %vm3947, %v3795
        %v4047 = vld [vmem:[#allocation2 + $0xb0] sm:$0x1]
        %v4048 = vsel %vm3297, %v3796, %v4047
        %4049 = vst [vmem:[#allocation2 + $0xb0] sm:$0x1] %v4048
        %v4050 = vld [vmem:[#allocation2 + $0xb4] sm:$0xf]
        %v4051 = vsel %vm3943, %v3803, %v4050
        %4052 = vst [vmem:[#allocation2 + $0xb4] sm:$0xf] %v4051
        %4053 = vst.msk [vmem:[#allocation2 + $0xb8] sm:$0xf] %vm3947, %v3812
        %v4054 = vld [vmem:[#allocation2 + $0xbc] sm:$0x1]
        %v4055 = vsel %vm3297, %v3813, %v4054
        %4056 = vst [vmem:[#allocation2 + $0xbc] sm:$0x1] %v4055
        %v4057 = vld [vmem:[#allocation2 + $0xc0] sm:$0xf]
        %v4058 = vsel %vm3943, %v3820, %v4057
        %4059 = vst [vmem:[#allocation2 + $0xc0] sm:$0xf] %v4058
        %4060 = vst.msk [vmem:[#allocation2 + $0xc4] sm:$0xf] %vm3947, %v3829
        %v4061 = vld [vmem:[#allocation2 + $0xc8] sm:$0x1]
        %v4062 = vsel %vm3297, %v3830, %v4061
        %4063 = vst [vmem:[#allocation2 + $0xc8] sm:$0x1] %v4062
        %v4064 = vld [vmem:[#allocation2 + $0xcc] sm:$0xf]
        %v4065 = vsel %vm3943, %v3837, %v4064
        %4066 = vst [vmem:[#allocation2 + $0xcc] sm:$0xf] %v4065
        %4067 = vst.msk [vmem:[#allocation2 + $0xd0] sm:$0xf] %vm3947, %v3846
        %v4068 = vld [vmem:[#allocation2 + $0xd4] sm:$0x1]
        %v4069 = vsel %vm3297, %v3847, %v4068
        %4070 = vst [vmem:[#allocation2 + $0xd4] sm:$0x1] %v4069
        %v4071 = vld [vmem:[#allocation2 + $0xd8] sm:$0xf]
        %v4072 = vsel %vm3943, %v3854, %v4071
        %4073 = vst [vmem:[#allocation2 + $0xd8] sm:$0xf] %v4072
        %4074 = vst.msk [vmem:[#allocation2 + $0xdc] sm:$0xf] %vm3947, %v3863
        %v4075 = vld [vmem:[#allocation2 + $0xe0] sm:$0x1]
        %v4076 = vsel %vm3297, %v3864, %v4075
        %4077 = vst [vmem:[#allocation2 + $0xe0] sm:$0x1] %v4076
        %v4078 = vld [vmem:[#allocation2 + $0xe4] sm:$0xf]
        %v4079 = vsel %vm3943, %v3871, %v4078
        %4080 = vst [vmem:[#allocation2 + $0xe4] sm:$0xf] %v4079
        %4081 = vst.msk [vmem:[#allocation2 + $0xe8] sm:$0xf] %vm3947, %v3880
        %v4082 = vld [vmem:[#allocation2 + $0xec] sm:$0x1]
        %v4083 = vsel %vm3297, %v3881, %v4082
        %4084 = vst [vmem:[#allocation2 + $0xec] sm:$0x1] %v4083
        %p4085 = scmp.eq.s32.totalorder %s21, 0
        // Predicated region
        $region41: #{resnet_block.1} parent=39 // pred_check
          %p4086 = pneg %p4085
        $region42: #{resnet_block.1} parent=39 // pred_check_branch
          %4088 = sbr.rel (%p4086) target = $region44
        $region43: #{resnet_block.1} parent=39 // pred_region
          %4089 = vst.msk [vmem:[#allocation2] sm:$0xf] %vm3947, 0
          %4090 = vst.msk [vmem:[#allocation2 + $0x4] sm:$0xf] %vm3947, 0
          %vm4091 = vcmask 57344
          %4092 = vst.msk [vmem:[#allocation2 + $0x8] sm:$0x1] %vm4091, 0
          %4093 = vst.msk [vmem:[#allocation2 + $0x78] sm:$0xf] %vm3947, 0
          %4094 = vst.msk [vmem:[#allocation2 + $0x7c] sm:$0xf] %vm3947, 0
          %4095 = vst.msk [vmem:[#allocation2 + $0x80] sm:$0x1] %vm4091, 0
        $region44: #{resnet_block.1} parent=39 // pred_fallthru
          _
        %p4096 = scmp.eq.s32.totalorder %s21, 1
        // Predicated region
        $region45: #{resnet_block.1} parent=39 // pred_check
          %p4097 = pneg %p4096
        $region46: #{resnet_block.1} parent=39 // pred_check_branch
          %4099 = sbr.rel (%p4097) target = $region48
        $region47: #{resnet_block.1} parent=39 // pred_region
          %s4100 = scalar_lea.vmem [#allocation2], 108
          %4101 = vst.msk [vmem:[%s4100] sm:$0xf] %vm3947, 0
          %4102 = vst.msk [vmem:[%s4100 + $0x4] sm:$0xf] %vm3947, 0
          %vm4103 = vcmask 57344
          %4104 = vst.msk [vmem:[%s4100 + $0x8] sm:$0x1] %vm4103, 0
          %4105 = vst.msk [vmem:[%s4100 + $0x78] sm:$0xf] %vm3947, 0
          %4106 = vst.msk [vmem:[%s4100 + $0x7c] sm:$0xf] %vm3947, 0
          %4107 = vst.msk [vmem:[%s4100 + $0x80] sm:$0x1] %vm4103, 0
        $region48: #{resnet_block.1} parent=39 // pred_fallthru
          _
        %v4108 = vld [vmem:[#allocation2] sm:$0xf]
        %v4109 = vld [vmem:[#allocation2 + $0x4] sm:$0xf]
        %v4110 = vld [vmem:[#allocation2 + $0xc] sm:$0xf]
        %v4111 = vld [vmem:[#allocation2 + $0x10] sm:$0xf]
        %v4112 = vld [vmem:[#allocation2 + $0x18] sm:$0xf]
        %v4113 = vld [vmem:[#allocation2 + $0x1c] sm:$0xf]
        %v4114 = vld [vmem:[#allocation2 + $0x24] sm:$0xf]
        %v4115 = vld [vmem:[#allocation2 + $0x28] sm:$0xf]
        %v4116 = vld [vmem:[#allocation2 + $0x30] sm:$0xf]
        %v4117 = vld [vmem:[#allocation2 + $0x34] sm:$0xf]
        %v4118 = vld [vmem:[#allocation2 + $0x3c] sm:$0xf]
        %v4119 = vld [vmem:[#allocation2 + $0x40] sm:$0xf]
        %v4120 = vld [vmem:[#allocation2 + $0x48] sm:$0xf]
        %v4121 = vld [vmem:[#allocation2 + $0x4c] sm:$0xf]
        %v4122 = vld [vmem:[#allocation2 + $0x54] sm:$0xf]
        %v4123 = vld [vmem:[#allocation2 + $0x58] sm:$0xf]
        %v4124 = vld [vmem:[#allocation2 + $0x78] sm:$0xf]
        %v4125 = vld [vmem:[#allocation2 + $0x7c] sm:$0xf]
        %v4126 = vld [vmem:[#allocation2 + $0x84] sm:$0xf]
        %v4127 = vld [vmem:[#allocation2 + $0x88] sm:$0xf]
        %v4128 = vld [vmem:[#allocation2 + $0x90] sm:$0xf]
        %v4129 = vld [vmem:[#allocation2 + $0x94] sm:$0xf]
        %v4130 = vld [vmem:[#allocation2 + $0x9c] sm:$0xf]
        %v4131 = vld [vmem:[#allocation2 + $0xa0] sm:$0xf]
        %v4132 = vld [vmem:[#allocation2 + $0xa8] sm:$0xf]
        %v4133 = vld [vmem:[#allocation2 + $0xac] sm:$0xf]
        %v4134 = vld [vmem:[#allocation2 + $0xb4] sm:$0xf]
        %v4135 = vld [vmem:[#allocation2 + $0xb8] sm:$0xf]
        %v4136 = vld [vmem:[#allocation2 + $0xc0] sm:$0xf]
        %v4137 = vld [vmem:[#allocation2 + $0xc4] sm:$0xf]
        %v4138 = vld [vmem:[#allocation2 + $0xcc] sm:$0xf]
        %v4139 = vld [vmem:[#allocation2 + $0xd0] sm:$0xf]
        %v4140 = vunpack.c.l.bf16 %v4108
        %v4141 = vunpack.c.l.bf16 %v4109
        %v4142 = vunpack.c.l.bf16 %v4110
        %v4143 = vunpack.c.l.bf16 %v4111
        %v4144 = vunpack.c.l.bf16 %v4112
        %v4145 = vunpack.c.l.bf16 %v4113
        %v4146 = vunpack.c.l.bf16 %v4114
        %v4147 = vunpack.c.l.bf16 %v4115
        %v4148 = vunpack.c.l.bf16 %v4116
        %v4149 = vunpack.c.l.bf16 %v4117
        %v4150 = vunpack.c.l.bf16 %v4118
        %v4151 = vunpack.c.l.bf16 %v4119
        %v4152 = vunpack.c.l.bf16 %v4120
        %v4153 = vunpack.c.l.bf16 %v4121
        %v4154 = vunpack.c.l.bf16 %v4122
        %v4155 = vunpack.c.l.bf16 %v4123
        %v4156 = vunpack.c.l.bf16 %v4124
        %v4157 = vunpack.c.l.bf16 %v4125
        %v4158 = vunpack.c.l.bf16 %v4126
        %v4159 = vunpack.c.l.bf16 %v4127
        %v4160 = vunpack.c.l.bf16 %v4128
        %v4161 = vunpack.c.l.bf16 %v4129
        %v4162 = vunpack.c.l.bf16 %v4130
        %v4163 = vunpack.c.l.bf16 %v4131
        %v4164 = vunpack.c.l.bf16 %v4132
        %v4165 = vunpack.c.l.bf16 %v4133
        %v4166 = vunpack.c.l.bf16 %v4134
        %v4167 = vunpack.c.l.bf16 %v4135
        %v4168 = vunpack.c.l.bf16 %v4136
        %v4169 = vunpack.c.l.bf16 %v4137
        %v4170 = vunpack.c.l.bf16 %v4138
        %v4171 = vunpack.c.l.bf16 %v4139
        %v4172 = vld [vmem:[#allocation2 + $0x8] sm:$0x1]
        %v4173 = vld [vmem:[#allocation2 + $0x14] sm:$0x1]
        %v4174 = vld [vmem:[#allocation2 + $0x20] sm:$0x1]
        %v4175 = vld [vmem:[#allocation2 + $0x2c] sm:$0x1]
        %v4176 = vld [vmem:[#allocation2 + $0x38] sm:$0x1]
        %v4177 = vld [vmem:[#allocation2 + $0x44] sm:$0x1]
        %v4178 = vld [vmem:[#allocation2 + $0x50] sm:$0x1]
        %v4179 = vld [vmem:[#allocation2 + $0x5c] sm:$0x1]
        %v4180 = vld [vmem:[#allocation2 + $0x80] sm:$0x1]
        %v4181 = vld [vmem:[#allocation2 + $0x8c] sm:$0x1]
        %v4182 = vld [vmem:[#allocation2 + $0x98] sm:$0x1]
        %v4183 = vld [vmem:[#allocation2 + $0xa4] sm:$0x1]
        %v4184 = vld [vmem:[#allocation2 + $0xb0] sm:$0x1]
        %v4185 = vld [vmem:[#allocation2 + $0xbc] sm:$0x1]
        %v4186 = vld [vmem:[#allocation2 + $0xc8] sm:$0x1]
        %v4187 = vld [vmem:[#allocation2 + $0xd4] sm:$0x1]
        %v4188 = vunpack.c.l.bf16 %v4172
        %v4189 = vunpack.c.l.bf16 %v4173
        %v4190 = vunpack.c.l.bf16 %v4174
        %v4191 = vunpack.c.l.bf16 %v4175
        %v4192 = vunpack.c.l.bf16 %v4176
        %v4193 = vunpack.c.l.bf16 %v4177
        %v4194 = vunpack.c.l.bf16 %v4178
        %v4195 = vunpack.c.l.bf16 %v4179
        %v4196 = vunpack.c.l.bf16 %v4180
        %v4197 = vunpack.c.l.bf16 %v4181
        %v4198 = vunpack.c.l.bf16 %v4182
        %v4199 = vunpack.c.l.bf16 %v4183
        %v4200 = vunpack.c.l.bf16 %v4184
        %v4201 = vunpack.c.l.bf16 %v4185
        %v4202 = vunpack.c.l.bf16 %v4186
        %v4203 = vunpack.c.l.bf16 %v4187
        %v4252 = vrot.slane %v4140, 1
        %v4253 = vrot.slane %v4141, 1
        %v4254 = vsel %vm431, %v4252, %v4253
        %v4255 = vrot.slane %v4188, 1
        %v4256 = vsel %vm431, %v4253, %v4255
        %v4257 = vrot.slane %v4142, 1
        %v4258 = vrot.slane %v4143, 1
        %v4259 = vsel %vm431, %v4257, %v4258
        %v4260 = vrot.slane %v4189, 1
        %v4261 = vsel %vm431, %v4258, %v4260
        %v4262 = vrot.slane %v4144, 1
        %v4263 = vrot.slane %v4145, 1
        %v4264 = vsel %vm431, %v4262, %v4263
        %v4265 = vrot.slane %v4190, 1
        %v4266 = vsel %vm431, %v4263, %v4265
        %v4267 = vrot.slane %v4146, 1
        %v4268 = vrot.slane %v4147, 1
        %v4269 = vsel %vm431, %v4267, %v4268
        %v4270 = vrot.slane %v4191, 1
        %v4271 = vsel %vm431, %v4268, %v4270
        %v4272 = vrot.slane %v4148, 1
        %v4273 = vrot.slane %v4149, 1
        %v4274 = vsel %vm431, %v4272, %v4273
        %v4275 = vrot.slane %v4192, 1
        %v4276 = vsel %vm431, %v4273, %v4275
        %v4277 = vrot.slane %v4150, 1
        %v4278 = vrot.slane %v4151, 1
        %v4279 = vsel %vm431, %v4277, %v4278
        %v4280 = vrot.slane %v4193, 1
        %v4281 = vsel %vm431, %v4278, %v4280
        %v4282 = vrot.slane %v4152, 1
        %v4283 = vrot.slane %v4153, 1
        %v4284 = vsel %vm431, %v4282, %v4283
        %v4285 = vrot.slane %v4194, 1
        %v4286 = vsel %vm431, %v4283, %v4285
        %v4287 = vrot.slane %v4154, 1
        %v4288 = vrot.slane %v4155, 1
        %v4289 = vsel %vm431, %v4287, %v4288
        %v4290 = vrot.slane %v4195, 1
        %v4291 = vsel %vm431, %v4288, %v4290
        %v4292 = vrot.slane %v4156, 1
        %v4293 = vrot.slane %v4157, 1
        %v4294 = vsel %vm431, %v4292, %v4293
        %v4295 = vrot.slane %v4196, 1
        %v4296 = vsel %vm431, %v4293, %v4295
        %v4297 = vrot.slane %v4158, 1
        %v4298 = vrot.slane %v4159, 1
        %v4299 = vsel %vm431, %v4297, %v4298
        %v4300 = vrot.slane %v4197, 1
        %v4301 = vsel %vm431, %v4298, %v4300
        %v4302 = vrot.slane %v4160, 1
        %v4303 = vrot.slane %v4161, 1
        %v4304 = vsel %vm431, %v4302, %v4303
        %v4305 = vrot.slane %v4198, 1
        %v4306 = vsel %vm431, %v4303, %v4305
        %v4307 = vrot.slane %v4162, 1
        %v4308 = vrot.slane %v4163, 1
        %v4309 = vsel %vm431, %v4307, %v4308
        %v4310 = vrot.slane %v4199, 1
        %v4311 = vsel %vm431, %v4308, %v4310
        %v4312 = vrot.slane %v4164, 1
        %v4313 = vrot.slane %v4165, 1
        %v4314 = vsel %vm431, %v4312, %v4313
        %v4315 = vrot.slane %v4200, 1
        %v4316 = vsel %vm431, %v4313, %v4315
        %v4317 = vrot.slane %v4166, 1
        %v4318 = vrot.slane %v4167, 1
        %v4319 = vsel %vm431, %v4317, %v4318
        %v4320 = vrot.slane %v4201, 1
        %v4321 = vsel %vm431, %v4318, %v4320
        %v4322 = vrot.slane %v4168, 1
        %v4323 = vrot.slane %v4169, 1
        %v4324 = vsel %vm431, %v4322, %v4323
        %v4325 = vrot.slane %v4202, 1
        %v4326 = vsel %vm431, %v4323, %v4325
        %v4327 = vrot.slane %v4170, 1
        %v4328 = vrot.slane %v4171, 1
        %v4329 = vsel %vm431, %v4327, %v4328
        %v4330 = vrot.slane %v4203, 1
        %v4331 = vsel %vm431, %v4328, %v4330
        %v4332 = vld [vmem:[#allocation2] sm:$0xe]
        %v4333 = vld [vmem:[#allocation2 + $0xc] sm:$0xe]
        %v4334 = vld [vmem:[#allocation2 + $0x18] sm:$0xe]
        %v4335 = vld [vmem:[#allocation2 + $0x24] sm:$0xe]
        %v4336 = vld [vmem:[#allocation2 + $0x30] sm:$0xe]
        %v4337 = vld [vmem:[#allocation2 + $0x3c] sm:$0xe]
        %v4338 = vld [vmem:[#allocation2 + $0x48] sm:$0xe]
        %v4339 = vld [vmem:[#allocation2 + $0x54] sm:$0xe]
        %v4340 = vld [vmem:[#allocation2 + $0x78] sm:$0xe]
        %v4341 = vld [vmem:[#allocation2 + $0x84] sm:$0xe]
        %v4342 = vld [vmem:[#allocation2 + $0x90] sm:$0xe]
        %v4343 = vld [vmem:[#allocation2 + $0x9c] sm:$0xe]
        %v4344 = vld [vmem:[#allocation2 + $0xa8] sm:$0xe]
        %v4345 = vld [vmem:[#allocation2 + $0xb4] sm:$0xe]
        %v4346 = vld [vmem:[#allocation2 + $0xc0] sm:$0xe]
        %v4347 = vld [vmem:[#allocation2 + $0xcc] sm:$0xe]
        %v4348 = vunpack.c.l.bf16 %v4332
        %v4349 = vunpack.c.l.bf16 %v4333
        %v4350 = vunpack.c.l.bf16 %v4334
        %v4351 = vunpack.c.l.bf16 %v4335
        %v4352 = vunpack.c.l.bf16 %v4336
        %v4353 = vunpack.c.l.bf16 %v4337
        %v4354 = vunpack.c.l.bf16 %v4338
        %v4355 = vunpack.c.l.bf16 %v4339
        %v4356 = vunpack.c.l.bf16 %v4340
        %v4357 = vunpack.c.l.bf16 %v4341
        %v4358 = vunpack.c.l.bf16 %v4342
        %v4359 = vunpack.c.l.bf16 %v4343
        %v4360 = vunpack.c.l.bf16 %v4344
        %v4361 = vunpack.c.l.bf16 %v4345
        %v4362 = vunpack.c.l.bf16 %v4346
        %v4363 = vunpack.c.l.bf16 %v4347
        %v4380 = vrot.slane %v4348, 2
        %v4381 = vrot.slane %v4141, 2
        %v4382 = vsel %vm592, %v4380, %v4381
        %v4383 = vrot.slane %v4188, 2
        %v4384 = vsel %vm592, %v4381, %v4383
        %v4385 = vrot.slane %v4349, 2
        %v4386 = vrot.slane %v4143, 2
        %v4387 = vsel %vm592, %v4385, %v4386
        %v4388 = vrot.slane %v4189, 2
        %v4389 = vsel %vm592, %v4386, %v4388
        %v4390 = vrot.slane %v4350, 2
        %v4391 = vrot.slane %v4145, 2
        %v4392 = vsel %vm592, %v4390, %v4391
        %v4393 = vrot.slane %v4190, 2
        %v4394 = vsel %vm592, %v4391, %v4393
        %v4395 = vrot.slane %v4351, 2
        %v4396 = vrot.slane %v4147, 2
        %v4397 = vsel %vm592, %v4395, %v4396
        %v4398 = vrot.slane %v4191, 2
        %v4399 = vsel %vm592, %v4396, %v4398
        %v4400 = vrot.slane %v4352, 2
        %v4401 = vrot.slane %v4149, 2
        %v4402 = vsel %vm592, %v4400, %v4401
        %v4403 = vrot.slane %v4192, 2
        %v4404 = vsel %vm592, %v4401, %v4403
        %v4405 = vrot.slane %v4353, 2
        %v4406 = vrot.slane %v4151, 2
        %v4407 = vsel %vm592, %v4405, %v4406
        %v4408 = vrot.slane %v4193, 2
        %v4409 = vsel %vm592, %v4406, %v4408
        %v4410 = vrot.slane %v4354, 2
        %v4411 = vrot.slane %v4153, 2
        %v4412 = vsel %vm592, %v4410, %v4411
        %v4413 = vrot.slane %v4194, 2
        %v4414 = vsel %vm592, %v4411, %v4413
        %v4415 = vrot.slane %v4355, 2
        %v4416 = vrot.slane %v4155, 2
        %v4417 = vsel %vm592, %v4415, %v4416
        %v4418 = vrot.slane %v4195, 2
        %v4419 = vsel %vm592, %v4416, %v4418
        %v4420 = vrot.slane %v4356, 2
        %v4421 = vrot.slane %v4157, 2
        %v4422 = vsel %vm592, %v4420, %v4421
        %v4423 = vrot.slane %v4196, 2
        %v4424 = vsel %vm592, %v4421, %v4423
        %v4425 = vrot.slane %v4357, 2
        %v4426 = vrot.slane %v4159, 2
        %v4427 = vsel %vm592, %v4425, %v4426
        %v4428 = vrot.slane %v4197, 2
        %v4429 = vsel %vm592, %v4426, %v4428
        %v4430 = vrot.slane %v4358, 2
        %v4431 = vrot.slane %v4161, 2
        %v4432 = vsel %vm592, %v4430, %v4431
        %v4433 = vrot.slane %v4198, 2
        %v4434 = vsel %vm592, %v4431, %v4433
        %v4435 = vrot.slane %v4359, 2
        %v4436 = vrot.slane %v4163, 2
        %v4437 = vsel %vm592, %v4435, %v4436
        %v4438 = vrot.slane %v4199, 2
        %v4439 = vsel %vm592, %v4436, %v4438
        %v4440 = vrot.slane %v4360, 2
        %v4441 = vrot.slane %v4165, 2
        %v4442 = vsel %vm592, %v4440, %v4441
        %v4443 = vrot.slane %v4200, 2
        %v4444 = vsel %vm592, %v4441, %v4443
        %v4445 = vrot.slane %v4361, 2
        %v4446 = vrot.slane %v4167, 2
        %v4447 = vsel %vm592, %v4445, %v4446
        %v4448 = vrot.slane %v4201, 2
        %v4449 = vsel %vm592, %v4446, %v4448
        %v4450 = vrot.slane %v4362, 2
        %v4451 = vrot.slane %v4169, 2
        %v4452 = vsel %vm592, %v4450, %v4451
        %v4453 = vrot.slane %v4202, 2
        %v4454 = vsel %vm592, %v4451, %v4453
        %v4455 = vrot.slane %v4363, 2
        %v4456 = vrot.slane %v4171, 2
        %v4457 = vsel %vm592, %v4455, %v4456
        %v4458 = vrot.slane %v4203, 2
        %v4459 = vsel %vm592, %v4456, %v4458
        %s4460 = scalar_lea.vmem [#allocation2], 12
        %v4461 = vld [vmem:[%s4460] sm:$0xf]
        %v4462 = vld [vmem:[%s4460 + $0x4] sm:$0xf]
        %v4463 = vld [vmem:[%s4460 + $0xc] sm:$0xf]
        %v4464 = vld [vmem:[%s4460 + $0x10] sm:$0xf]
        %v4465 = vld [vmem:[%s4460 + $0x18] sm:$0xf]
        %v4466 = vld [vmem:[%s4460 + $0x1c] sm:$0xf]
        %v4467 = vld [vmem:[%s4460 + $0x24] sm:$0xf]
        %v4468 = vld [vmem:[%s4460 + $0x28] sm:$0xf]
        %v4469 = vld [vmem:[%s4460 + $0x30] sm:$0xf]
        %v4470 = vld [vmem:[%s4460 + $0x34] sm:$0xf]
        %v4471 = vld [vmem:[%s4460 + $0x3c] sm:$0xf]
        %v4472 = vld [vmem:[%s4460 + $0x40] sm:$0xf]
        %v4473 = vld [vmem:[%s4460 + $0x48] sm:$0xf]
        %v4474 = vld [vmem:[%s4460 + $0x4c] sm:$0xf]
        %v4475 = vld [vmem:[%s4460 + $0x54] sm:$0xf]
        %v4476 = vld [vmem:[%s4460 + $0x58] sm:$0xf]
        %v4477 = vld [vmem:[%s4460 + $0x78] sm:$0xf]
        %v4478 = vld [vmem:[%s4460 + $0x7c] sm:$0xf]
        %v4479 = vld [vmem:[%s4460 + $0x84] sm:$0xf]
        %v4480 = vld [vmem:[%s4460 + $0x88] sm:$0xf]
        %v4481 = vld [vmem:[%s4460 + $0x90] sm:$0xf]
        %v4482 = vld [vmem:[%s4460 + $0x94] sm:$0xf]
        %v4483 = vld [vmem:[%s4460 + $0x9c] sm:$0xf]
        %v4484 = vld [vmem:[%s4460 + $0xa0] sm:$0xf]
        %v4485 = vld [vmem:[%s4460 + $0xa8] sm:$0xf]
        %v4486 = vld [vmem:[%s4460 + $0xac] sm:$0xf]
        %v4487 = vld [vmem:[%s4460 + $0xb4] sm:$0xf]
        %v4488 = vld [vmem:[%s4460 + $0xb8] sm:$0xf]
        %v4489 = vld [vmem:[%s4460 + $0xc0] sm:$0xf]
        %v4490 = vld [vmem:[%s4460 + $0xc4] sm:$0xf]
        %v4491 = vld [vmem:[%s4460 + $0xcc] sm:$0xf]
        %v4492 = vld [vmem:[%s4460 + $0xd0] sm:$0xf]
        %v4493 = vunpack.c.l.bf16 %v4461
        %v4494 = vunpack.c.l.bf16 %v4462
        %v4495 = vunpack.c.l.bf16 %v4463
        %v4496 = vunpack.c.l.bf16 %v4464
        %v4497 = vunpack.c.l.bf16 %v4465
        %v4498 = vunpack.c.l.bf16 %v4466
        %v4499 = vunpack.c.l.bf16 %v4467
        %v4500 = vunpack.c.l.bf16 %v4468
        %v4501 = vunpack.c.l.bf16 %v4469
        %v4502 = vunpack.c.l.bf16 %v4470
        %v4503 = vunpack.c.l.bf16 %v4471
        %v4504 = vunpack.c.l.bf16 %v4472
        %v4505 = vunpack.c.l.bf16 %v4473
        %v4506 = vunpack.c.l.bf16 %v4474
        %v4507 = vunpack.c.l.bf16 %v4475
        %v4508 = vunpack.c.l.bf16 %v4476
        %v4509 = vunpack.c.l.bf16 %v4477
        %v4510 = vunpack.c.l.bf16 %v4478
        %v4511 = vunpack.c.l.bf16 %v4479
        %v4512 = vunpack.c.l.bf16 %v4480
        %v4513 = vunpack.c.l.bf16 %v4481
        %v4514 = vunpack.c.l.bf16 %v4482
        %v4515 = vunpack.c.l.bf16 %v4483
        %v4516 = vunpack.c.l.bf16 %v4484
        %v4517 = vunpack.c.l.bf16 %v4485
        %v4518 = vunpack.c.l.bf16 %v4486
        %v4519 = vunpack.c.l.bf16 %v4487
        %v4520 = vunpack.c.l.bf16 %v4488
        %v4521 = vunpack.c.l.bf16 %v4489
        %v4522 = vunpack.c.l.bf16 %v4490
        %v4523 = vunpack.c.l.bf16 %v4491
        %v4524 = vunpack.c.l.bf16 %v4492
        %v4525 = vld [vmem:[%s4460 + $0x8] sm:$0x1]
        %v4526 = vld [vmem:[%s4460 + $0x14] sm:$0x1]
        %v4527 = vld [vmem:[%s4460 + $0x20] sm:$0x1]
        %v4528 = vld [vmem:[%s4460 + $0x2c] sm:$0x1]
        %v4529 = vld [vmem:[%s4460 + $0x38] sm:$0x1]
        %v4530 = vld [vmem:[%s4460 + $0x44] sm:$0x1]
        %v4531 = vld [vmem:[%s4460 + $0x50] sm:$0x1]
        %v4532 = vld [vmem:[%s4460 + $0x5c] sm:$0x1]
        %v4533 = vld [vmem:[%s4460 + $0x80] sm:$0x1]
        %v4534 = vld [vmem:[%s4460 + $0x8c] sm:$0x1]
        %v4535 = vld [vmem:[%s4460 + $0x98] sm:$0x1]
        %v4536 = vld [vmem:[%s4460 + $0xa4] sm:$0x1]
        %v4537 = vld [vmem:[%s4460 + $0xb0] sm:$0x1]
        %v4538 = vld [vmem:[%s4460 + $0xbc] sm:$0x1]
        %v4539 = vld [vmem:[%s4460 + $0xc8] sm:$0x1]
        %v4540 = vld [vmem:[%s4460 + $0xd4] sm:$0x1]
        %v4541 = vunpack.c.l.bf16 %v4525
        %v4542 = vunpack.c.l.bf16 %v4526
        %v4543 = vunpack.c.l.bf16 %v4527
        %v4544 = vunpack.c.l.bf16 %v4528
        %v4545 = vunpack.c.l.bf16 %v4529
        %v4546 = vunpack.c.l.bf16 %v4530
        %v4547 = vunpack.c.l.bf16 %v4531
        %v4548 = vunpack.c.l.bf16 %v4532
        %v4549 = vunpack.c.l.bf16 %v4533
        %v4550 = vunpack.c.l.bf16 %v4534
        %v4551 = vunpack.c.l.bf16 %v4535
        %v4552 = vunpack.c.l.bf16 %v4536
        %v4553 = vunpack.c.l.bf16 %v4537
        %v4554 = vunpack.c.l.bf16 %v4538
        %v4555 = vunpack.c.l.bf16 %v4539
        %v4556 = vunpack.c.l.bf16 %v4540
        %v4605 = vrot.slane %v4493, 1
        %v4606 = vrot.slane %v4494, 1
        %v4607 = vsel %vm431, %v4605, %v4606
        %v4608 = vrot.slane %v4541, 1
        %v4609 = vsel %vm431, %v4606, %v4608
        %v4610 = vrot.slane %v4495, 1
        %v4611 = vrot.slane %v4496, 1
        %v4612 = vsel %vm431, %v4610, %v4611
        %v4613 = vrot.slane %v4542, 1
        %v4614 = vsel %vm431, %v4611, %v4613
        %v4615 = vrot.slane %v4497, 1
        %v4616 = vrot.slane %v4498, 1
        %v4617 = vsel %vm431, %v4615, %v4616
        %v4618 = vrot.slane %v4543, 1
        %v4619 = vsel %vm431, %v4616, %v4618
        %v4620 = vrot.slane %v4499, 1
        %v4621 = vrot.slane %v4500, 1
        %v4622 = vsel %vm431, %v4620, %v4621
        %v4623 = vrot.slane %v4544, 1
        %v4624 = vsel %vm431, %v4621, %v4623
        %v4625 = vrot.slane %v4501, 1
        %v4626 = vrot.slane %v4502, 1
        %v4627 = vsel %vm431, %v4625, %v4626
        %v4628 = vrot.slane %v4545, 1
        %v4629 = vsel %vm431, %v4626, %v4628
        %v4630 = vrot.slane %v4503, 1
        %v4631 = vrot.slane %v4504, 1
        %v4632 = vsel %vm431, %v4630, %v4631
        %v4633 = vrot.slane %v4546, 1
        %v4634 = vsel %vm431, %v4631, %v4633
        %v4635 = vrot.slane %v4505, 1
        %v4636 = vrot.slane %v4506, 1
        %v4637 = vsel %vm431, %v4635, %v4636
        %v4638 = vrot.slane %v4547, 1
        %v4639 = vsel %vm431, %v4636, %v4638
        %v4640 = vrot.slane %v4507, 1
        %v4641 = vrot.slane %v4508, 1
        %v4642 = vsel %vm431, %v4640, %v4641
        %v4643 = vrot.slane %v4548, 1
        %v4644 = vsel %vm431, %v4641, %v4643
        %v4645 = vrot.slane %v4509, 1
        %v4646 = vrot.slane %v4510, 1
        %v4647 = vsel %vm431, %v4645, %v4646
        %v4648 = vrot.slane %v4549, 1
        %v4649 = vsel %vm431, %v4646, %v4648
        %v4650 = vrot.slane %v4511, 1
        %v4651 = vrot.slane %v4512, 1
        %v4652 = vsel %vm431, %v4650, %v4651
        %v4653 = vrot.slane %v4550, 1
        %v4654 = vsel %vm431, %v4651, %v4653
        %v4655 = vrot.slane %v4513, 1
        %v4656 = vrot.slane %v4514, 1
        %v4657 = vsel %vm431, %v4655, %v4656
        %v4658 = vrot.slane %v4551, 1
        %v4659 = vsel %vm431, %v4656, %v4658
        %v4660 = vrot.slane %v4515, 1
        %v4661 = vrot.slane %v4516, 1
        %v4662 = vsel %vm431, %v4660, %v4661
        %v4663 = vrot.slane %v4552, 1
        %v4664 = vsel %vm431, %v4661, %v4663
        %v4665 = vrot.slane %v4517, 1
        %v4666 = vrot.slane %v4518, 1
        %v4667 = vsel %vm431, %v4665, %v4666
        %v4668 = vrot.slane %v4553, 1
        %v4669 = vsel %vm431, %v4666, %v4668
        %v4670 = vrot.slane %v4519, 1
        %v4671 = vrot.slane %v4520, 1
        %v4672 = vsel %vm431, %v4670, %v4671
        %v4673 = vrot.slane %v4554, 1
        %v4674 = vsel %vm431, %v4671, %v4673
        %v4675 = vrot.slane %v4521, 1
        %v4676 = vrot.slane %v4522, 1
        %v4677 = vsel %vm431, %v4675, %v4676
        %v4678 = vrot.slane %v4555, 1
        %v4679 = vsel %vm431, %v4676, %v4678
        %v4680 = vrot.slane %v4523, 1
        %v4681 = vrot.slane %v4524, 1
        %v4682 = vsel %vm431, %v4680, %v4681
        %v4683 = vrot.slane %v4556, 1
        %v4684 = vsel %vm431, %v4681, %v4683
        %v4685 = vld [vmem:[%s4460] sm:$0xe]
        %v4686 = vld [vmem:[%s4460 + $0xc] sm:$0xe]
        %v4687 = vld [vmem:[%s4460 + $0x18] sm:$0xe]
        %v4688 = vld [vmem:[%s4460 + $0x24] sm:$0xe]
        %v4689 = vld [vmem:[%s4460 + $0x30] sm:$0xe]
        %v4690 = vld [vmem:[%s4460 + $0x3c] sm:$0xe]
        %v4691 = vld [vmem:[%s4460 + $0x48] sm:$0xe]
        %v4692 = vld [vmem:[%s4460 + $0x54] sm:$0xe]
        %v4693 = vld [vmem:[%s4460 + $0x78] sm:$0xe]
        %v4694 = vld [vmem:[%s4460 + $0x84] sm:$0xe]
        %v4695 = vld [vmem:[%s4460 + $0x90] sm:$0xe]
        %v4696 = vld [vmem:[%s4460 + $0x9c] sm:$0xe]
        %v4697 = vld [vmem:[%s4460 + $0xa8] sm:$0xe]
        %v4698 = vld [vmem:[%s4460 + $0xb4] sm:$0xe]
        %v4699 = vld [vmem:[%s4460 + $0xc0] sm:$0xe]
        %v4700 = vld [vmem:[%s4460 + $0xcc] sm:$0xe]
        %v4701 = vunpack.c.l.bf16 %v4685
        %v4702 = vunpack.c.l.bf16 %v4686
        %v4703 = vunpack.c.l.bf16 %v4687
        %v4704 = vunpack.c.l.bf16 %v4688
        %v4705 = vunpack.c.l.bf16 %v4689
        %v4706 = vunpack.c.l.bf16 %v4690
        %v4707 = vunpack.c.l.bf16 %v4691
        %v4708 = vunpack.c.l.bf16 %v4692
        %v4709 = vunpack.c.l.bf16 %v4693
        %v4710 = vunpack.c.l.bf16 %v4694
        %v4711 = vunpack.c.l.bf16 %v4695
        %v4712 = vunpack.c.l.bf16 %v4696
        %v4713 = vunpack.c.l.bf16 %v4697
        %v4714 = vunpack.c.l.bf16 %v4698
        %v4715 = vunpack.c.l.bf16 %v4699
        %v4716 = vunpack.c.l.bf16 %v4700
        %v4733 = vrot.slane %v4701, 2
        %v4734 = vrot.slane %v4494, 2
        %v4735 = vsel %vm592, %v4733, %v4734
        %v4736 = vrot.slane %v4541, 2
        %v4737 = vsel %vm592, %v4734, %v4736
        %v4738 = vrot.slane %v4702, 2
        %v4739 = vrot.slane %v4496, 2
        %v4740 = vsel %vm592, %v4738, %v4739
        %v4741 = vrot.slane %v4542, 2
        %v4742 = vsel %vm592, %v4739, %v4741
        %v4743 = vrot.slane %v4703, 2
        %v4744 = vrot.slane %v4498, 2
        %v4745 = vsel %vm592, %v4743, %v4744
        %v4746 = vrot.slane %v4543, 2
        %v4747 = vsel %vm592, %v4744, %v4746
        %v4748 = vrot.slane %v4704, 2
        %v4749 = vrot.slane %v4500, 2
        %v4750 = vsel %vm592, %v4748, %v4749
        %v4751 = vrot.slane %v4544, 2
        %v4752 = vsel %vm592, %v4749, %v4751
        %v4753 = vrot.slane %v4705, 2
        %v4754 = vrot.slane %v4502, 2
        %v4755 = vsel %vm592, %v4753, %v4754
        %v4756 = vrot.slane %v4545, 2
        %v4757 = vsel %vm592, %v4754, %v4756
        %v4758 = vrot.slane %v4706, 2
        %v4759 = vrot.slane %v4504, 2
        %v4760 = vsel %vm592, %v4758, %v4759
        %v4761 = vrot.slane %v4546, 2
        %v4762 = vsel %vm592, %v4759, %v4761
        %v4763 = vrot.slane %v4707, 2
        %v4764 = vrot.slane %v4506, 2
        %v4765 = vsel %vm592, %v4763, %v4764
        %v4766 = vrot.slane %v4547, 2
        %v4767 = vsel %vm592, %v4764, %v4766
        %v4768 = vrot.slane %v4708, 2
        %v4769 = vrot.slane %v4508, 2
        %v4770 = vsel %vm592, %v4768, %v4769
        %v4771 = vrot.slane %v4548, 2
        %v4772 = vsel %vm592, %v4769, %v4771
        %v4773 = vrot.slane %v4709, 2
        %v4774 = vrot.slane %v4510, 2
        %v4775 = vsel %vm592, %v4773, %v4774
        %v4776 = vrot.slane %v4549, 2
        %v4777 = vsel %vm592, %v4774, %v4776
        %v4778 = vrot.slane %v4710, 2
        %v4779 = vrot.slane %v4512, 2
        %v4780 = vsel %vm592, %v4778, %v4779
        %v4781 = vrot.slane %v4550, 2
        %v4782 = vsel %vm592, %v4779, %v4781
        %v4783 = vrot.slane %v4711, 2
        %v4784 = vrot.slane %v4514, 2
        %v4785 = vsel %vm592, %v4783, %v4784
        %v4786 = vrot.slane %v4551, 2
        %v4787 = vsel %vm592, %v4784, %v4786
        %v4788 = vrot.slane %v4712, 2
        %v4789 = vrot.slane %v4516, 2
        %v4790 = vsel %vm592, %v4788, %v4789
        %v4791 = vrot.slane %v4552, 2
        %v4792 = vsel %vm592, %v4789, %v4791
        %v4793 = vrot.slane %v4713, 2
        %v4794 = vrot.slane %v4518, 2
        %v4795 = vsel %vm592, %v4793, %v4794
        %v4796 = vrot.slane %v4553, 2
        %v4797 = vsel %vm592, %v4794, %v4796
        %v4798 = vrot.slane %v4714, 2
        %v4799 = vrot.slane %v4520, 2
        %v4800 = vsel %vm592, %v4798, %v4799
        %v4801 = vrot.slane %v4554, 2
        %v4802 = vsel %vm592, %v4799, %v4801
        %v4803 = vrot.slane %v4715, 2
        %v4804 = vrot.slane %v4522, 2
        %v4805 = vsel %vm592, %v4803, %v4804
        %v4806 = vrot.slane %v4555, 2
        %v4807 = vsel %vm592, %v4804, %v4806
        %v4808 = vrot.slane %v4716, 2
        %v4809 = vrot.slane %v4524, 2
        %v4810 = vsel %vm592, %v4808, %v4809
        %v4811 = vrot.slane %v4556, 2
        %v4812 = vsel %vm592, %v4809, %v4811
        %s4813 = scalar_lea.vmem [#allocation2], 24
        %v4814 = vld [vmem:[%s4813] sm:$0xf]
        %v4815 = vld [vmem:[%s4813 + $0x4] sm:$0xf]
        %v4816 = vld [vmem:[%s4813 + $0xc] sm:$0xf]
        %v4817 = vld [vmem:[%s4813 + $0x10] sm:$0xf]
        %v4818 = vld [vmem:[%s4813 + $0x18] sm:$0xf]
        %v4819 = vld [vmem:[%s4813 + $0x1c] sm:$0xf]
        %v4820 = vld [vmem:[%s4813 + $0x24] sm:$0xf]
        %v4821 = vld [vmem:[%s4813 + $0x28] sm:$0xf]
        %v4822 = vld [vmem:[%s4813 + $0x30] sm:$0xf]
        %v4823 = vld [vmem:[%s4813 + $0x34] sm:$0xf]
        %v4824 = vld [vmem:[%s4813 + $0x3c] sm:$0xf]
        %v4825 = vld [vmem:[%s4813 + $0x40] sm:$0xf]
        %v4826 = vld [vmem:[%s4813 + $0x48] sm:$0xf]
        %v4827 = vld [vmem:[%s4813 + $0x4c] sm:$0xf]
        %v4828 = vld [vmem:[%s4813 + $0x54] sm:$0xf]
        %v4829 = vld [vmem:[%s4813 + $0x58] sm:$0xf]
        %v4830 = vld [vmem:[%s4813 + $0x78] sm:$0xf]
        %v4831 = vld [vmem:[%s4813 + $0x7c] sm:$0xf]
        %v4832 = vld [vmem:[%s4813 + $0x84] sm:$0xf]
        %v4833 = vld [vmem:[%s4813 + $0x88] sm:$0xf]
        %v4834 = vld [vmem:[%s4813 + $0x90] sm:$0xf]
        %v4835 = vld [vmem:[%s4813 + $0x94] sm:$0xf]
        %v4836 = vld [vmem:[%s4813 + $0x9c] sm:$0xf]
        %v4837 = vld [vmem:[%s4813 + $0xa0] sm:$0xf]
        %v4838 = vld [vmem:[%s4813 + $0xa8] sm:$0xf]
        %v4839 = vld [vmem:[%s4813 + $0xac] sm:$0xf]
        %v4840 = vld [vmem:[%s4813 + $0xb4] sm:$0xf]
        %v4841 = vld [vmem:[%s4813 + $0xb8] sm:$0xf]
        %v4842 = vld [vmem:[%s4813 + $0xc0] sm:$0xf]
        %v4843 = vld [vmem:[%s4813 + $0xc4] sm:$0xf]
        %v4844 = vld [vmem:[%s4813 + $0xcc] sm:$0xf]
        %v4845 = vld [vmem:[%s4813 + $0xd0] sm:$0xf]
        %v4846 = vunpack.c.l.bf16 %v4814
        %v4847 = vunpack.c.l.bf16 %v4815
        %v4848 = vunpack.c.l.bf16 %v4816
        %v4849 = vunpack.c.l.bf16 %v4817
        %v4850 = vunpack.c.l.bf16 %v4818
        %v4851 = vunpack.c.l.bf16 %v4819
        %v4852 = vunpack.c.l.bf16 %v4820
        %v4853 = vunpack.c.l.bf16 %v4821
        %v4854 = vunpack.c.l.bf16 %v4822
        %v4855 = vunpack.c.l.bf16 %v4823
        %v4856 = vunpack.c.l.bf16 %v4824
        %v4857 = vunpack.c.l.bf16 %v4825
        %v4858 = vunpack.c.l.bf16 %v4826
        %v4859 = vunpack.c.l.bf16 %v4827
        %v4860 = vunpack.c.l.bf16 %v4828
        %v4861 = vunpack.c.l.bf16 %v4829
        %v4862 = vunpack.c.l.bf16 %v4830
        %v4863 = vunpack.c.l.bf16 %v4831
        %v4864 = vunpack.c.l.bf16 %v4832
        %v4865 = vunpack.c.l.bf16 %v4833
        %v4866 = vunpack.c.l.bf16 %v4834
        %v4867 = vunpack.c.l.bf16 %v4835
        %v4868 = vunpack.c.l.bf16 %v4836
        %v4869 = vunpack.c.l.bf16 %v4837
        %v4870 = vunpack.c.l.bf16 %v4838
        %v4871 = vunpack.c.l.bf16 %v4839
        %v4872 = vunpack.c.l.bf16 %v4840
        %v4873 = vunpack.c.l.bf16 %v4841
        %v4874 = vunpack.c.l.bf16 %v4842
        %v4875 = vunpack.c.l.bf16 %v4843
        %v4876 = vunpack.c.l.bf16 %v4844
        %v4877 = vunpack.c.l.bf16 %v4845
        %v4878 = vld [vmem:[%s4813 + $0x8] sm:$0x1]
        %v4879 = vld [vmem:[%s4813 + $0x14] sm:$0x1]
        %v4880 = vld [vmem:[%s4813 + $0x20] sm:$0x1]
        %v4881 = vld [vmem:[%s4813 + $0x2c] sm:$0x1]
        %v4882 = vld [vmem:[%s4813 + $0x38] sm:$0x1]
        %v4883 = vld [vmem:[%s4813 + $0x44] sm:$0x1]
        %v4884 = vld [vmem:[%s4813 + $0x50] sm:$0x1]
        %v4885 = vld [vmem:[%s4813 + $0x5c] sm:$0x1]
        %v4886 = vld [vmem:[%s4813 + $0x80] sm:$0x1]
        %v4887 = vld [vmem:[%s4813 + $0x8c] sm:$0x1]
        %v4888 = vld [vmem:[%s4813 + $0x98] sm:$0x1]
        %v4889 = vld [vmem:[%s4813 + $0xa4] sm:$0x1]
        %v4890 = vld [vmem:[%s4813 + $0xb0] sm:$0x1]
        %v4891 = vld [vmem:[%s4813 + $0xbc] sm:$0x1]
        %v4892 = vld [vmem:[%s4813 + $0xc8] sm:$0x1]
        %v4893 = vld [vmem:[%s4813 + $0xd4] sm:$0x1]
        %v4894 = vunpack.c.l.bf16 %v4878
        %v4895 = vunpack.c.l.bf16 %v4879
        %v4896 = vunpack.c.l.bf16 %v4880
        %v4897 = vunpack.c.l.bf16 %v4881
        %v4898 = vunpack.c.l.bf16 %v4882
        %v4899 = vunpack.c.l.bf16 %v4883
        %v4900 = vunpack.c.l.bf16 %v4884
        %v4901 = vunpack.c.l.bf16 %v4885
        %v4902 = vunpack.c.l.bf16 %v4886
        %v4903 = vunpack.c.l.bf16 %v4887
        %v4904 = vunpack.c.l.bf16 %v4888
        %v4905 = vunpack.c.l.bf16 %v4889
        %v4906 = vunpack.c.l.bf16 %v4890
        %v4907 = vunpack.c.l.bf16 %v4891
        %v4908 = vunpack.c.l.bf16 %v4892
        %v4909 = vunpack.c.l.bf16 %v4893
        %v4958 = vrot.slane %v4846, 1
        %v4959 = vrot.slane %v4847, 1
        %v4960 = vsel %vm431, %v4958, %v4959
        %v4961 = vrot.slane %v4894, 1
        %v4962 = vsel %vm431, %v4959, %v4961
        %v4963 = vrot.slane %v4848, 1
        %v4964 = vrot.slane %v4849, 1
        %v4965 = vsel %vm431, %v4963, %v4964
        %v4966 = vrot.slane %v4895, 1
        %v4967 = vsel %vm431, %v4964, %v4966
        %v4968 = vrot.slane %v4850, 1
        %v4969 = vrot.slane %v4851, 1
        %v4970 = vsel %vm431, %v4968, %v4969
        %v4971 = vrot.slane %v4896, 1
        %v4972 = vsel %vm431, %v4969, %v4971
        %v4973 = vrot.slane %v4852, 1
        %v4974 = vrot.slane %v4853, 1
        %v4975 = vsel %vm431, %v4973, %v4974
        %v4976 = vrot.slane %v4897, 1
        %v4977 = vsel %vm431, %v4974, %v4976
        %v4978 = vrot.slane %v4854, 1
        %v4979 = vrot.slane %v4855, 1
        %v4980 = vsel %vm431, %v4978, %v4979
        %v4981 = vrot.slane %v4898, 1
        %v4982 = vsel %vm431, %v4979, %v4981
        %v4983 = vrot.slane %v4856, 1
        %v4984 = vrot.slane %v4857, 1
        %v4985 = vsel %vm431, %v4983, %v4984
        %v4986 = vrot.slane %v4899, 1
        %v4987 = vsel %vm431, %v4984, %v4986
        %v4988 = vrot.slane %v4858, 1
        %v4989 = vrot.slane %v4859, 1
        %v4990 = vsel %vm431, %v4988, %v4989
        %v4991 = vrot.slane %v4900, 1
        %v4992 = vsel %vm431, %v4989, %v4991
        %v4993 = vrot.slane %v4860, 1
        %v4994 = vrot.slane %v4861, 1
        %v4995 = vsel %vm431, %v4993, %v4994
        %v4996 = vrot.slane %v4901, 1
        %v4997 = vsel %vm431, %v4994, %v4996
        %v4998 = vrot.slane %v4862, 1
        %v4999 = vrot.slane %v4863, 1
        %v5000 = vsel %vm431, %v4998, %v4999
        %v5001 = vrot.slane %v4902, 1
        %v5002 = vsel %vm431, %v4999, %v5001
        %v5003 = vrot.slane %v4864, 1
        %v5004 = vrot.slane %v4865, 1
        %v5005 = vsel %vm431, %v5003, %v5004
        %v5006 = vrot.slane %v4903, 1
        %v5007 = vsel %vm431, %v5004, %v5006
        %v5008 = vrot.slane %v4866, 1
        %v5009 = vrot.slane %v4867, 1
        %v5010 = vsel %vm431, %v5008, %v5009
        %v5011 = vrot.slane %v4904, 1
        %v5012 = vsel %vm431, %v5009, %v5011
        %v5013 = vrot.slane %v4868, 1
        %v5014 = vrot.slane %v4869, 1
        %v5015 = vsel %vm431, %v5013, %v5014
        %v5016 = vrot.slane %v4905, 1
        %v5017 = vsel %vm431, %v5014, %v5016
        %v5018 = vrot.slane %v4870, 1
        %v5019 = vrot.slane %v4871, 1
        %v5020 = vsel %vm431, %v5018, %v5019
        %v5021 = vrot.slane %v4906, 1
        %v5022 = vsel %vm431, %v5019, %v5021
        %v5023 = vrot.slane %v4872, 1
        %v5024 = vrot.slane %v4873, 1
        %v5025 = vsel %vm431, %v5023, %v5024
        %v5026 = vrot.slane %v4907, 1
        %v5027 = vsel %vm431, %v5024, %v5026
        %v5028 = vrot.slane %v4874, 1
        %v5029 = vrot.slane %v4875, 1
        %v5030 = vsel %vm431, %v5028, %v5029
        %v5031 = vrot.slane %v4908, 1
        %v5032 = vsel %vm431, %v5029, %v5031
        %v5033 = vrot.slane %v4876, 1
        %v5034 = vrot.slane %v4877, 1
        %v5035 = vsel %vm431, %v5033, %v5034
        %v5036 = vrot.slane %v4909, 1
        %v5037 = vsel %vm431, %v5034, %v5036
        %v5038 = vld [vmem:[%s4813] sm:$0xe]
        %v5039 = vld [vmem:[%s4813 + $0xc] sm:$0xe]
        %v5040 = vld [vmem:[%s4813 + $0x18] sm:$0xe]
        %v5041 = vld [vmem:[%s4813 + $0x24] sm:$0xe]
        %v5042 = vld [vmem:[%s4813 + $0x30] sm:$0xe]
        %v5043 = vld [vmem:[%s4813 + $0x3c] sm:$0xe]
        %v5044 = vld [vmem:[%s4813 + $0x48] sm:$0xe]
        %v5045 = vld [vmem:[%s4813 + $0x54] sm:$0xe]
        %v5046 = vld [vmem:[%s4813 + $0x78] sm:$0xe]
        %v5047 = vld [vmem:[%s4813 + $0x84] sm:$0xe]
        %v5048 = vld [vmem:[%s4813 + $0x90] sm:$0xe]
        %v5049 = vld [vmem:[%s4813 + $0x9c] sm:$0xe]
        %v5050 = vld [vmem:[%s4813 + $0xa8] sm:$0xe]
        %v5051 = vld [vmem:[%s4813 + $0xb4] sm:$0xe]
        %v5052 = vld [vmem:[%s4813 + $0xc0] sm:$0xe]
        %v5053 = vld [vmem:[%s4813 + $0xcc] sm:$0xe]
        %v5054 = vunpack.c.l.bf16 %v5038
        %v5055 = vunpack.c.l.bf16 %v5039
        %v5056 = vunpack.c.l.bf16 %v5040
        %v5057 = vunpack.c.l.bf16 %v5041
        %v5058 = vunpack.c.l.bf16 %v5042
        %v5059 = vunpack.c.l.bf16 %v5043
        %v5060 = vunpack.c.l.bf16 %v5044
        %v5061 = vunpack.c.l.bf16 %v5045
        %v5062 = vunpack.c.l.bf16 %v5046
        %v5063 = vunpack.c.l.bf16 %v5047
        %v5064 = vunpack.c.l.bf16 %v5048
        %v5065 = vunpack.c.l.bf16 %v5049
        %v5066 = vunpack.c.l.bf16 %v5050
        %v5067 = vunpack.c.l.bf16 %v5051
        %v5068 = vunpack.c.l.bf16 %v5052
        %v5069 = vunpack.c.l.bf16 %v5053
        %v5086 = vrot.slane %v5054, 2
        %v5087 = vrot.slane %v4847, 2
        %v5088 = vsel %vm592, %v5086, %v5087
        %v5089 = vrot.slane %v4894, 2
        %v5090 = vsel %vm592, %v5087, %v5089
        %v5091 = vrot.slane %v5055, 2
        %v5092 = vrot.slane %v4849, 2
        %v5093 = vsel %vm592, %v5091, %v5092
        %v5094 = vrot.slane %v4895, 2
        %v5095 = vsel %vm592, %v5092, %v5094
        %v5096 = vrot.slane %v5056, 2
        %v5097 = vrot.slane %v4851, 2
        %v5098 = vsel %vm592, %v5096, %v5097
        %v5099 = vrot.slane %v4896, 2
        %v5100 = vsel %vm592, %v5097, %v5099
        %v5101 = vrot.slane %v5057, 2
        %v5102 = vrot.slane %v4853, 2
        %v5103 = vsel %vm592, %v5101, %v5102
        %v5104 = vrot.slane %v4897, 2
        %v5105 = vsel %vm592, %v5102, %v5104
        %v5106 = vrot.slane %v5058, 2
        %v5107 = vrot.slane %v4855, 2
        %v5108 = vsel %vm592, %v5106, %v5107
        %v5109 = vrot.slane %v4898, 2
        %v5110 = vsel %vm592, %v5107, %v5109
        %v5111 = vrot.slane %v5059, 2
        %v5112 = vrot.slane %v4857, 2
        %v5113 = vsel %vm592, %v5111, %v5112
        %v5114 = vrot.slane %v4899, 2
        %v5115 = vsel %vm592, %v5112, %v5114
        %v5116 = vrot.slane %v5060, 2
        %v5117 = vrot.slane %v4859, 2
        %v5118 = vsel %vm592, %v5116, %v5117
        %v5119 = vrot.slane %v4900, 2
        %v5120 = vsel %vm592, %v5117, %v5119
        %v5121 = vrot.slane %v5061, 2
        %v5122 = vrot.slane %v4861, 2
        %v5123 = vsel %vm592, %v5121, %v5122
        %v5124 = vrot.slane %v4901, 2
        %v5125 = vsel %vm592, %v5122, %v5124
        %v5126 = vrot.slane %v5062, 2
        %v5127 = vrot.slane %v4863, 2
        %v5128 = vsel %vm592, %v5126, %v5127
        %v5129 = vrot.slane %v4902, 2
        %v5130 = vsel %vm592, %v5127, %v5129
        %v5131 = vrot.slane %v5063, 2
        %v5132 = vrot.slane %v4865, 2
        %v5133 = vsel %vm592, %v5131, %v5132
        %v5134 = vrot.slane %v4903, 2
        %v5135 = vsel %vm592, %v5132, %v5134
        %v5136 = vrot.slane %v5064, 2
        %v5137 = vrot.slane %v4867, 2
        %v5138 = vsel %vm592, %v5136, %v5137
        %v5139 = vrot.slane %v4904, 2
        %v5140 = vsel %vm592, %v5137, %v5139
        %v5141 = vrot.slane %v5065, 2
        %v5142 = vrot.slane %v4869, 2
        %v5143 = vsel %vm592, %v5141, %v5142
        %v5144 = vrot.slane %v4905, 2
        %v5145 = vsel %vm592, %v5142, %v5144
        %v5146 = vrot.slane %v5066, 2
        %v5147 = vrot.slane %v4871, 2
        %v5148 = vsel %vm592, %v5146, %v5147
        %v5149 = vrot.slane %v4906, 2
        %v5150 = vsel %vm592, %v5147, %v5149
        %v5151 = vrot.slane %v5067, 2
        %v5152 = vrot.slane %v4873, 2
        %v5153 = vsel %vm592, %v5151, %v5152
        %v5154 = vrot.slane %v4907, 2
        %v5155 = vsel %vm592, %v5152, %v5154
        %v5156 = vrot.slane %v5068, 2
        %v5157 = vrot.slane %v4875, 2
        %v5158 = vsel %vm592, %v5156, %v5157
        %v5159 = vrot.slane %v4908, 2
        %v5160 = vsel %vm592, %v5157, %v5159
        %v5161 = vrot.slane %v5069, 2
        %v5162 = vrot.slane %v4877, 2
        %v5163 = vsel %vm592, %v5161, %v5162
        %v5164 = vrot.slane %v4909, 2
        %v5165 = vsel %vm592, %v5162, %v5164
        %5166 = vrot.lane.b32.xlu0 %v4254, 8
        %v5167 = vpop.permute.xlu0 %5166
        %5168 = vrot.lane.b32.xlu0 %v4256, 8
        %v5169 = vpop.permute.xlu0 %5168
        %5170 = vrot.lane.b32.xlu0 %v4259, 8
        %v5171 = vpop.permute.xlu0 %5170
        %5172 = vrot.lane.b32.xlu0 %v4261, 8
        %v5173 = vpop.permute.xlu0 %5172
        %5174 = vrot.lane.b32.xlu0 %v4264, 8
        %v5175 = vpop.permute.xlu0 %5174
        %5176 = vrot.lane.b32.xlu0 %v4266, 8
        %v5177 = vpop.permute.xlu0 %5176
        %5178 = vrot.lane.b32.xlu0 %v4269, 8
        %v5179 = vpop.permute.xlu0 %5178
        %5180 = vrot.lane.b32.xlu0 %v4271, 8
        %v5181 = vpop.permute.xlu0 %5180
        %5182 = vrot.lane.b32.xlu0 %v4274, 8
        %v5183 = vpop.permute.xlu0 %5182
        %5184 = vrot.lane.b32.xlu0 %v4276, 8
        %v5185 = vpop.permute.xlu0 %5184
        %5186 = vrot.lane.b32.xlu0 %v4279, 8
        %v5187 = vpop.permute.xlu0 %5186
        %5188 = vrot.lane.b32.xlu0 %v4281, 8
        %v5189 = vpop.permute.xlu0 %5188
        %5190 = vrot.lane.b32.xlu0 %v4284, 8
        %v5191 = vpop.permute.xlu0 %5190
        %5192 = vrot.lane.b32.xlu0 %v4286, 8
        %v5193 = vpop.permute.xlu0 %5192
        %5194 = vrot.lane.b32.xlu0 %v4289, 8
        %v5195 = vpop.permute.xlu0 %5194
        %5196 = vrot.lane.b32.xlu0 %v4291, 8
        %v5197 = vpop.permute.xlu0 %5196
        %5198 = vrot.lane.b32.xlu0 %v4294, 8
        %v5199 = vpop.permute.xlu0 %5198
        %5200 = vrot.lane.b32.xlu0 %v4296, 8
        %v5201 = vpop.permute.xlu0 %5200
        %5202 = vrot.lane.b32.xlu0 %v4299, 8
        %v5203 = vpop.permute.xlu0 %5202
        %5204 = vrot.lane.b32.xlu0 %v4301, 8
        %v5205 = vpop.permute.xlu0 %5204
        %5206 = vrot.lane.b32.xlu0 %v4304, 8
        %v5207 = vpop.permute.xlu0 %5206
        %5208 = vrot.lane.b32.xlu0 %v4306, 8
        %v5209 = vpop.permute.xlu0 %5208
        %5210 = vrot.lane.b32.xlu0 %v4309, 8
        %v5211 = vpop.permute.xlu0 %5210
        %5212 = vrot.lane.b32.xlu0 %v4311, 8
        %v5213 = vpop.permute.xlu0 %5212
        %5214 = vrot.lane.b32.xlu0 %v4314, 8
        %v5215 = vpop.permute.xlu0 %5214
        %5216 = vrot.lane.b32.xlu0 %v4316, 8
        %v5217 = vpop.permute.xlu0 %5216
        %5218 = vrot.lane.b32.xlu0 %v4319, 8
        %v5219 = vpop.permute.xlu0 %5218
        %5220 = vrot.lane.b32.xlu0 %v4321, 8
        %v5221 = vpop.permute.xlu0 %5220
        %5222 = vrot.lane.b32.xlu0 %v4324, 8
        %v5223 = vpop.permute.xlu0 %5222
        %5224 = vrot.lane.b32.xlu0 %v4326, 8
        %v5225 = vpop.permute.xlu0 %5224
        %5226 = vrot.lane.b32.xlu0 %v4329, 8
        %v5227 = vpop.permute.xlu0 %5226
        %5228 = vrot.lane.b32.xlu0 %v4331, 8
        %v5229 = vpop.permute.xlu0 %5228
        %5262 = vrot.lane.b32.xlu0 %v4382, 16
        %v5263 = vpop.permute.xlu0 %5262
        %5264 = vrot.lane.b32.xlu0 %v4384, 16
        %v5265 = vpop.permute.xlu0 %5264
        %5266 = vrot.lane.b32.xlu0 %v4387, 16
        %v5267 = vpop.permute.xlu0 %5266
        %5268 = vrot.lane.b32.xlu0 %v4389, 16
        %v5269 = vpop.permute.xlu0 %5268
        %5270 = vrot.lane.b32.xlu0 %v4392, 16
        %v5271 = vpop.permute.xlu0 %5270
        %5272 = vrot.lane.b32.xlu0 %v4394, 16
        %v5273 = vpop.permute.xlu0 %5272
        %5274 = vrot.lane.b32.xlu0 %v4397, 16
        %v5275 = vpop.permute.xlu0 %5274
        %5276 = vrot.lane.b32.xlu0 %v4399, 16
        %v5277 = vpop.permute.xlu0 %5276
        %5278 = vrot.lane.b32.xlu0 %v4402, 16
        %v5279 = vpop.permute.xlu0 %5278
        %5280 = vrot.lane.b32.xlu0 %v4404, 16
        %v5281 = vpop.permute.xlu0 %5280
        %5282 = vrot.lane.b32.xlu0 %v4407, 16
        %v5283 = vpop.permute.xlu0 %5282
        %5284 = vrot.lane.b32.xlu0 %v4409, 16
        %v5285 = vpop.permute.xlu0 %5284
        %5286 = vrot.lane.b32.xlu0 %v4412, 16
        %v5287 = vpop.permute.xlu0 %5286
        %5288 = vrot.lane.b32.xlu0 %v4414, 16
        %v5289 = vpop.permute.xlu0 %5288
        %5290 = vrot.lane.b32.xlu0 %v4417, 16
        %v5291 = vpop.permute.xlu0 %5290
        %5292 = vrot.lane.b32.xlu0 %v4419, 16
        %v5293 = vpop.permute.xlu0 %5292
        %5294 = vrot.lane.b32.xlu0 %v4422, 16
        %v5295 = vpop.permute.xlu0 %5294
        %5296 = vrot.lane.b32.xlu0 %v4424, 16
        %v5297 = vpop.permute.xlu0 %5296
        %5298 = vrot.lane.b32.xlu0 %v4427, 16
        %v5299 = vpop.permute.xlu0 %5298
        %5300 = vrot.lane.b32.xlu0 %v4429, 16
        %v5301 = vpop.permute.xlu0 %5300
        %5302 = vrot.lane.b32.xlu0 %v4432, 16
        %v5303 = vpop.permute.xlu0 %5302
        %5304 = vrot.lane.b32.xlu0 %v4434, 16
        %v5305 = vpop.permute.xlu0 %5304
        %5306 = vrot.lane.b32.xlu0 %v4437, 16
        %v5307 = vpop.permute.xlu0 %5306
        %5308 = vrot.lane.b32.xlu0 %v4439, 16
        %v5309 = vpop.permute.xlu0 %5308
        %5310 = vrot.lane.b32.xlu0 %v4442, 16
        %v5311 = vpop.permute.xlu0 %5310
        %5312 = vrot.lane.b32.xlu0 %v4444, 16
        %v5313 = vpop.permute.xlu0 %5312
        %5314 = vrot.lane.b32.xlu0 %v4447, 16
        %v5315 = vpop.permute.xlu0 %5314
        %5316 = vrot.lane.b32.xlu0 %v4449, 16
        %v5317 = vpop.permute.xlu0 %5316
        %5318 = vrot.lane.b32.xlu0 %v4452, 16
        %v5319 = vpop.permute.xlu0 %5318
        %5320 = vrot.lane.b32.xlu0 %v4454, 16
        %v5321 = vpop.permute.xlu0 %5320
        %5322 = vrot.lane.b32.xlu0 %v4457, 16
        %v5323 = vpop.permute.xlu0 %5322
        %5324 = vrot.lane.b32.xlu0 %v4459, 16
        %v5325 = vpop.permute.xlu0 %5324
        %5358 = vrot.lane.b32.xlu0 %v4493, 24
        %v5359 = vpop.permute.xlu0 %5358
        %5360 = vrot.lane.b32.xlu0 %v4494, 24
        %v5361 = vpop.permute.xlu0 %5360
        %5362 = vrot.lane.b32.xlu0 %v4495, 24
        %v5363 = vpop.permute.xlu0 %5362
        %5364 = vrot.lane.b32.xlu0 %v4496, 24
        %v5365 = vpop.permute.xlu0 %5364
        %5366 = vrot.lane.b32.xlu0 %v4497, 24
        %v5367 = vpop.permute.xlu0 %5366
        %5368 = vrot.lane.b32.xlu0 %v4498, 24
        %v5369 = vpop.permute.xlu0 %5368
        %5370 = vrot.lane.b32.xlu0 %v4499, 24
        %v5371 = vpop.permute.xlu0 %5370
        %5372 = vrot.lane.b32.xlu0 %v4500, 24
        %v5373 = vpop.permute.xlu0 %5372
        %5374 = vrot.lane.b32.xlu0 %v4501, 24
        %v5375 = vpop.permute.xlu0 %5374
        %5376 = vrot.lane.b32.xlu0 %v4502, 24
        %v5377 = vpop.permute.xlu0 %5376
        %5378 = vrot.lane.b32.xlu0 %v4503, 24
        %v5379 = vpop.permute.xlu0 %5378
        %5380 = vrot.lane.b32.xlu0 %v4504, 24
        %v5381 = vpop.permute.xlu0 %5380
        %5382 = vrot.lane.b32.xlu0 %v4505, 24
        %v5383 = vpop.permute.xlu0 %5382
        %5384 = vrot.lane.b32.xlu0 %v4506, 24
        %v5385 = vpop.permute.xlu0 %5384
        %5386 = vrot.lane.b32.xlu0 %v4507, 24
        %v5387 = vpop.permute.xlu0 %5386
        %5388 = vrot.lane.b32.xlu0 %v4508, 24
        %v5389 = vpop.permute.xlu0 %5388
        %5390 = vrot.lane.b32.xlu0 %v4509, 24
        %v5391 = vpop.permute.xlu0 %5390
        %5392 = vrot.lane.b32.xlu0 %v4510, 24
        %v5393 = vpop.permute.xlu0 %5392
        %5394 = vrot.lane.b32.xlu0 %v4511, 24
        %v5395 = vpop.permute.xlu0 %5394
        %5396 = vrot.lane.b32.xlu0 %v4512, 24
        %v5397 = vpop.permute.xlu0 %5396
        %5398 = vrot.lane.b32.xlu0 %v4513, 24
        %v5399 = vpop.permute.xlu0 %5398
        %5400 = vrot.lane.b32.xlu0 %v4514, 24
        %v5401 = vpop.permute.xlu0 %5400
        %5402 = vrot.lane.b32.xlu0 %v4515, 24
        %v5403 = vpop.permute.xlu0 %5402
        %5404 = vrot.lane.b32.xlu0 %v4516, 24
        %v5405 = vpop.permute.xlu0 %5404
        %5406 = vrot.lane.b32.xlu0 %v4517, 24
        %v5407 = vpop.permute.xlu0 %5406
        %5408 = vrot.lane.b32.xlu0 %v4518, 24
        %v5409 = vpop.permute.xlu0 %5408
        %5410 = vrot.lane.b32.xlu0 %v4519, 24
        %v5411 = vpop.permute.xlu0 %5410
        %5412 = vrot.lane.b32.xlu0 %v4520, 24
        %v5413 = vpop.permute.xlu0 %5412
        %5414 = vrot.lane.b32.xlu0 %v4521, 24
        %v5415 = vpop.permute.xlu0 %5414
        %5416 = vrot.lane.b32.xlu0 %v4522, 24
        %v5417 = vpop.permute.xlu0 %5416
        %5418 = vrot.lane.b32.xlu0 %v4523, 24
        %v5419 = vpop.permute.xlu0 %5418
        %5420 = vrot.lane.b32.xlu0 %v4524, 24
        %v5421 = vpop.permute.xlu0 %5420
        %5454 = vrot.lane.b32.xlu0 %v4607, 32
        %v5455 = vpop.permute.xlu0 %5454
        %5456 = vrot.lane.b32.xlu0 %v4609, 32
        %v5457 = vpop.permute.xlu0 %5456
        %5458 = vrot.lane.b32.xlu0 %v4612, 32
        %v5459 = vpop.permute.xlu0 %5458
        %5460 = vrot.lane.b32.xlu0 %v4614, 32
        %v5461 = vpop.permute.xlu0 %5460
        %5462 = vrot.lane.b32.xlu0 %v4617, 32
        %v5463 = vpop.permute.xlu0 %5462
        %5464 = vrot.lane.b32.xlu0 %v4619, 32
        %v5465 = vpop.permute.xlu0 %5464
        %5466 = vrot.lane.b32.xlu0 %v4622, 32
        %v5467 = vpop.permute.xlu0 %5466
        %5468 = vrot.lane.b32.xlu0 %v4624, 32
        %v5469 = vpop.permute.xlu0 %5468
        %5470 = vrot.lane.b32.xlu0 %v4627, 32
        %v5471 = vpop.permute.xlu0 %5470
        %5472 = vrot.lane.b32.xlu0 %v4629, 32
        %v5473 = vpop.permute.xlu0 %5472
        %5474 = vrot.lane.b32.xlu0 %v4632, 32
        %v5475 = vpop.permute.xlu0 %5474
        %5476 = vrot.lane.b32.xlu0 %v4634, 32
        %v5477 = vpop.permute.xlu0 %5476
        %5478 = vrot.lane.b32.xlu0 %v4637, 32
        %v5479 = vpop.permute.xlu0 %5478
        %5480 = vrot.lane.b32.xlu0 %v4639, 32
        %v5481 = vpop.permute.xlu0 %5480
        %5482 = vrot.lane.b32.xlu0 %v4642, 32
        %v5483 = vpop.permute.xlu0 %5482
        %5484 = vrot.lane.b32.xlu0 %v4644, 32
        %v5485 = vpop.permute.xlu0 %5484
        %5486 = vrot.lane.b32.xlu0 %v4647, 32
        %v5487 = vpop.permute.xlu0 %5486
        %5488 = vrot.lane.b32.xlu0 %v4649, 32
        %v5489 = vpop.permute.xlu0 %5488
        %5490 = vrot.lane.b32.xlu0 %v4652, 32
        %v5491 = vpop.permute.xlu0 %5490
        %5492 = vrot.lane.b32.xlu0 %v4654, 32
        %v5493 = vpop.permute.xlu0 %5492
        %5494 = vrot.lane.b32.xlu0 %v4657, 32
        %v5495 = vpop.permute.xlu0 %5494
        %5496 = vrot.lane.b32.xlu0 %v4659, 32
        %v5497 = vpop.permute.xlu0 %5496
        %5498 = vrot.lane.b32.xlu0 %v4662, 32
        %v5499 = vpop.permute.xlu0 %5498
        %5500 = vrot.lane.b32.xlu0 %v4664, 32
        %v5501 = vpop.permute.xlu0 %5500
        %5502 = vrot.lane.b32.xlu0 %v4667, 32
        %v5503 = vpop.permute.xlu0 %5502
        %5504 = vrot.lane.b32.xlu0 %v4669, 32
        %v5505 = vpop.permute.xlu0 %5504
        %5506 = vrot.lane.b32.xlu0 %v4672, 32
        %v5507 = vpop.permute.xlu0 %5506
        %5508 = vrot.lane.b32.xlu0 %v4674, 32
        %v5509 = vpop.permute.xlu0 %5508
        %5510 = vrot.lane.b32.xlu0 %v4677, 32
        %v5511 = vpop.permute.xlu0 %5510
        %5512 = vrot.lane.b32.xlu0 %v4679, 32
        %v5513 = vpop.permute.xlu0 %5512
        %5514 = vrot.lane.b32.xlu0 %v4682, 32
        %v5515 = vpop.permute.xlu0 %5514
        %5516 = vrot.lane.b32.xlu0 %v4684, 32
        %v5517 = vpop.permute.xlu0 %5516
        %5550 = vrot.lane.b32.xlu0 %v4735, 40
        %v5551 = vpop.permute.xlu0 %5550
        %5552 = vrot.lane.b32.xlu0 %v4737, 40
        %v5553 = vpop.permute.xlu0 %5552
        %5554 = vrot.lane.b32.xlu0 %v4740, 40
        %v5555 = vpop.permute.xlu0 %5554
        %5556 = vrot.lane.b32.xlu0 %v4742, 40
        %v5557 = vpop.permute.xlu0 %5556
        %5558 = vrot.lane.b32.xlu0 %v4745, 40
        %v5559 = vpop.permute.xlu0 %5558
        %5560 = vrot.lane.b32.xlu0 %v4747, 40
        %v5561 = vpop.permute.xlu0 %5560
        %5562 = vrot.lane.b32.xlu0 %v4750, 40
        %v5563 = vpop.permute.xlu0 %5562
        %5564 = vrot.lane.b32.xlu0 %v4752, 40
        %v5565 = vpop.permute.xlu0 %5564
        %5566 = vrot.lane.b32.xlu0 %v4755, 40
        %v5567 = vpop.permute.xlu0 %5566
        %5568 = vrot.lane.b32.xlu0 %v4757, 40
        %v5569 = vpop.permute.xlu0 %5568
        %5570 = vrot.lane.b32.xlu0 %v4760, 40
        %v5571 = vpop.permute.xlu0 %5570
        %5572 = vrot.lane.b32.xlu0 %v4762, 40
        %v5573 = vpop.permute.xlu0 %5572
        %5574 = vrot.lane.b32.xlu0 %v4765, 40
        %v5575 = vpop.permute.xlu0 %5574
        %5576 = vrot.lane.b32.xlu0 %v4767, 40
        %v5577 = vpop.permute.xlu0 %5576
        %5578 = vrot.lane.b32.xlu0 %v4770, 40
        %v5579 = vpop.permute.xlu0 %5578
        %5580 = vrot.lane.b32.xlu0 %v4772, 40
        %v5581 = vpop.permute.xlu0 %5580
        %5582 = vrot.lane.b32.xlu0 %v4775, 40
        %v5583 = vpop.permute.xlu0 %5582
        %5584 = vrot.lane.b32.xlu0 %v4777, 40
        %v5585 = vpop.permute.xlu0 %5584
        %5586 = vrot.lane.b32.xlu0 %v4780, 40
        %v5587 = vpop.permute.xlu0 %5586
        %5588 = vrot.lane.b32.xlu0 %v4782, 40
        %v5589 = vpop.permute.xlu0 %5588
        %5590 = vrot.lane.b32.xlu0 %v4785, 40
        %v5591 = vpop.permute.xlu0 %5590
        %5592 = vrot.lane.b32.xlu0 %v4787, 40
        %v5593 = vpop.permute.xlu0 %5592
        %5594 = vrot.lane.b32.xlu0 %v4790, 40
        %v5595 = vpop.permute.xlu0 %5594
        %5596 = vrot.lane.b32.xlu0 %v4792, 40
        %v5597 = vpop.permute.xlu0 %5596
        %5598 = vrot.lane.b32.xlu0 %v4795, 40
        %v5599 = vpop.permute.xlu0 %5598
        %5600 = vrot.lane.b32.xlu0 %v4797, 40
        %v5601 = vpop.permute.xlu0 %5600
        %5602 = vrot.lane.b32.xlu0 %v4800, 40
        %v5603 = vpop.permute.xlu0 %5602
        %5604 = vrot.lane.b32.xlu0 %v4802, 40
        %v5605 = vpop.permute.xlu0 %5604
        %5606 = vrot.lane.b32.xlu0 %v4805, 40
        %v5607 = vpop.permute.xlu0 %5606
        %5608 = vrot.lane.b32.xlu0 %v4807, 40
        %v5609 = vpop.permute.xlu0 %5608
        %5610 = vrot.lane.b32.xlu0 %v4810, 40
        %v5611 = vpop.permute.xlu0 %5610
        %5612 = vrot.lane.b32.xlu0 %v4812, 40
        %v5613 = vpop.permute.xlu0 %5612
        %5646 = vrot.lane.b32.xlu0 %v4846, 48
        %v5647 = vpop.permute.xlu0 %5646
        %5648 = vrot.lane.b32.xlu0 %v4847, 48
        %v5649 = vpop.permute.xlu0 %5648
        %5650 = vrot.lane.b32.xlu0 %v4848, 48
        %v5651 = vpop.permute.xlu0 %5650
        %5652 = vrot.lane.b32.xlu0 %v4849, 48
        %v5653 = vpop.permute.xlu0 %5652
        %5654 = vrot.lane.b32.xlu0 %v4850, 48
        %v5655 = vpop.permute.xlu0 %5654
        %5656 = vrot.lane.b32.xlu0 %v4851, 48
        %v5657 = vpop.permute.xlu0 %5656
        %5658 = vrot.lane.b32.xlu0 %v4852, 48
        %v5659 = vpop.permute.xlu0 %5658
        %5660 = vrot.lane.b32.xlu0 %v4853, 48
        %v5661 = vpop.permute.xlu0 %5660
        %5662 = vrot.lane.b32.xlu0 %v4854, 48
        %v5663 = vpop.permute.xlu0 %5662
        %5664 = vrot.lane.b32.xlu0 %v4855, 48
        %v5665 = vpop.permute.xlu0 %5664
        %5666 = vrot.lane.b32.xlu0 %v4856, 48
        %v5667 = vpop.permute.xlu0 %5666
        %5668 = vrot.lane.b32.xlu0 %v4857, 48
        %v5669 = vpop.permute.xlu0 %5668
        %5670 = vrot.lane.b32.xlu0 %v4858, 48
        %v5671 = vpop.permute.xlu0 %5670
        %5672 = vrot.lane.b32.xlu0 %v4859, 48
        %v5673 = vpop.permute.xlu0 %5672
        %5674 = vrot.lane.b32.xlu0 %v4860, 48
        %v5675 = vpop.permute.xlu0 %5674
        %5676 = vrot.lane.b32.xlu0 %v4861, 48
        %v5677 = vpop.permute.xlu0 %5676
        %5678 = vrot.lane.b32.xlu0 %v4862, 48
        %v5679 = vpop.permute.xlu0 %5678
        %5680 = vrot.lane.b32.xlu0 %v4863, 48
        %v5681 = vpop.permute.xlu0 %5680
        %5682 = vrot.lane.b32.xlu0 %v4864, 48
        %v5683 = vpop.permute.xlu0 %5682
        %5684 = vrot.lane.b32.xlu0 %v4865, 48
        %v5685 = vpop.permute.xlu0 %5684
        %5686 = vrot.lane.b32.xlu0 %v4866, 48
        %v5687 = vpop.permute.xlu0 %5686
        %5688 = vrot.lane.b32.xlu0 %v4867, 48
        %v5689 = vpop.permute.xlu0 %5688
        %5690 = vrot.lane.b32.xlu0 %v4868, 48
        %v5691 = vpop.permute.xlu0 %5690
        %5692 = vrot.lane.b32.xlu0 %v4869, 48
        %v5693 = vpop.permute.xlu0 %5692
        %5694 = vrot.lane.b32.xlu0 %v4870, 48
        %v5695 = vpop.permute.xlu0 %5694
        %5696 = vrot.lane.b32.xlu0 %v4871, 48
        %v5697 = vpop.permute.xlu0 %5696
        %5698 = vrot.lane.b32.xlu0 %v4872, 48
        %v5699 = vpop.permute.xlu0 %5698
        %5700 = vrot.lane.b32.xlu0 %v4873, 48
        %v5701 = vpop.permute.xlu0 %5700
        %5702 = vrot.lane.b32.xlu0 %v4874, 48
        %v5703 = vpop.permute.xlu0 %5702
        %5704 = vrot.lane.b32.xlu0 %v4875, 48
        %v5705 = vpop.permute.xlu0 %5704
        %5706 = vrot.lane.b32.xlu0 %v4876, 48
        %v5707 = vpop.permute.xlu0 %5706
        %5708 = vrot.lane.b32.xlu0 %v4877, 48
        %v5709 = vpop.permute.xlu0 %5708
        %5742 = vrot.lane.b32.xlu0 %v4960, 56
        %v5743 = vpop.permute.xlu0 %5742
        %5744 = vrot.lane.b32.xlu0 %v4962, 56
        %v5745 = vpop.permute.xlu0 %5744
        %5746 = vrot.lane.b32.xlu0 %v4965, 56
        %v5747 = vpop.permute.xlu0 %5746
        %5748 = vrot.lane.b32.xlu0 %v4967, 56
        %v5749 = vpop.permute.xlu0 %5748
        %5750 = vrot.lane.b32.xlu0 %v4970, 56
        %v5751 = vpop.permute.xlu0 %5750
        %5752 = vrot.lane.b32.xlu0 %v4972, 56
        %v5753 = vpop.permute.xlu0 %5752
        %5754 = vrot.lane.b32.xlu0 %v4975, 56
        %v5755 = vpop.permute.xlu0 %5754
        %5756 = vrot.lane.b32.xlu0 %v4977, 56
        %v5757 = vpop.permute.xlu0 %5756
        %5758 = vrot.lane.b32.xlu0 %v4980, 56
        %v5759 = vpop.permute.xlu0 %5758
        %5760 = vrot.lane.b32.xlu0 %v4982, 56
        %v5761 = vpop.permute.xlu0 %5760
        %5762 = vrot.lane.b32.xlu0 %v4985, 56
        %v5763 = vpop.permute.xlu0 %5762
        %5764 = vrot.lane.b32.xlu0 %v4987, 56
        %v5765 = vpop.permute.xlu0 %5764
        %5766 = vrot.lane.b32.xlu0 %v4990, 56
        %v5767 = vpop.permute.xlu0 %5766
        %5768 = vrot.lane.b32.xlu0 %v4992, 56
        %v5769 = vpop.permute.xlu0 %5768
        %5770 = vrot.lane.b32.xlu0 %v4995, 56
        %v5771 = vpop.permute.xlu0 %5770
        %5772 = vrot.lane.b32.xlu0 %v4997, 56
        %v5773 = vpop.permute.xlu0 %5772
        %5774 = vrot.lane.b32.xlu0 %v5000, 56
        %v5775 = vpop.permute.xlu0 %5774
        %5776 = vrot.lane.b32.xlu0 %v5002, 56
        %v5777 = vpop.permute.xlu0 %5776
        %5778 = vrot.lane.b32.xlu0 %v5005, 56
        %v5779 = vpop.permute.xlu0 %5778
        %5780 = vrot.lane.b32.xlu0 %v5007, 56
        %v5781 = vpop.permute.xlu0 %5780
        %5782 = vrot.lane.b32.xlu0 %v5010, 56
        %v5783 = vpop.permute.xlu0 %5782
        %5784 = vrot.lane.b32.xlu0 %v5012, 56
        %v5785 = vpop.permute.xlu0 %5784
        %5786 = vrot.lane.b32.xlu0 %v5015, 56
        %v5787 = vpop.permute.xlu0 %5786
        %5788 = vrot.lane.b32.xlu0 %v5017, 56
        %v5789 = vpop.permute.xlu0 %5788
        %5790 = vrot.lane.b32.xlu0 %v5020, 56
        %v5791 = vpop.permute.xlu0 %5790
        %5792 = vrot.lane.b32.xlu0 %v5022, 56
        %v5793 = vpop.permute.xlu0 %5792
        %5794 = vrot.lane.b32.xlu0 %v5025, 56
        %v5795 = vpop.permute.xlu0 %5794
        %5796 = vrot.lane.b32.xlu0 %v5027, 56
        %v5797 = vpop.permute.xlu0 %5796
        %5798 = vrot.lane.b32.xlu0 %v5030, 56
        %v5799 = vpop.permute.xlu0 %5798
        %5800 = vrot.lane.b32.xlu0 %v5032, 56
        %v5801 = vpop.permute.xlu0 %5800
        %5802 = vrot.lane.b32.xlu0 %v5035, 56
        %v5803 = vpop.permute.xlu0 %5802
        %5804 = vrot.lane.b32.xlu0 %v5037, 56
        %v5805 = vpop.permute.xlu0 %5804
        %5838 = vrot.lane.b32.xlu0 %v5088, 64
        %v5839 = vpop.permute.xlu0 %5838
        %5840 = vrot.lane.b32.xlu0 %v5090, 64
        %v5841 = vpop.permute.xlu0 %5840
        %5842 = vrot.lane.b32.xlu0 %v5093, 64
        %v5843 = vpop.permute.xlu0 %5842
        %5844 = vrot.lane.b32.xlu0 %v5095, 64
        %v5845 = vpop.permute.xlu0 %5844
        %5846 = vrot.lane.b32.xlu0 %v5098, 64
        %v5847 = vpop.permute.xlu0 %5846
        %5848 = vrot.lane.b32.xlu0 %v5100, 64
        %v5849 = vpop.permute.xlu0 %5848
        %5850 = vrot.lane.b32.xlu0 %v5103, 64
        %v5851 = vpop.permute.xlu0 %5850
        %5852 = vrot.lane.b32.xlu0 %v5105, 64
        %v5853 = vpop.permute.xlu0 %5852
        %5854 = vrot.lane.b32.xlu0 %v5108, 64
        %v5855 = vpop.permute.xlu0 %5854
        %5856 = vrot.lane.b32.xlu0 %v5110, 64
        %v5857 = vpop.permute.xlu0 %5856
        %5858 = vrot.lane.b32.xlu0 %v5113, 64
        %v5859 = vpop.permute.xlu0 %5858
        %5860 = vrot.lane.b32.xlu0 %v5115, 64
        %v5861 = vpop.permute.xlu0 %5860
        %5862 = vrot.lane.b32.xlu0 %v5118, 64
        %v5863 = vpop.permute.xlu0 %5862
        %5864 = vrot.lane.b32.xlu0 %v5120, 64
        %v5865 = vpop.permute.xlu0 %5864
        %5866 = vrot.lane.b32.xlu0 %v5123, 64
        %v5867 = vpop.permute.xlu0 %5866
        %5868 = vrot.lane.b32.xlu0 %v5125, 64
        %v5869 = vpop.permute.xlu0 %5868
        %5870 = vrot.lane.b32.xlu0 %v5128, 64
        %v5871 = vpop.permute.xlu0 %5870
        %5872 = vrot.lane.b32.xlu0 %v5130, 64
        %v5873 = vpop.permute.xlu0 %5872
        %5874 = vrot.lane.b32.xlu0 %v5133, 64
        %v5875 = vpop.permute.xlu0 %5874
        %5876 = vrot.lane.b32.xlu0 %v5135, 64
        %v5877 = vpop.permute.xlu0 %5876
        %5878 = vrot.lane.b32.xlu0 %v5138, 64
        %v5879 = vpop.permute.xlu0 %5878
        %5880 = vrot.lane.b32.xlu0 %v5140, 64
        %v5881 = vpop.permute.xlu0 %5880
        %5882 = vrot.lane.b32.xlu0 %v5143, 64
        %v5883 = vpop.permute.xlu0 %5882
        %5884 = vrot.lane.b32.xlu0 %v5145, 64
        %v5885 = vpop.permute.xlu0 %5884
        %5886 = vrot.lane.b32.xlu0 %v5148, 64
        %v5887 = vpop.permute.xlu0 %5886
        %5888 = vrot.lane.b32.xlu0 %v5150, 64
        %v5889 = vpop.permute.xlu0 %5888
        %5890 = vrot.lane.b32.xlu0 %v5153, 64
        %v5891 = vpop.permute.xlu0 %5890
        %5892 = vrot.lane.b32.xlu0 %v5155, 64
        %v5893 = vpop.permute.xlu0 %5892
        %5894 = vrot.lane.b32.xlu0 %v5158, 64
        %v5895 = vpop.permute.xlu0 %5894
        %5896 = vrot.lane.b32.xlu0 %v5160, 64
        %v5897 = vpop.permute.xlu0 %5896
        %5898 = vrot.lane.b32.xlu0 %v5163, 64
        %v5899 = vpop.permute.xlu0 %5898
        %5900 = vrot.lane.b32.xlu0 %v5165, 64
        %v5901 = vpop.permute.xlu0 %5900
        %v5934 = vsel %vm2582, %v4140, %v5167
        %v5935 = vsel %vm2582, %v4141, %v5169
        %v5936 = vsel %vm2582, %v4142, %v5171
        %v5937 = vsel %vm2582, %v4143, %v5173
        %v5938 = vsel %vm2582, %v4144, %v5175
        %v5939 = vsel %vm2582, %v4145, %v5177
        %v5940 = vsel %vm2582, %v4146, %v5179
        %v5941 = vsel %vm2582, %v4147, %v5181
        %v5942 = vsel %vm2582, %v4148, %v5183
        %v5943 = vsel %vm2582, %v4149, %v5185
        %v5944 = vsel %vm2582, %v4150, %v5187
        %v5945 = vsel %vm2582, %v4151, %v5189
        %v5946 = vsel %vm2582, %v4152, %v5191
        %v5947 = vsel %vm2582, %v4153, %v5193
        %v5948 = vsel %vm2582, %v4154, %v5195
        %v5949 = vsel %vm2582, %v4155, %v5197
        %v5950 = vsel %vm2582, %v4156, %v5199
        %v5951 = vsel %vm2582, %v4157, %v5201
        %v5952 = vsel %vm2582, %v4158, %v5203
        %v5953 = vsel %vm2582, %v4159, %v5205
        %v5954 = vsel %vm2582, %v4160, %v5207
        %v5955 = vsel %vm2582, %v4161, %v5209
        %v5956 = vsel %vm2582, %v4162, %v5211
        %v5957 = vsel %vm2582, %v4163, %v5213
        %v5958 = vsel %vm2582, %v4164, %v5215
        %v5959 = vsel %vm2582, %v4165, %v5217
        %v5960 = vsel %vm2582, %v4166, %v5219
        %v5961 = vsel %vm2582, %v4167, %v5221
        %v5962 = vsel %vm2582, %v4168, %v5223
        %v5963 = vsel %vm2582, %v4169, %v5225
        %v5964 = vsel %vm2582, %v4170, %v5227
        %v5965 = vsel %vm2582, %v4171, %v5229
        %v5966 = vsel %vm2664, %v5934, %v5263
        %v5967 = vsel %vm2664, %v5935, %v5265
        %v5968 = vsel %vm2664, %v5936, %v5267
        %v5969 = vsel %vm2664, %v5937, %v5269
        %v5970 = vsel %vm2664, %v5938, %v5271
        %v5971 = vsel %vm2664, %v5939, %v5273
        %v5972 = vsel %vm2664, %v5940, %v5275
        %v5973 = vsel %vm2664, %v5941, %v5277
        %v5974 = vsel %vm2664, %v5942, %v5279
        %v5975 = vsel %vm2664, %v5943, %v5281
        %v5976 = vsel %vm2664, %v5944, %v5283
        %v5977 = vsel %vm2664, %v5945, %v5285
        %v5978 = vsel %vm2664, %v5946, %v5287
        %v5979 = vsel %vm2664, %v5947, %v5289
        %v5980 = vsel %vm2664, %v5948, %v5291
        %v5981 = vsel %vm2664, %v5949, %v5293
        %v5982 = vsel %vm2664, %v5950, %v5295
        %v5983 = vsel %vm2664, %v5951, %v5297
        %v5984 = vsel %vm2664, %v5952, %v5299
        %v5985 = vsel %vm2664, %v5953, %v5301
        %v5986 = vsel %vm2664, %v5954, %v5303
        %v5987 = vsel %vm2664, %v5955, %v5305
        %v5988 = vsel %vm2664, %v5956, %v5307
        %v5989 = vsel %vm2664, %v5957, %v5309
        %v5990 = vsel %vm2664, %v5958, %v5311
        %v5991 = vsel %vm2664, %v5959, %v5313
        %v5992 = vsel %vm2664, %v5960, %v5315
        %v5993 = vsel %vm2664, %v5961, %v5317
        %v5994 = vsel %vm2664, %v5962, %v5319
        %v5995 = vsel %vm2664, %v5963, %v5321
        %v5996 = vsel %vm2664, %v5964, %v5323
        %v5997 = vsel %vm2664, %v5965, %v5325
        %v5998 = vsel %vm2746, %v5966, %v5359
        %v5999 = vsel %vm2746, %v5967, %v5361
        %v6000 = vsel %vm2746, %v5968, %v5363
        %v6001 = vsel %vm2746, %v5969, %v5365
        %v6002 = vsel %vm2746, %v5970, %v5367
        %v6003 = vsel %vm2746, %v5971, %v5369
        %v6004 = vsel %vm2746, %v5972, %v5371
        %v6005 = vsel %vm2746, %v5973, %v5373
        %v6006 = vsel %vm2746, %v5974, %v5375
        %v6007 = vsel %vm2746, %v5975, %v5377
        %v6008 = vsel %vm2746, %v5976, %v5379
        %v6009 = vsel %vm2746, %v5977, %v5381
        %v6010 = vsel %vm2746, %v5978, %v5383
        %v6011 = vsel %vm2746, %v5979, %v5385
        %v6012 = vsel %vm2746, %v5980, %v5387
        %v6013 = vsel %vm2746, %v5981, %v5389
        %v6014 = vsel %vm2746, %v5982, %v5391
        %v6015 = vsel %vm2746, %v5983, %v5393
        %v6016 = vsel %vm2746, %v5984, %v5395
        %v6017 = vsel %vm2746, %v5985, %v5397
        %v6018 = vsel %vm2746, %v5986, %v5399
        %v6019 = vsel %vm2746, %v5987, %v5401
        %v6020 = vsel %vm2746, %v5988, %v5403
        %v6021 = vsel %vm2746, %v5989, %v5405
        %v6022 = vsel %vm2746, %v5990, %v5407
        %v6023 = vsel %vm2746, %v5991, %v5409
        %v6024 = vsel %vm2746, %v5992, %v5411
        %v6025 = vsel %vm2746, %v5993, %v5413
        %v6026 = vsel %vm2746, %v5994, %v5415
        %v6027 = vsel %vm2746, %v5995, %v5417
        %v6028 = vsel %vm2746, %v5996, %v5419
        %v6029 = vsel %vm2746, %v5997, %v5421
        %v6030 = vsel %vm2828, %v5998, %v5455
        %v6031 = vsel %vm2828, %v5999, %v5457
        %v6032 = vsel %vm2828, %v6000, %v5459
        %v6033 = vsel %vm2828, %v6001, %v5461
        %v6034 = vsel %vm2828, %v6002, %v5463
        %v6035 = vsel %vm2828, %v6003, %v5465
        %v6036 = vsel %vm2828, %v6004, %v5467
        %v6037 = vsel %vm2828, %v6005, %v5469
        %v6038 = vsel %vm2828, %v6006, %v5471
        %v6039 = vsel %vm2828, %v6007, %v5473
        %v6040 = vsel %vm2828, %v6008, %v5475
        %v6041 = vsel %vm2828, %v6009, %v5477
        %v6042 = vsel %vm2828, %v6010, %v5479
        %v6043 = vsel %vm2828, %v6011, %v5481
        %v6044 = vsel %vm2828, %v6012, %v5483
        %v6045 = vsel %vm2828, %v6013, %v5485
        %v6046 = vsel %vm2828, %v6014, %v5487
        %v6047 = vsel %vm2828, %v6015, %v5489
        %v6048 = vsel %vm2828, %v6016, %v5491
        %v6049 = vsel %vm2828, %v6017, %v5493
        %v6050 = vsel %vm2828, %v6018, %v5495
        %v6051 = vsel %vm2828, %v6019, %v5497
        %v6052 = vsel %vm2828, %v6020, %v5499
        %v6053 = vsel %vm2828, %v6021, %v5501
        %v6054 = vsel %vm2828, %v6022, %v5503
        %v6055 = vsel %vm2828, %v6023, %v5505
        %v6056 = vsel %vm2828, %v6024, %v5507
        %v6057 = vsel %vm2828, %v6025, %v5509
        %v6058 = vsel %vm2828, %v6026, %v5511
        %v6059 = vsel %vm2828, %v6027, %v5513
        %v6060 = vsel %vm2828, %v6028, %v5515
        %v6061 = vsel %vm2828, %v6029, %v5517
        %vm6062 = vcmask 326656
        %v6063 = vsel %vm6062, %v6030, %v5551
        %v6064 = vsel %vm6062, %v6031, %v5553
        %v6065 = vsel %vm6062, %v6032, %v5555
        %v6066 = vsel %vm6062, %v6033, %v5557
        %v6067 = vsel %vm6062, %v6034, %v5559
        %v6068 = vsel %vm6062, %v6035, %v5561
        %v6069 = vsel %vm6062, %v6036, %v5563
        %v6070 = vsel %vm6062, %v6037, %v5565
        %v6071 = vsel %vm6062, %v6038, %v5567
        %v6072 = vsel %vm6062, %v6039, %v5569
        %v6073 = vsel %vm6062, %v6040, %v5571
        %v6074 = vsel %vm6062, %v6041, %v5573
        %v6075 = vsel %vm6062, %v6042, %v5575
        %v6076 = vsel %vm6062, %v6043, %v5577
        %v6077 = vsel %vm6062, %v6044, %v5579
        %v6078 = vsel %vm6062, %v6045, %v5581
        %v6079 = vsel %vm6062, %v6046, %v5583
        %v6080 = vsel %vm6062, %v6047, %v5585
        %v6081 = vsel %vm6062, %v6048, %v5587
        %v6082 = vsel %vm6062, %v6049, %v5589
        %v6083 = vsel %vm6062, %v6050, %v5591
        %v6084 = vsel %vm6062, %v6051, %v5593
        %v6085 = vsel %vm6062, %v6052, %v5595
        %v6086 = vsel %vm6062, %v6053, %v5597
        %v6087 = vsel %vm6062, %v6054, %v5599
        %v6088 = vsel %vm6062, %v6055, %v5601
        %v6089 = vsel %vm6062, %v6056, %v5603
        %v6090 = vsel %vm6062, %v6057, %v5605
        %v6091 = vsel %vm6062, %v6058, %v5607
        %v6092 = vsel %vm6062, %v6059, %v5609
        %v6093 = vsel %vm6062, %v6060, %v5611
        %v6094 = vsel %vm6062, %v6061, %v5613
        %vm6095 = vcmask 392192
        %v6096 = vsel %vm6095, %v6063, %v5647
        %v6097 = vsel %vm6095, %v6064, %v5649
        %v6098 = vsel %vm6095, %v6065, %v5651
        %v6099 = vsel %vm6095, %v6066, %v5653
        %v6100 = vsel %vm6095, %v6067, %v5655
        %v6101 = vsel %vm6095, %v6068, %v5657
        %v6102 = vsel %vm6095, %v6069, %v5659
        %v6103 = vsel %vm6095, %v6070, %v5661
        %v6104 = vsel %vm6095, %v6071, %v5663
        %v6105 = vsel %vm6095, %v6072, %v5665
        %v6106 = vsel %vm6095, %v6073, %v5667
        %v6107 = vsel %vm6095, %v6074, %v5669
        %v6108 = vsel %vm6095, %v6075, %v5671
        %v6109 = vsel %vm6095, %v6076, %v5673
        %v6110 = vsel %vm6095, %v6077, %v5675
        %v6111 = vsel %vm6095, %v6078, %v5677
        %v6112 = vsel %vm6095, %v6079, %v5679
        %v6113 = vsel %vm6095, %v6080, %v5681
        %v6114 = vsel %vm6095, %v6081, %v5683
        %v6115 = vsel %vm6095, %v6082, %v5685
        %v6116 = vsel %vm6095, %v6083, %v5687
        %v6117 = vsel %vm6095, %v6084, %v5689
        %v6118 = vsel %vm6095, %v6085, %v5691
        %v6119 = vsel %vm6095, %v6086, %v5693
        %v6120 = vsel %vm6095, %v6087, %v5695
        %v6121 = vsel %vm6095, %v6088, %v5697
        %v6122 = vsel %vm6095, %v6089, %v5699
        %v6123 = vsel %vm6095, %v6090, %v5701
        %v6124 = vsel %vm6095, %v6091, %v5703
        %v6125 = vsel %vm6095, %v6092, %v5705
        %v6126 = vsel %vm6095, %v6093, %v5707
        %v6127 = vsel %vm6095, %v6094, %v5709
        %vm6128 = vcmask 457728
        %v6129 = vsel %vm6128, %v6096, %v5743
        %v6130 = vsel %vm6128, %v6097, %v5745
        %v6131 = vsel %vm6128, %v6098, %v5747
        %v6132 = vsel %vm6128, %v6099, %v5749
        %v6133 = vsel %vm6128, %v6100, %v5751
        %v6134 = vsel %vm6128, %v6101, %v5753
        %v6135 = vsel %vm6128, %v6102, %v5755
        %v6136 = vsel %vm6128, %v6103, %v5757
        %v6137 = vsel %vm6128, %v6104, %v5759
        %v6138 = vsel %vm6128, %v6105, %v5761
        %v6139 = vsel %vm6128, %v6106, %v5763
        %v6140 = vsel %vm6128, %v6107, %v5765
        %v6141 = vsel %vm6128, %v6108, %v5767
        %v6142 = vsel %vm6128, %v6109, %v5769
        %v6143 = vsel %vm6128, %v6110, %v5771
        %v6144 = vsel %vm6128, %v6111, %v5773
        %v6145 = vsel %vm6128, %v6112, %v5775
        %v6146 = vsel %vm6128, %v6113, %v5777
        %v6147 = vsel %vm6128, %v6114, %v5779
        %v6148 = vsel %vm6128, %v6115, %v5781
        %v6149 = vsel %vm6128, %v6116, %v5783
        %v6150 = vsel %vm6128, %v6117, %v5785
        %v6151 = vsel %vm6128, %v6118, %v5787
        %v6152 = vsel %vm6128, %v6119, %v5789
        %v6153 = vsel %vm6128, %v6120, %v5791
        %v6154 = vsel %vm6128, %v6121, %v5793
        %v6155 = vsel %vm6128, %v6122, %v5795
        %v6156 = vsel %vm6128, %v6123, %v5797
        %v6157 = vsel %vm6128, %v6124, %v5799
        %v6158 = vsel %vm6128, %v6125, %v5801
        %v6159 = vsel %vm6128, %v6126, %v5803
        %v6160 = vsel %vm6128, %v6127, %v5805
        %vm6161 = vcmask 523264
        %v6162 = vsel %vm6161, %v6129, %v5839
        %v6163 = vsel %vm6161, %v6130, %v5841
        %v6164 = vsel %vm6161, %v6131, %v5843
        %v6165 = vsel %vm6161, %v6132, %v5845
        %v6166 = vsel %vm6161, %v6133, %v5847
        %v6167 = vsel %vm6161, %v6134, %v5849
        %v6168 = vsel %vm6161, %v6135, %v5851
        %v6169 = vsel %vm6161, %v6136, %v5853
        %v6170 = vsel %vm6161, %v6137, %v5855
        %v6171 = vsel %vm6161, %v6138, %v5857
        %v6172 = vsel %vm6161, %v6139, %v5859
        %v6173 = vsel %vm6161, %v6140, %v5861
        %v6174 = vsel %vm6161, %v6141, %v5863
        %v6175 = vsel %vm6161, %v6142, %v5865
        %v6176 = vsel %vm6161, %v6143, %v5867
        %v6177 = vsel %vm6161, %v6144, %v5869
        %v6178 = vsel %vm6161, %v6145, %v5871
        %v6179 = vsel %vm6161, %v6146, %v5873
        %v6180 = vsel %vm6161, %v6147, %v5875
        %v6181 = vsel %vm6161, %v6148, %v5877
        %v6182 = vsel %vm6161, %v6149, %v5879
        %v6183 = vsel %vm6161, %v6150, %v5881
        %v6184 = vsel %vm6161, %v6151, %v5883
        %v6185 = vsel %vm6161, %v6152, %v5885
        %v6186 = vsel %vm6161, %v6153, %v5887
        %v6187 = vsel %vm6161, %v6154, %v5889
        %v6188 = vsel %vm6161, %v6155, %v5891
        %v6189 = vsel %vm6161, %v6156, %v5893
        %v6190 = vsel %vm6161, %v6157, %v5895
        %v6191 = vsel %vm6161, %v6158, %v5897
        %v6192 = vsel %vm6161, %v6159, %v5899
        %v6193 = vsel %vm6161, %v6160, %v5901
        %v6194 = vpack.c.bf16 %v6163, %v6162
        %v6195 = vpack.c.bf16 %v6165, %v6164
        %v6196 = vpack.c.bf16 %v6167, %v6166
        %v6197 = vpack.c.bf16 %v6169, %v6168
        %v6198 = vpack.c.bf16 %v6171, %v6170
        %v6199 = vpack.c.bf16 %v6173, %v6172
        %v6200 = vpack.c.bf16 %v6175, %v6174
        %v6201 = vpack.c.bf16 %v6177, %v6176
        %v6202 = vpack.c.bf16 %v6179, %v6178
        %v6203 = vpack.c.bf16 %v6181, %v6180
        %v6204 = vpack.c.bf16 %v6183, %v6182
        %v6205 = vpack.c.bf16 %v6185, %v6184
        %v6206 = vpack.c.bf16 %v6187, %v6186
        %v6207 = vpack.c.bf16 %v6189, %v6188
        %v6208 = vpack.c.bf16 %v6191, %v6190
        %v6209 = vpack.c.bf16 %v6193, %v6192
        %v6210 = vld [vmem:[%s2] sm:$0xf]
        %v6211 = vld [vmem:[%s2 + $0x4] sm:$0xf]
        %v6212 = vld [vmem:[%s2 + $0x8] sm:$0xf]
        %v6213 = vld [vmem:[%s2 + $0xc] sm:$0xf]
        %v6214 = vld [vmem:[%s2 + $0x10] sm:$0xf]
        %v6215 = vld [vmem:[%s2 + $0x14] sm:$0xf]
        %v6216 = vld [vmem:[%s2 + $0x18] sm:$0xf]
        %v6217 = vld [vmem:[%s2 + $0x1c] sm:$0xf]
        %v6218 = vld [vmem:[%s2 + $0x20] sm:$0xf]
        %v6228 = vunpack.c.l.b16 %v6210
        %v6229 = vunpack.c.l.b16 %v6211
        %v6230 = vunpack.c.l.b16 %v6212
        %v6231 = vunpack.c.l.b16 %v6213
        %v6232 = vunpack.c.l.b16 %v6214
        %v6233 = vunpack.c.l.b16 %v6215
        %v6234 = vunpack.c.l.b16 %v6216
        %v6235 = vunpack.c.l.b16 %v6217
        %v6236 = vunpack.c.l.b16 %v6218
        %v6237 = vpack.c.b16 %v6229, %v6228
        %v6238 = vpack.c.b16 %v6231, %v6230
        %v6239 = vpack.c.b16 %v6233, %v6232
        %v6240 = vpack.c.b16 %v6235, %v6234
        %v6241 = vpack.c.b16 %v6236, %v6236
        %vm6246 = vcmask 588800
        %v6248 = vsel %vm6246, %v6194, 0
        %v6251 = vsel %vm6246, %v6195, 0
        %v6254 = vsel %vm6246, %v6196, 0
        %v6257 = vsel %vm6246, %v6197, 0
        %v6260 = vsel %vm6246, %v6198, 0
        %v6263 = vsel %vm6246, %v6199, 0
        %v6266 = vsel %vm6246, %v6200, 0
        %v6269 = vsel %vm6246, %v6201, 0
        %v6272 = vsel %vm6246, %v6202, 0
        %v6275 = vsel %vm6246, %v6203, 0
        %v6278 = vsel %vm6246, %v6204, 0
        %v6281 = vsel %vm6246, %v6205, 0
        %v6284 = vsel %vm6246, %v6206, 0
        %v6287 = vsel %vm6246, %v6207, 0
        %v6290 = vsel %vm6246, %v6208, 0
        %v6293 = vsel %vm6246, %v6209, 0
        %vm6295 = vcmask 1043456
        %v6297 = vsel %vm6295, %v6241, 0
        %6299 = vmatprep.subr.bf16.mxu0 0
        %6300 = vmatpush1.bf16.msra.mxu0 0
        %6301 = vmatprep.subr.bf16.mxu0 0
        %6302 = vmatpush1.bf16.msra.mxu0 0
        %6303 = vmatprep.subr.bf16.mxu0 0
        %6304 = vmatpush1.bf16.msra.mxu0 0
        %6305 = vmatprep.subr.bf16.mxu0 0
        %6306 = vmatpush1.bf16.msra.mxu0 %v6297
        %6307 = vmatprep.subr.bf16.mxu0 0
        %6308 = vmatpush1.bf16.msra.mxu0 %v6240
        %6309 = vmatprep.subr.bf16.mxu0 0
        %6310 = vmatpush1.bf16.msra.mxu0 %v6239
        %6311 = vmatprep.subr.bf16.mxu0 0
        %6312 = vmatpush1.bf16.msra.mxu0 %v6238
        %6313 = vmatprep.subr.bf16.mxu0 0
        %6314 = vmatpush1.bf16.msra.mxu0 %v6237
        %6315 = vmatprep.subr.bf16.mxu0 0
        %6316 = vmatpush2.bf16.msra.mxu0 0
        %6317 = vmatprep.subr.bf16.mxu0 0
        %6318 = vmatpush2.bf16.msra.mxu0 0
        %6319 = vmatprep.subr.bf16.mxu0 0
        %6320 = vmatpush2.bf16.msra.mxu0 0
        %6321 = vmatprep.subr.bf16.mxu0 0
        %6322 = vmatpush2.bf16.msra.mxu0 0
        %6323 = vmatprep.subr.bf16.mxu0 0
        %6324 = vmatpush2.bf16.msra.mxu0 0
        %6325 = vmatprep.subr.bf16.mxu0 0
        %6326 = vmatpush2.bf16.msra.mxu0 0
        %6327 = vmatprep.subr.bf16.mxu0 0
        %6328 = vmatpush2.bf16.msra.mxu0 0
        %6329 = vmatprep.subr.bf16.mxu0 0
        %6330 = vmatpush2.bf16.msra.mxu0 0
        %6331 = vmatprep.mubr.bf16.mxu0 0
        %6332 = vmatmul.mubr.bf16.gmra.mxu0 %v6248
        %v6333 = vpop.f32.mrf.mxu0
        %v6334 = vadd.f32 0.0, %v6333
        %v6335 = vpop.f32.mrf.mxu0
        %v6336 = vpop.f32.mrf.mxu0
        %v6337 = vadd.f32 0.0, %v6336
        %v6338 = vpop.f32.mrf.mxu0
        %6339 = vmatprep.mubr.bf16.mxu0 0
        %6340 = vmatmul.mubr.bf16.gmra.mxu0 %v6251
        %v6341 = vpop.f32.mrf.mxu0
        %v6342 = vadd.f32 0.0, %v6341
        %v6343 = vpop.f32.mrf.mxu0
        %v6344 = vpop.f32.mrf.mxu0
        %v6345 = vadd.f32 0.0, %v6344
        %v6346 = vpop.f32.mrf.mxu0
        %6347 = vmatprep.mubr.bf16.mxu0 0
        %6348 = vmatmul.mubr.bf16.gmra.mxu0 %v6254
        %v6349 = vpop.f32.mrf.mxu0
        %v6350 = vadd.f32 0.0, %v6349
        %v6351 = vpop.f32.mrf.mxu0
        %v6352 = vpop.f32.mrf.mxu0
        %v6353 = vadd.f32 0.0, %v6352
        %v6354 = vpop.f32.mrf.mxu0
        %6355 = vmatprep.mubr.bf16.mxu0 0
        %6356 = vmatmul.mubr.bf16.gmra.mxu0 %v6257
        %v6357 = vpop.f32.mrf.mxu0
        %v6358 = vadd.f32 0.0, %v6357
        %v6359 = vpop.f32.mrf.mxu0
        %v6360 = vpop.f32.mrf.mxu0
        %v6361 = vadd.f32 0.0, %v6360
        %v6362 = vpop.f32.mrf.mxu0
        %6363 = vmatprep.mubr.bf16.mxu0 0
        %6364 = vmatmul.mubr.bf16.gmra.mxu0 %v6260
        %v6365 = vpop.f32.mrf.mxu0
        %v6366 = vadd.f32 0.0, %v6365
        %v6367 = vpop.f32.mrf.mxu0
        %v6368 = vpop.f32.mrf.mxu0
        %v6369 = vadd.f32 0.0, %v6368
        %v6370 = vpop.f32.mrf.mxu0
        %6371 = vmatprep.mubr.bf16.mxu0 0
        %6372 = vmatmul.mubr.bf16.gmra.mxu0 %v6263
        %v6373 = vpop.f32.mrf.mxu0
        %v6374 = vadd.f32 0.0, %v6373
        %v6375 = vpop.f32.mrf.mxu0
        %v6376 = vpop.f32.mrf.mxu0
        %v6377 = vadd.f32 0.0, %v6376
        %v6378 = vpop.f32.mrf.mxu0
        %6379 = vmatprep.mubr.bf16.mxu0 0
        %6380 = vmatmul.mubr.bf16.gmra.mxu0 %v6266
        %v6381 = vpop.f32.mrf.mxu0
        %v6382 = vadd.f32 0.0, %v6381
        %v6383 = vpop.f32.mrf.mxu0
        %v6384 = vpop.f32.mrf.mxu0
        %v6385 = vadd.f32 0.0, %v6384
        %v6386 = vpop.f32.mrf.mxu0
        %6387 = vmatprep.mubr.bf16.mxu0 0
        %6388 = vmatmul.mubr.bf16.gmra.mxu0 %v6269
        %v6389 = vpop.f32.mrf.mxu0
        %v6390 = vadd.f32 0.0, %v6389
        %v6391 = vpop.f32.mrf.mxu0
        %v6392 = vpop.f32.mrf.mxu0
        %v6393 = vadd.f32 0.0, %v6392
        %v6394 = vpop.f32.mrf.mxu0
        %6395 = vmatprep.mubr.bf16.mxu0 0
        %6396 = vmatmul.mubr.bf16.gmra.mxu0 %v6272
        %v6397 = vpop.f32.mrf.mxu0
        %v6398 = vadd.f32 0.0, %v6397
        %v6399 = vpop.f32.mrf.mxu0
        %v6400 = vpop.f32.mrf.mxu0
        %v6401 = vadd.f32 0.0, %v6400
        %v6402 = vpop.f32.mrf.mxu0
        %6403 = vmatprep.mubr.bf16.mxu0 0
        %6404 = vmatmul.mubr.bf16.gmra.mxu0 %v6275
        %v6405 = vpop.f32.mrf.mxu0
        %v6406 = vadd.f32 0.0, %v6405
        %v6407 = vpop.f32.mrf.mxu0
        %v6408 = vpop.f32.mrf.mxu0
        %v6409 = vadd.f32 0.0, %v6408
        %v6410 = vpop.f32.mrf.mxu0
        %6411 = vmatprep.mubr.bf16.mxu0 0
        %6412 = vmatmul.mubr.bf16.gmra.mxu0 %v6278
        %v6413 = vpop.f32.mrf.mxu0
        %v6414 = vadd.f32 0.0, %v6413
        %v6415 = vpop.f32.mrf.mxu0
        %v6416 = vpop.f32.mrf.mxu0
        %v6417 = vadd.f32 0.0, %v6416
        %v6418 = vpop.f32.mrf.mxu0
        %6419 = vmatprep.mubr.bf16.mxu0 0
        %6420 = vmatmul.mubr.bf16.gmra.mxu0 %v6281
        %v6421 = vpop.f32.mrf.mxu0
        %v6422 = vadd.f32 0.0, %v6421
        %v6423 = vpop.f32.mrf.mxu0
        %v6424 = vpop.f32.mrf.mxu0
        %v6425 = vadd.f32 0.0, %v6424
        %v6426 = vpop.f32.mrf.mxu0
        %6427 = vmatprep.mubr.bf16.mxu0 0
        %6428 = vmatmul.mubr.bf16.gmra.mxu0 %v6284
        %v6429 = vpop.f32.mrf.mxu0
        %v6430 = vadd.f32 0.0, %v6429
        %v6431 = vpop.f32.mrf.mxu0
        %v6432 = vpop.f32.mrf.mxu0
        %v6433 = vadd.f32 0.0, %v6432
        %v6434 = vpop.f32.mrf.mxu0
        %6435 = vmatprep.mubr.bf16.mxu0 0
        %6436 = vmatmul.mubr.bf16.gmra.mxu0 %v6287
        %v6437 = vpop.f32.mrf.mxu0
        %v6438 = vadd.f32 0.0, %v6437
        %v6439 = vpop.f32.mrf.mxu0
        %v6440 = vpop.f32.mrf.mxu0
        %v6441 = vadd.f32 0.0, %v6440
        %v6442 = vpop.f32.mrf.mxu0
        %6443 = vmatprep.mubr.bf16.mxu0 0
        %6444 = vmatmul.mubr.bf16.gmra.mxu0 %v6290
        %v6445 = vpop.f32.mrf.mxu0
        %v6446 = vadd.f32 0.0, %v6445
        %v6447 = vpop.f32.mrf.mxu0
        %v6448 = vpop.f32.mrf.mxu0
        %v6449 = vadd.f32 0.0, %v6448
        %v6450 = vpop.f32.mrf.mxu0
        %6451 = vmatprep.mubr.bf16.mxu0 0
        %6452 = vmatmul.mubr.bf16.gmra.mxu0 %v6293
        %v6453 = vpop.f32.mrf.mxu0
        %v6454 = vadd.f32 0.0, %v6453
        %v6455 = vpop.f32.mrf.mxu0
        %v6456 = vpop.f32.mrf.mxu0
        %v6457 = vadd.f32 0.0, %v6456
        %v6458 = vpop.f32.mrf.mxu0
        %6459 = vdwg.mxu0
        %v6460 = vlaneseq
        %v6461 = vshrl.u32 %v6460, 7
        %v6462 = vsub.s32 0, %v6461
        %v6463 = vrot.slane %v244, %v6462
        %v6464 = vmul.f32 %v6334, %v6463
        %v6465 = vmul.f32 %v6337, %v6463
        %v6466 = vmul.f32 %v6342, %v6463
        %v6467 = vmul.f32 %v6345, %v6463
        %v6468 = vmul.f32 %v6350, %v6463
        %v6469 = vmul.f32 %v6353, %v6463
        %v6470 = vmul.f32 %v6358, %v6463
        %v6471 = vmul.f32 %v6361, %v6463
        %v6472 = vmul.f32 %v6366, %v6463
        %v6473 = vmul.f32 %v6369, %v6463
        %v6474 = vmul.f32 %v6374, %v6463
        %v6475 = vmul.f32 %v6377, %v6463
        %v6476 = vmul.f32 %v6382, %v6463
        %v6477 = vmul.f32 %v6385, %v6463
        %v6478 = vmul.f32 %v6390, %v6463
        %v6479 = vmul.f32 %v6393, %v6463
        %v6480 = vmul.f32 %v6398, %v6463
        %v6481 = vmul.f32 %v6401, %v6463
        %v6482 = vmul.f32 %v6406, %v6463
        %v6483 = vmul.f32 %v6409, %v6463
        %v6484 = vmul.f32 %v6414, %v6463
        %v6485 = vmul.f32 %v6417, %v6463
        %v6486 = vmul.f32 %v6422, %v6463
        %v6487 = vmul.f32 %v6425, %v6463
        %v6488 = vmul.f32 %v6430, %v6463
        %v6489 = vmul.f32 %v6433, %v6463
        %v6490 = vmul.f32 %v6438, %v6463
        %v6491 = vmul.f32 %v6441, %v6463
        %v6492 = vmul.f32 %v6446, %v6463
        %v6493 = vmul.f32 %v6449, %v6463
        %v6494 = vmul.f32 %v6454, %v6463
        %v6495 = vmul.f32 %v6457, %v6463
        %v6496 = vlaneseq
        %v6497 = vshrl.u32 %v6496, 7
        %v6498 = vsub.s32 0, %v6497
        %v6499 = vrot.slane %v245, %v6498
        %v6500 = vadd.f32 %v6464, %v6499
        %v6501 = vadd.f32 %v6465, %v6499
        %v6502 = vadd.f32 %v6466, %v6499
        %v6503 = vadd.f32 %v6467, %v6499
        %v6504 = vadd.f32 %v6468, %v6499
        %v6505 = vadd.f32 %v6469, %v6499
        %v6506 = vadd.f32 %v6470, %v6499
        %v6507 = vadd.f32 %v6471, %v6499
        %v6508 = vadd.f32 %v6472, %v6499
        %v6509 = vadd.f32 %v6473, %v6499
        %v6510 = vadd.f32 %v6474, %v6499
        %v6511 = vadd.f32 %v6475, %v6499
        %v6512 = vadd.f32 %v6476, %v6499
        %v6513 = vadd.f32 %v6477, %v6499
        %v6514 = vadd.f32 %v6478, %v6499
        %v6515 = vadd.f32 %v6479, %v6499
        %v6516 = vadd.f32 %v6480, %v6499
        %v6517 = vadd.f32 %v6481, %v6499
        %v6518 = vadd.f32 %v6482, %v6499
        %v6519 = vadd.f32 %v6483, %v6499
        %v6520 = vadd.f32 %v6484, %v6499
        %v6521 = vadd.f32 %v6485, %v6499
        %v6522 = vadd.f32 %v6486, %v6499
        %v6523 = vadd.f32 %v6487, %v6499
        %v6524 = vadd.f32 %v6488, %v6499
        %v6525 = vadd.f32 %v6489, %v6499
        %v6526 = vadd.f32 %v6490, %v6499
        %v6527 = vadd.f32 %v6491, %v6499
        %v6528 = vadd.f32 %v6492, %v6499
        %v6529 = vadd.f32 %v6493, %v6499
        %v6530 = vadd.f32 %v6494, %v6499
        %v6531 = vadd.f32 %v6495, %v6499
        %v6532 = vld [vmem:[%s1140] sm:$0xf]
        %v6533 = vld [vmem:[%s1140 + $0x4] sm:$0xf]
        %v6534 = vld [vmem:[%s1140 + $0x8] sm:$0x1]
        %v6535 = vld [vmem:[%s1140 + $0xc] sm:$0xf]
        %v6536 = vld [vmem:[%s1140 + $0x10] sm:$0xf]
        %v6537 = vld [vmem:[%s1140 + $0x14] sm:$0x1]
        %v6538 = vld [vmem:[%s1140 + $0x18] sm:$0xf]
        %v6539 = vld [vmem:[%s1140 + $0x1c] sm:$0xf]
        %v6540 = vld [vmem:[%s1140 + $0x20] sm:$0x1]
        %v6541 = vld [vmem:[%s1140 + $0x24] sm:$0xf]
        %v6542 = vld [vmem:[%s1140 + $0x28] sm:$0xf]
        %v6543 = vld [vmem:[%s1140 + $0x2c] sm:$0x1]
        %v6544 = vld [vmem:[%s1140 + $0x30] sm:$0xf]
        %v6545 = vld [vmem:[%s1140 + $0x34] sm:$0xf]
        %v6546 = vld [vmem:[%s1140 + $0x38] sm:$0x1]
        %v6547 = vld [vmem:[%s1140 + $0x3c] sm:$0xf]
        %v6548 = vld [vmem:[%s1140 + $0x40] sm:$0xf]
        %v6549 = vld [vmem:[%s1140 + $0x44] sm:$0x1]
        %v6550 = vld [vmem:[%s1140 + $0x48] sm:$0xf]
        %v6551 = vld [vmem:[%s1140 + $0x4c] sm:$0xf]
        %v6552 = vld [vmem:[%s1140 + $0x50] sm:$0x1]
        %v6553 = vld [vmem:[%s1140 + $0x54] sm:$0xf]
        %v6554 = vld [vmem:[%s1140 + $0x58] sm:$0xf]
        %v6555 = vld [vmem:[%s1140 + $0x5c] sm:$0x1]
        %v6556 = vld [vmem:[%s1140 + $0xf0] sm:$0xf]
        %v6557 = vld [vmem:[%s1140 + $0xf4] sm:$0xf]
        %v6558 = vld [vmem:[%s1140 + $0xf8] sm:$0x1]
        %v6559 = vld [vmem:[%s1140 + $0xfc] sm:$0xf]
        %v6560 = vld [vmem:[%s1140 + $0x100] sm:$0xf]
        %v6561 = vld [vmem:[%s1140 + $0x104] sm:$0x1]
        %v6562 = vld [vmem:[%s1140 + $0x108] sm:$0xf]
        %v6563 = vld [vmem:[%s1140 + $0x10c] sm:$0xf]
        %v6564 = vld [vmem:[%s1140 + $0x110] sm:$0x1]
        %v6565 = vld [vmem:[%s1140 + $0x114] sm:$0xf]
        %v6566 = vld [vmem:[%s1140 + $0x118] sm:$0xf]
        %v6567 = vld [vmem:[%s1140 + $0x11c] sm:$0x1]
        %v6568 = vld [vmem:[%s1140 + $0x120] sm:$0xf]
        %v6569 = vld [vmem:[%s1140 + $0x124] sm:$0xf]
        %v6570 = vld [vmem:[%s1140 + $0x128] sm:$0x1]
        %v6571 = vld [vmem:[%s1140 + $0x12c] sm:$0xf]
        %v6572 = vld [vmem:[%s1140 + $0x130] sm:$0xf]
        %v6573 = vld [vmem:[%s1140 + $0x134] sm:$0x1]
        %v6574 = vld [vmem:[%s1140 + $0x138] sm:$0xf]
        %v6575 = vld [vmem:[%s1140 + $0x13c] sm:$0xf]
        %v6576 = vld [vmem:[%s1140 + $0x140] sm:$0x1]
        %v6577 = vld [vmem:[%s1140 + $0x144] sm:$0xf]
        %v6578 = vld [vmem:[%s1140 + $0x148] sm:$0xf]
        %v6579 = vld [vmem:[%s1140 + $0x14c] sm:$0x1]
        %vm6580 = vsmask.f32 3328
        %vm6581 = vsmask.f32 7440
        %vm6582 = vmor %vm6580, %vm6581
        %v6584 = vshrl.u32 %v6532, 16
        %v6586 = vrot.slane %v6584, 4
        %v6587 = vshll.u32 %v6532, 16
        %v6589 = vrot.slane %v6587, 5
        %v6590 = vor.u32 %v6586, %v6589
        %v6591 = vrot.slane %v6590, 4
        %v6593 = vshll.u32 %v6533, 16
        %v6595 = vrot.slane %v6593, 5
        %v6596 = vsel %vm6582, %v6591, %v6595
        %v6597 = vshrl.u32 %v6533, 16
        %v6599 = vrot.slane %v6597, 4
        %v6600 = vor.u32 %v6599, %v6595
        %v6601 = vrot.slane %v6600, 4
        %v6603 = vshll.u32 %v6534, 16
        %v6605 = vrot.slane %v6603, 5
        %v6606 = vsel %vm6582, %v6601, %v6605
        %v6608 = vshrl.u32 %v6535, 16
        %v6610 = vrot.slane %v6608, 4
        %v6611 = vshll.u32 %v6535, 16
        %v6613 = vrot.slane %v6611, 5
        %v6614 = vor.u32 %v6610, %v6613
        %v6615 = vrot.slane %v6614, 4
        %v6617 = vshll.u32 %v6536, 16
        %v6619 = vrot.slane %v6617, 5
        %v6620 = vsel %vm6582, %v6615, %v6619
        %v6621 = vshrl.u32 %v6536, 16
        %v6623 = vrot.slane %v6621, 4
        %v6624 = vor.u32 %v6623, %v6619
        %v6625 = vrot.slane %v6624, 4
        %v6627 = vshll.u32 %v6537, 16
        %v6629 = vrot.slane %v6627, 5
        %v6630 = vsel %vm6582, %v6625, %v6629
        %v6632 = vshrl.u32 %v6538, 16
        %v6634 = vrot.slane %v6632, 4
        %v6635 = vshll.u32 %v6538, 16
        %v6637 = vrot.slane %v6635, 5
        %v6638 = vor.u32 %v6634, %v6637
        %v6639 = vrot.slane %v6638, 4
        %v6641 = vshll.u32 %v6539, 16
        %v6643 = vrot.slane %v6641, 5
        %v6644 = vsel %vm6582, %v6639, %v6643
        %v6645 = vshrl.u32 %v6539, 16
        %v6647 = vrot.slane %v6645, 4
        %v6648 = vor.u32 %v6647, %v6643
        %v6649 = vrot.slane %v6648, 4
        %v6651 = vshll.u32 %v6540, 16
        %v6653 = vrot.slane %v6651, 5
        %v6654 = vsel %vm6582, %v6649, %v6653
        %v6656 = vshrl.u32 %v6541, 16
        %v6658 = vrot.slane %v6656, 4
        %v6659 = vshll.u32 %v6541, 16
        %v6661 = vrot.slane %v6659, 5
        %v6662 = vor.u32 %v6658, %v6661
        %v6663 = vrot.slane %v6662, 4
        %v6665 = vshll.u32 %v6542, 16
        %v6667 = vrot.slane %v6665, 5
        %v6668 = vsel %vm6582, %v6663, %v6667
        %v6669 = vshrl.u32 %v6542, 16
        %v6671 = vrot.slane %v6669, 4
        %v6672 = vor.u32 %v6671, %v6667
        %v6673 = vrot.slane %v6672, 4
        %v6675 = vshll.u32 %v6543, 16
        %v6677 = vrot.slane %v6675, 5
        %v6678 = vsel %vm6582, %v6673, %v6677
        %v6680 = vshrl.u32 %v6544, 16
        %v6682 = vrot.slane %v6680, 4
        %v6683 = vshll.u32 %v6544, 16
        %v6685 = vrot.slane %v6683, 5
        %v6686 = vor.u32 %v6682, %v6685
        %v6687 = vrot.slane %v6686, 4
        %v6689 = vshll.u32 %v6545, 16
        %v6691 = vrot.slane %v6689, 5
        %v6692 = vsel %vm6582, %v6687, %v6691
        %v6693 = vshrl.u32 %v6545, 16
        %v6695 = vrot.slane %v6693, 4
        %v6696 = vor.u32 %v6695, %v6691
        %v6697 = vrot.slane %v6696, 4
        %v6699 = vshll.u32 %v6546, 16
        %v6701 = vrot.slane %v6699, 5
        %v6702 = vsel %vm6582, %v6697, %v6701
        %v6704 = vshrl.u32 %v6547, 16
        %v6706 = vrot.slane %v6704, 4
        %v6707 = vshll.u32 %v6547, 16
        %v6709 = vrot.slane %v6707, 5
        %v6710 = vor.u32 %v6706, %v6709
        %v6711 = vrot.slane %v6710, 4
        %v6713 = vshll.u32 %v6548, 16
        %v6715 = vrot.slane %v6713, 5
        %v6716 = vsel %vm6582, %v6711, %v6715
        %v6717 = vshrl.u32 %v6548, 16
        %v6719 = vrot.slane %v6717, 4
        %v6720 = vor.u32 %v6719, %v6715
        %v6721 = vrot.slane %v6720, 4
        %v6723 = vshll.u32 %v6549, 16
        %v6725 = vrot.slane %v6723, 5
        %v6726 = vsel %vm6582, %v6721, %v6725
        %v6728 = vshrl.u32 %v6550, 16
        %v6730 = vrot.slane %v6728, 4
        %v6731 = vshll.u32 %v6550, 16
        %v6733 = vrot.slane %v6731, 5
        %v6734 = vor.u32 %v6730, %v6733
        %v6735 = vrot.slane %v6734, 4
        %v6737 = vshll.u32 %v6551, 16
        %v6739 = vrot.slane %v6737, 5
        %v6740 = vsel %vm6582, %v6735, %v6739
        %v6741 = vshrl.u32 %v6551, 16
        %v6743 = vrot.slane %v6741, 4
        %v6744 = vor.u32 %v6743, %v6739
        %v6745 = vrot.slane %v6744, 4
        %v6747 = vshll.u32 %v6552, 16
        %v6749 = vrot.slane %v6747, 5
        %v6750 = vsel %vm6582, %v6745, %v6749
        %v6752 = vshrl.u32 %v6553, 16
        %v6754 = vrot.slane %v6752, 4
        %v6755 = vshll.u32 %v6553, 16
        %v6757 = vrot.slane %v6755, 5
        %v6758 = vor.u32 %v6754, %v6757
        %v6759 = vrot.slane %v6758, 4
        %v6761 = vshll.u32 %v6554, 16
        %v6763 = vrot.slane %v6761, 5
        %v6764 = vsel %vm6582, %v6759, %v6763
        %v6765 = vshrl.u32 %v6554, 16
        %v6767 = vrot.slane %v6765, 4
        %v6768 = vor.u32 %v6767, %v6763
        %v6769 = vrot.slane %v6768, 4
        %v6771 = vshll.u32 %v6555, 16
        %v6773 = vrot.slane %v6771, 5
        %v6774 = vsel %vm6582, %v6769, %v6773
        %v6776 = vshrl.u32 %v6556, 16
        %v6778 = vrot.slane %v6776, 4
        %v6779 = vshll.u32 %v6556, 16
        %v6781 = vrot.slane %v6779, 5
        %v6782 = vor.u32 %v6778, %v6781
        %v6783 = vrot.slane %v6782, 4
        %v6785 = vshll.u32 %v6557, 16
        %v6787 = vrot.slane %v6785, 5
        %v6788 = vsel %vm6582, %v6783, %v6787
        %v6789 = vshrl.u32 %v6557, 16
        %v6791 = vrot.slane %v6789, 4
        %v6792 = vor.u32 %v6791, %v6787
        %v6793 = vrot.slane %v6792, 4
        %v6795 = vshll.u32 %v6558, 16
        %v6797 = vrot.slane %v6795, 5
        %v6798 = vsel %vm6582, %v6793, %v6797
        %v6800 = vshrl.u32 %v6559, 16
        %v6802 = vrot.slane %v6800, 4
        %v6803 = vshll.u32 %v6559, 16
        %v6805 = vrot.slane %v6803, 5
        %v6806 = vor.u32 %v6802, %v6805
        %v6807 = vrot.slane %v6806, 4
        %v6809 = vshll.u32 %v6560, 16
        %v6811 = vrot.slane %v6809, 5
        %v6812 = vsel %vm6582, %v6807, %v6811
        %v6813 = vshrl.u32 %v6560, 16
        %v6815 = vrot.slane %v6813, 4
        %v6816 = vor.u32 %v6815, %v6811
        %v6817 = vrot.slane %v6816, 4
        %v6819 = vshll.u32 %v6561, 16
        %v6821 = vrot.slane %v6819, 5
        %v6822 = vsel %vm6582, %v6817, %v6821
        %v6824 = vshrl.u32 %v6562, 16
        %v6826 = vrot.slane %v6824, 4
        %v6827 = vshll.u32 %v6562, 16
        %v6829 = vrot.slane %v6827, 5
        %v6830 = vor.u32 %v6826, %v6829
        %v6831 = vrot.slane %v6830, 4
        %v6833 = vshll.u32 %v6563, 16
        %v6835 = vrot.slane %v6833, 5
        %v6836 = vsel %vm6582, %v6831, %v6835
        %v6837 = vshrl.u32 %v6563, 16
        %v6839 = vrot.slane %v6837, 4
        %v6840 = vor.u32 %v6839, %v6835
        %v6841 = vrot.slane %v6840, 4
        %v6843 = vshll.u32 %v6564, 16
        %v6845 = vrot.slane %v6843, 5
        %v6846 = vsel %vm6582, %v6841, %v6845
        %v6848 = vshrl.u32 %v6565, 16
        %v6850 = vrot.slane %v6848, 4
        %v6851 = vshll.u32 %v6565, 16
        %v6853 = vrot.slane %v6851, 5
        %v6854 = vor.u32 %v6850, %v6853
        %v6855 = vrot.slane %v6854, 4
        %v6857 = vshll.u32 %v6566, 16
        %v6859 = vrot.slane %v6857, 5
        %v6860 = vsel %vm6582, %v6855, %v6859
        %v6861 = vshrl.u32 %v6566, 16
        %v6863 = vrot.slane %v6861, 4
        %v6864 = vor.u32 %v6863, %v6859
        %v6865 = vrot.slane %v6864, 4
        %v6867 = vshll.u32 %v6567, 16
        %v6869 = vrot.slane %v6867, 5
        %v6870 = vsel %vm6582, %v6865, %v6869
        %v6872 = vshrl.u32 %v6568, 16
        %v6874 = vrot.slane %v6872, 4
        %v6875 = vshll.u32 %v6568, 16
        %v6877 = vrot.slane %v6875, 5
        %v6878 = vor.u32 %v6874, %v6877
        %v6879 = vrot.slane %v6878, 4
        %v6881 = vshll.u32 %v6569, 16
        %v6883 = vrot.slane %v6881, 5
        %v6884 = vsel %vm6582, %v6879, %v6883
        %v6885 = vshrl.u32 %v6569, 16
        %v6887 = vrot.slane %v6885, 4
        %v6888 = vor.u32 %v6887, %v6883
        %v6889 = vrot.slane %v6888, 4
        %v6891 = vshll.u32 %v6570, 16
        %v6893 = vrot.slane %v6891, 5
        %v6894 = vsel %vm6582, %v6889, %v6893
        %v6896 = vshrl.u32 %v6571, 16
        %v6898 = vrot.slane %v6896, 4
        %v6899 = vshll.u32 %v6571, 16
        %v6901 = vrot.slane %v6899, 5
        %v6902 = vor.u32 %v6898, %v6901
        %v6903 = vrot.slane %v6902, 4
        %v6905 = vshll.u32 %v6572, 16
        %v6907 = vrot.slane %v6905, 5
        %v6908 = vsel %vm6582, %v6903, %v6907
        %v6909 = vshrl.u32 %v6572, 16
        %v6911 = vrot.slane %v6909, 4
        %v6912 = vor.u32 %v6911, %v6907
        %v6913 = vrot.slane %v6912, 4
        %v6915 = vshll.u32 %v6573, 16
        %v6917 = vrot.slane %v6915, 5
        %v6918 = vsel %vm6582, %v6913, %v6917
        %v6920 = vshrl.u32 %v6574, 16
        %v6922 = vrot.slane %v6920, 4
        %v6923 = vshll.u32 %v6574, 16
        %v6925 = vrot.slane %v6923, 5
        %v6926 = vor.u32 %v6922, %v6925
        %v6927 = vrot.slane %v6926, 4
        %v6929 = vshll.u32 %v6575, 16
        %v6931 = vrot.slane %v6929, 5
        %v6932 = vsel %vm6582, %v6927, %v6931
        %v6933 = vshrl.u32 %v6575, 16
        %v6935 = vrot.slane %v6933, 4
        %v6936 = vor.u32 %v6935, %v6931
        %v6937 = vrot.slane %v6936, 4
        %v6939 = vshll.u32 %v6576, 16
        %v6941 = vrot.slane %v6939, 5
        %v6942 = vsel %vm6582, %v6937, %v6941
        %v6944 = vshrl.u32 %v6577, 16
        %v6946 = vrot.slane %v6944, 4
        %v6947 = vshll.u32 %v6577, 16
        %v6949 = vrot.slane %v6947, 5
        %v6950 = vor.u32 %v6946, %v6949
        %v6951 = vrot.slane %v6950, 4
        %v6953 = vshll.u32 %v6578, 16
        %v6955 = vrot.slane %v6953, 5
        %v6956 = vsel %vm6582, %v6951, %v6955
        %v6957 = vshrl.u32 %v6578, 16
        %v6959 = vrot.slane %v6957, 4
        %v6960 = vor.u32 %v6959, %v6955
        %v6961 = vrot.slane %v6960, 4
        %v6963 = vshll.u32 %v6579, 16
        %v6965 = vrot.slane %v6963, 5
        %v6966 = vsel %vm6582, %v6961, %v6965
        %v6967 = vld [vmem:[%s3] sm:$0x3]
        %v6968 = vunpack.c.l.b16 %v6596
        %v6969 = vunpack.c.l.b16 %v6606
        %v6970 = vunpack.c.l.b16 %v6620
        %v6971 = vunpack.c.l.b16 %v6630
        %v6972 = vunpack.c.l.b16 %v6644
        %v6973 = vunpack.c.l.b16 %v6654
        %v6974 = vunpack.c.l.b16 %v6668
        %v6975 = vunpack.c.l.b16 %v6678
        %v6976 = vunpack.c.l.b16 %v6692
        %v6977 = vunpack.c.l.b16 %v6702
        %v6978 = vunpack.c.l.b16 %v6716
        %v6979 = vunpack.c.l.b16 %v6726
        %v6980 = vunpack.c.l.b16 %v6740
        %v6981 = vunpack.c.l.b16 %v6750
        %v6982 = vunpack.c.l.b16 %v6764
        %v6983 = vunpack.c.l.b16 %v6774
        %v6984 = vunpack.c.l.b16 %v6788
        %v6985 = vunpack.c.l.b16 %v6798
        %v6986 = vunpack.c.l.b16 %v6812
        %v6987 = vunpack.c.l.b16 %v6822
        %v6988 = vunpack.c.l.b16 %v6836
        %v6989 = vunpack.c.l.b16 %v6846
        %v6990 = vunpack.c.l.b16 %v6860
        %v6991 = vunpack.c.l.b16 %v6870
        %v6992 = vunpack.c.l.b16 %v6884
        %v6993 = vunpack.c.l.b16 %v6894
        %v6994 = vunpack.c.l.b16 %v6908
        %v6995 = vunpack.c.l.b16 %v6918
        %v6996 = vunpack.c.l.b16 %v6932
        %v6997 = vunpack.c.l.b16 %v6942
        %v6998 = vunpack.c.l.b16 %v6956
        %v6999 = vunpack.c.l.b16 %v6966
        %v7000 = vpack.c.b16 %v6969, %v6968
        %v7001 = vpack.c.b16 %v6971, %v6970
        %v7002 = vpack.c.b16 %v6973, %v6972
        %v7003 = vpack.c.b16 %v6975, %v6974
        %v7004 = vpack.c.b16 %v6977, %v6976
        %v7005 = vpack.c.b16 %v6979, %v6978
        %v7006 = vpack.c.b16 %v6981, %v6980
        %v7007 = vpack.c.b16 %v6983, %v6982
        %v7008 = vpack.c.b16 %v6985, %v6984
        %v7009 = vpack.c.b16 %v6987, %v6986
        %v7010 = vpack.c.b16 %v6989, %v6988
        %v7011 = vpack.c.b16 %v6991, %v6990
        %v7012 = vpack.c.b16 %v6993, %v6992
        %v7013 = vpack.c.b16 %v6995, %v6994
        %v7014 = vpack.c.b16 %v6997, %v6996
        %v7015 = vpack.c.b16 %v6999, %v6998
        %v7017 = vsel %vm2541, %v7000, 0
        %v7020 = vsel %vm2541, %v7001, 0
        %v7023 = vsel %vm2541, %v7002, 0
        %v7026 = vsel %vm2541, %v7003, 0
        %v7029 = vsel %vm2541, %v7004, 0
        %v7032 = vsel %vm2541, %v7005, 0
        %v7035 = vsel %vm2541, %v7006, 0
        %v7038 = vsel %vm2541, %v7007, 0
        %v7041 = vsel %vm2541, %v7008, 0
        %v7044 = vsel %vm2541, %v7009, 0
        %v7047 = vsel %vm2541, %v7010, 0
        %v7050 = vsel %vm2541, %v7011, 0
        %v7053 = vsel %vm2541, %v7012, 0
        %v7056 = vsel %vm2541, %v7013, 0
        %v7059 = vsel %vm2541, %v7014, 0
        %v7062 = vsel %vm2541, %v7015, 0
        %v7065 = vsel %vm2970, %v6967, 0
        %7067 = vmatprep.subr.bf16.mxu0 0
        %7068 = vmatpush1.bf16.msra.mxu0 0
        %7069 = vmatprep.subr.bf16.mxu0 0
        %7070 = vmatpush1.bf16.msra.mxu0 0
        %7071 = vmatprep.subr.bf16.mxu0 0
        %7072 = vmatpush1.bf16.msra.mxu0 0
        %7073 = vmatprep.subr.bf16.mxu0 0
        %7074 = vmatpush1.bf16.msra.mxu0 0
        %7075 = vmatprep.subr.bf16.mxu0 0
        %7076 = vmatpush1.bf16.msra.mxu0 0
        %7077 = vmatprep.subr.bf16.mxu0 0
        %7078 = vmatpush1.bf16.msra.mxu0 0
        %7079 = vmatprep.subr.bf16.mxu0 0
        %7080 = vmatpush1.bf16.msra.mxu0 0
        %7081 = vmatprep.subr.bf16.mxu0 0
        %7082 = vmatpush1.bf16.msra.mxu0 %v7065
        %7083 = vmatprep.subr.bf16.mxu0 0
        %7084 = vmatpush2.bf16.msra.mxu0 0
        %7085 = vmatprep.subr.bf16.mxu0 0
        %7086 = vmatpush2.bf16.msra.mxu0 0
        %7087 = vmatprep.subr.bf16.mxu0 0
        %7088 = vmatpush2.bf16.msra.mxu0 0
        %7089 = vmatprep.subr.bf16.mxu0 0
        %7090 = vmatpush2.bf16.msra.mxu0 0
        %7091 = vmatprep.subr.bf16.mxu0 0
        %7092 = vmatpush2.bf16.msra.mxu0 0
        %7093 = vmatprep.subr.bf16.mxu0 0
        %7094 = vmatpush2.bf16.msra.mxu0 0
        %7095 = vmatprep.subr.bf16.mxu0 0
        %7096 = vmatpush2.bf16.msra.mxu0 0
        %7097 = vmatprep.subr.bf16.mxu0 0
        %7098 = vmatpush2.bf16.msra.mxu0 0
        %7099 = vmatprep.mubr.bf16.mxu0 0
        %7100 = vmatmul.mubr.bf16.gmra.mxu0 %v7017
        %v7101 = vpop.f32.mrf.mxu0
        %v7102 = vadd.f32 0.0, %v7101
        %v7103 = vpop.f32.mrf.mxu0
        %v7104 = vpop.f32.mrf.mxu0
        %v7105 = vadd.f32 0.0, %v7104
        %v7106 = vpop.f32.mrf.mxu0
        %7107 = vmatprep.mubr.bf16.mxu0 0
        %7108 = vmatmul.mubr.bf16.gmra.mxu0 %v7020
        %v7109 = vpop.f32.mrf.mxu0
        %v7110 = vadd.f32 0.0, %v7109
        %v7111 = vpop.f32.mrf.mxu0
        %v7112 = vpop.f32.mrf.mxu0
        %v7113 = vadd.f32 0.0, %v7112
        %v7114 = vpop.f32.mrf.mxu0
        %7115 = vmatprep.mubr.bf16.mxu0 0
        %7116 = vmatmul.mubr.bf16.gmra.mxu0 %v7023
        %v7117 = vpop.f32.mrf.mxu0
        %v7118 = vadd.f32 0.0, %v7117
        %v7119 = vpop.f32.mrf.mxu0
        %v7120 = vpop.f32.mrf.mxu0
        %v7121 = vadd.f32 0.0, %v7120
        %v7122 = vpop.f32.mrf.mxu0
        %7123 = vmatprep.mubr.bf16.mxu0 0
        %7124 = vmatmul.mubr.bf16.gmra.mxu0 %v7026
        %v7125 = vpop.f32.mrf.mxu0
        %v7126 = vadd.f32 0.0, %v7125
        %v7127 = vpop.f32.mrf.mxu0
        %v7128 = vpop.f32.mrf.mxu0
        %v7129 = vadd.f32 0.0, %v7128
        %v7130 = vpop.f32.mrf.mxu0
        %7131 = vmatprep.mubr.bf16.mxu0 0
        %7132 = vmatmul.mubr.bf16.gmra.mxu0 %v7029
        %v7133 = vpop.f32.mrf.mxu0
        %v7134 = vadd.f32 0.0, %v7133
        %v7135 = vpop.f32.mrf.mxu0
        %v7136 = vpop.f32.mrf.mxu0
        %v7137 = vadd.f32 0.0, %v7136
        %v7138 = vpop.f32.mrf.mxu0
        %7139 = vmatprep.mubr.bf16.mxu0 0
        %7140 = vmatmul.mubr.bf16.gmra.mxu0 %v7032
        %v7141 = vpop.f32.mrf.mxu0
        %v7142 = vadd.f32 0.0, %v7141
        %v7143 = vpop.f32.mrf.mxu0
        %v7144 = vpop.f32.mrf.mxu0
        %v7145 = vadd.f32 0.0, %v7144
        %v7146 = vpop.f32.mrf.mxu0
        %7147 = vmatprep.mubr.bf16.mxu0 0
        %7148 = vmatmul.mubr.bf16.gmra.mxu0 %v7035
        %v7149 = vpop.f32.mrf.mxu0
        %v7150 = vadd.f32 0.0, %v7149
        %v7151 = vpop.f32.mrf.mxu0
        %v7152 = vpop.f32.mrf.mxu0
        %v7153 = vadd.f32 0.0, %v7152
        %v7154 = vpop.f32.mrf.mxu0
        %7155 = vmatprep.mubr.bf16.mxu0 0
        %7156 = vmatmul.mubr.bf16.gmra.mxu0 %v7038
        %v7157 = vpop.f32.mrf.mxu0
        %v7158 = vadd.f32 0.0, %v7157
        %v7159 = vpop.f32.mrf.mxu0
        %v7160 = vpop.f32.mrf.mxu0
        %v7161 = vadd.f32 0.0, %v7160
        %v7162 = vpop.f32.mrf.mxu0
        %7163 = vmatprep.mubr.bf16.mxu0 0
        %7164 = vmatmul.mubr.bf16.gmra.mxu0 %v7041
        %v7165 = vpop.f32.mrf.mxu0
        %v7166 = vadd.f32 0.0, %v7165
        %v7167 = vpop.f32.mrf.mxu0
        %v7168 = vpop.f32.mrf.mxu0
        %v7169 = vadd.f32 0.0, %v7168
        %v7170 = vpop.f32.mrf.mxu0
        %7171 = vmatprep.mubr.bf16.mxu0 0
        %7172 = vmatmul.mubr.bf16.gmra.mxu0 %v7044
        %v7173 = vpop.f32.mrf.mxu0
        %v7174 = vadd.f32 0.0, %v7173
        %v7175 = vpop.f32.mrf.mxu0
        %v7176 = vpop.f32.mrf.mxu0
        %v7177 = vadd.f32 0.0, %v7176
        %v7178 = vpop.f32.mrf.mxu0
        %7179 = vmatprep.mubr.bf16.mxu0 0
        %7180 = vmatmul.mubr.bf16.gmra.mxu0 %v7047
        %v7181 = vpop.f32.mrf.mxu0
        %v7182 = vadd.f32 0.0, %v7181
        %v7183 = vpop.f32.mrf.mxu0
        %v7184 = vpop.f32.mrf.mxu0
        %v7185 = vadd.f32 0.0, %v7184
        %v7186 = vpop.f32.mrf.mxu0
        %7187 = vmatprep.mubr.bf16.mxu0 0
        %7188 = vmatmul.mubr.bf16.gmra.mxu0 %v7050
        %v7189 = vpop.f32.mrf.mxu0
        %v7190 = vadd.f32 0.0, %v7189
        %v7191 = vpop.f32.mrf.mxu0
        %v7192 = vpop.f32.mrf.mxu0
        %v7193 = vadd.f32 0.0, %v7192
        %v7194 = vpop.f32.mrf.mxu0
        %7195 = vmatprep.mubr.bf16.mxu0 0
        %7196 = vmatmul.mubr.bf16.gmra.mxu0 %v7053
        %v7197 = vpop.f32.mrf.mxu0
        %v7198 = vadd.f32 0.0, %v7197
        %v7199 = vpop.f32.mrf.mxu0
        %v7200 = vpop.f32.mrf.mxu0
        %v7201 = vadd.f32 0.0, %v7200
        %v7202 = vpop.f32.mrf.mxu0
        %7203 = vmatprep.mubr.bf16.mxu0 0
        %7204 = vmatmul.mubr.bf16.gmra.mxu0 %v7056
        %v7205 = vpop.f32.mrf.mxu0
        %v7206 = vadd.f32 0.0, %v7205
        %v7207 = vpop.f32.mrf.mxu0
        %v7208 = vpop.f32.mrf.mxu0
        %v7209 = vadd.f32 0.0, %v7208
        %v7210 = vpop.f32.mrf.mxu0
        %7211 = vmatprep.mubr.bf16.mxu0 0
        %7212 = vmatmul.mubr.bf16.gmra.mxu0 %v7059
        %v7213 = vpop.f32.mrf.mxu0
        %v7214 = vadd.f32 0.0, %v7213
        %v7215 = vpop.f32.mrf.mxu0
        %v7216 = vpop.f32.mrf.mxu0
        %v7217 = vadd.f32 0.0, %v7216
        %v7218 = vpop.f32.mrf.mxu0
        %7219 = vmatprep.mubr.bf16.mxu0 0
        %7220 = vmatmul.mubr.bf16.gmra.mxu0 %v7062
        %v7221 = vpop.f32.mrf.mxu0
        %v7222 = vadd.f32 0.0, %v7221
        %v7223 = vpop.f32.mrf.mxu0
        %v7224 = vpop.f32.mrf.mxu0
        %v7225 = vadd.f32 0.0, %v7224
        %v7226 = vpop.f32.mrf.mxu0
        %7227 = vdwg.mxu0
        %v7228 = vlaneseq
        %v7229 = vshrl.u32 %v7228, 7
        %v7230 = vsub.s32 0, %v7229
        %v7231 = vrot.slane %v246, %v7230
        %v7232 = vmul.f32 %v7102, %v7231
        %v7233 = vmul.f32 %v7105, %v7231
        %v7234 = vmul.f32 %v7110, %v7231
        %v7235 = vmul.f32 %v7113, %v7231
        %v7236 = vmul.f32 %v7118, %v7231
        %v7237 = vmul.f32 %v7121, %v7231
        %v7238 = vmul.f32 %v7126, %v7231
        %v7239 = vmul.f32 %v7129, %v7231
        %v7240 = vmul.f32 %v7134, %v7231
        %v7241 = vmul.f32 %v7137, %v7231
        %v7242 = vmul.f32 %v7142, %v7231
        %v7243 = vmul.f32 %v7145, %v7231
        %v7244 = vmul.f32 %v7150, %v7231
        %v7245 = vmul.f32 %v7153, %v7231
        %v7246 = vmul.f32 %v7158, %v7231
        %v7247 = vmul.f32 %v7161, %v7231
        %v7248 = vmul.f32 %v7166, %v7231
        %v7249 = vmul.f32 %v7169, %v7231
        %v7250 = vmul.f32 %v7174, %v7231
        %v7251 = vmul.f32 %v7177, %v7231
        %v7252 = vmul.f32 %v7182, %v7231
        %v7253 = vmul.f32 %v7185, %v7231
        %v7254 = vmul.f32 %v7190, %v7231
        %v7255 = vmul.f32 %v7193, %v7231
        %v7256 = vmul.f32 %v7198, %v7231
        %v7257 = vmul.f32 %v7201, %v7231
        %v7258 = vmul.f32 %v7206, %v7231
        %v7259 = vmul.f32 %v7209, %v7231
        %v7260 = vmul.f32 %v7214, %v7231
        %v7261 = vmul.f32 %v7217, %v7231
        %v7262 = vmul.f32 %v7222, %v7231
        %v7263 = vmul.f32 %v7225, %v7231
        %v7264 = vlaneseq
        %v7265 = vshrl.u32 %v7264, 7
        %v7266 = vsub.s32 0, %v7265
        %v7267 = vrot.slane %v247, %v7266
        %v7268 = vadd.f32 %v7232, %v7267
        %v7269 = vadd.f32 %v7233, %v7267
        %v7270 = vadd.f32 %v7234, %v7267
        %v7271 = vadd.f32 %v7235, %v7267
        %v7272 = vadd.f32 %v7236, %v7267
        %v7273 = vadd.f32 %v7237, %v7267
        %v7274 = vadd.f32 %v7238, %v7267
        %v7275 = vadd.f32 %v7239, %v7267
        %v7276 = vadd.f32 %v7240, %v7267
        %v7277 = vadd.f32 %v7241, %v7267
        %v7278 = vadd.f32 %v7242, %v7267
        %v7279 = vadd.f32 %v7243, %v7267
        %v7280 = vadd.f32 %v7244, %v7267
        %v7281 = vadd.f32 %v7245, %v7267
        %v7282 = vadd.f32 %v7246, %v7267
        %v7283 = vadd.f32 %v7247, %v7267
        %v7284 = vadd.f32 %v7248, %v7267
        %v7285 = vadd.f32 %v7249, %v7267
        %v7286 = vadd.f32 %v7250, %v7267
        %v7287 = vadd.f32 %v7251, %v7267
        %v7288 = vadd.f32 %v7252, %v7267
        %v7289 = vadd.f32 %v7253, %v7267
        %v7290 = vadd.f32 %v7254, %v7267
        %v7291 = vadd.f32 %v7255, %v7267
        %v7292 = vadd.f32 %v7256, %v7267
        %v7293 = vadd.f32 %v7257, %v7267
        %v7294 = vadd.f32 %v7258, %v7267
        %v7295 = vadd.f32 %v7259, %v7267
        %v7296 = vadd.f32 %v7260, %v7267
        %v7297 = vadd.f32 %v7261, %v7267
        %v7298 = vadd.f32 %v7262, %v7267
        %v7299 = vadd.f32 %v7263, %v7267
        %v7300 = vadd.f32 %v6500, %v7268
        %v7301 = vadd.f32 %v6501, %v7269
        %v7302 = vadd.f32 %v6502, %v7270
        %v7303 = vadd.f32 %v6503, %v7271
        %v7304 = vadd.f32 %v6504, %v7272
        %v7305 = vadd.f32 %v6505, %v7273
        %v7306 = vadd.f32 %v6506, %v7274
        %v7307 = vadd.f32 %v6507, %v7275
        %v7308 = vadd.f32 %v6508, %v7276
        %v7309 = vadd.f32 %v6509, %v7277
        %v7310 = vadd.f32 %v6510, %v7278
        %v7311 = vadd.f32 %v6511, %v7279
        %v7312 = vadd.f32 %v6512, %v7280
        %v7313 = vadd.f32 %v6513, %v7281
        %v7314 = vadd.f32 %v6514, %v7282
        %v7315 = vadd.f32 %v6515, %v7283
        %v7316 = vadd.f32 %v6516, %v7284
        %v7317 = vadd.f32 %v6517, %v7285
        %v7318 = vadd.f32 %v6518, %v7286
        %v7319 = vadd.f32 %v6519, %v7287
        %v7320 = vadd.f32 %v6520, %v7288
        %v7321 = vadd.f32 %v6521, %v7289
        %v7322 = vadd.f32 %v6522, %v7290
        %v7323 = vadd.f32 %v6523, %v7291
        %v7324 = vadd.f32 %v6524, %v7292
        %v7325 = vadd.f32 %v6525, %v7293
        %v7326 = vadd.f32 %v6526, %v7294
        %v7327 = vadd.f32 %v6527, %v7295
        %v7328 = vadd.f32 %v6528, %v7296
        %v7329 = vadd.f32 %v6529, %v7297
        %v7330 = vadd.f32 %v6530, %v7298
        %v7331 = vadd.f32 %v6531, %v7299
        %v7332 = vmax.f32 %v7300, 0.0
        %v7333 = vmax.f32 %v7301, 0.0
        %v7334 = vmax.f32 %v7302, 0.0
        %v7335 = vmax.f32 %v7303, 0.0
        %v7336 = vmax.f32 %v7304, 0.0
        %v7337 = vmax.f32 %v7305, 0.0
        %v7338 = vmax.f32 %v7306, 0.0
        %v7339 = vmax.f32 %v7307, 0.0
        %v7340 = vmax.f32 %v7308, 0.0
        %v7341 = vmax.f32 %v7309, 0.0
        %v7342 = vmax.f32 %v7310, 0.0
        %v7343 = vmax.f32 %v7311, 0.0
        %v7344 = vmax.f32 %v7312, 0.0
        %v7345 = vmax.f32 %v7313, 0.0
        %v7346 = vmax.f32 %v7314, 0.0
        %v7347 = vmax.f32 %v7315, 0.0
        %v7348 = vmax.f32 %v7316, 0.0
        %v7349 = vmax.f32 %v7317, 0.0
        %v7350 = vmax.f32 %v7318, 0.0
        %v7351 = vmax.f32 %v7319, 0.0
        %v7352 = vmax.f32 %v7320, 0.0
        %v7353 = vmax.f32 %v7321, 0.0
        %v7354 = vmax.f32 %v7322, 0.0
        %v7355 = vmax.f32 %v7323, 0.0
        %v7356 = vmax.f32 %v7324, 0.0
        %v7357 = vmax.f32 %v7325, 0.0
        %v7358 = vmax.f32 %v7326, 0.0
        %v7359 = vmax.f32 %v7327, 0.0
        %v7360 = vmax.f32 %v7328, 0.0
        %v7361 = vmax.f32 %v7329, 0.0
        %v7362 = vmax.f32 %v7330, 0.0
        %v7363 = vmax.f32 %v7331, 0.0
        %7364 = vst.msk [vmem:[%s230] sm:$0xff] %vm2582, %v7332
        %7365 = vst.msk [vmem:[%s230 + $0x8] sm:$0xff] %vm2582, %v7333
        %7366 = vst.msk [vmem:[%s230 + $0x10] sm:$0xff] %vm2582, %v7334
        %7367 = vst.msk [vmem:[%s230 + $0x18] sm:$0xff] %vm2582, %v7335
        %7368 = vst.msk [vmem:[%s230 + $0x20] sm:$0xff] %vm2582, %v7336
        %7369 = vst.msk [vmem:[%s230 + $0x28] sm:$0xff] %vm2582, %v7337
        %7370 = vst.msk [vmem:[%s230 + $0x30] sm:$0xff] %vm2582, %v7338
        %7371 = vst.msk [vmem:[%s230 + $0x38] sm:$0xff] %vm2582, %v7339
        %7372 = vst.msk [vmem:[%s230 + $0x40] sm:$0xff] %vm2582, %v7340
        %7373 = vst.msk [vmem:[%s230 + $0x48] sm:$0xff] %vm2582, %v7341
        %7374 = vst.msk [vmem:[%s230 + $0x50] sm:$0xff] %vm2582, %v7342
        %7375 = vst.msk [vmem:[%s230 + $0x58] sm:$0xff] %vm2582, %v7343
        %7376 = vst.msk [vmem:[%s230 + $0x60] sm:$0xff] %vm2582, %v7344
        %7377 = vst.msk [vmem:[%s230 + $0x68] sm:$0xff] %vm2582, %v7345
        %7378 = vst.msk [vmem:[%s230 + $0x70] sm:$0xff] %vm2582, %v7346
        %7379 = vst.msk [vmem:[%s230 + $0x78] sm:$0xff] %vm2582, %v7347
        %7380 = vst.msk [vmem:[%s230 + $0x80] sm:$0xff] %vm2582, %v7348
        %7381 = vst.msk [vmem:[%s230 + $0x88] sm:$0xff] %vm2582, %v7349
        %7382 = vst.msk [vmem:[%s230 + $0x90] sm:$0xff] %vm2582, %v7350
        %7383 = vst.msk [vmem:[%s230 + $0x98] sm:$0xff] %vm2582, %v7351
        %7384 = vst.msk [vmem:[%s230 + $0xa0] sm:$0xff] %vm2582, %v7352
        %7385 = vst.msk [vmem:[%s230 + $0xa8] sm:$0xff] %vm2582, %v7353
        %7386 = vst.msk [vmem:[%s230 + $0xb0] sm:$0xff] %vm2582, %v7354
        %7387 = vst.msk [vmem:[%s230 + $0xb8] sm:$0xff] %vm2582, %v7355
        %7388 = vst.msk [vmem:[%s230 + $0xc0] sm:$0xff] %vm2582, %v7356
        %7389 = vst.msk [vmem:[%s230 + $0xc8] sm:$0xff] %vm2582, %v7357
        %7390 = vst.msk [vmem:[%s230 + $0xd0] sm:$0xff] %vm2582, %v7358
        %7391 = vst.msk [vmem:[%s230 + $0xd8] sm:$0xff] %vm2582, %v7359
        %7392 = vst.msk [vmem:[%s230 + $0xe0] sm:$0xff] %vm2582, %v7360
        %7393 = vst.msk [vmem:[%s230 + $0xe8] sm:$0xff] %vm2582, %v7361
        %7394 = vst.msk [vmem:[%s230 + $0xf0] sm:$0xff] %vm2582, %v7362
        %7395 = vst.msk [vmem:[%s230 + $0xf8] sm:$0xff] %vm2582, %v7363
        %s7396 = sand.u32 %s148, 1
        %s7397 = sand.u32 %s148, 1
        %s7398 = smul.addr %s7397, 256
        %s7399 = scalar_lea.vmem [#allocation3], %s7398
        // Predicated region
        $region49: #{resnet_block.1} parent=39 // pred_check
          %p7400 = pneg %p158
        $region50: #{resnet_block.1} parent=39 // pred_check_branch
          %7402 = sbr.rel (%p7400) target = $region52
        $region51: #{resnet_block.1} parent=39 // pred_region
          %s7403 = smul.u32 2, %s20
          %s7404 = smul.u32 8, %s21
          %s7405 = smul.addr %s7404, 2
          %s7406 = smul.addr %s7403, 32
          %s7407 = sadd.s32 %s7405, %s7406
          %s7408 = smul.addr %s7407, 8
          %s7409 = scalar_lea.vmem %s5, %s7408
          // Predicated region
          $region53: #{resnet_block.1} parent=51 // pred_check
            _
          $region54: #{resnet_block.1} parent=51 // pred_check_branch
            %7411 = sbr.rel (0) target = $region56
          $region55: #{resnet_block.1} parent=51 // pred_region
            // Predicated region
            $region57: #{resnet_block.1} parent=55 // pred_check
              _
            $region58: #{resnet_block.1} parent=55 // pred_check_branch
              %7413 = sbr.rel (0) target = $region60
            $region59: #{resnet_block.1} parent=55 // pred_region
              // Predicated region
              $region72: #{resnet_block.1} parent=59 // pred_check
                _
              $region73: #{resnet_block.1} parent=59 // pred_check_branch
                %7491 = sbr.rel (0) target = $region75
              $region74: #{resnet_block.1} parent=59 // pred_region
                loop: start=0, step=1, limit=1
                $region76: #{resnet_block.1} parent=74 // loop_pre_header
                  _
                $region77: #{resnet_block.1} parent=74 // loop_header
                  %s7493 = sphi 0, %s7497
                  %p7494 = scmp.ge.s32.totalorder %s7493, 1
                  %s7498 = sphi %s7399, %s7399
                  %s7499 = sphi %s7409, %s7409
                $region78: #{resnet_block.1} parent=74 // loop_header_branch
                  %7496 = sbr.rel (%p7494) target = $region82
                $region79: #{resnet_block.1} parent=74 // loop_body
                  %v7500 = vld [vmem:[%s7498] sm:$0xff]
                  %7501 = vst [vmem:[%s7499] sm:$0xff] %v7500
                  %v7502 = vld [vmem:[%s7498 + $0x8] sm:$0xff]
                  %7503 = vst [vmem:[%s7499 + $0x8] sm:$0xff] %v7502
                  %v7504 = vld [vmem:[%s7498 + $0x10] sm:$0xff]
                  %7505 = vst [vmem:[%s7499 + $0x10] sm:$0xff] %v7504
                  %v7506 = vld [vmem:[%s7498 + $0x18] sm:$0xff]
                  %7507 = vst [vmem:[%s7499 + $0x18] sm:$0xff] %v7506
                  %v7508 = vld [vmem:[%s7498 + $0x20] sm:$0xff]
                  %7509 = vst [vmem:[%s7499 + $0x20] sm:$0xff] %v7508
                  %v7510 = vld [vmem:[%s7498 + $0x28] sm:$0xff]
                  %7511 = vst [vmem:[%s7499 + $0x28] sm:$0xff] %v7510
                  %v7512 = vld [vmem:[%s7498 + $0x30] sm:$0xff]
                  %7513 = vst [vmem:[%s7499 + $0x30] sm:$0xff] %v7512
                  %v7514 = vld [vmem:[%s7498 + $0x38] sm:$0xff]
                  %7515 = vst [vmem:[%s7499 + $0x38] sm:$0xff] %v7514
                  %v7516 = vld [vmem:[%s7498 + $0x40] sm:$0xff]
                  %7517 = vst [vmem:[%s7499 + $0x40] sm:$0xff] %v7516
                  %v7518 = vld [vmem:[%s7498 + $0x48] sm:$0xff]
                  %7519 = vst [vmem:[%s7499 + $0x48] sm:$0xff] %v7518
                  %v7520 = vld [vmem:[%s7498 + $0x50] sm:$0xff]
                  %7521 = vst [vmem:[%s7499 + $0x50] sm:$0xff] %v7520
                  %v7522 = vld [vmem:[%s7498 + $0x58] sm:$0xff]
                  %7523 = vst [vmem:[%s7499 + $0x58] sm:$0xff] %v7522
                  %v7524 = vld [vmem:[%s7498 + $0x60] sm:$0xff]
                  %7525 = vst [vmem:[%s7499 + $0x60] sm:$0xff] %v7524
                  %v7526 = vld [vmem:[%s7498 + $0x68] sm:$0xff]
                  %7527 = vst [vmem:[%s7499 + $0x68] sm:$0xff] %v7526
                  %v7528 = vld [vmem:[%s7498 + $0x70] sm:$0xff]
                  %7529 = vst [vmem:[%s7499 + $0x70] sm:$0xff] %v7528
                  %v7530 = vld [vmem:[%s7498 + $0x78] sm:$0xff]
                  %7531 = vst [vmem:[%s7499 + $0x78] sm:$0xff] %v7530
                  %v7532 = vld [vmem:[%s7498 + $0x80] sm:$0xff]
                  %7533 = vst [vmem:[%s7499 + $0x100] sm:$0xff] %v7532
                  %v7534 = vld [vmem:[%s7498 + $0x88] sm:$0xff]
                  %7535 = vst [vmem:[%s7499 + $0x108] sm:$0xff] %v7534
                  %v7536 = vld [vmem:[%s7498 + $0x90] sm:$0xff]
                  %7537 = vst [vmem:[%s7499 + $0x110] sm:$0xff] %v7536
                  %v7538 = vld [vmem:[%s7498 + $0x98] sm:$0xff]
                  %7539 = vst [vmem:[%s7499 + $0x118] sm:$0xff] %v7538
                  %v7540 = vld [vmem:[%s7498 + $0xa0] sm:$0xff]
                  %7541 = vst [vmem:[%s7499 + $0x120] sm:$0xff] %v7540
                  %v7542 = vld [vmem:[%s7498 + $0xa8] sm:$0xff]
                  %7543 = vst [vmem:[%s7499 + $0x128] sm:$0xff] %v7542
                  %v7544 = vld [vmem:[%s7498 + $0xb0] sm:$0xff]
                  %7545 = vst [vmem:[%s7499 + $0x130] sm:$0xff] %v7544
                  %v7546 = vld [vmem:[%s7498 + $0xb8] sm:$0xff]
                  %7547 = vst [vmem:[%s7499 + $0x138] sm:$0xff] %v7546
                  %v7548 = vld [vmem:[%s7498 + $0xc0] sm:$0xff]
                  %7549 = vst [vmem:[%s7499 + $0x140] sm:$0xff] %v7548
                  %v7550 = vld [vmem:[%s7498 + $0xc8] sm:$0xff]
                  %7551 = vst [vmem:[%s7499 + $0x148] sm:$0xff] %v7550
                  %v7552 = vld [vmem:[%s7498 + $0xd0] sm:$0xff]
                  %7553 = vst [vmem:[%s7499 + $0x150] sm:$0xff] %v7552
                  %v7554 = vld [vmem:[%s7498 + $0xd8] sm:$0xff]
                  %7555 = vst [vmem:[%s7499 + $0x158] sm:$0xff] %v7554
                  %v7556 = vld [vmem:[%s7498 + $0xe0] sm:$0xff]
                  %7557 = vst [vmem:[%s7499 + $0x160] sm:$0xff] %v7556
                  %v7558 = vld [vmem:[%s7498 + $0xe8] sm:$0xff]
                  %7559 = vst [vmem:[%s7499 + $0x168] sm:$0xff] %v7558
                  %v7560 = vld [vmem:[%s7498 + $0xf0] sm:$0xff]
                  %7561 = vst [vmem:[%s7499 + $0x170] sm:$0xff] %v7560
                  %v7562 = vld [vmem:[%s7498 + $0xf8] sm:$0xff]
                  %7563 = vst [vmem:[%s7499 + $0x178] sm:$0xff] %v7562
                $region80: #{resnet_block.1} parent=74 // loop_footer
                  %s7497 = sadd.s32 1, %s7493
                $region81: #{resnet_block.1} parent=74 // loop_footer_branch
                  %7492 = sbr.rel target = $region77
                $region82: #{resnet_block.1} parent=74 // loop_exit
                  _
              $region75: #{resnet_block.1} parent=59 // pred_fallthru
                _
              // Predicated region
              $region83: #{resnet_block.1} parent=59 // pred_check
                _
              $region84: #{resnet_block.1} parent=59 // pred_check_branch
                %7565 = sbr.rel target = $region86
              $region85: #{resnet_block.1} parent=59 // pred_region
                _
              $region86: #{resnet_block.1} parent=59 // pred_fallthru
                _
            $region60: #{resnet_block.1} parent=55 // pred_fallthru
              _
            // Predicated region
            $region61: #{resnet_block.1} parent=55 // pred_check
              _
            $region62: #{resnet_block.1} parent=55 // pred_check_branch
              %7415 = sbr.rel target = $region64
            $region63: #{resnet_block.1} parent=55 // pred_region
              %s7417 = ssub.s32 256, 1
              loop: start=0, step=1, limit=1
              $region65: #{resnet_block.1} parent=63 // loop_pre_header
                _
              $region66: #{resnet_block.1} parent=63 // loop_header
                %s7419 = sphi 0, %s7423
                %p7420 = scmp.ge.s32.totalorder %s7419, 1
                %s7424 = sphi %s7399, %s7399
                %s7425 = sphi %s7409, %s7409
              $region67: #{resnet_block.1} parent=63 // loop_header_branch
                %7422 = sbr.rel (%p7420) target = $region71
              $region68: #{resnet_block.1} parent=63 // loop_body
                %v7426 = vld [vmem:[%s7424] sm:%s7417]
                %7427 = vst [vmem:[%s7425] sm:%s7417] %v7426
                %v7428 = vld [vmem:[%s7424 + $0x8] sm:%s7417]
                %7429 = vst [vmem:[%s7425 + $0x8] sm:%s7417] %v7428
                %v7430 = vld [vmem:[%s7424 + $0x10] sm:%s7417]
                %7431 = vst [vmem:[%s7425 + $0x10] sm:%s7417] %v7430
                %v7432 = vld [vmem:[%s7424 + $0x18] sm:%s7417]
                %7433 = vst [vmem:[%s7425 + $0x18] sm:%s7417] %v7432
                %v7434 = vld [vmem:[%s7424 + $0x20] sm:%s7417]
                %7435 = vst [vmem:[%s7425 + $0x20] sm:%s7417] %v7434
                %v7436 = vld [vmem:[%s7424 + $0x28] sm:%s7417]
                %7437 = vst [vmem:[%s7425 + $0x28] sm:%s7417] %v7436
                %v7438 = vld [vmem:[%s7424 + $0x30] sm:%s7417]
                %7439 = vst [vmem:[%s7425 + $0x30] sm:%s7417] %v7438
                %v7440 = vld [vmem:[%s7424 + $0x38] sm:%s7417]
                %7441 = vst [vmem:[%s7425 + $0x38] sm:%s7417] %v7440
                %v7442 = vld [vmem:[%s7424 + $0x40] sm:%s7417]
                %7443 = vst [vmem:[%s7425 + $0x40] sm:%s7417] %v7442
                %v7444 = vld [vmem:[%s7424 + $0x48] sm:%s7417]
                %7445 = vst [vmem:[%s7425 + $0x48] sm:%s7417] %v7444
                %v7446 = vld [vmem:[%s7424 + $0x50] sm:%s7417]
                %7447 = vst [vmem:[%s7425 + $0x50] sm:%s7417] %v7446
                %v7448 = vld [vmem:[%s7424 + $0x58] sm:%s7417]
                %7449 = vst [vmem:[%s7425 + $0x58] sm:%s7417] %v7448
                %v7450 = vld [vmem:[%s7424 + $0x60] sm:%s7417]
                %7451 = vst [vmem:[%s7425 + $0x60] sm:%s7417] %v7450
                %v7452 = vld [vmem:[%s7424 + $0x68] sm:%s7417]
                %7453 = vst [vmem:[%s7425 + $0x68] sm:%s7417] %v7452
                %v7454 = vld [vmem:[%s7424 + $0x70] sm:%s7417]
                %7455 = vst [vmem:[%s7425 + $0x70] sm:%s7417] %v7454
                %v7456 = vld [vmem:[%s7424 + $0x78] sm:%s7417]
                %7457 = vst [vmem:[%s7425 + $0x78] sm:%s7417] %v7456
                %v7458 = vld [vmem:[%s7424 + $0x80] sm:%s7417]
                %7459 = vst [vmem:[%s7425 + $0x100] sm:%s7417] %v7458
                %v7460 = vld [vmem:[%s7424 + $0x88] sm:%s7417]
                %7461 = vst [vmem:[%s7425 + $0x108] sm:%s7417] %v7460
                %v7462 = vld [vmem:[%s7424 + $0x90] sm:%s7417]
                %7463 = vst [vmem:[%s7425 + $0x110] sm:%s7417] %v7462
                %v7464 = vld [vmem:[%s7424 + $0x98] sm:%s7417]
                %7465 = vst [vmem:[%s7425 + $0x118] sm:%s7417] %v7464
                %v7466 = vld [vmem:[%s7424 + $0xa0] sm:%s7417]
                %7467 = vst [vmem:[%s7425 + $0x120] sm:%s7417] %v7466
                %v7468 = vld [vmem:[%s7424 + $0xa8] sm:%s7417]
                %7469 = vst [vmem:[%s7425 + $0x128] sm:%s7417] %v7468
                %v7470 = vld [vmem:[%s7424 + $0xb0] sm:%s7417]
                %7471 = vst [vmem:[%s7425 + $0x130] sm:%s7417] %v7470
                %v7472 = vld [vmem:[%s7424 + $0xb8] sm:%s7417]
                %7473 = vst [vmem:[%s7425 + $0x138] sm:%s7417] %v7472
                %v7474 = vld [vmem:[%s7424 + $0xc0] sm:%s7417]
                %7475 = vst [vmem:[%s7425 + $0x140] sm:%s7417] %v7474
                %v7476 = vld [vmem:[%s7424 + $0xc8] sm:%s7417]
                %7477 = vst [vmem:[%s7425 + $0x148] sm:%s7417] %v7476
                %v7478 = vld [vmem:[%s7424 + $0xd0] sm:%s7417]
                %7479 = vst [vmem:[%s7425 + $0x150] sm:%s7417] %v7478
                %v7480 = vld [vmem:[%s7424 + $0xd8] sm:%s7417]
                %7481 = vst [vmem:[%s7425 + $0x158] sm:%s7417] %v7480
                %v7482 = vld [vmem:[%s7424 + $0xe0] sm:%s7417]
                %7483 = vst [vmem:[%s7425 + $0x160] sm:%s7417] %v7482
                %v7484 = vld [vmem:[%s7424 + $0xe8] sm:%s7417]
                %7485 = vst [vmem:[%s7425 + $0x168] sm:%s7417] %v7484
                %v7486 = vld [vmem:[%s7424 + $0xf0] sm:%s7417]
                %7487 = vst [vmem:[%s7425 + $0x170] sm:%s7417] %v7486
                %v7488 = vld [vmem:[%s7424 + $0xf8] sm:%s7417]
                %7489 = vst [vmem:[%s7425 + $0x178] sm:%s7417] %v7488
              $region69: #{resnet_block.1} parent=63 // loop_footer
                %s7423 = sadd.s32 1, %s7419
              $region70: #{resnet_block.1} parent=63 // loop_footer_branch
                %7418 = sbr.rel target = $region66
              $region71: #{resnet_block.1} parent=63 // loop_exit
                _
            $region64: #{resnet_block.1} parent=55 // pred_fallthru
              _
          $region56: #{resnet_block.1} parent=51 // pred_fallthru
            _
          %7566 = vnop
        $region52: #{resnet_block.1} parent=39 // pred_fallthru
          _
      $region40: #{resnet_block.1} parent=5 // pred_fallthru
        _
      %p7567 = scmp.le.s32.totalorder 2, %s11
      // Predicated region
      $region87: #{resnet_block.1} parent=5 // pred_check
        %p7568 = pneg %p7567
      $region88: #{resnet_block.1} parent=5 // pred_check_branch
        %7570 = sbr.rel (%p7568) target = $region90
      $region89: #{resnet_block.1} parent=5 // pred_region
        %s7571 = ssub.s32 %s11, 2
        // Predicated region
        $region91: #{resnet_block.1} parent=89 // pred_check
          %p7572 = pneg %p164
        $region92: #{resnet_block.1} parent=89 // pred_check_branch
          %7574 = sbr.rel (%p7572) target = $region94
        $region93: #{resnet_block.1} parent=89 // pred_region
          %s7575 = sand.u32 %s149, 1
          %s7576 = sand.u32 %s149, 1
          %s7577 = smul.addr %s7576, 256
          %s7578 = scalar_lea.vmem [#allocation3], %s7577
        $region94: #{resnet_block.1} parent=89 // pred_fallthru
          _
      $region90: #{resnet_block.1} parent=5 // pred_fallthru
        _
    $region6: #{resnet_block.1} parent=1 // loop_footer
      %s15 = sadd.s32 1, %s11
    $region7: #{resnet_block.1} parent=1 // loop_footer_branch
      %10 = sbr.rel target = $region3
    $region8: #{resnet_block.1} parent=1 // loop_exit
      _

</llo_original>
